<compile_context>
chip_gen: v6e
topology: v6e:2x2x1
jax: 0.10.0
libtpu: 0.0.40
codegen_flags: <defaults>
</compile_context>

<pallas_src>
import jax
import jax.numpy as jnp
from jax.experimental import pallas as pl
from jax.experimental.pallas import tpu as pltpu


def _vq_kernel(x_ref, cbT_ref, cb_ref, c2h_ref, q_ref, idx_ref, loss_ref):
    x = x_ref[...]                        # (tm, D), input dtype
    tm, D = x.shape
    K = cb_ref.shape[0]                   # padded codebook rows (multiple of 128)

    # Distance score (argmin-equivalent): 0.5*||c||^2 - x.c
    xc = jnp.dot(x.astype(cbT_ref.dtype), cbT_ref[...],
                 preferred_element_type=jnp.float32)            # (tm, K)  MXU
    score = c2h_ref[...] - xc                                    # (tm, K)

    # argmin over the padded codebook axis; padded rows carry a 1e30 sentinel.
    idx = jnp.argmin(score, axis=-1).astype(jnp.int32)           # (tm,)

    # One-hot MXU gather of the selected codes (f32 codebook copy for accuracy).
    lane = jax.lax.broadcasted_iota(jnp.int32, (1, K), 1)        # (1, K) built once
    onehot = (lane == idx[:, None]).astype(jnp.float32)          # (tm, K)
    codes = jnp.dot(onehot, cb_ref[...],
                    preferred_element_type=jnp.float32)          # (tm, D)

    # Forward value of the straight-through estimator is simply the codes.
    q_ref[...] = codes.astype(q_ref.dtype)

    # Lane-dense index store: one (1, 1, tm) row per tile.
    idx_ref[...] = idx.reshape(1, 1, tm)

    # Per-tile loss partials (sublane reduce only); final scalar reduction and
    # scaling are done in the wrapper so the grid axis can stay "parallel".
    diff = codes - x.astype(jnp.float32)
    loss_ref[...] = jnp.sum(diff * diff, axis=0)[None, None, :]  # (1, 1, D)


def _pick_row_tile(M, tm_max=2048):
    """Largest multiple-of-8 divisor of M that is <= tm_max.

    Prefers tiles >= 128 rows that leave >= 2 grid steps, so the "parallel"
    grid axis can shard across both TensorCores on v7x.
    """
    cap = min(tm_max, M)
    divs = [d for d in range(8, cap + 1, 8) if M % d == 0]
    if not divs:
        raise ValueError(
            f"M={M} (=B*T) must have a divisor that is a multiple of 8 and <= {tm_max}")
    multi = [d for d in divs if (M // d) >= 2 and d >= 128]
    return max(multi) if multi else max(divs)


def vq_forward(x, codebook, commitment_weight=1.0, tm_max=2048,
               distance_dtype=jnp.bfloat16):
    """x: (B, T, code_dim), codebook: (n_codes, code_dim).

    Returns (quantized (B,T,D), indices (B,T) int32, loss scalar f32).
    `distance_dtype` controls only the argmin-score matmul feed; the gathered
    codes and the loss always use the f32 codebook.
    """
    B, T, D = x.shape
    K = codebook.shape[0]
    M = B * T

    tm = _pick_row_tile(M, tm_max)
    num_tiles = M // tm

    xf = x.reshape(M, D)

    # Pad the codebook along K to a full 128-lane width.
    K_pad = max(128, ((K + 127) // 128) * 128)
    cb = jnp.zeros((K_pad, D), jnp.float32).at[:K, :].set(codebook.astype(jnp.float32))
    # Pre-transposed copy for the distance matmul (avoids a per-step transpose),
    # cast to the MXU feed dtype (bf16 by default).
    cbT = cb.T.astype(distance_dtype)                       # (D, K_pad)
    # Hoisted 0.5*||c||^2 (2x folded in); huge sentinel on padded rows, kept f32.
    c2h = 0.5 * jnp.sum(cb * cb, axis=-1)
    c2h = jnp.where(jnp.arange(K_pad) < K, c2h, jnp.float32(1e30)).reshape(1, K_pad)

    # loss = mean((codes - x)^2) + commitment * mean((x - codes)^2)
    #      = (1 + commitment) * sum((codes - x)^2) / (M * D)
    loss_scale = (1.0 + float(commitment_weight)) / float(M * D)

    q, idx, partials = pl.pallas_call(
        _vq_kernel,
        out_shape=(
            jax.ShapeDtypeStruct((M, D), x.dtype),                 # quantized
            jax.ShapeDtypeStruct((num_tiles, 1, tm), jnp.int32),   # indices (lane-dense)
            jax.ShapeDtypeStruct((num_tiles, 1, D), jnp.float32),  # loss partials
        ),
        grid_spec=pltpu.PrefetchScalarGridSpec(
            num_scalar_prefetch=0,
            grid=(num_tiles,),
            in_specs=[
                pl.BlockSpec((tm, D), lambda i: (i, 0)),           # x row tile
                # Constant-index blocks: single-buffered (no prefetch overlap needed).
                pl.BlockSpec((D, K_pad), lambda i: (0, 0),
                             pipeline_mode=pl.Buffered(1)),        # codebook^T (distance feed)
                pl.BlockSpec((K_pad, D), lambda i: (0, 0),
                             pipeline_mode=pl.Buffered(1)),        # codebook f32 (gather)
                pl.BlockSpec((1, K_pad), lambda i: (0, 0),
                             pipeline_mode=pl.Buffered(1)),        # 0.5*||c||^2 + sentinel
            ],
            out_specs=[
                pl.BlockSpec((tm, D), lambda i: (i, 0)),           # quantized tile
                pl.BlockSpec((1, 1, tm), lambda i: (i, 0, 0)),     # indices row
                pl.BlockSpec((1, 1, D), lambda i: (i, 0, 0)),      # loss partial row
            ],
        ),
        compiler_params=pltpu.CompilerParams(
            # No cross-step accumulation -> safe to shard steps across cores.
            dimension_semantics=("parallel",),
            vmem_limit_bytes=32 * 1024 * 1024,
        ),
    )(xf, cbT, cb, c2h)

    loss = loss_scale * jnp.sum(partials)
    return q.reshape(B, T, D), idx.reshape(B, T), loss


def vq_reference(x, codebook, commitment_weight=1.0):
    # Pure-JAX reference matching the PyTorch forward (non-passthrough, non-one_hot).
    dist = jnp.sqrt(jnp.maximum(
        jnp.sum(x[..., :, None, :] ** 2, -1)
        - 2.0 * jnp.einsum("btd,kd->btk", x, codebook)
        + jnp.sum(codebook ** 2, -1)[None, None, :], 0.0))
    indices = jnp.argmin(dist, axis=-1)
    codes = codebook[indices]
    code_loss = jnp.mean((codes - x) ** 2)
    embedding_loss = jnp.mean((x - codes) ** 2) * commitment_weight
    loss = code_loss + embedding_loss
    quantized = x + (codes - x)
    return quantized, indices, loss


if __name__ == "__main__":
    # Small shapes consistent with the module: code_dim=32, n_codes=16,
    # input batch=2, seq=512  ->  x: (2, 512, 32), M = 1024 -> 2 row tiles of 512.
    code_dim = 32
    n_codes = 16
    B, T = 2, 512
    commitment_weight = 1.0

    key = jax.random.PRNGKey(0)
    k_x, k_cb = jax.random.split(key)
    x = jax.random.normal(k_x, (B, T, code_dim), dtype=jnp.float32)
    codebook = jax.random.normal(k_cb, (n_codes, code_dim), dtype=jnp.float32)

    q_ref, idx_ref, loss_ref = vq_reference(x, codebook, commitment_weight)

    # --- default path: bf16 MXU feed for the distance scores ------------------
    q, idx, loss = vq_forward(x, codebook, commitment_weight)
    jax.block_until_ready((q, idx, loss))

    M, D = B * T, code_dim
    xf = x.reshape(M, D)
    idx_flat = idx.reshape(M)
    # Exact f32 squared distances for a tie-tolerant index check: bf16 feed may
    # flip argmin only at near-ties, so the chosen code must be (near-)optimal.
    d2 = (jnp.sum(xf ** 2, -1, keepdims=True)
          - 2.0 * xf @ codebook.T
          + jnp.sum(codebook ** 2, -1)[None, :])
    d2_min = jnp.min(d2, axis=-1)
    d2_sel = jnp.take_along_axis(d2, idx_flat[:, None], axis=-1)[:, 0]
    assert jnp.all(d2_sel <= d2_min + 1.0), "selected codes are not (near-)optimal"
    # Quantized output must be exactly the selected codes.
    assert jnp.allclose(q.reshape(M, D), codebook[idx_flat], atol=1e-5), "quantized mismatch"
    # Loss consistent with the kernel's own code selection, and close to the reference.
    loss_chk = (1.0 + commitment_weight) * jnp.mean((codebook[idx_flat] - xf) ** 2)
    assert jnp.allclose(loss, loss_chk, atol=1e-5, rtol=1e-5), "loss/selection mismatch"
    assert jnp.allclose(loss, loss_ref, rtol=1e-3, atol=1e-4), "loss vs reference mismatch"

    # --- f32 distance path: bit-for-bit index agreement with the reference ----
    q32, idx32, loss32 = vq_forward(x, codebook, commitment_weight,
                                    distance_dtype=jnp.float32)
    jax.block_until_ready((q32, idx32, loss32))
    assert jnp.array_equal(idx32, idx_ref.astype(jnp.int32)), "indices mismatch (f32)"
    assert jnp.allclose(q32, q_ref, atol=1e-5), "quantized mismatch (f32)"
    assert jnp.allclose(loss32, loss_ref, atol=1e-5), "loss mismatch (f32)"

    # TODO(synk): one_hot branch (gumbel-softmax sampling) and passthrough branch
    # are trivial / stochastic glue and are not implemented as kernels.
    print("KERNEL_OK")
</pallas_src>

<mosaic_0001>
module attributes {stable_mosaic.version = 11 : i64} {
  func.func @_vq_kernel(%arg0: i32, %arg1: memref<512x32xf32, #tpu.memory_space<vmem>>, %arg2: memref<32x128xbf16, #tpu.memory_space<vmem>>, %arg3: memref<128x32xf32, #tpu.memory_space<vmem>>, %arg4: memref<1x128xf32, #tpu.memory_space<vmem>>, %arg5: memref<512x32xf32, #tpu.memory_space<vmem>>, %arg6: memref<1x1x512xi32, #tpu.memory_space<vmem>>, %arg7: memref<1x1x32xf32, #tpu.memory_space<vmem>>) attributes {dimension_semantics = [#tpu.dimension_semantics<parallel>], iteration_bounds = array<i64: 2>, scalar_prefetch = 0 : i64, scratch_operands = 0 : i64, tpu.core_type = #tpu.core_type<tc>, window_params = [{transform_indices = @transform_0, window_bounds = array<i64: 512, 32>}, {pipeline_mode = #tpu.pipeline_mode<synchronous>, transform_indices = @transform_1, window_bounds = array<i64: 32, 128>}, {pipeline_mode = #tpu.pipeline_mode<synchronous>, transform_indices = @transform_2, window_bounds = array<i64: 128, 32>}, {pipeline_mode = #tpu.pipeline_mode<synchronous>, transform_indices = @transform_3, window_bounds = array<i64: 1, 128>}, {transform_indices = @transform_4, window_bounds = array<i64: 512, 32>}, {transform_indices = @transform_5, window_bounds = array<i64: 1, 1, 512>}, {transform_indices = @transform_6, window_bounds = array<i64: 1, 1, 32>}]} {
    %c0 = arith.constant 0 : index
    %c0_0 = arith.constant 0 : index
    %0 = vector.load %arg1[%c0, %c0_0] : memref<512x32xf32, #tpu.memory_space<vmem>>, vector<512x32xf32>
    %1 = arith.truncf %0 : vector<512x32xf32> to vector<512x32xbf16>
    %c0_1 = arith.constant 0 : index
    %c0_2 = arith.constant 0 : index
    %2 = vector.load %arg2[%c0_1, %c0_2] : memref<32x128xbf16, #tpu.memory_space<vmem>>, vector<32x128xbf16>
    %cst = arith.constant dense<0.000000e+00> : vector<512x128xf32>
    %3 = tpu.matmul %1, %2, %cst {dimension_numbers = #tpu.dot_dimension_numbers<[1], [0], [0], [1], [0, 0, 1, 1], [], []>} : vector<512x32xbf16>, vector<32x128xbf16>, vector<512x128xf32> -> vector<512x128xf32>
    %c0_3 = arith.constant 0 : index
    %c0_4 = arith.constant 0 : index
    %4 = vector.load %arg4[%c0_3, %c0_4] : memref<1x128xf32, #tpu.memory_space<vmem>>, vector<1x128xf32>
    %5 = vector.broadcast %4 : vector<1x128xf32> to vector<512x128xf32>
    %6 = arith.subf %5, %3 : vector<512x128xf32>
    %7 = tpu.reduce_index %6 {axis = 1 : i32, kind = #tpu.reduction_kind<arg_min>} : vector<512x128xf32> -> vector<512xi32>
    %8 = tpu.iota {dimensions = array<i32: 1>} : vector<1x128xi32>
    %9 = vector.shape_cast %7 : vector<512xi32> to vector<512x1xi32>
    %10 = vector.broadcast %8 : vector<1x128xi32> to vector<512x128xi32>
    %11 = vector.broadcast %9 : vector<512x1xi32> to vector<512x128xi32>
    %12 = arith.cmpi eq, %10, %11 : vector<512x128xi32>
    %13 = arith.extui %12 : vector<512x128xi1> to vector<512x128xi32>
    %14 = arith.sitofp %13 : vector<512x128xi32> to vector<512x128xf32>
    %c0_5 = arith.constant 0 : index
    %c0_6 = arith.constant 0 : index
    %15 = vector.load %arg3[%c0_5, %c0_6] : memref<128x32xf32, #tpu.memory_space<vmem>>, vector<128x32xf32>
    %cst_7 = arith.constant dense<0.000000e+00> : vector<512x32xf32>
    %16 = tpu.matmul %14, %15, %cst_7 {dimension_numbers = #tpu.dot_dimension_numbers<[1], [0], [0], [1], [0, 0, 1, 1], [], []>} : vector<512x128xf32>, vector<128x32xf32>, vector<512x32xf32> -> vector<512x32xf32>
    %c0_8 = arith.constant 0 : index
    %c0_9 = arith.constant 0 : index
    %17 = vector.load %arg5[%c0_8, %c0_9] : memref<512x32xf32, #tpu.memory_space<vmem>>, vector<512x32xf32>
    tpu.vector_store %arg5[%c0_8, %c0_9], %16 {strides = array<i32>} : memref<512x32xf32, #tpu.memory_space<vmem>>, vector<512x32xf32>,
    %18 = vector.shape_cast %7 : vector<512xi32> to vector<1x1x512xi32>
    %c0_10 = arith.constant 0 : index
    %c0_11 = arith.constant 0 : index
    %c0_12 = arith.constant 0 : index
    %19 = vector.load %arg6[%c0_10, %c0_11, %c0_12] : memref<1x1x512xi32, #tpu.memory_space<vmem>>, vector<1x1x512xi32>
    tpu.vector_store %arg6[%c0_10, %c0_11, %c0_12], %18 {strides = array<i32>} : memref<1x1x512xi32, #tpu.memory_space<vmem>>, vector<1x1x512xi32>,
    %20 = arith.subf %16, %0 : vector<512x32xf32>
    %21 = arith.mulf %20, %20 : vector<512x32xf32>
    %cst_13 = arith.constant dense<0.000000e+00> : vector<32xf32>
    %22 = vector.multi_reduction <add>, %21, %cst_13 [0] : vector<512x32xf32> to vector<32xf32>
    %23 = vector.shape_cast %22 : vector<32xf32> to vector<1x1x32xf32>
    %c0_14 = arith.constant 0 : index
    %c0_15 = arith.constant 0 : index
    %c0_16 = arith.constant 0 : index
    %24 = vector.load %arg7[%c0_14, %c0_15, %c0_16] : memref<1x1x32xf32, #tpu.memory_space<vmem>>, vector<1x1x32xf32>
    tpu.vector_store %arg7[%c0_14, %c0_15, %c0_16], %23 {strides = array<i32>} : memref<1x1x32xf32, #tpu.memory_space<vmem>>, vector<1x1x32xf32>,
    return
  }
  func.func @transform_0(%arg0: i32) -> (i32, i32) {
    %c0_i32 = arith.constant 0 : i32
    %c0_i32_0 = arith.constant 0 : i32
    return %arg0, %c0_i32 : i32, i32
  }
  func.func @transform_1(%arg0: i32) -> (i32, i32) {
    %c0_i32 = arith.constant 0 : i32
    %c0_i32_0 = arith.constant 0 : i32
    %c0_i32_1 = arith.constant 0 : i32
    return %c0_i32, %c0_i32_0 : i32, i32
  }
  func.func @transform_2(%arg0: i32) -> (i32, i32) {
    %c0_i32 = arith.constant 0 : i32
    %c0_i32_0 = arith.constant 0 : i32
    %c0_i32_1 = arith.constant 0 : i32
    return %c0_i32, %c0_i32_0 : i32, i32
  }
  func.func @transform_3(%arg0: i32) -> (i32, i32) {
    %c0_i32 = arith.constant 0 : i32
    %c0_i32_0 = arith.constant 0 : i32
    %c0_i32_1 = arith.constant 0 : i32
    return %c0_i32, %c0_i32_0 : i32, i32
  }
  func.func @transform_4(%arg0: i32) -> (i32, i32) {
    %c0_i32 = arith.constant 0 : i32
    %c0_i32_0 = arith.constant 0 : i32
    return %arg0, %c0_i32 : i32, i32
  }
  func.func @transform_5(%arg0: i32) -> (i32, i32, i32) {
    %c0_i32 = arith.constant 0 : i32
    %c0_i32_0 = arith.constant 0 : i32
    %c0_i32_1 = arith.constant 0 : i32
    return %arg0, %c0_i32, %c0_i32_0 : i32, i32, i32
  }
  func.func @transform_6(%arg0: i32) -> (i32, i32, i32) {
    %c0_i32 = arith.constant 0 : i32
    %c0_i32_0 = arith.constant 0 : i32
    %c0_i32_1 = arith.constant 0 : i32
    return %arg0, %c0_i32, %c0_i32_0 : i32, i32, i32
  }
}

</mosaic_0001>

<llo_original>
// kernel: tpu_custom_call.1
$region0: #{tpu_custom_call.1}
  #allocation0 [shape = 'u32[]', space=smem, size = 0x4, offset = 0x4, fixed_abs, tag = 'smem constant byte address 0x4 - core index']
  #allocation1 [shape = 'u32[144,128]{1,0:T(1,128)}', space=vmem, size = 0x12000, scoped, tag = 'internal scratch']
  %s0 = inlined_call_operand.vmem [shape: f32[1024,32], index: 0, kind: input, shape index: {}]
  %s1 = inlined_call_operand.vmem [shape: bf16[32,128], index: 1, kind: input, shape index: {}]
  %s2 = inlined_call_operand.vmem [shape: f32[128,32], index: 2, kind: input, shape index: {}]
  %s3 = inlined_call_operand.vmem [shape: f32[1,128], index: 3, kind: input, shape index: {}]
  %s4 = inlined_call_operand.vmem [shape: f32[1024,32], index: 4, kind: output, shape index: {0}]
  %s5 = inlined_call_operand.hbm [shape: s32[2,1,512], index: 5, kind: output, shape index: {1}]
  %s6 = inlined_call_operand.hbm [shape: f32[2,1,32], index: 6, kind: output, shape index: {2}]
  %7 = xla_tuple %s4, %s5, %s6
  %s8 = sld [smem:[#allocation0]]
  $region65: #{tpu_custom_call.1} parent=0
    _
  %s10 = ssub.s32 1, %s8
  %s11 = scalar_select 0, %s10, %s8
  $region1: #{tpu_custom_call.1} parent=0
    #allocation2 [shape = 'u8[4096]{0}', space=vmem, size = 0x1000, scoped, tag = 'output window, operand 1']
    #allocation3 [shape = 's32[2]{0}', space=sflag, size = 0x8, scoped, tag = 'scoped memory for tpu_custom_call.1']
    #allocation4 [shape = 'u8[1024]{0}', space=vmem, size = 0x400, scoped, tag = 'output window, operand 2']
    #allocation5 [shape = 's32[2]{0}', space=sflag, size = 0x8, scoped, tag = 'scoped memory for tpu_custom_call.1']
    %12 = vsyncpa [#allocation3], 0
    %s13 = scalar_lea.sflag [#allocation3], 1
    %14 = vsyncpa %s13, 0
    %15 = vsyncpa [#allocation5], 0
    %s16 = scalar_lea.sflag [#allocation5], 1
    %17 = vsyncpa %s16, 0
    loop: start=0, step=1, limit=4
    $region2: #{tpu_custom_call.1} parent=1 // loop_pre_header
      _
    $region3: #{tpu_custom_call.1} parent=1 // loop_header
      %s19 = sphi 0, %s23
      %p20 = scmp.ge.s32.totalorder %s19, 4
      %s29 = sphi 0, %s31
      %s32 = sphi 0, %s29
      %s33 = sphi 0, %s32
      %s49 = sphi 0, %s33
      %s53 = sphi 0, %s53
      %s55 = sphi 0, %s53
      %s56 = sphi 0, %s55
      %s70 = sphi 0, %s56
      %s74 = sphi 0, %s74
      %s76 = sphi 0, %s74
      %s77 = sphi 0, %s76
      %s91 = sphi 0, %s77
      %s95 = sphi 0, %s95
      %s97 = sphi 0, %s95
      %s98 = sphi 0, %s97
      %s112 = sphi 0, %s98
      %s118 = sphi 0, %s120
      %s121 = sphi 0, %s118
      %s122 = sphi 0, %s121
      %s138 = sphi 0, %s122
      %s144 = sphi 0, %s146
      %s147 = sphi 0, %s144
      %s148 = sphi 0, %s147
      %s164 = sphi 0, %s148
      %s170 = sphi 0, %s172
      %s173 = sphi 0, %s170
      %s174 = sphi 0, %s173
      %s190 = sphi 0, %s174
    $region4: #{tpu_custom_call.1} parent=1 // loop_header_branch
      %22 = sbr.rel (%p20) target = $region8
    $region5: #{tpu_custom_call.1} parent=1 // loop_body
      %s24 = ssub.s32 %s19, 1
      %s25 = ssub.s32 %s19, 2
      %s26 = sadd.s32 %s19, 1
      %s27 = ssub.s32 %s19, %s26
      %p28 = scmp.eq.s32.totalorder %s27, 0
      %s30 = sadd.s32 %s29, 1
      %s31 = scalar_select %p28, %s29, %s30
      %p34 = pneg %p28
      %p35 = scmp.eq.s32.totalorder %s19, 1
      %p36 = por %p34, %p35
      %p37 = scmp.ne.s32.totalorder %s29, %s32
      %p38 = scmp.eq.s32.totalorder %s19, 0
      %p39 = por %p37, %p38
      %p40 = scmp.ne.s32.totalorder %s29, %s32
      %p41 = scmp.eq.s32.totalorder %s24, 1
      %p42 = por %p40, %p41
      %p43 = scmp.ne.s32.totalorder %s32, %s33
      %p44 = scmp.eq.s32.totalorder %s24, 0
      %p45 = por %p43, %p44
      %p46 = scmp.ne.s32.totalorder %s32, %s33
      %p47 = scmp.eq.s32.totalorder %s25, 1
      %p48 = por %p46, %p47
      %p50 = scmp.ne.s32.totalorder %s33, %s49
      %p51 = scmp.eq.s32.totalorder %s25, 0
      %p52 = por %p50, %p51
      %s54 = sadd.s32 %s53, 1
      %p57 = scmp.eq.s32.totalorder %s19, 1
      %p58 = scmp.ne.s32.totalorder %s53, %s55
      %p59 = scmp.eq.s32.totalorder %s19, 0
      %p60 = por %p58, %p59
      %p61 = scmp.ne.s32.totalorder %s53, %s55
      %p62 = scmp.eq.s32.totalorder %s24, 1
      %p63 = por %p61, %p62
      %p64 = scmp.ne.s32.totalorder %s55, %s56
      %p65 = scmp.eq.s32.totalorder %s24, 0
      %p66 = por %p64, %p65
      %p67 = scmp.ne.s32.totalorder %s55, %s56
      %p68 = scmp.eq.s32.totalorder %s25, 1
      %p69 = por %p67, %p68
      %p71 = scmp.ne.s32.totalorder %s56, %s70
      %p72 = scmp.eq.s32.totalorder %s25, 0
      %p73 = por %p71, %p72
      %s75 = sadd.s32 %s74, 1
      %p78 = scmp.eq.s32.totalorder %s19, 1
      %p79 = scmp.ne.s32.totalorder %s74, %s76
      %p80 = scmp.eq.s32.totalorder %s19, 0
      %p81 = por %p79, %p80
      %p82 = scmp.ne.s32.totalorder %s74, %s76
      %p83 = scmp.eq.s32.totalorder %s24, 1
      %p84 = por %p82, %p83
      %p85 = scmp.ne.s32.totalorder %s76, %s77
      %p86 = scmp.eq.s32.totalorder %s24, 0
      %p87 = por %p85, %p86
      %p88 = scmp.ne.s32.totalorder %s76, %s77
      %p89 = scmp.eq.s32.totalorder %s25, 1
      %p90 = por %p88, %p89
      %p92 = scmp.ne.s32.totalorder %s77, %s91
      %p93 = scmp.eq.s32.totalorder %s25, 0
      %p94 = por %p92, %p93
      %s96 = sadd.s32 %s95, 1
      %p99 = scmp.eq.s32.totalorder %s19, 1
      %p100 = scmp.ne.s32.totalorder %s95, %s97
      %p101 = scmp.eq.s32.totalorder %s19, 0
      %p102 = por %p100, %p101
      %p103 = scmp.ne.s32.totalorder %s95, %s97
      %p104 = scmp.eq.s32.totalorder %s24, 1
      %p105 = por %p103, %p104
      %p106 = scmp.ne.s32.totalorder %s97, %s98
      %p107 = scmp.eq.s32.totalorder %s24, 0
      %p108 = por %p106, %p107
      %p109 = scmp.ne.s32.totalorder %s97, %s98
      %p110 = scmp.eq.s32.totalorder %s25, 1
      %p111 = por %p109, %p110
      %p113 = scmp.ne.s32.totalorder %s98, %s112
      %p114 = scmp.eq.s32.totalorder %s25, 0
      %p115 = por %p113, %p114
      %s116 = ssub.s32 %s19, %s26
      %p117 = scmp.eq.s32.totalorder %s116, 0
      %s119 = sadd.s32 %s118, 1
      %s120 = scalar_select %p117, %s118, %s119
      %p123 = pneg %p117
      %p124 = scmp.eq.s32.totalorder %s19, 1
      %p125 = por %p123, %p124
      %p126 = scmp.ne.s32.totalorder %s118, %s121
      %p127 = scmp.eq.s32.totalorder %s19, 0
      %p128 = por %p126, %p127
      %p129 = scmp.ne.s32.totalorder %s118, %s121
      %p130 = scmp.eq.s32.totalorder %s24, 1
      %p131 = por %p129, %p130
      %p132 = scmp.ne.s32.totalorder %s121, %s122
      %p133 = scmp.eq.s32.totalorder %s24, 0
      %p134 = por %p132, %p133
      %p135 = scmp.ne.s32.totalorder %s121, %s122
      %p136 = scmp.eq.s32.totalorder %s25, 1
      %p137 = por %p135, %p136
      %p139 = scmp.ne.s32.totalorder %s122, %s138
      %p140 = scmp.eq.s32.totalorder %s25, 0
      %p141 = por %p139, %p140
      %s142 = ssub.s32 %s19, %s26
      %p143 = scmp.eq.s32.totalorder %s142, 0
      %s145 = sadd.s32 %s144, 1
      %s146 = scalar_select %p143, %s144, %s145
      %p149 = pneg %p143
      %p150 = scmp.eq.s32.totalorder %s19, 1
      %p151 = por %p149, %p150
      %p152 = scmp.ne.s32.totalorder %s144, %s147
      %p153 = scmp.eq.s32.totalorder %s19, 0
      %p154 = por %p152, %p153
      %p155 = scmp.ne.s32.totalorder %s144, %s147
      %p156 = scmp.eq.s32.totalorder %s24, 1
      %p157 = por %p155, %p156
      %p158 = scmp.ne.s32.totalorder %s147, %s148
      %p159 = scmp.eq.s32.totalorder %s24, 0
      %p160 = por %p158, %p159
      %p161 = scmp.ne.s32.totalorder %s147, %s148
      %p162 = scmp.eq.s32.totalorder %s25, 1
      %p163 = por %p161, %p162
      %p165 = scmp.ne.s32.totalorder %s148, %s164
      %p166 = scmp.eq.s32.totalorder %s25, 0
      %p167 = por %p165, %p166
      %s168 = ssub.s32 %s19, %s26
      %p169 = scmp.eq.s32.totalorder %s168, 0
      %s171 = sadd.s32 %s170, 1
      %s172 = scalar_select %p169, %s170, %s171
      %p175 = pneg %p169
      %p176 = scmp.eq.s32.totalorder %s19, 1
      %p177 = por %p175, %p176
      %p178 = scmp.ne.s32.totalorder %s170, %s173
      %p179 = scmp.eq.s32.totalorder %s19, 0
      %p180 = por %p178, %p179
      %p181 = scmp.ne.s32.totalorder %s170, %s173
      %p182 = scmp.eq.s32.totalorder %s24, 1
      %p183 = por %p181, %p182
      %p184 = scmp.ne.s32.totalorder %s173, %s174
      %p185 = scmp.eq.s32.totalorder %s24, 0
      %p186 = por %p184, %p185
      %p187 = scmp.ne.s32.totalorder %s173, %s174
      %p188 = scmp.eq.s32.totalorder %s25, 1
      %p189 = por %p187, %p188
      %p191 = scmp.ne.s32.totalorder %s174, %s190
      %p192 = scmp.eq.s32.totalorder %s25, 0
      %p193 = por %p191, %p192
      %p194 = scmp.le.s32.totalorder 1, %s19
      %p195 = scmp.lt.s32.totalorder %s19, 3
      %p196 = pnand %p194, %p195
      %p197 = pneg %p196
      // Predicated region
      $region9: #{tpu_custom_call.1} parent=5 // pred_check
        _
      $region10: #{tpu_custom_call.1} parent=5 // pred_check_branch
        %199 = sbr.rel (%p196) target = $region12
      $region11: #{tpu_custom_call.1} parent=5 // pred_region
        %s200 = ssub.s32 %s19, 1
        // Predicated region
        $region13: #{tpu_custom_call.1} parent=11 // pred_check
          %p201 = pneg %p66
        $region14: #{tpu_custom_call.1} parent=11 // pred_check_branch
          %203 = sbr.rel (%p201) target = $region16
        $region15: #{tpu_custom_call.1} parent=11 // pred_region
          _
        $region16: #{tpu_custom_call.1} parent=11 // pred_fallthru
          _
        // Predicated region
        $region17: #{tpu_custom_call.1} parent=11 // pred_check
          %p204 = pneg %p87
        $region18: #{tpu_custom_call.1} parent=11 // pred_check_branch
          %206 = sbr.rel (%p204) target = $region20
        $region19: #{tpu_custom_call.1} parent=11 // pred_region
          _
        $region20: #{tpu_custom_call.1} parent=11 // pred_fallthru
          _
        // Predicated region
        $region21: #{tpu_custom_call.1} parent=11 // pred_check
          %p207 = pneg %p108
        $region22: #{tpu_custom_call.1} parent=11 // pred_check_branch
          %209 = sbr.rel (%p207) target = $region24
        $region23: #{tpu_custom_call.1} parent=11 // pred_region
          _
        $region24: #{tpu_custom_call.1} parent=11 // pred_fallthru
          _
      $region12: #{tpu_custom_call.1} parent=5 // pred_fallthru
        _
      %p210 = scmp.lt.s32.totalorder %s19, 2
      // Predicated region
      $region25: #{tpu_custom_call.1} parent=5 // pred_check
        %p211 = pneg %p210
      $region26: #{tpu_custom_call.1} parent=5 // pred_check_branch
        %213 = sbr.rel (%p211) target = $region28
      $region27: #{tpu_custom_call.1} parent=5 // pred_region
        // Predicated region
        $region29: #{tpu_custom_call.1} parent=27 // pred_check
          %p214 = pneg %p39
        $region30: #{tpu_custom_call.1} parent=27 // pred_check_branch
          %216 = sbr.rel (%p214) target = $region32
        $region31: #{tpu_custom_call.1} parent=27 // pred_region
          %s217 = smul.u32 64, %s19
          %p218 = scmp.lt.s32.totalorder %s217, 127
          %s219 = scalar_select %p218, %s217, 127
          %s220 = smul.addr %s219, 8
          %s221 = scalar_lea.vmem %s0, %s220
          %s222 = smul.u32 64, %s19
        $region32: #{tpu_custom_call.1} parent=27 // pred_fallthru
          _
      $region28: #{tpu_custom_call.1} parent=5 // pred_fallthru
        _
      %p223 = scmp.le.s32.totalorder 1, %s19
      %p224 = scmp.lt.s32.totalorder %s19, 3
      %p225 = pnand %p223, %p224
      %p226 = pneg %p225
      // Predicated region
      $region33: #{tpu_custom_call.1} parent=5 // pred_check
        _
      $region34: #{tpu_custom_call.1} parent=5 // pred_check_branch
        %228 = sbr.rel (%p225) target = $region36
      $region35: #{tpu_custom_call.1} parent=5 // pred_region
        %s229 = ssub.s32 %s19, 1
        %s230 = smul.u32 64, %s24
        %p231 = scmp.lt.s32.totalorder %s230, 127
        %s232 = scalar_select %p231, %s230, 127
        %s233 = smul.addr %s232, 8
        %s234 = scalar_lea.vmem %s0, %s233
        %p235 = pneg %p45
        %p236 = pneg %p42
        %p237 = pneg %p66
        %p238 = pneg %p63
        %p239 = pneg %p87
        %p240 = pneg %p84
        %p241 = pneg %p108
        %p242 = pneg %p105
        %p243 = pneg %p134
        %p244 = pneg %p131
        %s245 = smul.u32 64, %s24
        %p246 = scmp.lt.s32.totalorder %s245, 127
        %s247 = scalar_select %p246, %s245, 127
        %s248 = smul.addr %s247, 8
        %s249 = scalar_lea.vmem %s4, %s248
        %p250 = pneg %p160
        %p251 = pneg %p157
        %s252 = sand.u32 %s147, 1
        %s253 = scalar_lea.sflag [#allocation3], %s252
        %s254 = sand.u32 %s147, 1
        %s255 = smul.addr %s254, 4
        %s256 = scalar_lea.vmem [#allocation2], %s255
        %p257 = pneg %p186
        %p258 = pneg %p183
        %s259 = sand.u32 %s173, 1
        %s260 = scalar_lea.sflag [#allocation5], %s259
        %s261 = sand.u32 %s173, 1
        %s262 = scalar_lea.vmem [#allocation4], %s261
        %s263 = smul.u32 64, %s24
        %p264 = scmp.lt.s32.totalorder %s263, 127
        %s265 = scalar_select %p264, %s263, 127
        %s266 = smul.addr %s265, 8
        %s267 = scalar_lea.vmem %s0, %s266
        %s268 = smul.u32 64, %s24
        %s269 = smul.u32 64, %s24
        %p270 = scmp.lt.s32.totalorder %s269, 127
        %s271 = scalar_select %p270, %s269, 127
        %s272 = smul.addr %s271, 8
        %s273 = scalar_lea.vmem %s4, %s272
        %s274 = smul.u32 64, %s24
        %v276 = vld [vmem:[%s267] sm:$0xff]
        %v277 = vld [vmem:[%s267 + $0x8] sm:$0xff]
        %v278 = vld [vmem:[%s267 + $0x10] sm:$0xff]
        %v279 = vld [vmem:[%s267 + $0x18] sm:$0xff]
        %v280 = vld [vmem:[%s267 + $0x20] sm:$0xff]
        %v281 = vld [vmem:[%s267 + $0x28] sm:$0xff]
        %v282 = vld [vmem:[%s267 + $0x30] sm:$0xff]
        %v283 = vld [vmem:[%s267 + $0x38] sm:$0xff]
        %v284 = vld [vmem:[%s267 + $0x40] sm:$0xff]
        %v285 = vld [vmem:[%s267 + $0x48] sm:$0xff]
        %v286 = vld [vmem:[%s267 + $0x50] sm:$0xff]
        %v287 = vld [vmem:[%s267 + $0x58] sm:$0xff]
        %v288 = vld [vmem:[%s267 + $0x60] sm:$0xff]
        %v289 = vld [vmem:[%s267 + $0x68] sm:$0xff]
        %v290 = vld [vmem:[%s267 + $0x70] sm:$0xff]
        %v291 = vld [vmem:[%s267 + $0x78] sm:$0xff]
        %v292 = vld [vmem:[%s267 + $0x80] sm:$0xff]
        %v293 = vld [vmem:[%s267 + $0x88] sm:$0xff]
        %v294 = vld [vmem:[%s267 + $0x90] sm:$0xff]
        %v295 = vld [vmem:[%s267 + $0x98] sm:$0xff]
        %v296 = vld [vmem:[%s267 + $0xa0] sm:$0xff]
        %v297 = vld [vmem:[%s267 + $0xa8] sm:$0xff]
        %v298 = vld [vmem:[%s267 + $0xb0] sm:$0xff]
        %v299 = vld [vmem:[%s267 + $0xb8] sm:$0xff]
        %v300 = vld [vmem:[%s267 + $0xc0] sm:$0xff]
        %v301 = vld [vmem:[%s267 + $0xc8] sm:$0xff]
        %v302 = vld [vmem:[%s267 + $0xd0] sm:$0xff]
        %v303 = vld [vmem:[%s267 + $0xd8] sm:$0xff]
        %v304 = vld [vmem:[%s267 + $0xe0] sm:$0xff]
        %v305 = vld [vmem:[%s267 + $0xe8] sm:$0xff]
        %v306 = vld [vmem:[%s267 + $0xf0] sm:$0xff]
        %v307 = vld [vmem:[%s267 + $0xf8] sm:$0xff]
        %v308 = vld [vmem:[%s267 + $0x100] sm:$0xff]
        %v309 = vld [vmem:[%s267 + $0x108] sm:$0xff]
        %v310 = vld [vmem:[%s267 + $0x110] sm:$0xff]
        %v311 = vld [vmem:[%s267 + $0x118] sm:$0xff]
        %v312 = vld [vmem:[%s267 + $0x120] sm:$0xff]
        %v313 = vld [vmem:[%s267 + $0x128] sm:$0xff]
        %v314 = vld [vmem:[%s267 + $0x130] sm:$0xff]
        %v315 = vld [vmem:[%s267 + $0x138] sm:$0xff]
        %v316 = vld [vmem:[%s267 + $0x140] sm:$0xff]
        %v317 = vld [vmem:[%s267 + $0x148] sm:$0xff]
        %v318 = vld [vmem:[%s267 + $0x150] sm:$0xff]
        %v319 = vld [vmem:[%s267 + $0x158] sm:$0xff]
        %v320 = vld [vmem:[%s267 + $0x160] sm:$0xff]
        %v321 = vld [vmem:[%s267 + $0x168] sm:$0xff]
        %v322 = vld [vmem:[%s267 + $0x170] sm:$0xff]
        %v323 = vld [vmem:[%s267 + $0x178] sm:$0xff]
        %v324 = vld [vmem:[%s267 + $0x180] sm:$0xff]
        %v325 = vld [vmem:[%s267 + $0x188] sm:$0xff]
        %v326 = vld [vmem:[%s267 + $0x190] sm:$0xff]
        %v327 = vld [vmem:[%s267 + $0x198] sm:$0xff]
        %v328 = vld [vmem:[%s267 + $0x1a0] sm:$0xff]
        %v329 = vld [vmem:[%s267 + $0x1a8] sm:$0xff]
        %v330 = vld [vmem:[%s267 + $0x1b0] sm:$0xff]
        %v331 = vld [vmem:[%s267 + $0x1b8] sm:$0xff]
        %v332 = vld [vmem:[%s267 + $0x1c0] sm:$0xff]
        %v333 = vld [vmem:[%s267 + $0x1c8] sm:$0xff]
        %v334 = vld [vmem:[%s267 + $0x1d0] sm:$0xff]
        %v335 = vld [vmem:[%s267 + $0x1d8] sm:$0xff]
        %v336 = vld [vmem:[%s267 + $0x1e0] sm:$0xff]
        %v337 = vld [vmem:[%s267 + $0x1e8] sm:$0xff]
        %v338 = vld [vmem:[%s267 + $0x1f0] sm:$0xff]
        %v339 = vld [vmem:[%s267 + $0x1f8] sm:$0xff]
        %v340 = vpack.c.bf16 %v277, %v276
        %v341 = vpack.c.bf16 %v279, %v278
        %v342 = vpack.c.bf16 %v281, %v280
        %v343 = vpack.c.bf16 %v283, %v282
        %v344 = vpack.c.bf16 %v285, %v284
        %v345 = vpack.c.bf16 %v287, %v286
        %v346 = vpack.c.bf16 %v289, %v288
        %v347 = vpack.c.bf16 %v291, %v290
        %v348 = vpack.c.bf16 %v293, %v292
        %v349 = vpack.c.bf16 %v295, %v294
        %v350 = vpack.c.bf16 %v297, %v296
        %v351 = vpack.c.bf16 %v299, %v298
        %v352 = vpack.c.bf16 %v301, %v300
        %v353 = vpack.c.bf16 %v303, %v302
        %v354 = vpack.c.bf16 %v305, %v304
        %v355 = vpack.c.bf16 %v307, %v306
        %v356 = vpack.c.bf16 %v309, %v308
        %v357 = vpack.c.bf16 %v311, %v310
        %v358 = vpack.c.bf16 %v313, %v312
        %v359 = vpack.c.bf16 %v315, %v314
        %v360 = vpack.c.bf16 %v317, %v316
        %v361 = vpack.c.bf16 %v319, %v318
        %v362 = vpack.c.bf16 %v321, %v320
        %v363 = vpack.c.bf16 %v323, %v322
        %v364 = vpack.c.bf16 %v325, %v324
        %v365 = vpack.c.bf16 %v327, %v326
        %v366 = vpack.c.bf16 %v329, %v328
        %v367 = vpack.c.bf16 %v331, %v330
        %v368 = vpack.c.bf16 %v333, %v332
        %v369 = vpack.c.bf16 %v335, %v334
        %v370 = vpack.c.bf16 %v337, %v336
        %v371 = vpack.c.bf16 %v339, %v338
        %v372 = vld [vmem:[%s1] sm:$0xf]
        %v373 = vld [vmem:[%s1 + $0x4] sm:$0xf]
        %v374 = vld [vmem:[%s1 + $0x8] sm:$0xf]
        %v375 = vld [vmem:[%s1 + $0xc] sm:$0xf]
        %v380 = vunpack.c.l.b16 %v372
        %v381 = vunpack.c.l.b16 %v373
        %v382 = vunpack.c.l.b16 %v374
        %v383 = vunpack.c.l.b16 %v375
        %v384 = vpack.c.b16 %v381, %v380
        %v385 = vpack.c.b16 %v383, %v382
        %vm388 = vcmask 261120
        %v390 = vsel %vm388, %v340, 0
        %v393 = vsel %vm388, %v341, 0
        %v396 = vsel %vm388, %v342, 0
        %v399 = vsel %vm388, %v343, 0
        %v402 = vsel %vm388, %v344, 0
        %v405 = vsel %vm388, %v345, 0
        %v408 = vsel %vm388, %v346, 0
        %v411 = vsel %vm388, %v347, 0
        %v414 = vsel %vm388, %v348, 0
        %v417 = vsel %vm388, %v349, 0
        %v420 = vsel %vm388, %v350, 0
        %v423 = vsel %vm388, %v351, 0
        %v426 = vsel %vm388, %v352, 0
        %v429 = vsel %vm388, %v353, 0
        %v432 = vsel %vm388, %v354, 0
        %v435 = vsel %vm388, %v355, 0
        %v438 = vsel %vm388, %v356, 0
        %v441 = vsel %vm388, %v357, 0
        %v444 = vsel %vm388, %v358, 0
        %v447 = vsel %vm388, %v359, 0
        %v450 = vsel %vm388, %v360, 0
        %v453 = vsel %vm388, %v361, 0
        %v456 = vsel %vm388, %v362, 0
        %v459 = vsel %vm388, %v363, 0
        %v462 = vsel %vm388, %v364, 0
        %v465 = vsel %vm388, %v365, 0
        %v468 = vsel %vm388, %v366, 0
        %v471 = vsel %vm388, %v367, 0
        %v474 = vsel %vm388, %v368, 0
        %v477 = vsel %vm388, %v369, 0
        %v480 = vsel %vm388, %v370, 0
        %v483 = vsel %vm388, %v371, 0
        %485 = vmatprep.subr.bf16.mxu0 0
        %486 = vmatpush1.bf16.msra.mxu0 0
        %487 = vmatprep.subr.bf16.mxu0 0
        %488 = vmatpush1.bf16.msra.mxu0 0
        %489 = vmatprep.subr.bf16.mxu0 0
        %490 = vmatpush1.bf16.msra.mxu0 0
        %491 = vmatprep.subr.bf16.mxu0 0
        %492 = vmatpush1.bf16.msra.mxu0 0
        %493 = vmatprep.subr.bf16.mxu0 0
        %494 = vmatpush1.bf16.msra.mxu0 0
        %495 = vmatprep.subr.bf16.mxu0 0
        %496 = vmatpush1.bf16.msra.mxu0 0
        %497 = vmatprep.subr.bf16.mxu0 0
        %498 = vmatpush1.bf16.msra.mxu0 %v385
        %499 = vmatprep.subr.bf16.mxu0 0
        %500 = vmatpush1.bf16.msra.mxu0 %v384
        %501 = vmatprep.subr.bf16.mxu0 0
        %502 = vmatpush2.bf16.msra.mxu0 0
        %503 = vmatprep.subr.bf16.mxu0 0
        %504 = vmatpush2.bf16.msra.mxu0 0
        %505 = vmatprep.subr.bf16.mxu0 0
        %506 = vmatpush2.bf16.msra.mxu0 0
        %507 = vmatprep.subr.bf16.mxu0 0
        %508 = vmatpush2.bf16.msra.mxu0 0
        %509 = vmatprep.subr.bf16.mxu0 0
        %510 = vmatpush2.bf16.msra.mxu0 0
        %511 = vmatprep.subr.bf16.mxu0 0
        %512 = vmatpush2.bf16.msra.mxu0 0
        %513 = vmatprep.subr.bf16.mxu0 0
        %514 = vmatpush2.bf16.msra.mxu0 0
        %515 = vmatprep.subr.bf16.mxu0 0
        %516 = vmatpush2.bf16.msra.mxu0 0
        %517 = vmatprep.mubr.bf16.mxu0 0
        %518 = vmatmul.mubr.bf16.gmra.mxu0 %v390
        %v519 = vpop.f32.mrf.mxu0
        %v520 = vadd.f32 0.0, %v519
        %v521 = vpop.f32.mrf.mxu0
        %v522 = vpop.f32.mrf.mxu0
        %v523 = vadd.f32 0.0, %v522
        %v524 = vpop.f32.mrf.mxu0
        %525 = vmatprep.mubr.bf16.mxu0 0
        %526 = vmatmul.mubr.bf16.gmra.mxu0 %v393
        %v527 = vpop.f32.mrf.mxu0
        %v528 = vadd.f32 0.0, %v527
        %v529 = vpop.f32.mrf.mxu0
        %v530 = vpop.f32.mrf.mxu0
        %v531 = vadd.f32 0.0, %v530
        %v532 = vpop.f32.mrf.mxu0
        %533 = vmatprep.mubr.bf16.mxu0 0
        %534 = vmatmul.mubr.bf16.gmra.mxu0 %v396
        %v535 = vpop.f32.mrf.mxu0
        %v536 = vadd.f32 0.0, %v535
        %v537 = vpop.f32.mrf.mxu0
        %v538 = vpop.f32.mrf.mxu0
        %v539 = vadd.f32 0.0, %v538
        %v540 = vpop.f32.mrf.mxu0
        %541 = vmatprep.mubr.bf16.mxu0 0
        %542 = vmatmul.mubr.bf16.gmra.mxu0 %v399
        %v543 = vpop.f32.mrf.mxu0
        %v544 = vadd.f32 0.0, %v543
        %v545 = vpop.f32.mrf.mxu0
        %v546 = vpop.f32.mrf.mxu0
        %v547 = vadd.f32 0.0, %v546
        %v548 = vpop.f32.mrf.mxu0
        %549 = vmatprep.mubr.bf16.mxu0 0
        %550 = vmatmul.mubr.bf16.gmra.mxu0 %v402
        %v551 = vpop.f32.mrf.mxu0
        %v552 = vadd.f32 0.0, %v551
        %v553 = vpop.f32.mrf.mxu0
        %v554 = vpop.f32.mrf.mxu0
        %v555 = vadd.f32 0.0, %v554
        %v556 = vpop.f32.mrf.mxu0
        %557 = vmatprep.mubr.bf16.mxu0 0
        %558 = vmatmul.mubr.bf16.gmra.mxu0 %v405
        %v559 = vpop.f32.mrf.mxu0
        %v560 = vadd.f32 0.0, %v559
        %v561 = vpop.f32.mrf.mxu0
        %v562 = vpop.f32.mrf.mxu0
        %v563 = vadd.f32 0.0, %v562
        %v564 = vpop.f32.mrf.mxu0
        %565 = vmatprep.mubr.bf16.mxu0 0
        %566 = vmatmul.mubr.bf16.gmra.mxu0 %v408
        %v567 = vpop.f32.mrf.mxu0
        %v568 = vadd.f32 0.0, %v567
        %v569 = vpop.f32.mrf.mxu0
        %v570 = vpop.f32.mrf.mxu0
        %v571 = vadd.f32 0.0, %v570
        %v572 = vpop.f32.mrf.mxu0
        %573 = vmatprep.mubr.bf16.mxu0 0
        %574 = vmatmul.mubr.bf16.gmra.mxu0 %v411
        %v575 = vpop.f32.mrf.mxu0
        %v576 = vadd.f32 0.0, %v575
        %v577 = vpop.f32.mrf.mxu0
        %v578 = vpop.f32.mrf.mxu0
        %v579 = vadd.f32 0.0, %v578
        %v580 = vpop.f32.mrf.mxu0
        %581 = vmatprep.mubr.bf16.mxu0 0
        %582 = vmatmul.mubr.bf16.gmra.mxu0 %v414
        %v583 = vpop.f32.mrf.mxu0
        %v584 = vadd.f32 0.0, %v583
        %v585 = vpop.f32.mrf.mxu0
        %v586 = vpop.f32.mrf.mxu0
        %v587 = vadd.f32 0.0, %v586
        %v588 = vpop.f32.mrf.mxu0
        %589 = vmatprep.mubr.bf16.mxu0 0
        %590 = vmatmul.mubr.bf16.gmra.mxu0 %v417
        %v591 = vpop.f32.mrf.mxu0
        %v592 = vadd.f32 0.0, %v591
        %v593 = vpop.f32.mrf.mxu0
        %v594 = vpop.f32.mrf.mxu0
        %v595 = vadd.f32 0.0, %v594
        %v596 = vpop.f32.mrf.mxu0
        %597 = vmatprep.mubr.bf16.mxu0 0
        %598 = vmatmul.mubr.bf16.gmra.mxu0 %v420
        %v599 = vpop.f32.mrf.mxu0
        %v600 = vadd.f32 0.0, %v599
        %v601 = vpop.f32.mrf.mxu0
        %v602 = vpop.f32.mrf.mxu0
        %v603 = vadd.f32 0.0, %v602
        %v604 = vpop.f32.mrf.mxu0
        %605 = vmatprep.mubr.bf16.mxu0 0
        %606 = vmatmul.mubr.bf16.gmra.mxu0 %v423
        %v607 = vpop.f32.mrf.mxu0
        %v608 = vadd.f32 0.0, %v607
        %v609 = vpop.f32.mrf.mxu0
        %v610 = vpop.f32.mrf.mxu0
        %v611 = vadd.f32 0.0, %v610
        %v612 = vpop.f32.mrf.mxu0
        %613 = vmatprep.mubr.bf16.mxu0 0
        %614 = vmatmul.mubr.bf16.gmra.mxu0 %v426
        %v615 = vpop.f32.mrf.mxu0
        %v616 = vadd.f32 0.0, %v615
        %v617 = vpop.f32.mrf.mxu0
        %v618 = vpop.f32.mrf.mxu0
        %v619 = vadd.f32 0.0, %v618
        %v620 = vpop.f32.mrf.mxu0
        %621 = vmatprep.mubr.bf16.mxu0 0
        %622 = vmatmul.mubr.bf16.gmra.mxu0 %v429
        %v623 = vpop.f32.mrf.mxu0
        %v624 = vadd.f32 0.0, %v623
        %v625 = vpop.f32.mrf.mxu0
        %v626 = vpop.f32.mrf.mxu0
        %v627 = vadd.f32 0.0, %v626
        %v628 = vpop.f32.mrf.mxu0
        %629 = vmatprep.mubr.bf16.mxu0 0
        %630 = vmatmul.mubr.bf16.gmra.mxu0 %v432
        %v631 = vpop.f32.mrf.mxu0
        %v632 = vadd.f32 0.0, %v631
        %v633 = vpop.f32.mrf.mxu0
        %v634 = vpop.f32.mrf.mxu0
        %v635 = vadd.f32 0.0, %v634
        %v636 = vpop.f32.mrf.mxu0
        %637 = vmatprep.mubr.bf16.mxu0 0
        %638 = vmatmul.mubr.bf16.gmra.mxu0 %v435
        %v639 = vpop.f32.mrf.mxu0
        %v640 = vadd.f32 0.0, %v639
        %v641 = vpop.f32.mrf.mxu0
        %v642 = vpop.f32.mrf.mxu0
        %v643 = vadd.f32 0.0, %v642
        %v644 = vpop.f32.mrf.mxu0
        %645 = vmatprep.mubr.bf16.mxu0 0
        %646 = vmatmul.mubr.bf16.gmra.mxu0 %v438
        %v647 = vpop.f32.mrf.mxu0
        %v648 = vadd.f32 0.0, %v647
        %v649 = vpop.f32.mrf.mxu0
        %v650 = vpop.f32.mrf.mxu0
        %v651 = vadd.f32 0.0, %v650
        %v652 = vpop.f32.mrf.mxu0
        %653 = vmatprep.mubr.bf16.mxu0 0
        %654 = vmatmul.mubr.bf16.gmra.mxu0 %v441
        %v655 = vpop.f32.mrf.mxu0
        %v656 = vadd.f32 0.0, %v655
        %v657 = vpop.f32.mrf.mxu0
        %v658 = vpop.f32.mrf.mxu0
        %v659 = vadd.f32 0.0, %v658
        %v660 = vpop.f32.mrf.mxu0
        %661 = vmatprep.mubr.bf16.mxu0 0
        %662 = vmatmul.mubr.bf16.gmra.mxu0 %v444
        %v663 = vpop.f32.mrf.mxu0
        %v664 = vadd.f32 0.0, %v663
        %v665 = vpop.f32.mrf.mxu0
        %v666 = vpop.f32.mrf.mxu0
        %v667 = vadd.f32 0.0, %v666
        %v668 = vpop.f32.mrf.mxu0
        %669 = vmatprep.mubr.bf16.mxu0 0
        %670 = vmatmul.mubr.bf16.gmra.mxu0 %v447
        %v671 = vpop.f32.mrf.mxu0
        %v672 = vadd.f32 0.0, %v671
        %v673 = vpop.f32.mrf.mxu0
        %v674 = vpop.f32.mrf.mxu0
        %v675 = vadd.f32 0.0, %v674
        %v676 = vpop.f32.mrf.mxu0
        %677 = vmatprep.mubr.bf16.mxu0 0
        %678 = vmatmul.mubr.bf16.gmra.mxu0 %v450
        %v679 = vpop.f32.mrf.mxu0
        %v680 = vadd.f32 0.0, %v679
        %v681 = vpop.f32.mrf.mxu0
        %v682 = vpop.f32.mrf.mxu0
        %v683 = vadd.f32 0.0, %v682
        %v684 = vpop.f32.mrf.mxu0
        %685 = vmatprep.mubr.bf16.mxu0 0
        %686 = vmatmul.mubr.bf16.gmra.mxu0 %v453
        %v687 = vpop.f32.mrf.mxu0
        %v688 = vadd.f32 0.0, %v687
        %v689 = vpop.f32.mrf.mxu0
        %v690 = vpop.f32.mrf.mxu0
        %v691 = vadd.f32 0.0, %v690
        %v692 = vpop.f32.mrf.mxu0
        %693 = vmatprep.mubr.bf16.mxu0 0
        %694 = vmatmul.mubr.bf16.gmra.mxu0 %v456
        %v695 = vpop.f32.mrf.mxu0
        %v696 = vadd.f32 0.0, %v695
        %v697 = vpop.f32.mrf.mxu0
        %v698 = vpop.f32.mrf.mxu0
        %v699 = vadd.f32 0.0, %v698
        %v700 = vpop.f32.mrf.mxu0
        %701 = vmatprep.mubr.bf16.mxu0 0
        %702 = vmatmul.mubr.bf16.gmra.mxu0 %v459
        %v703 = vpop.f32.mrf.mxu0
        %v704 = vadd.f32 0.0, %v703
        %v705 = vpop.f32.mrf.mxu0
        %v706 = vpop.f32.mrf.mxu0
        %v707 = vadd.f32 0.0, %v706
        %v708 = vpop.f32.mrf.mxu0
        %709 = vmatprep.mubr.bf16.mxu0 0
        %710 = vmatmul.mubr.bf16.gmra.mxu0 %v462
        %v711 = vpop.f32.mrf.mxu0
        %v712 = vadd.f32 0.0, %v711
        %v713 = vpop.f32.mrf.mxu0
        %v714 = vpop.f32.mrf.mxu0
        %v715 = vadd.f32 0.0, %v714
        %v716 = vpop.f32.mrf.mxu0
        %717 = vmatprep.mubr.bf16.mxu0 0
        %718 = vmatmul.mubr.bf16.gmra.mxu0 %v465
        %v719 = vpop.f32.mrf.mxu0
        %v720 = vadd.f32 0.0, %v719
        %v721 = vpop.f32.mrf.mxu0
        %v722 = vpop.f32.mrf.mxu0
        %v723 = vadd.f32 0.0, %v722
        %v724 = vpop.f32.mrf.mxu0
        %725 = vmatprep.mubr.bf16.mxu0 0
        %726 = vmatmul.mubr.bf16.gmra.mxu0 %v468
        %v727 = vpop.f32.mrf.mxu0
        %v728 = vadd.f32 0.0, %v727
        %v729 = vpop.f32.mrf.mxu0
        %v730 = vpop.f32.mrf.mxu0
        %v731 = vadd.f32 0.0, %v730
        %v732 = vpop.f32.mrf.mxu0
        %733 = vmatprep.mubr.bf16.mxu0 0
        %734 = vmatmul.mubr.bf16.gmra.mxu0 %v471
        %v735 = vpop.f32.mrf.mxu0
        %v736 = vadd.f32 0.0, %v735
        %v737 = vpop.f32.mrf.mxu0
        %v738 = vpop.f32.mrf.mxu0
        %v739 = vadd.f32 0.0, %v738
        %v740 = vpop.f32.mrf.mxu0
        %741 = vmatprep.mubr.bf16.mxu0 0
        %742 = vmatmul.mubr.bf16.gmra.mxu0 %v474
        %v743 = vpop.f32.mrf.mxu0
        %v744 = vadd.f32 0.0, %v743
        %v745 = vpop.f32.mrf.mxu0
        %v746 = vpop.f32.mrf.mxu0
        %v747 = vadd.f32 0.0, %v746
        %v748 = vpop.f32.mrf.mxu0
        %749 = vmatprep.mubr.bf16.mxu0 0
        %750 = vmatmul.mubr.bf16.gmra.mxu0 %v477
        %v751 = vpop.f32.mrf.mxu0
        %v752 = vadd.f32 0.0, %v751
        %v753 = vpop.f32.mrf.mxu0
        %v754 = vpop.f32.mrf.mxu0
        %v755 = vadd.f32 0.0, %v754
        %v756 = vpop.f32.mrf.mxu0
        %757 = vmatprep.mubr.bf16.mxu0 0
        %758 = vmatmul.mubr.bf16.gmra.mxu0 %v480
        %v759 = vpop.f32.mrf.mxu0
        %v760 = vadd.f32 0.0, %v759
        %v761 = vpop.f32.mrf.mxu0
        %v762 = vpop.f32.mrf.mxu0
        %v763 = vadd.f32 0.0, %v762
        %v764 = vpop.f32.mrf.mxu0
        %765 = vmatprep.mubr.bf16.mxu0 0
        %766 = vmatmul.mubr.bf16.gmra.mxu0 %v483
        %v767 = vpop.f32.mrf.mxu0
        %v768 = vadd.f32 0.0, %v767
        %v769 = vpop.f32.mrf.mxu0
        %v770 = vpop.f32.mrf.mxu0
        %v771 = vadd.f32 0.0, %v770
        %v772 = vpop.f32.mrf.mxu0
        %773 = vdwg.mxu0
        %v774 = vld [vmem:[%s3] sm:$0x1]
        %v776 = vlaneseq
        %v777 = vshrl.u32 %v776, 7
        %v778 = vsub.s32 0, %v777
        %v779 = vrot.slane %v774, %v778
        %v781 = vsub.f32 %v779, %v520
        %v782 = vsub.f32 %v779, %v523
        %v783 = vsub.f32 %v779, %v528
        %v784 = vsub.f32 %v779, %v531
        %v785 = vsub.f32 %v779, %v536
        %v786 = vsub.f32 %v779, %v539
        %v787 = vsub.f32 %v779, %v544
        %v788 = vsub.f32 %v779, %v547
        %v789 = vsub.f32 %v779, %v552
        %v790 = vsub.f32 %v779, %v555
        %v791 = vsub.f32 %v779, %v560
        %v792 = vsub.f32 %v779, %v563
        %v793 = vsub.f32 %v779, %v568
        %v794 = vsub.f32 %v779, %v571
        %v795 = vsub.f32 %v779, %v576
        %v796 = vsub.f32 %v779, %v579
        %v797 = vsub.f32 %v779, %v584
        %v798 = vsub.f32 %v779, %v587
        %v799 = vsub.f32 %v779, %v592
        %v800 = vsub.f32 %v779, %v595
        %v801 = vsub.f32 %v779, %v600
        %v802 = vsub.f32 %v779, %v603
        %v803 = vsub.f32 %v779, %v608
        %v804 = vsub.f32 %v779, %v611
        %v805 = vsub.f32 %v779, %v616
        %v806 = vsub.f32 %v779, %v619
        %v807 = vsub.f32 %v779, %v624
        %v808 = vsub.f32 %v779, %v627
        %v809 = vsub.f32 %v779, %v632
        %v810 = vsub.f32 %v779, %v635
        %v811 = vsub.f32 %v779, %v640
        %v812 = vsub.f32 %v779, %v643
        %v813 = vsub.f32 %v779, %v648
        %v814 = vsub.f32 %v779, %v651
        %v815 = vsub.f32 %v779, %v656
        %v816 = vsub.f32 %v779, %v659
        %v817 = vsub.f32 %v779, %v664
        %v818 = vsub.f32 %v779, %v667
        %v819 = vsub.f32 %v779, %v672
        %v820 = vsub.f32 %v779, %v675
        %v821 = vsub.f32 %v779, %v680
        %v822 = vsub.f32 %v779, %v683
        %v823 = vsub.f32 %v779, %v688
        %v824 = vsub.f32 %v779, %v691
        %v825 = vsub.f32 %v779, %v696
        %v826 = vsub.f32 %v779, %v699
        %v827 = vsub.f32 %v779, %v704
        %v828 = vsub.f32 %v779, %v707
        %v829 = vsub.f32 %v779, %v712
        %v830 = vsub.f32 %v779, %v715
        %v831 = vsub.f32 %v779, %v720
        %v832 = vsub.f32 %v779, %v723
        %v833 = vsub.f32 %v779, %v728
        %v834 = vsub.f32 %v779, %v731
        %v835 = vsub.f32 %v779, %v736
        %v836 = vsub.f32 %v779, %v739
        %v837 = vsub.f32 %v779, %v744
        %v838 = vsub.f32 %v779, %v747
        %v839 = vsub.f32 %v779, %v752
        %v840 = vsub.f32 %v779, %v755
        %v841 = vsub.f32 %v779, %v760
        %v842 = vsub.f32 %v779, %v763
        %v843 = vsub.f32 %v779, %v768
        %v844 = vsub.f32 %v779, %v771
        %845 = vmin.index.xlane.f32.xlu0 %v781
        %v846 = vpop.xlane.xlu0 %845
        %847 = vmin.index.xlane.f32.xlu0 %v782
        %v848 = vpop.xlane.xlu0 %847
        %849 = vmin.index.xlane.f32.xlu0 %v783
        %v850 = vpop.xlane.xlu0 %849
        %851 = vmin.index.xlane.f32.xlu0 %v784
        %v852 = vpop.xlane.xlu0 %851
        %853 = vmin.index.xlane.f32.xlu0 %v785
        %v854 = vpop.xlane.xlu0 %853
        %855 = vmin.index.xlane.f32.xlu0 %v786
        %v856 = vpop.xlane.xlu0 %855
        %857 = vmin.index.xlane.f32.xlu0 %v787
        %v858 = vpop.xlane.xlu0 %857
        %859 = vmin.index.xlane.f32.xlu0 %v788
        %v860 = vpop.xlane.xlu0 %859
        %861 = vmin.index.xlane.f32.xlu0 %v789
        %v862 = vpop.xlane.xlu0 %861
        %863 = vmin.index.xlane.f32.xlu0 %v790
        %v864 = vpop.xlane.xlu0 %863
        %865 = vmin.index.xlane.f32.xlu0 %v791
        %v866 = vpop.xlane.xlu0 %865
        %867 = vmin.index.xlane.f32.xlu0 %v792
        %v868 = vpop.xlane.xlu0 %867
        %869 = vmin.index.xlane.f32.xlu0 %v793
        %v870 = vpop.xlane.xlu0 %869
        %871 = vmin.index.xlane.f32.xlu0 %v794
        %v872 = vpop.xlane.xlu0 %871
        %873 = vmin.index.xlane.f32.xlu0 %v795
        %v874 = vpop.xlane.xlu0 %873
        %875 = vmin.index.xlane.f32.xlu0 %v796
        %v876 = vpop.xlane.xlu0 %875
        %877 = vmin.index.xlane.f32.xlu0 %v797
        %v878 = vpop.xlane.xlu0 %877
        %879 = vmin.index.xlane.f32.xlu0 %v798
        %v880 = vpop.xlane.xlu0 %879
        %881 = vmin.index.xlane.f32.xlu0 %v799
        %v882 = vpop.xlane.xlu0 %881
        %883 = vmin.index.xlane.f32.xlu0 %v800
        %v884 = vpop.xlane.xlu0 %883
        %885 = vmin.index.xlane.f32.xlu0 %v801
        %v886 = vpop.xlane.xlu0 %885
        %887 = vmin.index.xlane.f32.xlu0 %v802
        %v888 = vpop.xlane.xlu0 %887
        %889 = vmin.index.xlane.f32.xlu0 %v803
        %v890 = vpop.xlane.xlu0 %889
        %891 = vmin.index.xlane.f32.xlu0 %v804
        %v892 = vpop.xlane.xlu0 %891
        %893 = vmin.index.xlane.f32.xlu0 %v805
        %v894 = vpop.xlane.xlu0 %893
        %895 = vmin.index.xlane.f32.xlu0 %v806
        %v896 = vpop.xlane.xlu0 %895
        %897 = vmin.index.xlane.f32.xlu0 %v807
        %v898 = vpop.xlane.xlu0 %897
        %899 = vmin.index.xlane.f32.xlu0 %v808
        %v900 = vpop.xlane.xlu0 %899
        %901 = vmin.index.xlane.f32.xlu0 %v809
        %v902 = vpop.xlane.xlu0 %901
        %903 = vmin.index.xlane.f32.xlu0 %v810
        %v904 = vpop.xlane.xlu0 %903
        %905 = vmin.index.xlane.f32.xlu0 %v811
        %v906 = vpop.xlane.xlu0 %905
        %907 = vmin.index.xlane.f32.xlu0 %v812
        %v908 = vpop.xlane.xlu0 %907
        %909 = vmin.index.xlane.f32.xlu0 %v813
        %v910 = vpop.xlane.xlu0 %909
        %911 = vmin.index.xlane.f32.xlu0 %v814
        %v912 = vpop.xlane.xlu0 %911
        %913 = vmin.index.xlane.f32.xlu0 %v815
        %v914 = vpop.xlane.xlu0 %913
        %915 = vmin.index.xlane.f32.xlu0 %v816
        %v916 = vpop.xlane.xlu0 %915
        %917 = vmin.index.xlane.f32.xlu0 %v817
        %v918 = vpop.xlane.xlu0 %917
        %919 = vmin.index.xlane.f32.xlu0 %v818
        %v920 = vpop.xlane.xlu0 %919
        %921 = vmin.index.xlane.f32.xlu0 %v819
        %v922 = vpop.xlane.xlu0 %921
        %923 = vmin.index.xlane.f32.xlu0 %v820
        %v924 = vpop.xlane.xlu0 %923
        %925 = vmin.index.xlane.f32.xlu0 %v821
        %v926 = vpop.xlane.xlu0 %925
        %927 = vmin.index.xlane.f32.xlu0 %v822
        %v928 = vpop.xlane.xlu0 %927
        %929 = vmin.index.xlane.f32.xlu0 %v823
        %v930 = vpop.xlane.xlu0 %929
        %931 = vmin.index.xlane.f32.xlu0 %v824
        %v932 = vpop.xlane.xlu0 %931
        %933 = vmin.index.xlane.f32.xlu0 %v825
        %v934 = vpop.xlane.xlu0 %933
        %935 = vmin.index.xlane.f32.xlu0 %v826
        %v936 = vpop.xlane.xlu0 %935
        %937 = vmin.index.xlane.f32.xlu0 %v827
        %v938 = vpop.xlane.xlu0 %937
        %939 = vmin.index.xlane.f32.xlu0 %v828
        %v940 = vpop.xlane.xlu0 %939
        %941 = vmin.index.xlane.f32.xlu0 %v829
        %v942 = vpop.xlane.xlu0 %941
        %943 = vmin.index.xlane.f32.xlu0 %v830
        %v944 = vpop.xlane.xlu0 %943
        %945 = vmin.index.xlane.f32.xlu0 %v831
        %v946 = vpop.xlane.xlu0 %945
        %947 = vmin.index.xlane.f32.xlu0 %v832
        %v948 = vpop.xlane.xlu0 %947
        %949 = vmin.index.xlane.f32.xlu0 %v833
        %v950 = vpop.xlane.xlu0 %949
        %951 = vmin.index.xlane.f32.xlu0 %v834
        %v952 = vpop.xlane.xlu0 %951
        %953 = vmin.index.xlane.f32.xlu0 %v835
        %v954 = vpop.xlane.xlu0 %953
        %955 = vmin.index.xlane.f32.xlu0 %v836
        %v956 = vpop.xlane.xlu0 %955
        %957 = vmin.index.xlane.f32.xlu0 %v837
        %v958 = vpop.xlane.xlu0 %957
        %959 = vmin.index.xlane.f32.xlu0 %v838
        %v960 = vpop.xlane.xlu0 %959
        %961 = vmin.index.xlane.f32.xlu0 %v839
        %v962 = vpop.xlane.xlu0 %961
        %963 = vmin.index.xlane.f32.xlu0 %v840
        %v964 = vpop.xlane.xlu0 %963
        %965 = vmin.index.xlane.f32.xlu0 %v841
        %v966 = vpop.xlane.xlu0 %965
        %967 = vmin.index.xlane.f32.xlu0 %v842
        %v968 = vpop.xlane.xlu0 %967
        %969 = vmin.index.xlane.f32.xlu0 %v843
        %v970 = vpop.xlane.xlu0 %969
        %971 = vmin.index.xlane.f32.xlu0 %v844
        %v972 = vpop.xlane.xlu0 %971
        %v973 = vlaneseq
        %v974 = vand.u32 %v973, 127
        %vm975 = vcmp.eq.s32.totalorder %v974, %v846
        %vm976 = vcmp.eq.s32.totalorder %v974, %v848
        %vm977 = vcmp.eq.s32.totalorder %v974, %v850
        %vm978 = vcmp.eq.s32.totalorder %v974, %v852
        %vm979 = vcmp.eq.s32.totalorder %v974, %v854
        %vm980 = vcmp.eq.s32.totalorder %v974, %v856
        %vm981 = vcmp.eq.s32.totalorder %v974, %v858
        %vm982 = vcmp.eq.s32.totalorder %v974, %v860
        %vm983 = vcmp.eq.s32.totalorder %v974, %v862
        %vm984 = vcmp.eq.s32.totalorder %v974, %v864
        %vm985 = vcmp.eq.s32.totalorder %v974, %v866
        %vm986 = vcmp.eq.s32.totalorder %v974, %v868
        %vm987 = vcmp.eq.s32.totalorder %v974, %v870
        %vm988 = vcmp.eq.s32.totalorder %v974, %v872
        %vm989 = vcmp.eq.s32.totalorder %v974, %v874
        %vm990 = vcmp.eq.s32.totalorder %v974, %v876
        %vm991 = vcmp.eq.s32.totalorder %v974, %v878
        %vm992 = vcmp.eq.s32.totalorder %v974, %v880
        %vm993 = vcmp.eq.s32.totalorder %v974, %v882
        %vm994 = vcmp.eq.s32.totalorder %v974, %v884
        %vm995 = vcmp.eq.s32.totalorder %v974, %v886
        %vm996 = vcmp.eq.s32.totalorder %v974, %v888
        %vm997 = vcmp.eq.s32.totalorder %v974, %v890
        %vm998 = vcmp.eq.s32.totalorder %v974, %v892
        %vm999 = vcmp.eq.s32.totalorder %v974, %v894
        %vm1000 = vcmp.eq.s32.totalorder %v974, %v896
        %vm1001 = vcmp.eq.s32.totalorder %v974, %v898
        %vm1002 = vcmp.eq.s32.totalorder %v974, %v900
        %vm1003 = vcmp.eq.s32.totalorder %v974, %v902
        %vm1004 = vcmp.eq.s32.totalorder %v974, %v904
        %vm1005 = vcmp.eq.s32.totalorder %v974, %v906
        %vm1006 = vcmp.eq.s32.totalorder %v974, %v908
        %vm1007 = vcmp.eq.s32.totalorder %v974, %v910
        %vm1008 = vcmp.eq.s32.totalorder %v974, %v912
        %vm1009 = vcmp.eq.s32.totalorder %v974, %v914
        %vm1010 = vcmp.eq.s32.totalorder %v974, %v916
        %vm1011 = vcmp.eq.s32.totalorder %v974, %v918
        %vm1012 = vcmp.eq.s32.totalorder %v974, %v920
        %vm1013 = vcmp.eq.s32.totalorder %v974, %v922
        %vm1014 = vcmp.eq.s32.totalorder %v974, %v924
        %vm1015 = vcmp.eq.s32.totalorder %v974, %v926
        %vm1016 = vcmp.eq.s32.totalorder %v974, %v928
        %vm1017 = vcmp.eq.s32.totalorder %v974, %v930
        %vm1018 = vcmp.eq.s32.totalorder %v974, %v932
        %vm1019 = vcmp.eq.s32.totalorder %v974, %v934
        %vm1020 = vcmp.eq.s32.totalorder %v974, %v936
        %vm1021 = vcmp.eq.s32.totalorder %v974, %v938
        %vm1022 = vcmp.eq.s32.totalorder %v974, %v940
        %vm1023 = vcmp.eq.s32.totalorder %v974, %v942
        %vm1024 = vcmp.eq.s32.totalorder %v974, %v944
        %vm1025 = vcmp.eq.s32.totalorder %v974, %v946
        %vm1026 = vcmp.eq.s32.totalorder %v974, %v948
        %vm1027 = vcmp.eq.s32.totalorder %v974, %v950
        %vm1028 = vcmp.eq.s32.totalorder %v974, %v952
        %vm1029 = vcmp.eq.s32.totalorder %v974, %v954
        %vm1030 = vcmp.eq.s32.totalorder %v974, %v956
        %vm1031 = vcmp.eq.s32.totalorder %v974, %v958
        %vm1032 = vcmp.eq.s32.totalorder %v974, %v960
        %vm1033 = vcmp.eq.s32.totalorder %v974, %v962
        %vm1034 = vcmp.eq.s32.totalorder %v974, %v964
        %vm1035 = vcmp.eq.s32.totalorder %v974, %v966
        %vm1036 = vcmp.eq.s32.totalorder %v974, %v968
        %vm1037 = vcmp.eq.s32.totalorder %v974, %v970
        %vm1038 = vcmp.eq.s32.totalorder %v974, %v972
        %v1039 = vsel %vm975, 1, 0
        %v1040 = vsel %vm976, 1, 0
        %v1041 = vsel %vm977, 1, 0
        %v1042 = vsel %vm978, 1, 0
        %v1043 = vsel %vm979, 1, 0
        %v1044 = vsel %vm980, 1, 0
        %v1045 = vsel %vm981, 1, 0
        %v1046 = vsel %vm982, 1, 0
        %v1047 = vsel %vm983, 1, 0
        %v1048 = vsel %vm984, 1, 0
        %v1049 = vsel %vm985, 1, 0
        %v1050 = vsel %vm986, 1, 0
        %v1051 = vsel %vm987, 1, 0
        %v1052 = vsel %vm988, 1, 0
        %v1053 = vsel %vm989, 1, 0
        %v1054 = vsel %vm990, 1, 0
        %v1055 = vsel %vm991, 1, 0
        %v1056 = vsel %vm992, 1, 0
        %v1057 = vsel %vm993, 1, 0
        %v1058 = vsel %vm994, 1, 0
        %v1059 = vsel %vm995, 1, 0
        %v1060 = vsel %vm996, 1, 0
        %v1061 = vsel %vm997, 1, 0
        %v1062 = vsel %vm998, 1, 0
        %v1063 = vsel %vm999, 1, 0
        %v1064 = vsel %vm1000, 1, 0
        %v1065 = vsel %vm1001, 1, 0
        %v1066 = vsel %vm1002, 1, 0
        %v1067 = vsel %vm1003, 1, 0
        %v1068 = vsel %vm1004, 1, 0
        %v1069 = vsel %vm1005, 1, 0
        %v1070 = vsel %vm1006, 1, 0
        %v1071 = vsel %vm1007, 1, 0
        %v1072 = vsel %vm1008, 1, 0
        %v1073 = vsel %vm1009, 1, 0
        %v1074 = vsel %vm1010, 1, 0
        %v1075 = vsel %vm1011, 1, 0
        %v1076 = vsel %vm1012, 1, 0
        %v1077 = vsel %vm1013, 1, 0
        %v1078 = vsel %vm1014, 1, 0
        %v1079 = vsel %vm1015, 1, 0
        %v1080 = vsel %vm1016, 1, 0
        %v1081 = vsel %vm1017, 1, 0
        %v1082 = vsel %vm1018, 1, 0
        %v1083 = vsel %vm1019, 1, 0
        %v1084 = vsel %vm1020, 1, 0
        %v1085 = vsel %vm1021, 1, 0
        %v1086 = vsel %vm1022, 1, 0
        %v1087 = vsel %vm1023, 1, 0
        %v1088 = vsel %vm1024, 1, 0
        %v1089 = vsel %vm1025, 1, 0
        %v1090 = vsel %vm1026, 1, 0
        %v1091 = vsel %vm1027, 1, 0
        %v1092 = vsel %vm1028, 1, 0
        %v1093 = vsel %vm1029, 1, 0
        %v1094 = vsel %vm1030, 1, 0
        %v1095 = vsel %vm1031, 1, 0
        %v1096 = vsel %vm1032, 1, 0
        %v1097 = vsel %vm1033, 1, 0
        %v1098 = vsel %vm1034, 1, 0
        %v1099 = vsel %vm1035, 1, 0
        %v1100 = vsel %vm1036, 1, 0
        %v1101 = vsel %vm1037, 1, 0
        %v1102 = vsel %vm1038, 1, 0
        %v1103 = vcvt.s32.f32 %v1039
        %v1104 = vcvt.s32.f32 %v1040
        %v1105 = vcvt.s32.f32 %v1041
        %v1106 = vcvt.s32.f32 %v1042
        %v1107 = vcvt.s32.f32 %v1043
        %v1108 = vcvt.s32.f32 %v1044
        %v1109 = vcvt.s32.f32 %v1045
        %v1110 = vcvt.s32.f32 %v1046
        %v1111 = vcvt.s32.f32 %v1047
        %v1112 = vcvt.s32.f32 %v1048
        %v1113 = vcvt.s32.f32 %v1049
        %v1114 = vcvt.s32.f32 %v1050
        %v1115 = vcvt.s32.f32 %v1051
        %v1116 = vcvt.s32.f32 %v1052
        %v1117 = vcvt.s32.f32 %v1053
        %v1118 = vcvt.s32.f32 %v1054
        %v1119 = vcvt.s32.f32 %v1055
        %v1120 = vcvt.s32.f32 %v1056
        %v1121 = vcvt.s32.f32 %v1057
        %v1122 = vcvt.s32.f32 %v1058
        %v1123 = vcvt.s32.f32 %v1059
        %v1124 = vcvt.s32.f32 %v1060
        %v1125 = vcvt.s32.f32 %v1061
        %v1126 = vcvt.s32.f32 %v1062
        %v1127 = vcvt.s32.f32 %v1063
        %v1128 = vcvt.s32.f32 %v1064
        %v1129 = vcvt.s32.f32 %v1065
        %v1130 = vcvt.s32.f32 %v1066
        %v1131 = vcvt.s32.f32 %v1067
        %v1132 = vcvt.s32.f32 %v1068
        %v1133 = vcvt.s32.f32 %v1069
        %v1134 = vcvt.s32.f32 %v1070
        %v1135 = vcvt.s32.f32 %v1071
        %v1136 = vcvt.s32.f32 %v1072
        %v1137 = vcvt.s32.f32 %v1073
        %v1138 = vcvt.s32.f32 %v1074
        %v1139 = vcvt.s32.f32 %v1075
        %v1140 = vcvt.s32.f32 %v1076
        %v1141 = vcvt.s32.f32 %v1077
        %v1142 = vcvt.s32.f32 %v1078
        %v1143 = vcvt.s32.f32 %v1079
        %v1144 = vcvt.s32.f32 %v1080
        %v1145 = vcvt.s32.f32 %v1081
        %v1146 = vcvt.s32.f32 %v1082
        %v1147 = vcvt.s32.f32 %v1083
        %v1148 = vcvt.s32.f32 %v1084
        %v1149 = vcvt.s32.f32 %v1085
        %v1150 = vcvt.s32.f32 %v1086
        %v1151 = vcvt.s32.f32 %v1087
        %v1152 = vcvt.s32.f32 %v1088
        %v1153 = vcvt.s32.f32 %v1089
        %v1154 = vcvt.s32.f32 %v1090
        %v1155 = vcvt.s32.f32 %v1091
        %v1156 = vcvt.s32.f32 %v1092
        %v1157 = vcvt.s32.f32 %v1093
        %v1158 = vcvt.s32.f32 %v1094
        %v1159 = vcvt.s32.f32 %v1095
        %v1160 = vcvt.s32.f32 %v1096
        %v1161 = vcvt.s32.f32 %v1097
        %v1162 = vcvt.s32.f32 %v1098
        %v1163 = vcvt.s32.f32 %v1099
        %v1164 = vcvt.s32.f32 %v1100
        %v1165 = vcvt.s32.f32 %v1101
        %v1166 = vcvt.s32.f32 %v1102
        %v1167 = vld [vmem:[%s2] sm:$0xff]
        %v1168 = vld [vmem:[%s2 + $0x8] sm:$0xff]
        %v1169 = vld [vmem:[%s2 + $0x10] sm:$0xff]
        %v1170 = vld [vmem:[%s2 + $0x18] sm:$0xff]
        %v1171 = vld [vmem:[%s2 + $0x20] sm:$0xff]
        %v1172 = vld [vmem:[%s2 + $0x28] sm:$0xff]
        %v1173 = vld [vmem:[%s2 + $0x30] sm:$0xff]
        %v1174 = vld [vmem:[%s2 + $0x38] sm:$0xff]
        %v1175 = vld [vmem:[%s2 + $0x40] sm:$0xff]
        %v1176 = vld [vmem:[%s2 + $0x48] sm:$0xff]
        %v1177 = vld [vmem:[%s2 + $0x50] sm:$0xff]
        %v1178 = vld [vmem:[%s2 + $0x58] sm:$0xff]
        %v1179 = vld [vmem:[%s2 + $0x60] sm:$0xff]
        %v1180 = vld [vmem:[%s2 + $0x68] sm:$0xff]
        %v1181 = vld [vmem:[%s2 + $0x70] sm:$0xff]
        %v1182 = vld [vmem:[%s2 + $0x78] sm:$0xff]
        %1183 = vmatprep.subr.mxu0 0.0
        %1184 = vmatpush1.msra.mxu0 %v1182
        %1185 = vmatprep.subr.mxu0 0.0
        %1186 = vmatpush1.msra.mxu0 %v1181
        %1187 = vmatprep.subr.mxu0 0.0
        %1188 = vmatpush1.msra.mxu0 %v1180
        %1189 = vmatprep.subr.mxu0 0.0
        %1190 = vmatpush1.msra.mxu0 %v1179
        %1191 = vmatprep.subr.mxu0 0.0
        %1192 = vmatpush1.msra.mxu0 %v1178
        %1193 = vmatprep.subr.mxu0 0.0
        %1194 = vmatpush1.msra.mxu0 %v1177
        %1195 = vmatprep.subr.mxu0 0.0
        %1196 = vmatpush1.msra.mxu0 %v1176
        %1197 = vmatprep.subr.mxu0 0.0
        %1198 = vmatpush1.msra.mxu0 %v1175
        %1199 = vmatprep.subr.mxu0 0.0
        %1200 = vmatpush1.msra.mxu0 %v1174
        %1201 = vmatprep.subr.mxu0 0.0
        %1202 = vmatpush1.msra.mxu0 %v1173
        %1203 = vmatprep.subr.mxu0 0.0
        %1204 = vmatpush1.msra.mxu0 %v1172
        %1205 = vmatprep.subr.mxu0 0.0
        %1206 = vmatpush1.msra.mxu0 %v1171
        %1207 = vmatprep.subr.mxu0 0.0
        %1208 = vmatpush1.msra.mxu0 %v1170
        %1209 = vmatprep.subr.mxu0 0.0
        %1210 = vmatpush1.msra.mxu0 %v1169
        %1211 = vmatprep.subr.mxu0 0.0
        %1212 = vmatpush1.msra.mxu0 %v1168
        %1213 = vmatprep.subr.mxu0 0.0
        %1214 = vmatpush1.msra.mxu0 %v1167
        %1215 = vmatprep.subr.mxu0 0.0
        %1216 = vmatpush2.msra.mxu0 0.0
        %1217 = vmatprep.subr.mxu0 0.0
        %1218 = vmatpush2.msra.mxu0 0.0
        %1219 = vmatprep.subr.mxu0 0.0
        %1220 = vmatpush2.msra.mxu0 0.0
        %1221 = vmatprep.subr.mxu0 0.0
        %1222 = vmatpush2.msra.mxu0 0.0
        %1223 = vmatprep.subr.mxu0 0.0
        %1224 = vmatpush2.msra.mxu0 0.0
        %1225 = vmatprep.subr.mxu0 0.0
        %1226 = vmatpush2.msra.mxu0 0.0
        %1227 = vmatprep.subr.mxu0 0.0
        %1228 = vmatpush2.msra.mxu0 0.0
        %1229 = vmatprep.subr.mxu0 0.0
        %1230 = vmatpush2.msra.mxu0 0.0
        %1231 = vmatprep.subr.mxu0 0.0
        %1232 = vmatpush2.msra.mxu0 0.0
        %1233 = vmatprep.subr.mxu0 0.0
        %1234 = vmatpush2.msra.mxu0 0.0
        %1235 = vmatprep.subr.mxu0 0.0
        %1236 = vmatpush2.msra.mxu0 0.0
        %1237 = vmatprep.subr.mxu0 0.0
        %1238 = vmatpush2.msra.mxu0 0.0
        %1239 = vmatprep.subr.mxu0 0.0
        %1240 = vmatpush2.msra.mxu0 0.0
        %1241 = vmatprep.subr.mxu0 0.0
        %1242 = vmatpush2.msra.mxu0 0.0
        %1243 = vmatprep.subr.mxu0 0.0
        %1244 = vmatpush2.msra.mxu0 0.0
        %1245 = vmatprep.subr.mxu0 0.0
        %1246 = vmatpush2.msra.mxu0 0.0
        %1247 = vmatprep.mubr.f32.mxu0 0.0
        %1248 = vmatmul.mubr.f32.gmra.mxu0 %v1103
        %v1249 = vpop.f32.mrf.mxu0
        %v1250 = vadd.f32 0.0, %v1249
        %v1251 = vpop.f32.mrf.mxu0
        %1252 = vmatprep.mubr.f32.mxu0 0.0
        %1253 = vmatmul.mubr.f32.gmra.mxu0 %v1104
        %v1254 = vpop.f32.mrf.mxu0
        %v1255 = vadd.f32 0.0, %v1254
        %v1256 = vpop.f32.mrf.mxu0
        %1257 = vmatprep.mubr.f32.mxu0 0.0
        %1258 = vmatmul.mubr.f32.gmra.mxu0 %v1105
        %v1259 = vpop.f32.mrf.mxu0
        %v1260 = vadd.f32 0.0, %v1259
        %v1261 = vpop.f32.mrf.mxu0
        %1262 = vmatprep.mubr.f32.mxu0 0.0
        %1263 = vmatmul.mubr.f32.gmra.mxu0 %v1106
        %v1264 = vpop.f32.mrf.mxu0
        %v1265 = vadd.f32 0.0, %v1264
        %v1266 = vpop.f32.mrf.mxu0
        %1267 = vmatprep.mubr.f32.mxu0 0.0
        %1268 = vmatmul.mubr.f32.gmra.mxu0 %v1107
        %v1269 = vpop.f32.mrf.mxu0
        %v1270 = vadd.f32 0.0, %v1269
        %v1271 = vpop.f32.mrf.mxu0
        %1272 = vmatprep.mubr.f32.mxu0 0.0
        %1273 = vmatmul.mubr.f32.gmra.mxu0 %v1108
        %v1274 = vpop.f32.mrf.mxu0
        %v1275 = vadd.f32 0.0, %v1274
        %v1276 = vpop.f32.mrf.mxu0
        %1277 = vmatprep.mubr.f32.mxu0 0.0
        %1278 = vmatmul.mubr.f32.gmra.mxu0 %v1109
        %v1279 = vpop.f32.mrf.mxu0
        %v1280 = vadd.f32 0.0, %v1279
        %v1281 = vpop.f32.mrf.mxu0
        %1282 = vmatprep.mubr.f32.mxu0 0.0
        %1283 = vmatmul.mubr.f32.gmra.mxu0 %v1110
        %v1284 = vpop.f32.mrf.mxu0
        %v1285 = vadd.f32 0.0, %v1284
        %v1286 = vpop.f32.mrf.mxu0
        %1287 = vmatprep.mubr.f32.mxu0 0.0
        %1288 = vmatmul.mubr.f32.gmra.mxu0 %v1111
        %v1289 = vpop.f32.mrf.mxu0
        %v1290 = vadd.f32 0.0, %v1289
        %v1291 = vpop.f32.mrf.mxu0
        %1292 = vmatprep.mubr.f32.mxu0 0.0
        %1293 = vmatmul.mubr.f32.gmra.mxu0 %v1112
        %v1294 = vpop.f32.mrf.mxu0
        %v1295 = vadd.f32 0.0, %v1294
        %v1296 = vpop.f32.mrf.mxu0
        %1297 = vmatprep.mubr.f32.mxu0 0.0
        %1298 = vmatmul.mubr.f32.gmra.mxu0 %v1113
        %v1299 = vpop.f32.mrf.mxu0
        %v1300 = vadd.f32 0.0, %v1299
        %v1301 = vpop.f32.mrf.mxu0
        %1302 = vmatprep.mubr.f32.mxu0 0.0
        %1303 = vmatmul.mubr.f32.gmra.mxu0 %v1114
        %v1304 = vpop.f32.mrf.mxu0
        %v1305 = vadd.f32 0.0, %v1304
        %v1306 = vpop.f32.mrf.mxu0
        %1307 = vmatprep.mubr.f32.mxu0 0.0
        %1308 = vmatmul.mubr.f32.gmra.mxu0 %v1115
        %v1309 = vpop.f32.mrf.mxu0
        %v1310 = vadd.f32 0.0, %v1309
        %v1311 = vpop.f32.mrf.mxu0
        %1312 = vmatprep.mubr.f32.mxu0 0.0
        %1313 = vmatmul.mubr.f32.gmra.mxu0 %v1116
        %v1314 = vpop.f32.mrf.mxu0
        %v1315 = vadd.f32 0.0, %v1314
        %v1316 = vpop.f32.mrf.mxu0
        %1317 = vmatprep.mubr.f32.mxu0 0.0
        %1318 = vmatmul.mubr.f32.gmra.mxu0 %v1117
        %v1319 = vpop.f32.mrf.mxu0
        %v1320 = vadd.f32 0.0, %v1319
        %v1321 = vpop.f32.mrf.mxu0
        %1322 = vmatprep.mubr.f32.mxu0 0.0
        %1323 = vmatmul.mubr.f32.gmra.mxu0 %v1118
        %v1324 = vpop.f32.mrf.mxu0
        %v1325 = vadd.f32 0.0, %v1324
        %v1326 = vpop.f32.mrf.mxu0
        %1327 = vmatprep.mubr.f32.mxu0 0.0
        %1328 = vmatmul.mubr.f32.gmra.mxu0 %v1119
        %v1329 = vpop.f32.mrf.mxu0
        %v1330 = vadd.f32 0.0, %v1329
        %v1331 = vpop.f32.mrf.mxu0
        %1332 = vmatprep.mubr.f32.mxu0 0.0
        %1333 = vmatmul.mubr.f32.gmra.mxu0 %v1120
        %v1334 = vpop.f32.mrf.mxu0
        %v1335 = vadd.f32 0.0, %v1334
        %v1336 = vpop.f32.mrf.mxu0
        %1337 = vmatprep.mubr.f32.mxu0 0.0
        %1338 = vmatmul.mubr.f32.gmra.mxu0 %v1121
        %v1339 = vpop.f32.mrf.mxu0
        %v1340 = vadd.f32 0.0, %v1339
        %v1341 = vpop.f32.mrf.mxu0
        %1342 = vmatprep.mubr.f32.mxu0 0.0
        %1343 = vmatmul.mubr.f32.gmra.mxu0 %v1122
        %v1344 = vpop.f32.mrf.mxu0
        %v1345 = vadd.f32 0.0, %v1344
        %v1346 = vpop.f32.mrf.mxu0
        %1347 = vmatprep.mubr.f32.mxu0 0.0
        %1348 = vmatmul.mubr.f32.gmra.mxu0 %v1123
        %v1349 = vpop.f32.mrf.mxu0
        %v1350 = vadd.f32 0.0, %v1349
        %v1351 = vpop.f32.mrf.mxu0
        %1352 = vmatprep.mubr.f32.mxu0 0.0
        %1353 = vmatmul.mubr.f32.gmra.mxu0 %v1124
        %v1354 = vpop.f32.mrf.mxu0
        %v1355 = vadd.f32 0.0, %v1354
        %v1356 = vpop.f32.mrf.mxu0
        %1357 = vmatprep.mubr.f32.mxu0 0.0
        %1358 = vmatmul.mubr.f32.gmra.mxu0 %v1125
        %v1359 = vpop.f32.mrf.mxu0
        %v1360 = vadd.f32 0.0, %v1359
        %v1361 = vpop.f32.mrf.mxu0
        %1362 = vmatprep.mubr.f32.mxu0 0.0
        %1363 = vmatmul.mubr.f32.gmra.mxu0 %v1126
        %v1364 = vpop.f32.mrf.mxu0
        %v1365 = vadd.f32 0.0, %v1364
        %v1366 = vpop.f32.mrf.mxu0
        %1367 = vmatprep.mubr.f32.mxu0 0.0
        %1368 = vmatmul.mubr.f32.gmra.mxu0 %v1127
        %v1369 = vpop.f32.mrf.mxu0
        %v1370 = vadd.f32 0.0, %v1369
        %v1371 = vpop.f32.mrf.mxu0
        %1372 = vmatprep.mubr.f32.mxu0 0.0
        %1373 = vmatmul.mubr.f32.gmra.mxu0 %v1128
        %v1374 = vpop.f32.mrf.mxu0
        %v1375 = vadd.f32 0.0, %v1374
        %v1376 = vpop.f32.mrf.mxu0
        %1377 = vmatprep.mubr.f32.mxu0 0.0
        %1378 = vmatmul.mubr.f32.gmra.mxu0 %v1129
        %v1379 = vpop.f32.mrf.mxu0
        %v1380 = vadd.f32 0.0, %v1379
        %v1381 = vpop.f32.mrf.mxu0
        %1382 = vmatprep.mubr.f32.mxu0 0.0
        %1383 = vmatmul.mubr.f32.gmra.mxu0 %v1130
        %v1384 = vpop.f32.mrf.mxu0
        %v1385 = vadd.f32 0.0, %v1384
        %v1386 = vpop.f32.mrf.mxu0
        %1387 = vmatprep.mubr.f32.mxu0 0.0
        %1388 = vmatmul.mubr.f32.gmra.mxu0 %v1131
        %v1389 = vpop.f32.mrf.mxu0
        %v1390 = vadd.f32 0.0, %v1389
        %v1391 = vpop.f32.mrf.mxu0
        %1392 = vmatprep.mubr.f32.mxu0 0.0
        %1393 = vmatmul.mubr.f32.gmra.mxu0 %v1132
        %v1394 = vpop.f32.mrf.mxu0
        %v1395 = vadd.f32 0.0, %v1394
        %v1396 = vpop.f32.mrf.mxu0
        %1397 = vmatprep.mubr.f32.mxu0 0.0
        %1398 = vmatmul.mubr.f32.gmra.mxu0 %v1133
        %v1399 = vpop.f32.mrf.mxu0
        %v1400 = vadd.f32 0.0, %v1399
        %v1401 = vpop.f32.mrf.mxu0
        %1402 = vmatprep.mubr.f32.mxu0 0.0
        %1403 = vmatmul.mubr.f32.gmra.mxu0 %v1134
        %v1404 = vpop.f32.mrf.mxu0
        %v1405 = vadd.f32 0.0, %v1404
        %v1406 = vpop.f32.mrf.mxu0
        %1407 = vmatprep.mubr.f32.mxu0 0.0
        %1408 = vmatmul.mubr.f32.gmra.mxu0 %v1135
        %v1409 = vpop.f32.mrf.mxu0
        %v1410 = vadd.f32 0.0, %v1409
        %v1411 = vpop.f32.mrf.mxu0
        %1412 = vmatprep.mubr.f32.mxu0 0.0
        %1413 = vmatmul.mubr.f32.gmra.mxu0 %v1136
        %v1414 = vpop.f32.mrf.mxu0
        %v1415 = vadd.f32 0.0, %v1414
        %v1416 = vpop.f32.mrf.mxu0
        %1417 = vmatprep.mubr.f32.mxu0 0.0
        %1418 = vmatmul.mubr.f32.gmra.mxu0 %v1137
        %v1419 = vpop.f32.mrf.mxu0
        %v1420 = vadd.f32 0.0, %v1419
        %v1421 = vpop.f32.mrf.mxu0
        %1422 = vmatprep.mubr.f32.mxu0 0.0
        %1423 = vmatmul.mubr.f32.gmra.mxu0 %v1138
        %v1424 = vpop.f32.mrf.mxu0
        %v1425 = vadd.f32 0.0, %v1424
        %v1426 = vpop.f32.mrf.mxu0
        %1427 = vmatprep.mubr.f32.mxu0 0.0
        %1428 = vmatmul.mubr.f32.gmra.mxu0 %v1139
        %v1429 = vpop.f32.mrf.mxu0
        %v1430 = vadd.f32 0.0, %v1429
        %v1431 = vpop.f32.mrf.mxu0
        %1432 = vmatprep.mubr.f32.mxu0 0.0
        %1433 = vmatmul.mubr.f32.gmra.mxu0 %v1140
        %v1434 = vpop.f32.mrf.mxu0
        %v1435 = vadd.f32 0.0, %v1434
        %v1436 = vpop.f32.mrf.mxu0
        %1437 = vmatprep.mubr.f32.mxu0 0.0
        %1438 = vmatmul.mubr.f32.gmra.mxu0 %v1141
        %v1439 = vpop.f32.mrf.mxu0
        %v1440 = vadd.f32 0.0, %v1439
        %v1441 = vpop.f32.mrf.mxu0
        %1442 = vmatprep.mubr.f32.mxu0 0.0
        %1443 = vmatmul.mubr.f32.gmra.mxu0 %v1142
        %v1444 = vpop.f32.mrf.mxu0
        %v1445 = vadd.f32 0.0, %v1444
        %v1446 = vpop.f32.mrf.mxu0
        %1447 = vmatprep.mubr.f32.mxu0 0.0
        %1448 = vmatmul.mubr.f32.gmra.mxu0 %v1143
        %v1449 = vpop.f32.mrf.mxu0
        %v1450 = vadd.f32 0.0, %v1449
        %v1451 = vpop.f32.mrf.mxu0
        %1452 = vmatprep.mubr.f32.mxu0 0.0
        %1453 = vmatmul.mubr.f32.gmra.mxu0 %v1144
        %v1454 = vpop.f32.mrf.mxu0
        %v1455 = vadd.f32 0.0, %v1454
        %v1456 = vpop.f32.mrf.mxu0
        %1457 = vmatprep.mubr.f32.mxu0 0.0
        %1458 = vmatmul.mubr.f32.gmra.mxu0 %v1145
        %v1459 = vpop.f32.mrf.mxu0
        %v1460 = vadd.f32 0.0, %v1459
        %v1461 = vpop.f32.mrf.mxu0
        %1462 = vmatprep.mubr.f32.mxu0 0.0
        %1463 = vmatmul.mubr.f32.gmra.mxu0 %v1146
        %v1464 = vpop.f32.mrf.mxu0
        %v1465 = vadd.f32 0.0, %v1464
        %v1466 = vpop.f32.mrf.mxu0
        %1467 = vmatprep.mubr.f32.mxu0 0.0
        %1468 = vmatmul.mubr.f32.gmra.mxu0 %v1147
        %v1469 = vpop.f32.mrf.mxu0
        %v1470 = vadd.f32 0.0, %v1469
        %v1471 = vpop.f32.mrf.mxu0
        %1472 = vmatprep.mubr.f32.mxu0 0.0
        %1473 = vmatmul.mubr.f32.gmra.mxu0 %v1148
        %v1474 = vpop.f32.mrf.mxu0
        %v1475 = vadd.f32 0.0, %v1474
        %v1476 = vpop.f32.mrf.mxu0
        %1477 = vmatprep.mubr.f32.mxu0 0.0
        %1478 = vmatmul.mubr.f32.gmra.mxu0 %v1149
        %v1479 = vpop.f32.mrf.mxu0
        %v1480 = vadd.f32 0.0, %v1479
        %v1481 = vpop.f32.mrf.mxu0
        %1482 = vmatprep.mubr.f32.mxu0 0.0
        %1483 = vmatmul.mubr.f32.gmra.mxu0 %v1150
        %v1484 = vpop.f32.mrf.mxu0
        %v1485 = vadd.f32 0.0, %v1484
        %v1486 = vpop.f32.mrf.mxu0
        %1487 = vmatprep.mubr.f32.mxu0 0.0
        %1488 = vmatmul.mubr.f32.gmra.mxu0 %v1151
        %v1489 = vpop.f32.mrf.mxu0
        %v1490 = vadd.f32 0.0, %v1489
        %v1491 = vpop.f32.mrf.mxu0
        %1492 = vmatprep.mubr.f32.mxu0 0.0
        %1493 = vmatmul.mubr.f32.gmra.mxu0 %v1152
        %v1494 = vpop.f32.mrf.mxu0
        %v1495 = vadd.f32 0.0, %v1494
        %v1496 = vpop.f32.mrf.mxu0
        %1497 = vmatprep.mubr.f32.mxu0 0.0
        %1498 = vmatmul.mubr.f32.gmra.mxu0 %v1153
        %v1499 = vpop.f32.mrf.mxu0
        %v1500 = vadd.f32 0.0, %v1499
        %v1501 = vpop.f32.mrf.mxu0
        %1502 = vmatprep.mubr.f32.mxu0 0.0
        %1503 = vmatmul.mubr.f32.gmra.mxu0 %v1154
        %v1504 = vpop.f32.mrf.mxu0
        %v1505 = vadd.f32 0.0, %v1504
        %v1506 = vpop.f32.mrf.mxu0
        %1507 = vmatprep.mubr.f32.mxu0 0.0
        %1508 = vmatmul.mubr.f32.gmra.mxu0 %v1155
        %v1509 = vpop.f32.mrf.mxu0
        %v1510 = vadd.f32 0.0, %v1509
        %v1511 = vpop.f32.mrf.mxu0
        %1512 = vmatprep.mubr.f32.mxu0 0.0
        %1513 = vmatmul.mubr.f32.gmra.mxu0 %v1156
        %v1514 = vpop.f32.mrf.mxu0
        %v1515 = vadd.f32 0.0, %v1514
        %v1516 = vpop.f32.mrf.mxu0
        %1517 = vmatprep.mubr.f32.mxu0 0.0
        %1518 = vmatmul.mubr.f32.gmra.mxu0 %v1157
        %v1519 = vpop.f32.mrf.mxu0
        %v1520 = vadd.f32 0.0, %v1519
        %v1521 = vpop.f32.mrf.mxu0
        %1522 = vmatprep.mubr.f32.mxu0 0.0
        %1523 = vmatmul.mubr.f32.gmra.mxu0 %v1158
        %v1524 = vpop.f32.mrf.mxu0
        %v1525 = vadd.f32 0.0, %v1524
        %v1526 = vpop.f32.mrf.mxu0
        %1527 = vmatprep.mubr.f32.mxu0 0.0
        %1528 = vmatmul.mubr.f32.gmra.mxu0 %v1159
        %v1529 = vpop.f32.mrf.mxu0
        %v1530 = vadd.f32 0.0, %v1529
        %v1531 = vpop.f32.mrf.mxu0
        %1532 = vmatprep.mubr.f32.mxu0 0.0
        %1533 = vmatmul.mubr.f32.gmra.mxu0 %v1160
        %v1534 = vpop.f32.mrf.mxu0
        %v1535 = vadd.f32 0.0, %v1534
        %v1536 = vpop.f32.mrf.mxu0
        %1537 = vmatprep.mubr.f32.mxu0 0.0
        %1538 = vmatmul.mubr.f32.gmra.mxu0 %v1161
        %v1539 = vpop.f32.mrf.mxu0
        %v1540 = vadd.f32 0.0, %v1539
        %v1541 = vpop.f32.mrf.mxu0
        %1542 = vmatprep.mubr.f32.mxu0 0.0
        %1543 = vmatmul.mubr.f32.gmra.mxu0 %v1162
        %v1544 = vpop.f32.mrf.mxu0
        %v1545 = vadd.f32 0.0, %v1544
        %v1546 = vpop.f32.mrf.mxu0
        %1547 = vmatprep.mubr.f32.mxu0 0.0
        %1548 = vmatmul.mubr.f32.gmra.mxu0 %v1163
        %v1549 = vpop.f32.mrf.mxu0
        %v1550 = vadd.f32 0.0, %v1549
        %v1551 = vpop.f32.mrf.mxu0
        %1552 = vmatprep.mubr.f32.mxu0 0.0
        %1553 = vmatmul.mubr.f32.gmra.mxu0 %v1164
        %v1554 = vpop.f32.mrf.mxu0
        %v1555 = vadd.f32 0.0, %v1554
        %v1556 = vpop.f32.mrf.mxu0
        %1557 = vmatprep.mubr.f32.mxu0 0.0
        %1558 = vmatmul.mubr.f32.gmra.mxu0 %v1165
        %v1559 = vpop.f32.mrf.mxu0
        %v1560 = vadd.f32 0.0, %v1559
        %v1561 = vpop.f32.mrf.mxu0
        %1562 = vmatprep.mubr.f32.mxu0 0.0
        %1563 = vmatmul.mubr.f32.gmra.mxu0 %v1166
        %v1564 = vpop.f32.mrf.mxu0
        %v1565 = vadd.f32 0.0, %v1564
        %v1566 = vpop.f32.mrf.mxu0
        %1567 = vdwg.mxu0
        %1568 = vst.msk [vmem:[%s273] sm:$0xff] %vm388, %v1250
        %1569 = vst.msk [vmem:[%s273 + $0x8] sm:$0xff] %vm388, %v1255
        %1570 = vst.msk [vmem:[%s273 + $0x10] sm:$0xff] %vm388, %v1260
        %1571 = vst.msk [vmem:[%s273 + $0x18] sm:$0xff] %vm388, %v1265
        %1572 = vst.msk [vmem:[%s273 + $0x20] sm:$0xff] %vm388, %v1270
        %1573 = vst.msk [vmem:[%s273 + $0x28] sm:$0xff] %vm388, %v1275
        %1574 = vst.msk [vmem:[%s273 + $0x30] sm:$0xff] %vm388, %v1280
        %1575 = vst.msk [vmem:[%s273 + $0x38] sm:$0xff] %vm388, %v1285
        %1576 = vst.msk [vmem:[%s273 + $0x40] sm:$0xff] %vm388, %v1290
        %1577 = vst.msk [vmem:[%s273 + $0x48] sm:$0xff] %vm388, %v1295
        %1578 = vst.msk [vmem:[%s273 + $0x50] sm:$0xff] %vm388, %v1300
        %1579 = vst.msk [vmem:[%s273 + $0x58] sm:$0xff] %vm388, %v1305
        %1580 = vst.msk [vmem:[%s273 + $0x60] sm:$0xff] %vm388, %v1310
        %1581 = vst.msk [vmem:[%s273 + $0x68] sm:$0xff] %vm388, %v1315
        %1582 = vst.msk [vmem:[%s273 + $0x70] sm:$0xff] %vm388, %v1320
        %1583 = vst.msk [vmem:[%s273 + $0x78] sm:$0xff] %vm388, %v1325
        %1584 = vst.msk [vmem:[%s273 + $0x80] sm:$0xff] %vm388, %v1330
        %1585 = vst.msk [vmem:[%s273 + $0x88] sm:$0xff] %vm388, %v1335
        %1586 = vst.msk [vmem:[%s273 + $0x90] sm:$0xff] %vm388, %v1340
        %1587 = vst.msk [vmem:[%s273 + $0x98] sm:$0xff] %vm388, %v1345
        %1588 = vst.msk [vmem:[%s273 + $0xa0] sm:$0xff] %vm388, %v1350
        %1589 = vst.msk [vmem:[%s273 + $0xa8] sm:$0xff] %vm388, %v1355
        %1590 = vst.msk [vmem:[%s273 + $0xb0] sm:$0xff] %vm388, %v1360
        %1591 = vst.msk [vmem:[%s273 + $0xb8] sm:$0xff] %vm388, %v1365
        %1592 = vst.msk [vmem:[%s273 + $0xc0] sm:$0xff] %vm388, %v1370
        %1593 = vst.msk [vmem:[%s273 + $0xc8] sm:$0xff] %vm388, %v1375
        %1594 = vst.msk [vmem:[%s273 + $0xd0] sm:$0xff] %vm388, %v1380
        %1595 = vst.msk [vmem:[%s273 + $0xd8] sm:$0xff] %vm388, %v1385
        %1596 = vst.msk [vmem:[%s273 + $0xe0] sm:$0xff] %vm388, %v1390
        %1597 = vst.msk [vmem:[%s273 + $0xe8] sm:$0xff] %vm388, %v1395
        %1598 = vst.msk [vmem:[%s273 + $0xf0] sm:$0xff] %vm388, %v1400
        %1599 = vst.msk [vmem:[%s273 + $0xf8] sm:$0xff] %vm388, %v1405
        %1600 = vst.msk [vmem:[%s273 + $0x100] sm:$0xff] %vm388, %v1410
        %1601 = vst.msk [vmem:[%s273 + $0x108] sm:$0xff] %vm388, %v1415
        %1602 = vst.msk [vmem:[%s273 + $0x110] sm:$0xff] %vm388, %v1420
        %1603 = vst.msk [vmem:[%s273 + $0x118] sm:$0xff] %vm388, %v1425
        %1604 = vst.msk [vmem:[%s273 + $0x120] sm:$0xff] %vm388, %v1430
        %1605 = vst.msk [vmem:[%s273 + $0x128] sm:$0xff] %vm388, %v1435
        %1606 = vst.msk [vmem:[%s273 + $0x130] sm:$0xff] %vm388, %v1440
        %1607 = vst.msk [vmem:[%s273 + $0x138] sm:$0xff] %vm388, %v1445
        %1608 = vst.msk [vmem:[%s273 + $0x140] sm:$0xff] %vm388, %v1450
        %1609 = vst.msk [vmem:[%s273 + $0x148] sm:$0xff] %vm388, %v1455
        %1610 = vst.msk [vmem:[%s273 + $0x150] sm:$0xff] %vm388, %v1460
        %1611 = vst.msk [vmem:[%s273 + $0x158] sm:$0xff] %vm388, %v1465
        %1612 = vst.msk [vmem:[%s273 + $0x160] sm:$0xff] %vm388, %v1470
        %1613 = vst.msk [vmem:[%s273 + $0x168] sm:$0xff] %vm388, %v1475
        %1614 = vst.msk [vmem:[%s273 + $0x170] sm:$0xff] %vm388, %v1480
        %1615 = vst.msk [vmem:[%s273 + $0x178] sm:$0xff] %vm388, %v1485
        %1616 = vst.msk [vmem:[%s273 + $0x180] sm:$0xff] %vm388, %v1490
        %1617 = vst.msk [vmem:[%s273 + $0x188] sm:$0xff] %vm388, %v1495
        %1618 = vst.msk [vmem:[%s273 + $0x190] sm:$0xff] %vm388, %v1500
        %1619 = vst.msk [vmem:[%s273 + $0x198] sm:$0xff] %vm388, %v1505
        %1620 = vst.msk [vmem:[%s273 + $0x1a0] sm:$0xff] %vm388, %v1510
        %1621 = vst.msk [vmem:[%s273 + $0x1a8] sm:$0xff] %vm388, %v1515
        %1622 = vst.msk [vmem:[%s273 + $0x1b0] sm:$0xff] %vm388, %v1520
        %1623 = vst.msk [vmem:[%s273 + $0x1b8] sm:$0xff] %vm388, %v1525
        %1624 = vst.msk [vmem:[%s273 + $0x1c0] sm:$0xff] %vm388, %v1530
        %1625 = vst.msk [vmem:[%s273 + $0x1c8] sm:$0xff] %vm388, %v1535
        %1626 = vst.msk [vmem:[%s273 + $0x1d0] sm:$0xff] %vm388, %v1540
        %1627 = vst.msk [vmem:[%s273 + $0x1d8] sm:$0xff] %vm388, %v1545
        %1628 = vst.msk [vmem:[%s273 + $0x1e0] sm:$0xff] %vm388, %v1550
        %1629 = vst.msk [vmem:[%s273 + $0x1e8] sm:$0xff] %vm388, %v1555
        %1630 = vst.msk [vmem:[%s273 + $0x1f0] sm:$0xff] %vm388, %v1560
        %1631 = vst.msk [vmem:[%s273 + $0x1f8] sm:$0xff] %vm388, %v1565
        %v1632 = vlaneseq
        %v1633 = vshrl.u32 %v1632, 7
        %v1634 = vsub.s32 0, %v1633
        %v1635 = vrot.slane %v846, %v1634
        %v1636 = vlaneseq
        %v1637 = vshrl.u32 %v1636, 7
        %v1638 = vsub.s32 1, %v1637
        %v1639 = vrot.slane %v846, %v1638
        %v1640 = vlaneseq
        %v1641 = vshrl.u32 %v1640, 7
        %v1642 = vsub.s32 2, %v1641
        %v1643 = vrot.slane %v846, %v1642
        %v1644 = vlaneseq
        %v1645 = vshrl.u32 %v1644, 7
        %v1646 = vsub.s32 3, %v1645
        %v1647 = vrot.slane %v846, %v1646
        %v1648 = vlaneseq
        %v1649 = vshrl.u32 %v1648, 7
        %v1650 = vsub.s32 4, %v1649
        %v1651 = vrot.slane %v846, %v1650
        %v1652 = vlaneseq
        %v1653 = vshrl.u32 %v1652, 7
        %v1654 = vsub.s32 5, %v1653
        %v1655 = vrot.slane %v846, %v1654
        %v1656 = vlaneseq
        %v1657 = vshrl.u32 %v1656, 7
        %v1658 = vsub.s32 6, %v1657
        %v1659 = vrot.slane %v846, %v1658
        %v1660 = vlaneseq
        %v1661 = vshrl.u32 %v1660, 7
        %v1662 = vsub.s32 7, %v1661
        %v1663 = vrot.slane %v846, %v1662
        %v1664 = vlaneseq
        %v1665 = vshrl.u32 %v1664, 7
        %v1666 = vsub.s32 0, %v1665
        %v1667 = vrot.slane %v848, %v1666
        %v1668 = vlaneseq
        %v1669 = vshrl.u32 %v1668, 7
        %v1670 = vsub.s32 1, %v1669
        %v1671 = vrot.slane %v848, %v1670
        %v1672 = vlaneseq
        %v1673 = vshrl.u32 %v1672, 7
        %v1674 = vsub.s32 2, %v1673
        %v1675 = vrot.slane %v848, %v1674
        %v1676 = vlaneseq
        %v1677 = vshrl.u32 %v1676, 7
        %v1678 = vsub.s32 3, %v1677
        %v1679 = vrot.slane %v848, %v1678
        %v1680 = vlaneseq
        %v1681 = vshrl.u32 %v1680, 7
        %v1682 = vsub.s32 4, %v1681
        %v1683 = vrot.slane %v848, %v1682
        %v1684 = vlaneseq
        %v1685 = vshrl.u32 %v1684, 7
        %v1686 = vsub.s32 5, %v1685
        %v1687 = vrot.slane %v848, %v1686
        %v1688 = vlaneseq
        %v1689 = vshrl.u32 %v1688, 7
        %v1690 = vsub.s32 6, %v1689
        %v1691 = vrot.slane %v848, %v1690
        %v1692 = vlaneseq
        %v1693 = vshrl.u32 %v1692, 7
        %v1694 = vsub.s32 7, %v1693
        %v1695 = vrot.slane %v848, %v1694
        %v1696 = vlaneseq
        %v1697 = vshrl.u32 %v1696, 7
        %v1698 = vsub.s32 0, %v1697
        %v1699 = vrot.slane %v850, %v1698
        %v1700 = vlaneseq
        %v1701 = vshrl.u32 %v1700, 7
        %v1702 = vsub.s32 1, %v1701
        %v1703 = vrot.slane %v850, %v1702
        %v1704 = vlaneseq
        %v1705 = vshrl.u32 %v1704, 7
        %v1706 = vsub.s32 2, %v1705
        %v1707 = vrot.slane %v850, %v1706
        %v1708 = vlaneseq
        %v1709 = vshrl.u32 %v1708, 7
        %v1710 = vsub.s32 3, %v1709
        %v1711 = vrot.slane %v850, %v1710
        %v1712 = vlaneseq
        %v1713 = vshrl.u32 %v1712, 7
        %v1714 = vsub.s32 4, %v1713
        %v1715 = vrot.slane %v850, %v1714
        %v1716 = vlaneseq
        %v1717 = vshrl.u32 %v1716, 7
        %v1718 = vsub.s32 5, %v1717
        %v1719 = vrot.slane %v850, %v1718
        %v1720 = vlaneseq
        %v1721 = vshrl.u32 %v1720, 7
        %v1722 = vsub.s32 6, %v1721
        %v1723 = vrot.slane %v850, %v1722
        %v1724 = vlaneseq
        %v1725 = vshrl.u32 %v1724, 7
        %v1726 = vsub.s32 7, %v1725
        %v1727 = vrot.slane %v850, %v1726
        %v1728 = vlaneseq
        %v1729 = vshrl.u32 %v1728, 7
        %v1730 = vsub.s32 0, %v1729
        %v1731 = vrot.slane %v852, %v1730
        %v1732 = vlaneseq
        %v1733 = vshrl.u32 %v1732, 7
        %v1734 = vsub.s32 1, %v1733
        %v1735 = vrot.slane %v852, %v1734
        %v1736 = vlaneseq
        %v1737 = vshrl.u32 %v1736, 7
        %v1738 = vsub.s32 2, %v1737
        %v1739 = vrot.slane %v852, %v1738
        %v1740 = vlaneseq
        %v1741 = vshrl.u32 %v1740, 7
        %v1742 = vsub.s32 3, %v1741
        %v1743 = vrot.slane %v852, %v1742
        %v1744 = vlaneseq
        %v1745 = vshrl.u32 %v1744, 7
        %v1746 = vsub.s32 4, %v1745
        %v1747 = vrot.slane %v852, %v1746
        %v1748 = vlaneseq
        %v1749 = vshrl.u32 %v1748, 7
        %v1750 = vsub.s32 5, %v1749
        %v1751 = vrot.slane %v852, %v1750
        %v1752 = vlaneseq
        %v1753 = vshrl.u32 %v1752, 7
        %v1754 = vsub.s32 6, %v1753
        %v1755 = vrot.slane %v852, %v1754
        %v1756 = vlaneseq
        %v1757 = vshrl.u32 %v1756, 7
        %v1758 = vsub.s32 7, %v1757
        %v1759 = vrot.slane %v852, %v1758
        %v1760 = vlaneseq
        %v1761 = vshrl.u32 %v1760, 7
        %v1762 = vsub.s32 0, %v1761
        %v1763 = vrot.slane %v854, %v1762
        %v1764 = vlaneseq
        %v1765 = vshrl.u32 %v1764, 7
        %v1766 = vsub.s32 1, %v1765
        %v1767 = vrot.slane %v854, %v1766
        %v1768 = vlaneseq
        %v1769 = vshrl.u32 %v1768, 7
        %v1770 = vsub.s32 2, %v1769
        %v1771 = vrot.slane %v854, %v1770
        %v1772 = vlaneseq
        %v1773 = vshrl.u32 %v1772, 7
        %v1774 = vsub.s32 3, %v1773
        %v1775 = vrot.slane %v854, %v1774
        %v1776 = vlaneseq
        %v1777 = vshrl.u32 %v1776, 7
        %v1778 = vsub.s32 4, %v1777
        %v1779 = vrot.slane %v854, %v1778
        %v1780 = vlaneseq
        %v1781 = vshrl.u32 %v1780, 7
        %v1782 = vsub.s32 5, %v1781
        %v1783 = vrot.slane %v854, %v1782
        %v1784 = vlaneseq
        %v1785 = vshrl.u32 %v1784, 7
        %v1786 = vsub.s32 6, %v1785
        %v1787 = vrot.slane %v854, %v1786
        %v1788 = vlaneseq
        %v1789 = vshrl.u32 %v1788, 7
        %v1790 = vsub.s32 7, %v1789
        %v1791 = vrot.slane %v854, %v1790
        %v1792 = vlaneseq
        %v1793 = vshrl.u32 %v1792, 7
        %v1794 = vsub.s32 0, %v1793
        %v1795 = vrot.slane %v856, %v1794
        %v1796 = vlaneseq
        %v1797 = vshrl.u32 %v1796, 7
        %v1798 = vsub.s32 1, %v1797
        %v1799 = vrot.slane %v856, %v1798
        %v1800 = vlaneseq
        %v1801 = vshrl.u32 %v1800, 7
        %v1802 = vsub.s32 2, %v1801
        %v1803 = vrot.slane %v856, %v1802
        %v1804 = vlaneseq
        %v1805 = vshrl.u32 %v1804, 7
        %v1806 = vsub.s32 3, %v1805
        %v1807 = vrot.slane %v856, %v1806
        %v1808 = vlaneseq
        %v1809 = vshrl.u32 %v1808, 7
        %v1810 = vsub.s32 4, %v1809
        %v1811 = vrot.slane %v856, %v1810
        %v1812 = vlaneseq
        %v1813 = vshrl.u32 %v1812, 7
        %v1814 = vsub.s32 5, %v1813
        %v1815 = vrot.slane %v856, %v1814
        %v1816 = vlaneseq
        %v1817 = vshrl.u32 %v1816, 7
        %v1818 = vsub.s32 6, %v1817
        %v1819 = vrot.slane %v856, %v1818
        %v1820 = vlaneseq
        %v1821 = vshrl.u32 %v1820, 7
        %v1822 = vsub.s32 7, %v1821
        %v1823 = vrot.slane %v856, %v1822
        %v1824 = vlaneseq
        %v1825 = vshrl.u32 %v1824, 7
        %v1826 = vsub.s32 0, %v1825
        %v1827 = vrot.slane %v858, %v1826
        %v1828 = vlaneseq
        %v1829 = vshrl.u32 %v1828, 7
        %v1830 = vsub.s32 1, %v1829
        %v1831 = vrot.slane %v858, %v1830
        %v1832 = vlaneseq
        %v1833 = vshrl.u32 %v1832, 7
        %v1834 = vsub.s32 2, %v1833
        %v1835 = vrot.slane %v858, %v1834
        %v1836 = vlaneseq
        %v1837 = vshrl.u32 %v1836, 7
        %v1838 = vsub.s32 3, %v1837
        %v1839 = vrot.slane %v858, %v1838
        %v1840 = vlaneseq
        %v1841 = vshrl.u32 %v1840, 7
        %v1842 = vsub.s32 4, %v1841
        %v1843 = vrot.slane %v858, %v1842
        %v1844 = vlaneseq
        %v1845 = vshrl.u32 %v1844, 7
        %v1846 = vsub.s32 5, %v1845
        %v1847 = vrot.slane %v858, %v1846
        %v1848 = vlaneseq
        %v1849 = vshrl.u32 %v1848, 7
        %v1850 = vsub.s32 6, %v1849
        %v1851 = vrot.slane %v858, %v1850
        %v1852 = vlaneseq
        %v1853 = vshrl.u32 %v1852, 7
        %v1854 = vsub.s32 7, %v1853
        %v1855 = vrot.slane %v858, %v1854
        %v1856 = vlaneseq
        %v1857 = vshrl.u32 %v1856, 7
        %v1858 = vsub.s32 0, %v1857
        %v1859 = vrot.slane %v860, %v1858
        %v1860 = vlaneseq
        %v1861 = vshrl.u32 %v1860, 7
        %v1862 = vsub.s32 1, %v1861
        %v1863 = vrot.slane %v860, %v1862
        %v1864 = vlaneseq
        %v1865 = vshrl.u32 %v1864, 7
        %v1866 = vsub.s32 2, %v1865
        %v1867 = vrot.slane %v860, %v1866
        %v1868 = vlaneseq
        %v1869 = vshrl.u32 %v1868, 7
        %v1870 = vsub.s32 3, %v1869
        %v1871 = vrot.slane %v860, %v1870
        %v1872 = vlaneseq
        %v1873 = vshrl.u32 %v1872, 7
        %v1874 = vsub.s32 4, %v1873
        %v1875 = vrot.slane %v860, %v1874
        %v1876 = vlaneseq
        %v1877 = vshrl.u32 %v1876, 7
        %v1878 = vsub.s32 5, %v1877
        %v1879 = vrot.slane %v860, %v1878
        %v1880 = vlaneseq
        %v1881 = vshrl.u32 %v1880, 7
        %v1882 = vsub.s32 6, %v1881
        %v1883 = vrot.slane %v860, %v1882
        %v1884 = vlaneseq
        %v1885 = vshrl.u32 %v1884, 7
        %v1886 = vsub.s32 7, %v1885
        %v1887 = vrot.slane %v860, %v1886
        %v1888 = vlaneseq
        %v1889 = vshrl.u32 %v1888, 7
        %v1890 = vsub.s32 0, %v1889
        %v1891 = vrot.slane %v862, %v1890
        %v1892 = vlaneseq
        %v1893 = vshrl.u32 %v1892, 7
        %v1894 = vsub.s32 1, %v1893
        %v1895 = vrot.slane %v862, %v1894
        %v1896 = vlaneseq
        %v1897 = vshrl.u32 %v1896, 7
        %v1898 = vsub.s32 2, %v1897
        %v1899 = vrot.slane %v862, %v1898
        %v1900 = vlaneseq
        %v1901 = vshrl.u32 %v1900, 7
        %v1902 = vsub.s32 3, %v1901
        %v1903 = vrot.slane %v862, %v1902
        %v1904 = vlaneseq
        %v1905 = vshrl.u32 %v1904, 7
        %v1906 = vsub.s32 4, %v1905
        %v1907 = vrot.slane %v862, %v1906
        %v1908 = vlaneseq
        %v1909 = vshrl.u32 %v1908, 7
        %v1910 = vsub.s32 5, %v1909
        %v1911 = vrot.slane %v862, %v1910
        %v1912 = vlaneseq
        %v1913 = vshrl.u32 %v1912, 7
        %v1914 = vsub.s32 6, %v1913
        %v1915 = vrot.slane %v862, %v1914
        %v1916 = vlaneseq
        %v1917 = vshrl.u32 %v1916, 7
        %v1918 = vsub.s32 7, %v1917
        %v1919 = vrot.slane %v862, %v1918
        %v1920 = vlaneseq
        %v1921 = vshrl.u32 %v1920, 7
        %v1922 = vsub.s32 0, %v1921
        %v1923 = vrot.slane %v864, %v1922
        %v1924 = vlaneseq
        %v1925 = vshrl.u32 %v1924, 7
        %v1926 = vsub.s32 1, %v1925
        %v1927 = vrot.slane %v864, %v1926
        %v1928 = vlaneseq
        %v1929 = vshrl.u32 %v1928, 7
        %v1930 = vsub.s32 2, %v1929
        %v1931 = vrot.slane %v864, %v1930
        %v1932 = vlaneseq
        %v1933 = vshrl.u32 %v1932, 7
        %v1934 = vsub.s32 3, %v1933
        %v1935 = vrot.slane %v864, %v1934
        %v1936 = vlaneseq
        %v1937 = vshrl.u32 %v1936, 7
        %v1938 = vsub.s32 4, %v1937
        %v1939 = vrot.slane %v864, %v1938
        %v1940 = vlaneseq
        %v1941 = vshrl.u32 %v1940, 7
        %v1942 = vsub.s32 5, %v1941
        %v1943 = vrot.slane %v864, %v1942
        %v1944 = vlaneseq
        %v1945 = vshrl.u32 %v1944, 7
        %v1946 = vsub.s32 6, %v1945
        %v1947 = vrot.slane %v864, %v1946
        %v1948 = vlaneseq
        %v1949 = vshrl.u32 %v1948, 7
        %v1950 = vsub.s32 7, %v1949
        %v1951 = vrot.slane %v864, %v1950
        %v1952 = vlaneseq
        %v1953 = vshrl.u32 %v1952, 7
        %v1954 = vsub.s32 0, %v1953
        %v1955 = vrot.slane %v866, %v1954
        %v1956 = vlaneseq
        %v1957 = vshrl.u32 %v1956, 7
        %v1958 = vsub.s32 1, %v1957
        %v1959 = vrot.slane %v866, %v1958
        %v1960 = vlaneseq
        %v1961 = vshrl.u32 %v1960, 7
        %v1962 = vsub.s32 2, %v1961
        %v1963 = vrot.slane %v866, %v1962
        %v1964 = vlaneseq
        %v1965 = vshrl.u32 %v1964, 7
        %v1966 = vsub.s32 3, %v1965
        %v1967 = vrot.slane %v866, %v1966
        %v1968 = vlaneseq
        %v1969 = vshrl.u32 %v1968, 7
        %v1970 = vsub.s32 4, %v1969
        %v1971 = vrot.slane %v866, %v1970
        %v1972 = vlaneseq
        %v1973 = vshrl.u32 %v1972, 7
        %v1974 = vsub.s32 5, %v1973
        %v1975 = vrot.slane %v866, %v1974
        %v1976 = vlaneseq
        %v1977 = vshrl.u32 %v1976, 7
        %v1978 = vsub.s32 6, %v1977
        %v1979 = vrot.slane %v866, %v1978
        %v1980 = vlaneseq
        %v1981 = vshrl.u32 %v1980, 7
        %v1982 = vsub.s32 7, %v1981
        %v1983 = vrot.slane %v866, %v1982
        %v1984 = vlaneseq
        %v1985 = vshrl.u32 %v1984, 7
        %v1986 = vsub.s32 0, %v1985
        %v1987 = vrot.slane %v868, %v1986
        %v1988 = vlaneseq
        %v1989 = vshrl.u32 %v1988, 7
        %v1990 = vsub.s32 1, %v1989
        %v1991 = vrot.slane %v868, %v1990
        %v1992 = vlaneseq
        %v1993 = vshrl.u32 %v1992, 7
        %v1994 = vsub.s32 2, %v1993
        %v1995 = vrot.slane %v868, %v1994
        %v1996 = vlaneseq
        %v1997 = vshrl.u32 %v1996, 7
        %v1998 = vsub.s32 3, %v1997
        %v1999 = vrot.slane %v868, %v1998
        %v2000 = vlaneseq
        %v2001 = vshrl.u32 %v2000, 7
        %v2002 = vsub.s32 4, %v2001
        %v2003 = vrot.slane %v868, %v2002
        %v2004 = vlaneseq
        %v2005 = vshrl.u32 %v2004, 7
        %v2006 = vsub.s32 5, %v2005
        %v2007 = vrot.slane %v868, %v2006
        %v2008 = vlaneseq
        %v2009 = vshrl.u32 %v2008, 7
        %v2010 = vsub.s32 6, %v2009
        %v2011 = vrot.slane %v868, %v2010
        %v2012 = vlaneseq
        %v2013 = vshrl.u32 %v2012, 7
        %v2014 = vsub.s32 7, %v2013
        %v2015 = vrot.slane %v868, %v2014
        %v2016 = vlaneseq
        %v2017 = vshrl.u32 %v2016, 7
        %v2018 = vsub.s32 0, %v2017
        %v2019 = vrot.slane %v870, %v2018
        %v2020 = vlaneseq
        %v2021 = vshrl.u32 %v2020, 7
        %v2022 = vsub.s32 1, %v2021
        %v2023 = vrot.slane %v870, %v2022
        %v2024 = vlaneseq
        %v2025 = vshrl.u32 %v2024, 7
        %v2026 = vsub.s32 2, %v2025
        %v2027 = vrot.slane %v870, %v2026
        %v2028 = vlaneseq
        %v2029 = vshrl.u32 %v2028, 7
        %v2030 = vsub.s32 3, %v2029
        %v2031 = vrot.slane %v870, %v2030
        %v2032 = vlaneseq
        %v2033 = vshrl.u32 %v2032, 7
        %v2034 = vsub.s32 4, %v2033
        %v2035 = vrot.slane %v870, %v2034
        %v2036 = vlaneseq
        %v2037 = vshrl.u32 %v2036, 7
        %v2038 = vsub.s32 5, %v2037
        %v2039 = vrot.slane %v870, %v2038
        %v2040 = vlaneseq
        %v2041 = vshrl.u32 %v2040, 7
        %v2042 = vsub.s32 6, %v2041
        %v2043 = vrot.slane %v870, %v2042
        %v2044 = vlaneseq
        %v2045 = vshrl.u32 %v2044, 7
        %v2046 = vsub.s32 7, %v2045
        %v2047 = vrot.slane %v870, %v2046
        %v2048 = vlaneseq
        %v2049 = vshrl.u32 %v2048, 7
        %v2050 = vsub.s32 0, %v2049
        %v2051 = vrot.slane %v872, %v2050
        %v2052 = vlaneseq
        %v2053 = vshrl.u32 %v2052, 7
        %v2054 = vsub.s32 1, %v2053
        %v2055 = vrot.slane %v872, %v2054
        %v2056 = vlaneseq
        %v2057 = vshrl.u32 %v2056, 7
        %v2058 = vsub.s32 2, %v2057
        %v2059 = vrot.slane %v872, %v2058
        %v2060 = vlaneseq
        %v2061 = vshrl.u32 %v2060, 7
        %v2062 = vsub.s32 3, %v2061
        %v2063 = vrot.slane %v872, %v2062
        %v2064 = vlaneseq
        %v2065 = vshrl.u32 %v2064, 7
        %v2066 = vsub.s32 4, %v2065
        %v2067 = vrot.slane %v872, %v2066
        %v2068 = vlaneseq
        %v2069 = vshrl.u32 %v2068, 7
        %v2070 = vsub.s32 5, %v2069
        %v2071 = vrot.slane %v872, %v2070
        %v2072 = vlaneseq
        %v2073 = vshrl.u32 %v2072, 7
        %v2074 = vsub.s32 6, %v2073
        %v2075 = vrot.slane %v872, %v2074
        %v2076 = vlaneseq
        %v2077 = vshrl.u32 %v2076, 7
        %v2078 = vsub.s32 7, %v2077
        %v2079 = vrot.slane %v872, %v2078
        %v2080 = vlaneseq
        %v2081 = vshrl.u32 %v2080, 7
        %v2082 = vsub.s32 0, %v2081
        %v2083 = vrot.slane %v874, %v2082
        %v2084 = vlaneseq
        %v2085 = vshrl.u32 %v2084, 7
        %v2086 = vsub.s32 1, %v2085
        %v2087 = vrot.slane %v874, %v2086
        %v2088 = vlaneseq
        %v2089 = vshrl.u32 %v2088, 7
        %v2090 = vsub.s32 2, %v2089
        %v2091 = vrot.slane %v874, %v2090
        %v2092 = vlaneseq
        %v2093 = vshrl.u32 %v2092, 7
        %v2094 = vsub.s32 3, %v2093
        %v2095 = vrot.slane %v874, %v2094
        %v2096 = vlaneseq
        %v2097 = vshrl.u32 %v2096, 7
        %v2098 = vsub.s32 4, %v2097
        %v2099 = vrot.slane %v874, %v2098
        %v2100 = vlaneseq
        %v2101 = vshrl.u32 %v2100, 7
        %v2102 = vsub.s32 5, %v2101
        %v2103 = vrot.slane %v874, %v2102
        %v2104 = vlaneseq
        %v2105 = vshrl.u32 %v2104, 7
        %v2106 = vsub.s32 6, %v2105
        %v2107 = vrot.slane %v874, %v2106
        %v2108 = vlaneseq
        %v2109 = vshrl.u32 %v2108, 7
        %v2110 = vsub.s32 7, %v2109
        %v2111 = vrot.slane %v874, %v2110
        %v2112 = vlaneseq
        %v2113 = vshrl.u32 %v2112, 7
        %v2114 = vsub.s32 0, %v2113
        %v2115 = vrot.slane %v876, %v2114
        %v2116 = vlaneseq
        %v2117 = vshrl.u32 %v2116, 7
        %v2118 = vsub.s32 1, %v2117
        %v2119 = vrot.slane %v876, %v2118
        %v2120 = vlaneseq
        %v2121 = vshrl.u32 %v2120, 7
        %v2122 = vsub.s32 2, %v2121
        %v2123 = vrot.slane %v876, %v2122
        %v2124 = vlaneseq
        %v2125 = vshrl.u32 %v2124, 7
        %v2126 = vsub.s32 3, %v2125
        %v2127 = vrot.slane %v876, %v2126
        %v2128 = vlaneseq
        %v2129 = vshrl.u32 %v2128, 7
        %v2130 = vsub.s32 4, %v2129
        %v2131 = vrot.slane %v876, %v2130
        %v2132 = vlaneseq
        %v2133 = vshrl.u32 %v2132, 7
        %v2134 = vsub.s32 5, %v2133
        %v2135 = vrot.slane %v876, %v2134
        %v2136 = vlaneseq
        %v2137 = vshrl.u32 %v2136, 7
        %v2138 = vsub.s32 6, %v2137
        %v2139 = vrot.slane %v876, %v2138
        %v2140 = vlaneseq
        %v2141 = vshrl.u32 %v2140, 7
        %v2142 = vsub.s32 7, %v2141
        %v2143 = vrot.slane %v876, %v2142
        %v2144 = vlaneseq
        %v2145 = vshrl.u32 %v2144, 7
        %v2146 = vsub.s32 0, %v2145
        %v2147 = vrot.slane %v878, %v2146
        %v2148 = vlaneseq
        %v2149 = vshrl.u32 %v2148, 7
        %v2150 = vsub.s32 1, %v2149
        %v2151 = vrot.slane %v878, %v2150
        %v2152 = vlaneseq
        %v2153 = vshrl.u32 %v2152, 7
        %v2154 = vsub.s32 2, %v2153
        %v2155 = vrot.slane %v878, %v2154
        %v2156 = vlaneseq
        %v2157 = vshrl.u32 %v2156, 7
        %v2158 = vsub.s32 3, %v2157
        %v2159 = vrot.slane %v878, %v2158
        %v2160 = vlaneseq
        %v2161 = vshrl.u32 %v2160, 7
        %v2162 = vsub.s32 4, %v2161
        %v2163 = vrot.slane %v878, %v2162
        %v2164 = vlaneseq
        %v2165 = vshrl.u32 %v2164, 7
        %v2166 = vsub.s32 5, %v2165
        %v2167 = vrot.slane %v878, %v2166
        %v2168 = vlaneseq
        %v2169 = vshrl.u32 %v2168, 7
        %v2170 = vsub.s32 6, %v2169
        %v2171 = vrot.slane %v878, %v2170
        %v2172 = vlaneseq
        %v2173 = vshrl.u32 %v2172, 7
        %v2174 = vsub.s32 7, %v2173
        %v2175 = vrot.slane %v878, %v2174
        %v2176 = vlaneseq
        %v2177 = vshrl.u32 %v2176, 7
        %v2178 = vsub.s32 0, %v2177
        %v2179 = vrot.slane %v880, %v2178
        %v2180 = vlaneseq
        %v2181 = vshrl.u32 %v2180, 7
        %v2182 = vsub.s32 1, %v2181
        %v2183 = vrot.slane %v880, %v2182
        %v2184 = vlaneseq
        %v2185 = vshrl.u32 %v2184, 7
        %v2186 = vsub.s32 2, %v2185
        %v2187 = vrot.slane %v880, %v2186
        %v2188 = vlaneseq
        %v2189 = vshrl.u32 %v2188, 7
        %v2190 = vsub.s32 3, %v2189
        %v2191 = vrot.slane %v880, %v2190
        %v2192 = vlaneseq
        %v2193 = vshrl.u32 %v2192, 7
        %v2194 = vsub.s32 4, %v2193
        %v2195 = vrot.slane %v880, %v2194
        %v2196 = vlaneseq
        %v2197 = vshrl.u32 %v2196, 7
        %v2198 = vsub.s32 5, %v2197
        %v2199 = vrot.slane %v880, %v2198
        %v2200 = vlaneseq
        %v2201 = vshrl.u32 %v2200, 7
        %v2202 = vsub.s32 6, %v2201
        %v2203 = vrot.slane %v880, %v2202
        %v2204 = vlaneseq
        %v2205 = vshrl.u32 %v2204, 7
        %v2206 = vsub.s32 7, %v2205
        %v2207 = vrot.slane %v880, %v2206
        %v2208 = vlaneseq
        %v2209 = vshrl.u32 %v2208, 7
        %v2210 = vsub.s32 0, %v2209
        %v2211 = vrot.slane %v882, %v2210
        %v2212 = vlaneseq
        %v2213 = vshrl.u32 %v2212, 7
        %v2214 = vsub.s32 1, %v2213
        %v2215 = vrot.slane %v882, %v2214
        %v2216 = vlaneseq
        %v2217 = vshrl.u32 %v2216, 7
        %v2218 = vsub.s32 2, %v2217
        %v2219 = vrot.slane %v882, %v2218
        %v2220 = vlaneseq
        %v2221 = vshrl.u32 %v2220, 7
        %v2222 = vsub.s32 3, %v2221
        %v2223 = vrot.slane %v882, %v2222
        %v2224 = vlaneseq
        %v2225 = vshrl.u32 %v2224, 7
        %v2226 = vsub.s32 4, %v2225
        %v2227 = vrot.slane %v882, %v2226
        %v2228 = vlaneseq
        %v2229 = vshrl.u32 %v2228, 7
        %v2230 = vsub.s32 5, %v2229
        %v2231 = vrot.slane %v882, %v2230
        %v2232 = vlaneseq
        %v2233 = vshrl.u32 %v2232, 7
        %v2234 = vsub.s32 6, %v2233
        %v2235 = vrot.slane %v882, %v2234
        %v2236 = vlaneseq
        %v2237 = vshrl.u32 %v2236, 7
        %v2238 = vsub.s32 7, %v2237
        %v2239 = vrot.slane %v882, %v2238
        %v2240 = vlaneseq
        %v2241 = vshrl.u32 %v2240, 7
        %v2242 = vsub.s32 0, %v2241
        %v2243 = vrot.slane %v884, %v2242
        %v2244 = vlaneseq
        %v2245 = vshrl.u32 %v2244, 7
        %v2246 = vsub.s32 1, %v2245
        %v2247 = vrot.slane %v884, %v2246
        %v2248 = vlaneseq
        %v2249 = vshrl.u32 %v2248, 7
        %v2250 = vsub.s32 2, %v2249
        %v2251 = vrot.slane %v884, %v2250
        %v2252 = vlaneseq
        %v2253 = vshrl.u32 %v2252, 7
        %v2254 = vsub.s32 3, %v2253
        %v2255 = vrot.slane %v884, %v2254
        %v2256 = vlaneseq
        %v2257 = vshrl.u32 %v2256, 7
        %v2258 = vsub.s32 4, %v2257
        %v2259 = vrot.slane %v884, %v2258
        %v2260 = vlaneseq
        %v2261 = vshrl.u32 %v2260, 7
        %v2262 = vsub.s32 5, %v2261
        %v2263 = vrot.slane %v884, %v2262
        %v2264 = vlaneseq
        %v2265 = vshrl.u32 %v2264, 7
        %v2266 = vsub.s32 6, %v2265
        %v2267 = vrot.slane %v884, %v2266
        %v2268 = vlaneseq
        %v2269 = vshrl.u32 %v2268, 7
        %v2270 = vsub.s32 7, %v2269
        %v2271 = vrot.slane %v884, %v2270
        %v2272 = vlaneseq
        %v2273 = vshrl.u32 %v2272, 7
        %v2274 = vsub.s32 0, %v2273
        %v2275 = vrot.slane %v886, %v2274
        %v2276 = vlaneseq
        %v2277 = vshrl.u32 %v2276, 7
        %v2278 = vsub.s32 1, %v2277
        %v2279 = vrot.slane %v886, %v2278
        %v2280 = vlaneseq
        %v2281 = vshrl.u32 %v2280, 7
        %v2282 = vsub.s32 2, %v2281
        %v2283 = vrot.slane %v886, %v2282
        %v2284 = vlaneseq
        %v2285 = vshrl.u32 %v2284, 7
        %v2286 = vsub.s32 3, %v2285
        %v2287 = vrot.slane %v886, %v2286
        %v2288 = vlaneseq
        %v2289 = vshrl.u32 %v2288, 7
        %v2290 = vsub.s32 4, %v2289
        %v2291 = vrot.slane %v886, %v2290
        %v2292 = vlaneseq
        %v2293 = vshrl.u32 %v2292, 7
        %v2294 = vsub.s32 5, %v2293
        %v2295 = vrot.slane %v886, %v2294
        %v2296 = vlaneseq
        %v2297 = vshrl.u32 %v2296, 7
        %v2298 = vsub.s32 6, %v2297
        %v2299 = vrot.slane %v886, %v2298
        %v2300 = vlaneseq
        %v2301 = vshrl.u32 %v2300, 7
        %v2302 = vsub.s32 7, %v2301
        %v2303 = vrot.slane %v886, %v2302
        %v2304 = vlaneseq
        %v2305 = vshrl.u32 %v2304, 7
        %v2306 = vsub.s32 0, %v2305
        %v2307 = vrot.slane %v888, %v2306
        %v2308 = vlaneseq
        %v2309 = vshrl.u32 %v2308, 7
        %v2310 = vsub.s32 1, %v2309
        %v2311 = vrot.slane %v888, %v2310
        %v2312 = vlaneseq
        %v2313 = vshrl.u32 %v2312, 7
        %v2314 = vsub.s32 2, %v2313
        %v2315 = vrot.slane %v888, %v2314
        %v2316 = vlaneseq
        %v2317 = vshrl.u32 %v2316, 7
        %v2318 = vsub.s32 3, %v2317
        %v2319 = vrot.slane %v888, %v2318
        %v2320 = vlaneseq
        %v2321 = vshrl.u32 %v2320, 7
        %v2322 = vsub.s32 4, %v2321
        %v2323 = vrot.slane %v888, %v2322
        %v2324 = vlaneseq
        %v2325 = vshrl.u32 %v2324, 7
        %v2326 = vsub.s32 5, %v2325
        %v2327 = vrot.slane %v888, %v2326
        %v2328 = vlaneseq
        %v2329 = vshrl.u32 %v2328, 7
        %v2330 = vsub.s32 6, %v2329
        %v2331 = vrot.slane %v888, %v2330
        %v2332 = vlaneseq
        %v2333 = vshrl.u32 %v2332, 7
        %v2334 = vsub.s32 7, %v2333
        %v2335 = vrot.slane %v888, %v2334
        %v2336 = vlaneseq
        %v2337 = vshrl.u32 %v2336, 7
        %v2338 = vsub.s32 0, %v2337
        %v2339 = vrot.slane %v890, %v2338
        %v2340 = vlaneseq
        %v2341 = vshrl.u32 %v2340, 7
        %v2342 = vsub.s32 1, %v2341
        %v2343 = vrot.slane %v890, %v2342
        %v2344 = vlaneseq
        %v2345 = vshrl.u32 %v2344, 7
        %v2346 = vsub.s32 2, %v2345
        %v2347 = vrot.slane %v890, %v2346
        %v2348 = vlaneseq
        %v2349 = vshrl.u32 %v2348, 7
        %v2350 = vsub.s32 3, %v2349
        %v2351 = vrot.slane %v890, %v2350
        %v2352 = vlaneseq
        %v2353 = vshrl.u32 %v2352, 7
        %v2354 = vsub.s32 4, %v2353
        %v2355 = vrot.slane %v890, %v2354
        %v2356 = vlaneseq
        %v2357 = vshrl.u32 %v2356, 7
        %v2358 = vsub.s32 5, %v2357
        %v2359 = vrot.slane %v890, %v2358
        %v2360 = vlaneseq
        %v2361 = vshrl.u32 %v2360, 7
        %v2362 = vsub.s32 6, %v2361
        %v2363 = vrot.slane %v890, %v2362
        %v2364 = vlaneseq
        %v2365 = vshrl.u32 %v2364, 7
        %v2366 = vsub.s32 7, %v2365
        %v2367 = vrot.slane %v890, %v2366
        %v2368 = vlaneseq
        %v2369 = vshrl.u32 %v2368, 7
        %v2370 = vsub.s32 0, %v2369
        %v2371 = vrot.slane %v892, %v2370
        %v2372 = vlaneseq
        %v2373 = vshrl.u32 %v2372, 7
        %v2374 = vsub.s32 1, %v2373
        %v2375 = vrot.slane %v892, %v2374
        %v2376 = vlaneseq
        %v2377 = vshrl.u32 %v2376, 7
        %v2378 = vsub.s32 2, %v2377
        %v2379 = vrot.slane %v892, %v2378
        %v2380 = vlaneseq
        %v2381 = vshrl.u32 %v2380, 7
        %v2382 = vsub.s32 3, %v2381
        %v2383 = vrot.slane %v892, %v2382
        %v2384 = vlaneseq
        %v2385 = vshrl.u32 %v2384, 7
        %v2386 = vsub.s32 4, %v2385
        %v2387 = vrot.slane %v892, %v2386
        %v2388 = vlaneseq
        %v2389 = vshrl.u32 %v2388, 7
        %v2390 = vsub.s32 5, %v2389
        %v2391 = vrot.slane %v892, %v2390
        %v2392 = vlaneseq
        %v2393 = vshrl.u32 %v2392, 7
        %v2394 = vsub.s32 6, %v2393
        %v2395 = vrot.slane %v892, %v2394
        %v2396 = vlaneseq
        %v2397 = vshrl.u32 %v2396, 7
        %v2398 = vsub.s32 7, %v2397
        %v2399 = vrot.slane %v892, %v2398
        %v2400 = vlaneseq
        %v2401 = vshrl.u32 %v2400, 7
        %v2402 = vsub.s32 0, %v2401
        %v2403 = vrot.slane %v894, %v2402
        %v2404 = vlaneseq
        %v2405 = vshrl.u32 %v2404, 7
        %v2406 = vsub.s32 1, %v2405
        %v2407 = vrot.slane %v894, %v2406
        %v2408 = vlaneseq
        %v2409 = vshrl.u32 %v2408, 7
        %v2410 = vsub.s32 2, %v2409
        %v2411 = vrot.slane %v894, %v2410
        %v2412 = vlaneseq
        %v2413 = vshrl.u32 %v2412, 7
        %v2414 = vsub.s32 3, %v2413
        %v2415 = vrot.slane %v894, %v2414
        %v2416 = vlaneseq
        %v2417 = vshrl.u32 %v2416, 7
        %v2418 = vsub.s32 4, %v2417
        %v2419 = vrot.slane %v894, %v2418
        %v2420 = vlaneseq
        %v2421 = vshrl.u32 %v2420, 7
        %v2422 = vsub.s32 5, %v2421
        %v2423 = vrot.slane %v894, %v2422
        %v2424 = vlaneseq
        %v2425 = vshrl.u32 %v2424, 7
        %v2426 = vsub.s32 6, %v2425
        %v2427 = vrot.slane %v894, %v2426
        %v2428 = vlaneseq
        %v2429 = vshrl.u32 %v2428, 7
        %v2430 = vsub.s32 7, %v2429
        %v2431 = vrot.slane %v894, %v2430
        %v2432 = vlaneseq
        %v2433 = vshrl.u32 %v2432, 7
        %v2434 = vsub.s32 0, %v2433
        %v2435 = vrot.slane %v896, %v2434
        %v2436 = vlaneseq
        %v2437 = vshrl.u32 %v2436, 7
        %v2438 = vsub.s32 1, %v2437
        %v2439 = vrot.slane %v896, %v2438
        %v2440 = vlaneseq
        %v2441 = vshrl.u32 %v2440, 7
        %v2442 = vsub.s32 2, %v2441
        %v2443 = vrot.slane %v896, %v2442
        %v2444 = vlaneseq
        %v2445 = vshrl.u32 %v2444, 7
        %v2446 = vsub.s32 3, %v2445
        %v2447 = vrot.slane %v896, %v2446
        %v2448 = vlaneseq
        %v2449 = vshrl.u32 %v2448, 7
        %v2450 = vsub.s32 4, %v2449
        %v2451 = vrot.slane %v896, %v2450
        %v2452 = vlaneseq
        %v2453 = vshrl.u32 %v2452, 7
        %v2454 = vsub.s32 5, %v2453
        %v2455 = vrot.slane %v896, %v2454
        %v2456 = vlaneseq
        %v2457 = vshrl.u32 %v2456, 7
        %v2458 = vsub.s32 6, %v2457
        %v2459 = vrot.slane %v896, %v2458
        %v2460 = vlaneseq
        %v2461 = vshrl.u32 %v2460, 7
        %v2462 = vsub.s32 7, %v2461
        %v2463 = vrot.slane %v896, %v2462
        %v2464 = vlaneseq
        %v2465 = vshrl.u32 %v2464, 7
        %v2466 = vsub.s32 0, %v2465
        %v2467 = vrot.slane %v898, %v2466
        %v2468 = vlaneseq
        %v2469 = vshrl.u32 %v2468, 7
        %v2470 = vsub.s32 1, %v2469
        %v2471 = vrot.slane %v898, %v2470
        %v2472 = vlaneseq
        %v2473 = vshrl.u32 %v2472, 7
        %v2474 = vsub.s32 2, %v2473
        %v2475 = vrot.slane %v898, %v2474
        %v2476 = vlaneseq
        %v2477 = vshrl.u32 %v2476, 7
        %v2478 = vsub.s32 3, %v2477
        %v2479 = vrot.slane %v898, %v2478
        %v2480 = vlaneseq
        %v2481 = vshrl.u32 %v2480, 7
        %v2482 = vsub.s32 4, %v2481
        %v2483 = vrot.slane %v898, %v2482
        %v2484 = vlaneseq
        %v2485 = vshrl.u32 %v2484, 7
        %v2486 = vsub.s32 5, %v2485
        %v2487 = vrot.slane %v898, %v2486
        %v2488 = vlaneseq
        %v2489 = vshrl.u32 %v2488, 7
        %v2490 = vsub.s32 6, %v2489
        %v2491 = vrot.slane %v898, %v2490
        %v2492 = vlaneseq
        %v2493 = vshrl.u32 %v2492, 7
        %v2494 = vsub.s32 7, %v2493
        %v2495 = vrot.slane %v898, %v2494
        %v2496 = vlaneseq
        %v2497 = vshrl.u32 %v2496, 7
        %v2498 = vsub.s32 0, %v2497
        %v2499 = vrot.slane %v900, %v2498
        %v2500 = vlaneseq
        %v2501 = vshrl.u32 %v2500, 7
        %v2502 = vsub.s32 1, %v2501
        %v2503 = vrot.slane %v900, %v2502
        %v2504 = vlaneseq
        %v2505 = vshrl.u32 %v2504, 7
        %v2506 = vsub.s32 2, %v2505
        %v2507 = vrot.slane %v900, %v2506
        %v2508 = vlaneseq
        %v2509 = vshrl.u32 %v2508, 7
        %v2510 = vsub.s32 3, %v2509
        %v2511 = vrot.slane %v900, %v2510
        %v2512 = vlaneseq
        %v2513 = vshrl.u32 %v2512, 7
        %v2514 = vsub.s32 4, %v2513
        %v2515 = vrot.slane %v900, %v2514
        %v2516 = vlaneseq
        %v2517 = vshrl.u32 %v2516, 7
        %v2518 = vsub.s32 5, %v2517
        %v2519 = vrot.slane %v900, %v2518
        %v2520 = vlaneseq
        %v2521 = vshrl.u32 %v2520, 7
        %v2522 = vsub.s32 6, %v2521
        %v2523 = vrot.slane %v900, %v2522
        %v2524 = vlaneseq
        %v2525 = vshrl.u32 %v2524, 7
        %v2526 = vsub.s32 7, %v2525
        %v2527 = vrot.slane %v900, %v2526
        %v2528 = vlaneseq
        %v2529 = vshrl.u32 %v2528, 7
        %v2530 = vsub.s32 0, %v2529
        %v2531 = vrot.slane %v902, %v2530
        %v2532 = vlaneseq
        %v2533 = vshrl.u32 %v2532, 7
        %v2534 = vsub.s32 1, %v2533
        %v2535 = vrot.slane %v902, %v2534
        %v2536 = vlaneseq
        %v2537 = vshrl.u32 %v2536, 7
        %v2538 = vsub.s32 2, %v2537
        %v2539 = vrot.slane %v902, %v2538
        %v2540 = vlaneseq
        %v2541 = vshrl.u32 %v2540, 7
        %v2542 = vsub.s32 3, %v2541
        %v2543 = vrot.slane %v902, %v2542
        %v2544 = vlaneseq
        %v2545 = vshrl.u32 %v2544, 7
        %v2546 = vsub.s32 4, %v2545
        %v2547 = vrot.slane %v902, %v2546
        %v2548 = vlaneseq
        %v2549 = vshrl.u32 %v2548, 7
        %v2550 = vsub.s32 5, %v2549
        %v2551 = vrot.slane %v902, %v2550
        %v2552 = vlaneseq
        %v2553 = vshrl.u32 %v2552, 7
        %v2554 = vsub.s32 6, %v2553
        %v2555 = vrot.slane %v902, %v2554
        %v2556 = vlaneseq
        %v2557 = vshrl.u32 %v2556, 7
        %v2558 = vsub.s32 7, %v2557
        %v2559 = vrot.slane %v902, %v2558
        %v2560 = vlaneseq
        %v2561 = vshrl.u32 %v2560, 7
        %v2562 = vsub.s32 0, %v2561
        %v2563 = vrot.slane %v904, %v2562
        %v2564 = vlaneseq
        %v2565 = vshrl.u32 %v2564, 7
        %v2566 = vsub.s32 1, %v2565
        %v2567 = vrot.slane %v904, %v2566
        %v2568 = vlaneseq
        %v2569 = vshrl.u32 %v2568, 7
        %v2570 = vsub.s32 2, %v2569
        %v2571 = vrot.slane %v904, %v2570
        %v2572 = vlaneseq
        %v2573 = vshrl.u32 %v2572, 7
        %v2574 = vsub.s32 3, %v2573
        %v2575 = vrot.slane %v904, %v2574
        %v2576 = vlaneseq
        %v2577 = vshrl.u32 %v2576, 7
        %v2578 = vsub.s32 4, %v2577
        %v2579 = vrot.slane %v904, %v2578
        %v2580 = vlaneseq
        %v2581 = vshrl.u32 %v2580, 7
        %v2582 = vsub.s32 5, %v2581
        %v2583 = vrot.slane %v904, %v2582
        %v2584 = vlaneseq
        %v2585 = vshrl.u32 %v2584, 7
        %v2586 = vsub.s32 6, %v2585
        %v2587 = vrot.slane %v904, %v2586
        %v2588 = vlaneseq
        %v2589 = vshrl.u32 %v2588, 7
        %v2590 = vsub.s32 7, %v2589
        %v2591 = vrot.slane %v904, %v2590
        %v2592 = vlaneseq
        %v2593 = vshrl.u32 %v2592, 7
        %v2594 = vsub.s32 0, %v2593
        %v2595 = vrot.slane %v906, %v2594
        %v2596 = vlaneseq
        %v2597 = vshrl.u32 %v2596, 7
        %v2598 = vsub.s32 1, %v2597
        %v2599 = vrot.slane %v906, %v2598
        %v2600 = vlaneseq
        %v2601 = vshrl.u32 %v2600, 7
        %v2602 = vsub.s32 2, %v2601
        %v2603 = vrot.slane %v906, %v2602
        %v2604 = vlaneseq
        %v2605 = vshrl.u32 %v2604, 7
        %v2606 = vsub.s32 3, %v2605
        %v2607 = vrot.slane %v906, %v2606
        %v2608 = vlaneseq
        %v2609 = vshrl.u32 %v2608, 7
        %v2610 = vsub.s32 4, %v2609
        %v2611 = vrot.slane %v906, %v2610
        %v2612 = vlaneseq
        %v2613 = vshrl.u32 %v2612, 7
        %v2614 = vsub.s32 5, %v2613
        %v2615 = vrot.slane %v906, %v2614
        %v2616 = vlaneseq
        %v2617 = vshrl.u32 %v2616, 7
        %v2618 = vsub.s32 6, %v2617
        %v2619 = vrot.slane %v906, %v2618
        %v2620 = vlaneseq
        %v2621 = vshrl.u32 %v2620, 7
        %v2622 = vsub.s32 7, %v2621
        %v2623 = vrot.slane %v906, %v2622
        %v2624 = vlaneseq
        %v2625 = vshrl.u32 %v2624, 7
        %v2626 = vsub.s32 0, %v2625
        %v2627 = vrot.slane %v908, %v2626
        %v2628 = vlaneseq
        %v2629 = vshrl.u32 %v2628, 7
        %v2630 = vsub.s32 1, %v2629
        %v2631 = vrot.slane %v908, %v2630
        %v2632 = vlaneseq
        %v2633 = vshrl.u32 %v2632, 7
        %v2634 = vsub.s32 2, %v2633
        %v2635 = vrot.slane %v908, %v2634
        %v2636 = vlaneseq
        %v2637 = vshrl.u32 %v2636, 7
        %v2638 = vsub.s32 3, %v2637
        %v2639 = vrot.slane %v908, %v2638
        %v2640 = vlaneseq
        %v2641 = vshrl.u32 %v2640, 7
        %v2642 = vsub.s32 4, %v2641
        %v2643 = vrot.slane %v908, %v2642
        %v2644 = vlaneseq
        %v2645 = vshrl.u32 %v2644, 7
        %v2646 = vsub.s32 5, %v2645
        %v2647 = vrot.slane %v908, %v2646
        %v2648 = vlaneseq
        %v2649 = vshrl.u32 %v2648, 7
        %v2650 = vsub.s32 6, %v2649
        %v2651 = vrot.slane %v908, %v2650
        %v2652 = vlaneseq
        %v2653 = vshrl.u32 %v2652, 7
        %v2654 = vsub.s32 7, %v2653
        %v2655 = vrot.slane %v908, %v2654
        %v2656 = vlaneseq
        %v2657 = vshrl.u32 %v2656, 7
        %v2658 = vsub.s32 0, %v2657
        %v2659 = vrot.slane %v910, %v2658
        %v2660 = vlaneseq
        %v2661 = vshrl.u32 %v2660, 7
        %v2662 = vsub.s32 1, %v2661
        %v2663 = vrot.slane %v910, %v2662
        %v2664 = vlaneseq
        %v2665 = vshrl.u32 %v2664, 7
        %v2666 = vsub.s32 2, %v2665
        %v2667 = vrot.slane %v910, %v2666
        %v2668 = vlaneseq
        %v2669 = vshrl.u32 %v2668, 7
        %v2670 = vsub.s32 3, %v2669
        %v2671 = vrot.slane %v910, %v2670
        %v2672 = vlaneseq
        %v2673 = vshrl.u32 %v2672, 7
        %v2674 = vsub.s32 4, %v2673
        %v2675 = vrot.slane %v910, %v2674
        %v2676 = vlaneseq
        %v2677 = vshrl.u32 %v2676, 7
        %v2678 = vsub.s32 5, %v2677
        %v2679 = vrot.slane %v910, %v2678
        %v2680 = vlaneseq
        %v2681 = vshrl.u32 %v2680, 7
        %v2682 = vsub.s32 6, %v2681
        %v2683 = vrot.slane %v910, %v2682
        %v2684 = vlaneseq
        %v2685 = vshrl.u32 %v2684, 7
        %v2686 = vsub.s32 7, %v2685
        %v2687 = vrot.slane %v910, %v2686
        %v2688 = vlaneseq
        %v2689 = vshrl.u32 %v2688, 7
        %v2690 = vsub.s32 0, %v2689
        %v2691 = vrot.slane %v912, %v2690
        %v2692 = vlaneseq
        %v2693 = vshrl.u32 %v2692, 7
        %v2694 = vsub.s32 1, %v2693
        %v2695 = vrot.slane %v912, %v2694
        %v2696 = vlaneseq
        %v2697 = vshrl.u32 %v2696, 7
        %v2698 = vsub.s32 2, %v2697
        %v2699 = vrot.slane %v912, %v2698
        %v2700 = vlaneseq
        %v2701 = vshrl.u32 %v2700, 7
        %v2702 = vsub.s32 3, %v2701
        %v2703 = vrot.slane %v912, %v2702
        %v2704 = vlaneseq
        %v2705 = vshrl.u32 %v2704, 7
        %v2706 = vsub.s32 4, %v2705
        %v2707 = vrot.slane %v912, %v2706
        %v2708 = vlaneseq
        %v2709 = vshrl.u32 %v2708, 7
        %v2710 = vsub.s32 5, %v2709
        %v2711 = vrot.slane %v912, %v2710
        %v2712 = vlaneseq
        %v2713 = vshrl.u32 %v2712, 7
        %v2714 = vsub.s32 6, %v2713
        %v2715 = vrot.slane %v912, %v2714
        %v2716 = vlaneseq
        %v2717 = vshrl.u32 %v2716, 7
        %v2718 = vsub.s32 7, %v2717
        %v2719 = vrot.slane %v912, %v2718
        %v2720 = vlaneseq
        %v2721 = vshrl.u32 %v2720, 7
        %v2722 = vsub.s32 0, %v2721
        %v2723 = vrot.slane %v914, %v2722
        %v2724 = vlaneseq
        %v2725 = vshrl.u32 %v2724, 7
        %v2726 = vsub.s32 1, %v2725
        %v2727 = vrot.slane %v914, %v2726
        %v2728 = vlaneseq
        %v2729 = vshrl.u32 %v2728, 7
        %v2730 = vsub.s32 2, %v2729
        %v2731 = vrot.slane %v914, %v2730
        %v2732 = vlaneseq
        %v2733 = vshrl.u32 %v2732, 7
        %v2734 = vsub.s32 3, %v2733
        %v2735 = vrot.slane %v914, %v2734
        %v2736 = vlaneseq
        %v2737 = vshrl.u32 %v2736, 7
        %v2738 = vsub.s32 4, %v2737
        %v2739 = vrot.slane %v914, %v2738
        %v2740 = vlaneseq
        %v2741 = vshrl.u32 %v2740, 7
        %v2742 = vsub.s32 5, %v2741
        %v2743 = vrot.slane %v914, %v2742
        %v2744 = vlaneseq
        %v2745 = vshrl.u32 %v2744, 7
        %v2746 = vsub.s32 6, %v2745
        %v2747 = vrot.slane %v914, %v2746
        %v2748 = vlaneseq
        %v2749 = vshrl.u32 %v2748, 7
        %v2750 = vsub.s32 7, %v2749
        %v2751 = vrot.slane %v914, %v2750
        %v2752 = vlaneseq
        %v2753 = vshrl.u32 %v2752, 7
        %v2754 = vsub.s32 0, %v2753
        %v2755 = vrot.slane %v916, %v2754
        %v2756 = vlaneseq
        %v2757 = vshrl.u32 %v2756, 7
        %v2758 = vsub.s32 1, %v2757
        %v2759 = vrot.slane %v916, %v2758
        %v2760 = vlaneseq
        %v2761 = vshrl.u32 %v2760, 7
        %v2762 = vsub.s32 2, %v2761
        %v2763 = vrot.slane %v916, %v2762
        %v2764 = vlaneseq
        %v2765 = vshrl.u32 %v2764, 7
        %v2766 = vsub.s32 3, %v2765
        %v2767 = vrot.slane %v916, %v2766
        %v2768 = vlaneseq
        %v2769 = vshrl.u32 %v2768, 7
        %v2770 = vsub.s32 4, %v2769
        %v2771 = vrot.slane %v916, %v2770
        %v2772 = vlaneseq
        %v2773 = vshrl.u32 %v2772, 7
        %v2774 = vsub.s32 5, %v2773
        %v2775 = vrot.slane %v916, %v2774
        %v2776 = vlaneseq
        %v2777 = vshrl.u32 %v2776, 7
        %v2778 = vsub.s32 6, %v2777
        %v2779 = vrot.slane %v916, %v2778
        %v2780 = vlaneseq
        %v2781 = vshrl.u32 %v2780, 7
        %v2782 = vsub.s32 7, %v2781
        %v2783 = vrot.slane %v916, %v2782
        %v2784 = vlaneseq
        %v2785 = vshrl.u32 %v2784, 7
        %v2786 = vsub.s32 0, %v2785
        %v2787 = vrot.slane %v918, %v2786
        %v2788 = vlaneseq
        %v2789 = vshrl.u32 %v2788, 7
        %v2790 = vsub.s32 1, %v2789
        %v2791 = vrot.slane %v918, %v2790
        %v2792 = vlaneseq
        %v2793 = vshrl.u32 %v2792, 7
        %v2794 = vsub.s32 2, %v2793
        %v2795 = vrot.slane %v918, %v2794
        %v2796 = vlaneseq
        %v2797 = vshrl.u32 %v2796, 7
        %v2798 = vsub.s32 3, %v2797
        %v2799 = vrot.slane %v918, %v2798
        %v2800 = vlaneseq
        %v2801 = vshrl.u32 %v2800, 7
        %v2802 = vsub.s32 4, %v2801
        %v2803 = vrot.slane %v918, %v2802
        %v2804 = vlaneseq
        %v2805 = vshrl.u32 %v2804, 7
        %v2806 = vsub.s32 5, %v2805
        %v2807 = vrot.slane %v918, %v2806
        %v2808 = vlaneseq
        %v2809 = vshrl.u32 %v2808, 7
        %v2810 = vsub.s32 6, %v2809
        %v2811 = vrot.slane %v918, %v2810
        %v2812 = vlaneseq
        %v2813 = vshrl.u32 %v2812, 7
        %v2814 = vsub.s32 7, %v2813
        %v2815 = vrot.slane %v918, %v2814
        %v2816 = vlaneseq
        %v2817 = vshrl.u32 %v2816, 7
        %v2818 = vsub.s32 0, %v2817
        %v2819 = vrot.slane %v920, %v2818
        %v2820 = vlaneseq
        %v2821 = vshrl.u32 %v2820, 7
        %v2822 = vsub.s32 1, %v2821
        %v2823 = vrot.slane %v920, %v2822
        %v2824 = vlaneseq
        %v2825 = vshrl.u32 %v2824, 7
        %v2826 = vsub.s32 2, %v2825
        %v2827 = vrot.slane %v920, %v2826
        %v2828 = vlaneseq
        %v2829 = vshrl.u32 %v2828, 7
        %v2830 = vsub.s32 3, %v2829
        %v2831 = vrot.slane %v920, %v2830
        %v2832 = vlaneseq
        %v2833 = vshrl.u32 %v2832, 7
        %v2834 = vsub.s32 4, %v2833
        %v2835 = vrot.slane %v920, %v2834
        %v2836 = vlaneseq
        %v2837 = vshrl.u32 %v2836, 7
        %v2838 = vsub.s32 5, %v2837
        %v2839 = vrot.slane %v920, %v2838
        %v2840 = vlaneseq
        %v2841 = vshrl.u32 %v2840, 7
        %v2842 = vsub.s32 6, %v2841
        %v2843 = vrot.slane %v920, %v2842
        %v2844 = vlaneseq
        %v2845 = vshrl.u32 %v2844, 7
        %v2846 = vsub.s32 7, %v2845
        %v2847 = vrot.slane %v920, %v2846
        %v2848 = vlaneseq
        %v2849 = vshrl.u32 %v2848, 7
        %v2850 = vsub.s32 0, %v2849
        %v2851 = vrot.slane %v922, %v2850
        %v2852 = vlaneseq
        %v2853 = vshrl.u32 %v2852, 7
        %v2854 = vsub.s32 1, %v2853
        %v2855 = vrot.slane %v922, %v2854
        %v2856 = vlaneseq
        %v2857 = vshrl.u32 %v2856, 7
        %v2858 = vsub.s32 2, %v2857
        %v2859 = vrot.slane %v922, %v2858
        %v2860 = vlaneseq
        %v2861 = vshrl.u32 %v2860, 7
        %v2862 = vsub.s32 3, %v2861
        %v2863 = vrot.slane %v922, %v2862
        %v2864 = vlaneseq
        %v2865 = vshrl.u32 %v2864, 7
        %v2866 = vsub.s32 4, %v2865
        %v2867 = vrot.slane %v922, %v2866
        %v2868 = vlaneseq
        %v2869 = vshrl.u32 %v2868, 7
        %v2870 = vsub.s32 5, %v2869
        %v2871 = vrot.slane %v922, %v2870
        %v2872 = vlaneseq
        %v2873 = vshrl.u32 %v2872, 7
        %v2874 = vsub.s32 6, %v2873
        %v2875 = vrot.slane %v922, %v2874
        %v2876 = vlaneseq
        %v2877 = vshrl.u32 %v2876, 7
        %v2878 = vsub.s32 7, %v2877
        %v2879 = vrot.slane %v922, %v2878
        %v2880 = vlaneseq
        %v2881 = vshrl.u32 %v2880, 7
        %v2882 = vsub.s32 0, %v2881
        %v2883 = vrot.slane %v924, %v2882
        %v2884 = vlaneseq
        %v2885 = vshrl.u32 %v2884, 7
        %v2886 = vsub.s32 1, %v2885
        %v2887 = vrot.slane %v924, %v2886
        %v2888 = vlaneseq
        %v2889 = vshrl.u32 %v2888, 7
        %v2890 = vsub.s32 2, %v2889
        %v2891 = vrot.slane %v924, %v2890
        %v2892 = vlaneseq
        %v2893 = vshrl.u32 %v2892, 7
        %v2894 = vsub.s32 3, %v2893
        %v2895 = vrot.slane %v924, %v2894
        %v2896 = vlaneseq
        %v2897 = vshrl.u32 %v2896, 7
        %v2898 = vsub.s32 4, %v2897
        %v2899 = vrot.slane %v924, %v2898
        %v2900 = vlaneseq
        %v2901 = vshrl.u32 %v2900, 7
        %v2902 = vsub.s32 5, %v2901
        %v2903 = vrot.slane %v924, %v2902
        %v2904 = vlaneseq
        %v2905 = vshrl.u32 %v2904, 7
        %v2906 = vsub.s32 6, %v2905
        %v2907 = vrot.slane %v924, %v2906
        %v2908 = vlaneseq
        %v2909 = vshrl.u32 %v2908, 7
        %v2910 = vsub.s32 7, %v2909
        %v2911 = vrot.slane %v924, %v2910
        %v2912 = vlaneseq
        %v2913 = vshrl.u32 %v2912, 7
        %v2914 = vsub.s32 0, %v2913
        %v2915 = vrot.slane %v926, %v2914
        %v2916 = vlaneseq
        %v2917 = vshrl.u32 %v2916, 7
        %v2918 = vsub.s32 1, %v2917
        %v2919 = vrot.slane %v926, %v2918
        %v2920 = vlaneseq
        %v2921 = vshrl.u32 %v2920, 7
        %v2922 = vsub.s32 2, %v2921
        %v2923 = vrot.slane %v926, %v2922
        %v2924 = vlaneseq
        %v2925 = vshrl.u32 %v2924, 7
        %v2926 = vsub.s32 3, %v2925
        %v2927 = vrot.slane %v926, %v2926
        %v2928 = vlaneseq
        %v2929 = vshrl.u32 %v2928, 7
        %v2930 = vsub.s32 4, %v2929
        %v2931 = vrot.slane %v926, %v2930
        %v2932 = vlaneseq
        %v2933 = vshrl.u32 %v2932, 7
        %v2934 = vsub.s32 5, %v2933
        %v2935 = vrot.slane %v926, %v2934
        %v2936 = vlaneseq
        %v2937 = vshrl.u32 %v2936, 7
        %v2938 = vsub.s32 6, %v2937
        %v2939 = vrot.slane %v926, %v2938
        %v2940 = vlaneseq
        %v2941 = vshrl.u32 %v2940, 7
        %v2942 = vsub.s32 7, %v2941
        %v2943 = vrot.slane %v926, %v2942
        %v2944 = vlaneseq
        %v2945 = vshrl.u32 %v2944, 7
        %v2946 = vsub.s32 0, %v2945
        %v2947 = vrot.slane %v928, %v2946
        %v2948 = vlaneseq
        %v2949 = vshrl.u32 %v2948, 7
        %v2950 = vsub.s32 1, %v2949
        %v2951 = vrot.slane %v928, %v2950
        %v2952 = vlaneseq
        %v2953 = vshrl.u32 %v2952, 7
        %v2954 = vsub.s32 2, %v2953
        %v2955 = vrot.slane %v928, %v2954
        %v2956 = vlaneseq
        %v2957 = vshrl.u32 %v2956, 7
        %v2958 = vsub.s32 3, %v2957
        %v2959 = vrot.slane %v928, %v2958
        %v2960 = vlaneseq
        %v2961 = vshrl.u32 %v2960, 7
        %v2962 = vsub.s32 4, %v2961
        %v2963 = vrot.slane %v928, %v2962
        %v2964 = vlaneseq
        %v2965 = vshrl.u32 %v2964, 7
        %v2966 = vsub.s32 5, %v2965
        %v2967 = vrot.slane %v928, %v2966
        %v2968 = vlaneseq
        %v2969 = vshrl.u32 %v2968, 7
        %v2970 = vsub.s32 6, %v2969
        %v2971 = vrot.slane %v928, %v2970
        %v2972 = vlaneseq
        %v2973 = vshrl.u32 %v2972, 7
        %v2974 = vsub.s32 7, %v2973
        %v2975 = vrot.slane %v928, %v2974
        %v2976 = vlaneseq
        %v2977 = vshrl.u32 %v2976, 7
        %v2978 = vsub.s32 0, %v2977
        %v2979 = vrot.slane %v930, %v2978
        %v2980 = vlaneseq
        %v2981 = vshrl.u32 %v2980, 7
        %v2982 = vsub.s32 1, %v2981
        %v2983 = vrot.slane %v930, %v2982
        %v2984 = vlaneseq
        %v2985 = vshrl.u32 %v2984, 7
        %v2986 = vsub.s32 2, %v2985
        %v2987 = vrot.slane %v930, %v2986
        %v2988 = vlaneseq
        %v2989 = vshrl.u32 %v2988, 7
        %v2990 = vsub.s32 3, %v2989
        %v2991 = vrot.slane %v930, %v2990
        %v2992 = vlaneseq
        %v2993 = vshrl.u32 %v2992, 7
        %v2994 = vsub.s32 4, %v2993
        %v2995 = vrot.slane %v930, %v2994
        %v2996 = vlaneseq
        %v2997 = vshrl.u32 %v2996, 7
        %v2998 = vsub.s32 5, %v2997
        %v2999 = vrot.slane %v930, %v2998
        %v3000 = vlaneseq
        %v3001 = vshrl.u32 %v3000, 7
        %v3002 = vsub.s32 6, %v3001
        %v3003 = vrot.slane %v930, %v3002
        %v3004 = vlaneseq
        %v3005 = vshrl.u32 %v3004, 7
        %v3006 = vsub.s32 7, %v3005
        %v3007 = vrot.slane %v930, %v3006
        %v3008 = vlaneseq
        %v3009 = vshrl.u32 %v3008, 7
        %v3010 = vsub.s32 0, %v3009
        %v3011 = vrot.slane %v932, %v3010
        %v3012 = vlaneseq
        %v3013 = vshrl.u32 %v3012, 7
        %v3014 = vsub.s32 1, %v3013
        %v3015 = vrot.slane %v932, %v3014
        %v3016 = vlaneseq
        %v3017 = vshrl.u32 %v3016, 7
        %v3018 = vsub.s32 2, %v3017
        %v3019 = vrot.slane %v932, %v3018
        %v3020 = vlaneseq
        %v3021 = vshrl.u32 %v3020, 7
        %v3022 = vsub.s32 3, %v3021
        %v3023 = vrot.slane %v932, %v3022
        %v3024 = vlaneseq
        %v3025 = vshrl.u32 %v3024, 7
        %v3026 = vsub.s32 4, %v3025
        %v3027 = vrot.slane %v932, %v3026
        %v3028 = vlaneseq
        %v3029 = vshrl.u32 %v3028, 7
        %v3030 = vsub.s32 5, %v3029
        %v3031 = vrot.slane %v932, %v3030
        %v3032 = vlaneseq
        %v3033 = vshrl.u32 %v3032, 7
        %v3034 = vsub.s32 6, %v3033
        %v3035 = vrot.slane %v932, %v3034
        %v3036 = vlaneseq
        %v3037 = vshrl.u32 %v3036, 7
        %v3038 = vsub.s32 7, %v3037
        %v3039 = vrot.slane %v932, %v3038
        %v3040 = vlaneseq
        %v3041 = vshrl.u32 %v3040, 7
        %v3042 = vsub.s32 0, %v3041
        %v3043 = vrot.slane %v934, %v3042
        %v3044 = vlaneseq
        %v3045 = vshrl.u32 %v3044, 7
        %v3046 = vsub.s32 1, %v3045
        %v3047 = vrot.slane %v934, %v3046
        %v3048 = vlaneseq
        %v3049 = vshrl.u32 %v3048, 7
        %v3050 = vsub.s32 2, %v3049
        %v3051 = vrot.slane %v934, %v3050
        %v3052 = vlaneseq
        %v3053 = vshrl.u32 %v3052, 7
        %v3054 = vsub.s32 3, %v3053
        %v3055 = vrot.slane %v934, %v3054
        %v3056 = vlaneseq
        %v3057 = vshrl.u32 %v3056, 7
        %v3058 = vsub.s32 4, %v3057
        %v3059 = vrot.slane %v934, %v3058
        %v3060 = vlaneseq
        %v3061 = vshrl.u32 %v3060, 7
        %v3062 = vsub.s32 5, %v3061
        %v3063 = vrot.slane %v934, %v3062
        %v3064 = vlaneseq
        %v3065 = vshrl.u32 %v3064, 7
        %v3066 = vsub.s32 6, %v3065
        %v3067 = vrot.slane %v934, %v3066
        %v3068 = vlaneseq
        %v3069 = vshrl.u32 %v3068, 7
        %v3070 = vsub.s32 7, %v3069
        %v3071 = vrot.slane %v934, %v3070
        %v3072 = vlaneseq
        %v3073 = vshrl.u32 %v3072, 7
        %v3074 = vsub.s32 0, %v3073
        %v3075 = vrot.slane %v936, %v3074
        %v3076 = vlaneseq
        %v3077 = vshrl.u32 %v3076, 7
        %v3078 = vsub.s32 1, %v3077
        %v3079 = vrot.slane %v936, %v3078
        %v3080 = vlaneseq
        %v3081 = vshrl.u32 %v3080, 7
        %v3082 = vsub.s32 2, %v3081
        %v3083 = vrot.slane %v936, %v3082
        %v3084 = vlaneseq
        %v3085 = vshrl.u32 %v3084, 7
        %v3086 = vsub.s32 3, %v3085
        %v3087 = vrot.slane %v936, %v3086
        %v3088 = vlaneseq
        %v3089 = vshrl.u32 %v3088, 7
        %v3090 = vsub.s32 4, %v3089
        %v3091 = vrot.slane %v936, %v3090
        %v3092 = vlaneseq
        %v3093 = vshrl.u32 %v3092, 7
        %v3094 = vsub.s32 5, %v3093
        %v3095 = vrot.slane %v936, %v3094
        %v3096 = vlaneseq
        %v3097 = vshrl.u32 %v3096, 7
        %v3098 = vsub.s32 6, %v3097
        %v3099 = vrot.slane %v936, %v3098
        %v3100 = vlaneseq
        %v3101 = vshrl.u32 %v3100, 7
        %v3102 = vsub.s32 7, %v3101
        %v3103 = vrot.slane %v936, %v3102
        %v3104 = vlaneseq
        %v3105 = vshrl.u32 %v3104, 7
        %v3106 = vsub.s32 0, %v3105
        %v3107 = vrot.slane %v938, %v3106
        %v3108 = vlaneseq
        %v3109 = vshrl.u32 %v3108, 7
        %v3110 = vsub.s32 1, %v3109
        %v3111 = vrot.slane %v938, %v3110
        %v3112 = vlaneseq
        %v3113 = vshrl.u32 %v3112, 7
        %v3114 = vsub.s32 2, %v3113
        %v3115 = vrot.slane %v938, %v3114
        %v3116 = vlaneseq
        %v3117 = vshrl.u32 %v3116, 7
        %v3118 = vsub.s32 3, %v3117
        %v3119 = vrot.slane %v938, %v3118
        %v3120 = vlaneseq
        %v3121 = vshrl.u32 %v3120, 7
        %v3122 = vsub.s32 4, %v3121
        %v3123 = vrot.slane %v938, %v3122
        %v3124 = vlaneseq
        %v3125 = vshrl.u32 %v3124, 7
        %v3126 = vsub.s32 5, %v3125
        %v3127 = vrot.slane %v938, %v3126
        %v3128 = vlaneseq
        %v3129 = vshrl.u32 %v3128, 7
        %v3130 = vsub.s32 6, %v3129
        %v3131 = vrot.slane %v938, %v3130
        %v3132 = vlaneseq
        %v3133 = vshrl.u32 %v3132, 7
        %v3134 = vsub.s32 7, %v3133
        %v3135 = vrot.slane %v938, %v3134
        %v3136 = vlaneseq
        %v3137 = vshrl.u32 %v3136, 7
        %v3138 = vsub.s32 0, %v3137
        %v3139 = vrot.slane %v940, %v3138
        %v3140 = vlaneseq
        %v3141 = vshrl.u32 %v3140, 7
        %v3142 = vsub.s32 1, %v3141
        %v3143 = vrot.slane %v940, %v3142
        %v3144 = vlaneseq
        %v3145 = vshrl.u32 %v3144, 7
        %v3146 = vsub.s32 2, %v3145
        %v3147 = vrot.slane %v940, %v3146
        %v3148 = vlaneseq
        %v3149 = vshrl.u32 %v3148, 7
        %v3150 = vsub.s32 3, %v3149
        %v3151 = vrot.slane %v940, %v3150
        %v3152 = vlaneseq
        %v3153 = vshrl.u32 %v3152, 7
        %v3154 = vsub.s32 4, %v3153
        %v3155 = vrot.slane %v940, %v3154
        %v3156 = vlaneseq
        %v3157 = vshrl.u32 %v3156, 7
        %v3158 = vsub.s32 5, %v3157
        %v3159 = vrot.slane %v940, %v3158
        %v3160 = vlaneseq
        %v3161 = vshrl.u32 %v3160, 7
        %v3162 = vsub.s32 6, %v3161
        %v3163 = vrot.slane %v940, %v3162
        %v3164 = vlaneseq
        %v3165 = vshrl.u32 %v3164, 7
        %v3166 = vsub.s32 7, %v3165
        %v3167 = vrot.slane %v940, %v3166
        %v3168 = vlaneseq
        %v3169 = vshrl.u32 %v3168, 7
        %v3170 = vsub.s32 0, %v3169
        %v3171 = vrot.slane %v942, %v3170
        %v3172 = vlaneseq
        %v3173 = vshrl.u32 %v3172, 7
        %v3174 = vsub.s32 1, %v3173
        %v3175 = vrot.slane %v942, %v3174
        %v3176 = vlaneseq
        %v3177 = vshrl.u32 %v3176, 7
        %v3178 = vsub.s32 2, %v3177
        %v3179 = vrot.slane %v942, %v3178
        %v3180 = vlaneseq
        %v3181 = vshrl.u32 %v3180, 7
        %v3182 = vsub.s32 3, %v3181
        %v3183 = vrot.slane %v942, %v3182
        %v3184 = vlaneseq
        %v3185 = vshrl.u32 %v3184, 7
        %v3186 = vsub.s32 4, %v3185
        %v3187 = vrot.slane %v942, %v3186
        %v3188 = vlaneseq
        %v3189 = vshrl.u32 %v3188, 7
        %v3190 = vsub.s32 5, %v3189
        %v3191 = vrot.slane %v942, %v3190
        %v3192 = vlaneseq
        %v3193 = vshrl.u32 %v3192, 7
        %v3194 = vsub.s32 6, %v3193
        %v3195 = vrot.slane %v942, %v3194
        %v3196 = vlaneseq
        %v3197 = vshrl.u32 %v3196, 7
        %v3198 = vsub.s32 7, %v3197
        %v3199 = vrot.slane %v942, %v3198
        %v3200 = vlaneseq
        %v3201 = vshrl.u32 %v3200, 7
        %v3202 = vsub.s32 0, %v3201
        %v3203 = vrot.slane %v944, %v3202
        %v3204 = vlaneseq
        %v3205 = vshrl.u32 %v3204, 7
        %v3206 = vsub.s32 1, %v3205
        %v3207 = vrot.slane %v944, %v3206
        %v3208 = vlaneseq
        %v3209 = vshrl.u32 %v3208, 7
        %v3210 = vsub.s32 2, %v3209
        %v3211 = vrot.slane %v944, %v3210
        %v3212 = vlaneseq
        %v3213 = vshrl.u32 %v3212, 7
        %v3214 = vsub.s32 3, %v3213
        %v3215 = vrot.slane %v944, %v3214
        %v3216 = vlaneseq
        %v3217 = vshrl.u32 %v3216, 7
        %v3218 = vsub.s32 4, %v3217
        %v3219 = vrot.slane %v944, %v3218
        %v3220 = vlaneseq
        %v3221 = vshrl.u32 %v3220, 7
        %v3222 = vsub.s32 5, %v3221
        %v3223 = vrot.slane %v944, %v3222
        %v3224 = vlaneseq
        %v3225 = vshrl.u32 %v3224, 7
        %v3226 = vsub.s32 6, %v3225
        %v3227 = vrot.slane %v944, %v3226
        %v3228 = vlaneseq
        %v3229 = vshrl.u32 %v3228, 7
        %v3230 = vsub.s32 7, %v3229
        %v3231 = vrot.slane %v944, %v3230
        %v3232 = vlaneseq
        %v3233 = vshrl.u32 %v3232, 7
        %v3234 = vsub.s32 0, %v3233
        %v3235 = vrot.slane %v946, %v3234
        %v3236 = vlaneseq
        %v3237 = vshrl.u32 %v3236, 7
        %v3238 = vsub.s32 1, %v3237
        %v3239 = vrot.slane %v946, %v3238
        %v3240 = vlaneseq
        %v3241 = vshrl.u32 %v3240, 7
        %v3242 = vsub.s32 2, %v3241
        %v3243 = vrot.slane %v946, %v3242
        %v3244 = vlaneseq
        %v3245 = vshrl.u32 %v3244, 7
        %v3246 = vsub.s32 3, %v3245
        %v3247 = vrot.slane %v946, %v3246
        %v3248 = vlaneseq
        %v3249 = vshrl.u32 %v3248, 7
        %v3250 = vsub.s32 4, %v3249
        %v3251 = vrot.slane %v946, %v3250
        %v3252 = vlaneseq
        %v3253 = vshrl.u32 %v3252, 7
        %v3254 = vsub.s32 5, %v3253
        %v3255 = vrot.slane %v946, %v3254
        %v3256 = vlaneseq
        %v3257 = vshrl.u32 %v3256, 7
        %v3258 = vsub.s32 6, %v3257
        %v3259 = vrot.slane %v946, %v3258
        %v3260 = vlaneseq
        %v3261 = vshrl.u32 %v3260, 7
        %v3262 = vsub.s32 7, %v3261
        %v3263 = vrot.slane %v946, %v3262
        %v3264 = vlaneseq
        %v3265 = vshrl.u32 %v3264, 7
        %v3266 = vsub.s32 0, %v3265
        %v3267 = vrot.slane %v948, %v3266
        %v3268 = vlaneseq
        %v3269 = vshrl.u32 %v3268, 7
        %v3270 = vsub.s32 1, %v3269
        %v3271 = vrot.slane %v948, %v3270
        %v3272 = vlaneseq
        %v3273 = vshrl.u32 %v3272, 7
        %v3274 = vsub.s32 2, %v3273
        %v3275 = vrot.slane %v948, %v3274
        %v3276 = vlaneseq
        %v3277 = vshrl.u32 %v3276, 7
        %v3278 = vsub.s32 3, %v3277
        %v3279 = vrot.slane %v948, %v3278
        %v3280 = vlaneseq
        %v3281 = vshrl.u32 %v3280, 7
        %v3282 = vsub.s32 4, %v3281
        %v3283 = vrot.slane %v948, %v3282
        %v3284 = vlaneseq
        %v3285 = vshrl.u32 %v3284, 7
        %v3286 = vsub.s32 5, %v3285
        %v3287 = vrot.slane %v948, %v3286
        %v3288 = vlaneseq
        %v3289 = vshrl.u32 %v3288, 7
        %v3290 = vsub.s32 6, %v3289
        %v3291 = vrot.slane %v948, %v3290
        %v3292 = vlaneseq
        %v3293 = vshrl.u32 %v3292, 7
        %v3294 = vsub.s32 7, %v3293
        %v3295 = vrot.slane %v948, %v3294
        %v3296 = vlaneseq
        %v3297 = vshrl.u32 %v3296, 7
        %v3298 = vsub.s32 0, %v3297
        %v3299 = vrot.slane %v950, %v3298
        %v3300 = vlaneseq
        %v3301 = vshrl.u32 %v3300, 7
        %v3302 = vsub.s32 1, %v3301
        %v3303 = vrot.slane %v950, %v3302
        %v3304 = vlaneseq
        %v3305 = vshrl.u32 %v3304, 7
        %v3306 = vsub.s32 2, %v3305
        %v3307 = vrot.slane %v950, %v3306
        %v3308 = vlaneseq
        %v3309 = vshrl.u32 %v3308, 7
        %v3310 = vsub.s32 3, %v3309
        %v3311 = vrot.slane %v950, %v3310
        %v3312 = vlaneseq
        %v3313 = vshrl.u32 %v3312, 7
        %v3314 = vsub.s32 4, %v3313
        %v3315 = vrot.slane %v950, %v3314
        %v3316 = vlaneseq
        %v3317 = vshrl.u32 %v3316, 7
        %v3318 = vsub.s32 5, %v3317
        %v3319 = vrot.slane %v950, %v3318
        %v3320 = vlaneseq
        %v3321 = vshrl.u32 %v3320, 7
        %v3322 = vsub.s32 6, %v3321
        %v3323 = vrot.slane %v950, %v3322
        %v3324 = vlaneseq
        %v3325 = vshrl.u32 %v3324, 7
        %v3326 = vsub.s32 7, %v3325
        %v3327 = vrot.slane %v950, %v3326
        %v3328 = vlaneseq
        %v3329 = vshrl.u32 %v3328, 7
        %v3330 = vsub.s32 0, %v3329
        %v3331 = vrot.slane %v952, %v3330
        %v3332 = vlaneseq
        %v3333 = vshrl.u32 %v3332, 7
        %v3334 = vsub.s32 1, %v3333
        %v3335 = vrot.slane %v952, %v3334
        %v3336 = vlaneseq
        %v3337 = vshrl.u32 %v3336, 7
        %v3338 = vsub.s32 2, %v3337
        %v3339 = vrot.slane %v952, %v3338
        %v3340 = vlaneseq
        %v3341 = vshrl.u32 %v3340, 7
        %v3342 = vsub.s32 3, %v3341
        %v3343 = vrot.slane %v952, %v3342
        %v3344 = vlaneseq
        %v3345 = vshrl.u32 %v3344, 7
        %v3346 = vsub.s32 4, %v3345
        %v3347 = vrot.slane %v952, %v3346
        %v3348 = vlaneseq
        %v3349 = vshrl.u32 %v3348, 7
        %v3350 = vsub.s32 5, %v3349
        %v3351 = vrot.slane %v952, %v3350
        %v3352 = vlaneseq
        %v3353 = vshrl.u32 %v3352, 7
        %v3354 = vsub.s32 6, %v3353
        %v3355 = vrot.slane %v952, %v3354
        %v3356 = vlaneseq
        %v3357 = vshrl.u32 %v3356, 7
        %v3358 = vsub.s32 7, %v3357
        %v3359 = vrot.slane %v952, %v3358
        %v3360 = vlaneseq
        %v3361 = vshrl.u32 %v3360, 7
        %v3362 = vsub.s32 0, %v3361
        %v3363 = vrot.slane %v954, %v3362
        %v3364 = vlaneseq
        %v3365 = vshrl.u32 %v3364, 7
        %v3366 = vsub.s32 1, %v3365
        %v3367 = vrot.slane %v954, %v3366
        %v3368 = vlaneseq
        %v3369 = vshrl.u32 %v3368, 7
        %v3370 = vsub.s32 2, %v3369
        %v3371 = vrot.slane %v954, %v3370
        %v3372 = vlaneseq
        %v3373 = vshrl.u32 %v3372, 7
        %v3374 = vsub.s32 3, %v3373
        %v3375 = vrot.slane %v954, %v3374
        %v3376 = vlaneseq
        %v3377 = vshrl.u32 %v3376, 7
        %v3378 = vsub.s32 4, %v3377
        %v3379 = vrot.slane %v954, %v3378
        %v3380 = vlaneseq
        %v3381 = vshrl.u32 %v3380, 7
        %v3382 = vsub.s32 5, %v3381
        %v3383 = vrot.slane %v954, %v3382
        %v3384 = vlaneseq
        %v3385 = vshrl.u32 %v3384, 7
        %v3386 = vsub.s32 6, %v3385
        %v3387 = vrot.slane %v954, %v3386
        %v3388 = vlaneseq
        %v3389 = vshrl.u32 %v3388, 7
        %v3390 = vsub.s32 7, %v3389
        %v3391 = vrot.slane %v954, %v3390
        %v3392 = vlaneseq
        %v3393 = vshrl.u32 %v3392, 7
        %v3394 = vsub.s32 0, %v3393
        %v3395 = vrot.slane %v956, %v3394
        %v3396 = vlaneseq
        %v3397 = vshrl.u32 %v3396, 7
        %v3398 = vsub.s32 1, %v3397
        %v3399 = vrot.slane %v956, %v3398
        %v3400 = vlaneseq
        %v3401 = vshrl.u32 %v3400, 7
        %v3402 = vsub.s32 2, %v3401
        %v3403 = vrot.slane %v956, %v3402
        %v3404 = vlaneseq
        %v3405 = vshrl.u32 %v3404, 7
        %v3406 = vsub.s32 3, %v3405
        %v3407 = vrot.slane %v956, %v3406
        %v3408 = vlaneseq
        %v3409 = vshrl.u32 %v3408, 7
        %v3410 = vsub.s32 4, %v3409
        %v3411 = vrot.slane %v956, %v3410
        %v3412 = vlaneseq
        %v3413 = vshrl.u32 %v3412, 7
        %v3414 = vsub.s32 5, %v3413
        %v3415 = vrot.slane %v956, %v3414
        %v3416 = vlaneseq
        %v3417 = vshrl.u32 %v3416, 7
        %v3418 = vsub.s32 6, %v3417
        %v3419 = vrot.slane %v956, %v3418
        %v3420 = vlaneseq
        %v3421 = vshrl.u32 %v3420, 7
        %v3422 = vsub.s32 7, %v3421
        %v3423 = vrot.slane %v956, %v3422
        %v3424 = vlaneseq
        %v3425 = vshrl.u32 %v3424, 7
        %v3426 = vsub.s32 0, %v3425
        %v3427 = vrot.slane %v958, %v3426
        %v3428 = vlaneseq
        %v3429 = vshrl.u32 %v3428, 7
        %v3430 = vsub.s32 1, %v3429
        %v3431 = vrot.slane %v958, %v3430
        %v3432 = vlaneseq
        %v3433 = vshrl.u32 %v3432, 7
        %v3434 = vsub.s32 2, %v3433
        %v3435 = vrot.slane %v958, %v3434
        %v3436 = vlaneseq
        %v3437 = vshrl.u32 %v3436, 7
        %v3438 = vsub.s32 3, %v3437
        %v3439 = vrot.slane %v958, %v3438
        %v3440 = vlaneseq
        %v3441 = vshrl.u32 %v3440, 7
        %v3442 = vsub.s32 4, %v3441
        %v3443 = vrot.slane %v958, %v3442
        %v3444 = vlaneseq
        %v3445 = vshrl.u32 %v3444, 7
        %v3446 = vsub.s32 5, %v3445
        %v3447 = vrot.slane %v958, %v3446
        %v3448 = vlaneseq
        %v3449 = vshrl.u32 %v3448, 7
        %v3450 = vsub.s32 6, %v3449
        %v3451 = vrot.slane %v958, %v3450
        %v3452 = vlaneseq
        %v3453 = vshrl.u32 %v3452, 7
        %v3454 = vsub.s32 7, %v3453
        %v3455 = vrot.slane %v958, %v3454
        %v3456 = vlaneseq
        %v3457 = vshrl.u32 %v3456, 7
        %v3458 = vsub.s32 0, %v3457
        %v3459 = vrot.slane %v960, %v3458
        %v3460 = vlaneseq
        %v3461 = vshrl.u32 %v3460, 7
        %v3462 = vsub.s32 1, %v3461
        %v3463 = vrot.slane %v960, %v3462
        %v3464 = vlaneseq
        %v3465 = vshrl.u32 %v3464, 7
        %v3466 = vsub.s32 2, %v3465
        %v3467 = vrot.slane %v960, %v3466
        %v3468 = vlaneseq
        %v3469 = vshrl.u32 %v3468, 7
        %v3470 = vsub.s32 3, %v3469
        %v3471 = vrot.slane %v960, %v3470
        %v3472 = vlaneseq
        %v3473 = vshrl.u32 %v3472, 7
        %v3474 = vsub.s32 4, %v3473
        %v3475 = vrot.slane %v960, %v3474
        %v3476 = vlaneseq
        %v3477 = vshrl.u32 %v3476, 7
        %v3478 = vsub.s32 5, %v3477
        %v3479 = vrot.slane %v960, %v3478
        %v3480 = vlaneseq
        %v3481 = vshrl.u32 %v3480, 7
        %v3482 = vsub.s32 6, %v3481
        %v3483 = vrot.slane %v960, %v3482
        %v3484 = vlaneseq
        %v3485 = vshrl.u32 %v3484, 7
        %v3486 = vsub.s32 7, %v3485
        %v3487 = vrot.slane %v960, %v3486
        %v3488 = vlaneseq
        %v3489 = vshrl.u32 %v3488, 7
        %v3490 = vsub.s32 0, %v3489
        %v3491 = vrot.slane %v962, %v3490
        %v3492 = vlaneseq
        %v3493 = vshrl.u32 %v3492, 7
        %v3494 = vsub.s32 1, %v3493
        %v3495 = vrot.slane %v962, %v3494
        %v3496 = vlaneseq
        %v3497 = vshrl.u32 %v3496, 7
        %v3498 = vsub.s32 2, %v3497
        %v3499 = vrot.slane %v962, %v3498
        %v3500 = vlaneseq
        %v3501 = vshrl.u32 %v3500, 7
        %v3502 = vsub.s32 3, %v3501
        %v3503 = vrot.slane %v962, %v3502
        %v3504 = vlaneseq
        %v3505 = vshrl.u32 %v3504, 7
        %v3506 = vsub.s32 4, %v3505
        %v3507 = vrot.slane %v962, %v3506
        %v3508 = vlaneseq
        %v3509 = vshrl.u32 %v3508, 7
        %v3510 = vsub.s32 5, %v3509
        %v3511 = vrot.slane %v962, %v3510
        %v3512 = vlaneseq
        %v3513 = vshrl.u32 %v3512, 7
        %v3514 = vsub.s32 6, %v3513
        %v3515 = vrot.slane %v962, %v3514
        %v3516 = vlaneseq
        %v3517 = vshrl.u32 %v3516, 7
        %v3518 = vsub.s32 7, %v3517
        %v3519 = vrot.slane %v962, %v3518
        %v3520 = vlaneseq
        %v3521 = vshrl.u32 %v3520, 7
        %v3522 = vsub.s32 0, %v3521
        %v3523 = vrot.slane %v964, %v3522
        %v3524 = vlaneseq
        %v3525 = vshrl.u32 %v3524, 7
        %v3526 = vsub.s32 1, %v3525
        %v3527 = vrot.slane %v964, %v3526
        %v3528 = vlaneseq
        %v3529 = vshrl.u32 %v3528, 7
        %v3530 = vsub.s32 2, %v3529
        %v3531 = vrot.slane %v964, %v3530
        %v3532 = vlaneseq
        %v3533 = vshrl.u32 %v3532, 7
        %v3534 = vsub.s32 3, %v3533
        %v3535 = vrot.slane %v964, %v3534
        %v3536 = vlaneseq
        %v3537 = vshrl.u32 %v3536, 7
        %v3538 = vsub.s32 4, %v3537
        %v3539 = vrot.slane %v964, %v3538
        %v3540 = vlaneseq
        %v3541 = vshrl.u32 %v3540, 7
        %v3542 = vsub.s32 5, %v3541
        %v3543 = vrot.slane %v964, %v3542
        %v3544 = vlaneseq
        %v3545 = vshrl.u32 %v3544, 7
        %v3546 = vsub.s32 6, %v3545
        %v3547 = vrot.slane %v964, %v3546
        %v3548 = vlaneseq
        %v3549 = vshrl.u32 %v3548, 7
        %v3550 = vsub.s32 7, %v3549
        %v3551 = vrot.slane %v964, %v3550
        %v3552 = vlaneseq
        %v3553 = vshrl.u32 %v3552, 7
        %v3554 = vsub.s32 0, %v3553
        %v3555 = vrot.slane %v966, %v3554
        %v3556 = vlaneseq
        %v3557 = vshrl.u32 %v3556, 7
        %v3558 = vsub.s32 1, %v3557
        %v3559 = vrot.slane %v966, %v3558
        %v3560 = vlaneseq
        %v3561 = vshrl.u32 %v3560, 7
        %v3562 = vsub.s32 2, %v3561
        %v3563 = vrot.slane %v966, %v3562
        %v3564 = vlaneseq
        %v3565 = vshrl.u32 %v3564, 7
        %v3566 = vsub.s32 3, %v3565
        %v3567 = vrot.slane %v966, %v3566
        %v3568 = vlaneseq
        %v3569 = vshrl.u32 %v3568, 7
        %v3570 = vsub.s32 4, %v3569
        %v3571 = vrot.slane %v966, %v3570
        %v3572 = vlaneseq
        %v3573 = vshrl.u32 %v3572, 7
        %v3574 = vsub.s32 5, %v3573
        %v3575 = vrot.slane %v966, %v3574
        %v3576 = vlaneseq
        %v3577 = vshrl.u32 %v3576, 7
        %v3578 = vsub.s32 6, %v3577
        %v3579 = vrot.slane %v966, %v3578
        %v3580 = vlaneseq
        %v3581 = vshrl.u32 %v3580, 7
        %v3582 = vsub.s32 7, %v3581
        %v3583 = vrot.slane %v966, %v3582
        %v3584 = vlaneseq
        %v3585 = vshrl.u32 %v3584, 7
        %v3586 = vsub.s32 0, %v3585
        %v3587 = vrot.slane %v968, %v3586
        %v3588 = vlaneseq
        %v3589 = vshrl.u32 %v3588, 7
        %v3590 = vsub.s32 1, %v3589
        %v3591 = vrot.slane %v968, %v3590
        %v3592 = vlaneseq
        %v3593 = vshrl.u32 %v3592, 7
        %v3594 = vsub.s32 2, %v3593
        %v3595 = vrot.slane %v968, %v3594
        %v3596 = vlaneseq
        %v3597 = vshrl.u32 %v3596, 7
        %v3598 = vsub.s32 3, %v3597
        %v3599 = vrot.slane %v968, %v3598
        %v3600 = vlaneseq
        %v3601 = vshrl.u32 %v3600, 7
        %v3602 = vsub.s32 4, %v3601
        %v3603 = vrot.slane %v968, %v3602
        %v3604 = vlaneseq
        %v3605 = vshrl.u32 %v3604, 7
        %v3606 = vsub.s32 5, %v3605
        %v3607 = vrot.slane %v968, %v3606
        %v3608 = vlaneseq
        %v3609 = vshrl.u32 %v3608, 7
        %v3610 = vsub.s32 6, %v3609
        %v3611 = vrot.slane %v968, %v3610
        %v3612 = vlaneseq
        %v3613 = vshrl.u32 %v3612, 7
        %v3614 = vsub.s32 7, %v3613
        %v3615 = vrot.slane %v968, %v3614
        %v3616 = vlaneseq
        %v3617 = vshrl.u32 %v3616, 7
        %v3618 = vsub.s32 0, %v3617
        %v3619 = vrot.slane %v970, %v3618
        %v3620 = vlaneseq
        %v3621 = vshrl.u32 %v3620, 7
        %v3622 = vsub.s32 1, %v3621
        %v3623 = vrot.slane %v970, %v3622
        %v3624 = vlaneseq
        %v3625 = vshrl.u32 %v3624, 7
        %v3626 = vsub.s32 2, %v3625
        %v3627 = vrot.slane %v970, %v3626
        %v3628 = vlaneseq
        %v3629 = vshrl.u32 %v3628, 7
        %v3630 = vsub.s32 3, %v3629
        %v3631 = vrot.slane %v970, %v3630
        %v3632 = vlaneseq
        %v3633 = vshrl.u32 %v3632, 7
        %v3634 = vsub.s32 4, %v3633
        %v3635 = vrot.slane %v970, %v3634
        %v3636 = vlaneseq
        %v3637 = vshrl.u32 %v3636, 7
        %v3638 = vsub.s32 5, %v3637
        %v3639 = vrot.slane %v970, %v3638
        %v3640 = vlaneseq
        %v3641 = vshrl.u32 %v3640, 7
        %v3642 = vsub.s32 6, %v3641
        %v3643 = vrot.slane %v970, %v3642
        %v3644 = vlaneseq
        %v3645 = vshrl.u32 %v3644, 7
        %v3646 = vsub.s32 7, %v3645
        %v3647 = vrot.slane %v970, %v3646
        %v3648 = vlaneseq
        %v3649 = vshrl.u32 %v3648, 7
        %v3650 = vsub.s32 0, %v3649
        %v3651 = vrot.slane %v972, %v3650
        %v3652 = vlaneseq
        %v3653 = vshrl.u32 %v3652, 7
        %v3654 = vsub.s32 1, %v3653
        %v3655 = vrot.slane %v972, %v3654
        %v3656 = vlaneseq
        %v3657 = vshrl.u32 %v3656, 7
        %v3658 = vsub.s32 2, %v3657
        %v3659 = vrot.slane %v972, %v3658
        %v3660 = vlaneseq
        %v3661 = vshrl.u32 %v3660, 7
        %v3662 = vsub.s32 3, %v3661
        %v3663 = vrot.slane %v972, %v3662
        %v3664 = vlaneseq
        %v3665 = vshrl.u32 %v3664, 7
        %v3666 = vsub.s32 4, %v3665
        %v3667 = vrot.slane %v972, %v3666
        %v3668 = vlaneseq
        %v3669 = vshrl.u32 %v3668, 7
        %v3670 = vsub.s32 5, %v3669
        %v3671 = vrot.slane %v972, %v3670
        %v3672 = vlaneseq
        %v3673 = vshrl.u32 %v3672, 7
        %v3674 = vsub.s32 6, %v3673
        %v3675 = vrot.slane %v972, %v3674
        %v3676 = vlaneseq
        %v3677 = vshrl.u32 %v3676, 7
        %v3678 = vsub.s32 7, %v3677
        %v3679 = vrot.slane %v972, %v3678
        %v3680 = vcombine.low %v1635, %v1639
        %v3681 = vcombine.low %v1643, %v1647
        %v3682 = vcombine.low %v1651, %v1655
        %v3683 = vcombine.low %v1659, %v1663
        %v3685 = vunpack.c.l.s4 1966171168
        %v3686 = vunpack.c.0.s8 %v3685
        %v3687 = vlaneseq
        %v3688 = vshrl.u32 %v3687, 7
        %v3689 = vsub.s32 %v3686, %v3688
        %v3690 = vrot.slane %v3680, %v3689
        %v3692 = vunpack.c.l.s4 1966171168
        %v3693 = vunpack.c.0.s8 %v3692
        %v3694 = vlaneseq
        %v3695 = vshrl.u32 %v3694, 7
        %v3696 = vsub.s32 %v3693, %v3695
        %v3697 = vrot.slane %v3681, %v3696
        %v3699 = vunpack.c.l.s4 1966171168
        %v3700 = vunpack.c.0.s8 %v3699
        %v3701 = vlaneseq
        %v3702 = vshrl.u32 %v3701, 7
        %v3703 = vsub.s32 %v3700, %v3702
        %v3704 = vrot.slane %v3682, %v3703
        %v3706 = vunpack.c.l.s4 1966171168
        %v3707 = vunpack.c.0.s8 %v3706
        %v3708 = vlaneseq
        %v3709 = vshrl.u32 %v3708, 7
        %v3710 = vsub.s32 %v3707, %v3709
        %v3711 = vrot.slane %v3683, %v3710
        %v3712 = vcombine.low %v3690, %v3697
        %v3713 = vcombine.low %v3704, %v3711
        %v3715 = vunpack.c.l.s4 1966171168
        %v3716 = vunpack.c.0.s8 %v3715
        %v3717 = vlaneseq
        %v3718 = vshrl.u32 %v3717, 7
        %v3719 = vsub.s32 %v3716, %v3718
        %v3720 = vrot.slane %v3712, %v3719
        %v3722 = vunpack.c.l.s4 1966171168
        %v3723 = vunpack.c.0.s8 %v3722
        %v3724 = vlaneseq
        %v3725 = vshrl.u32 %v3724, 7
        %v3726 = vsub.s32 %v3723, %v3725
        %v3727 = vrot.slane %v3713, %v3726
        %v3728 = vcombine.low %v3720, %v3727
        %v3729 = vcombine.low %v1667, %v1671
        %v3730 = vcombine.low %v1675, %v1679
        %v3731 = vcombine.low %v1683, %v1687
        %v3732 = vcombine.low %v1691, %v1695
        %v3734 = vunpack.c.l.s4 1966171168
        %v3735 = vunpack.c.0.s8 %v3734
        %v3736 = vlaneseq
        %v3737 = vshrl.u32 %v3736, 7
        %v3738 = vsub.s32 %v3735, %v3737
        %v3739 = vrot.slane %v3729, %v3738
        %v3741 = vunpack.c.l.s4 1966171168
        %v3742 = vunpack.c.0.s8 %v3741
        %v3743 = vlaneseq
        %v3744 = vshrl.u32 %v3743, 7
        %v3745 = vsub.s32 %v3742, %v3744
        %v3746 = vrot.slane %v3730, %v3745
        %v3748 = vunpack.c.l.s4 1966171168
        %v3749 = vunpack.c.0.s8 %v3748
        %v3750 = vlaneseq
        %v3751 = vshrl.u32 %v3750, 7
        %v3752 = vsub.s32 %v3749, %v3751
        %v3753 = vrot.slane %v3731, %v3752
        %v3755 = vunpack.c.l.s4 1966171168
        %v3756 = vunpack.c.0.s8 %v3755
        %v3757 = vlaneseq
        %v3758 = vshrl.u32 %v3757, 7
        %v3759 = vsub.s32 %v3756, %v3758
        %v3760 = vrot.slane %v3732, %v3759
        %v3761 = vcombine.low %v3739, %v3746
        %v3762 = vcombine.low %v3753, %v3760
        %v3764 = vunpack.c.l.s4 1966171168
        %v3765 = vunpack.c.0.s8 %v3764
        %v3766 = vlaneseq
        %v3767 = vshrl.u32 %v3766, 7
        %v3768 = vsub.s32 %v3765, %v3767
        %v3769 = vrot.slane %v3761, %v3768
        %v3771 = vunpack.c.l.s4 1966171168
        %v3772 = vunpack.c.0.s8 %v3771
        %v3773 = vlaneseq
        %v3774 = vshrl.u32 %v3773, 7
        %v3775 = vsub.s32 %v3772, %v3774
        %v3776 = vrot.slane %v3762, %v3775
        %v3777 = vcombine.low %v3769, %v3776
        %v3778 = vcombine.low %v1699, %v1703
        %v3779 = vcombine.low %v1707, %v1711
        %v3780 = vcombine.low %v1715, %v1719
        %v3781 = vcombine.low %v1723, %v1727
        %v3783 = vunpack.c.l.s4 1966171168
        %v3784 = vunpack.c.0.s8 %v3783
        %v3785 = vlaneseq
        %v3786 = vshrl.u32 %v3785, 7
        %v3787 = vsub.s32 %v3784, %v3786
        %v3788 = vrot.slane %v3778, %v3787
        %v3790 = vunpack.c.l.s4 1966171168
        %v3791 = vunpack.c.0.s8 %v3790
        %v3792 = vlaneseq
        %v3793 = vshrl.u32 %v3792, 7
        %v3794 = vsub.s32 %v3791, %v3793
        %v3795 = vrot.slane %v3779, %v3794
        %v3797 = vunpack.c.l.s4 1966171168
        %v3798 = vunpack.c.0.s8 %v3797
        %v3799 = vlaneseq
        %v3800 = vshrl.u32 %v3799, 7
        %v3801 = vsub.s32 %v3798, %v3800
        %v3802 = vrot.slane %v3780, %v3801
        %v3804 = vunpack.c.l.s4 1966171168
        %v3805 = vunpack.c.0.s8 %v3804
        %v3806 = vlaneseq
        %v3807 = vshrl.u32 %v3806, 7
        %v3808 = vsub.s32 %v3805, %v3807
        %v3809 = vrot.slane %v3781, %v3808
        %v3810 = vcombine.low %v3788, %v3795
        %v3811 = vcombine.low %v3802, %v3809
        %v3813 = vunpack.c.l.s4 1966171168
        %v3814 = vunpack.c.0.s8 %v3813
        %v3815 = vlaneseq
        %v3816 = vshrl.u32 %v3815, 7
        %v3817 = vsub.s32 %v3814, %v3816
        %v3818 = vrot.slane %v3810, %v3817
        %v3820 = vunpack.c.l.s4 1966171168
        %v3821 = vunpack.c.0.s8 %v3820
        %v3822 = vlaneseq
        %v3823 = vshrl.u32 %v3822, 7
        %v3824 = vsub.s32 %v3821, %v3823
        %v3825 = vrot.slane %v3811, %v3824
        %v3826 = vcombine.low %v3818, %v3825
        %v3827 = vcombine.low %v1731, %v1735
        %v3828 = vcombine.low %v1739, %v1743
        %v3829 = vcombine.low %v1747, %v1751
        %v3830 = vcombine.low %v1755, %v1759
        %v3832 = vunpack.c.l.s4 1966171168
        %v3833 = vunpack.c.0.s8 %v3832
        %v3834 = vlaneseq
        %v3835 = vshrl.u32 %v3834, 7
        %v3836 = vsub.s32 %v3833, %v3835
        %v3837 = vrot.slane %v3827, %v3836
        %v3839 = vunpack.c.l.s4 1966171168
        %v3840 = vunpack.c.0.s8 %v3839
        %v3841 = vlaneseq
        %v3842 = vshrl.u32 %v3841, 7
        %v3843 = vsub.s32 %v3840, %v3842
        %v3844 = vrot.slane %v3828, %v3843
        %v3846 = vunpack.c.l.s4 1966171168
        %v3847 = vunpack.c.0.s8 %v3846
        %v3848 = vlaneseq
        %v3849 = vshrl.u32 %v3848, 7
        %v3850 = vsub.s32 %v3847, %v3849
        %v3851 = vrot.slane %v3829, %v3850
        %v3853 = vunpack.c.l.s4 1966171168
        %v3854 = vunpack.c.0.s8 %v3853
        %v3855 = vlaneseq
        %v3856 = vshrl.u32 %v3855, 7
        %v3857 = vsub.s32 %v3854, %v3856
        %v3858 = vrot.slane %v3830, %v3857
        %v3859 = vcombine.low %v3837, %v3844
        %v3860 = vcombine.low %v3851, %v3858
        %v3862 = vunpack.c.l.s4 1966171168
        %v3863 = vunpack.c.0.s8 %v3862
        %v3864 = vlaneseq
        %v3865 = vshrl.u32 %v3864, 7
        %v3866 = vsub.s32 %v3863, %v3865
        %v3867 = vrot.slane %v3859, %v3866
        %v3869 = vunpack.c.l.s4 1966171168
        %v3870 = vunpack.c.0.s8 %v3869
        %v3871 = vlaneseq
        %v3872 = vshrl.u32 %v3871, 7
        %v3873 = vsub.s32 %v3870, %v3872
        %v3874 = vrot.slane %v3860, %v3873
        %v3875 = vcombine.low %v3867, %v3874
        %v3876 = vcombine.low %v1763, %v1767
        %v3877 = vcombine.low %v1771, %v1775
        %v3878 = vcombine.low %v1779, %v1783
        %v3879 = vcombine.low %v1787, %v1791
        %v3881 = vunpack.c.l.s4 1966171168
        %v3882 = vunpack.c.0.s8 %v3881
        %v3883 = vlaneseq
        %v3884 = vshrl.u32 %v3883, 7
        %v3885 = vsub.s32 %v3882, %v3884
        %v3886 = vrot.slane %v3876, %v3885
        %v3888 = vunpack.c.l.s4 1966171168
        %v3889 = vunpack.c.0.s8 %v3888
        %v3890 = vlaneseq
        %v3891 = vshrl.u32 %v3890, 7
        %v3892 = vsub.s32 %v3889, %v3891
        %v3893 = vrot.slane %v3877, %v3892
        %v3895 = vunpack.c.l.s4 1966171168
        %v3896 = vunpack.c.0.s8 %v3895
        %v3897 = vlaneseq
        %v3898 = vshrl.u32 %v3897, 7
        %v3899 = vsub.s32 %v3896, %v3898
        %v3900 = vrot.slane %v3878, %v3899
        %v3902 = vunpack.c.l.s4 1966171168
        %v3903 = vunpack.c.0.s8 %v3902
        %v3904 = vlaneseq
        %v3905 = vshrl.u32 %v3904, 7
        %v3906 = vsub.s32 %v3903, %v3905
        %v3907 = vrot.slane %v3879, %v3906
        %v3908 = vcombine.low %v3886, %v3893
        %v3909 = vcombine.low %v3900, %v3907
        %v3911 = vunpack.c.l.s4 1966171168
        %v3912 = vunpack.c.0.s8 %v3911
        %v3913 = vlaneseq
        %v3914 = vshrl.u32 %v3913, 7
        %v3915 = vsub.s32 %v3912, %v3914
        %v3916 = vrot.slane %v3908, %v3915
        %v3918 = vunpack.c.l.s4 1966171168
        %v3919 = vunpack.c.0.s8 %v3918
        %v3920 = vlaneseq
        %v3921 = vshrl.u32 %v3920, 7
        %v3922 = vsub.s32 %v3919, %v3921
        %v3923 = vrot.slane %v3909, %v3922
        %v3924 = vcombine.low %v3916, %v3923
        %v3925 = vcombine.low %v1795, %v1799
        %v3926 = vcombine.low %v1803, %v1807
        %v3927 = vcombine.low %v1811, %v1815
        %v3928 = vcombine.low %v1819, %v1823
        %v3930 = vunpack.c.l.s4 1966171168
        %v3931 = vunpack.c.0.s8 %v3930
        %v3932 = vlaneseq
        %v3933 = vshrl.u32 %v3932, 7
        %v3934 = vsub.s32 %v3931, %v3933
        %v3935 = vrot.slane %v3925, %v3934
        %v3937 = vunpack.c.l.s4 1966171168
        %v3938 = vunpack.c.0.s8 %v3937
        %v3939 = vlaneseq
        %v3940 = vshrl.u32 %v3939, 7
        %v3941 = vsub.s32 %v3938, %v3940
        %v3942 = vrot.slane %v3926, %v3941
        %v3944 = vunpack.c.l.s4 1966171168
        %v3945 = vunpack.c.0.s8 %v3944
        %v3946 = vlaneseq
        %v3947 = vshrl.u32 %v3946, 7
        %v3948 = vsub.s32 %v3945, %v3947
        %v3949 = vrot.slane %v3927, %v3948
        %v3951 = vunpack.c.l.s4 1966171168
        %v3952 = vunpack.c.0.s8 %v3951
        %v3953 = vlaneseq
        %v3954 = vshrl.u32 %v3953, 7
        %v3955 = vsub.s32 %v3952, %v3954
        %v3956 = vrot.slane %v3928, %v3955
        %v3957 = vcombine.low %v3935, %v3942
        %v3958 = vcombine.low %v3949, %v3956
        %v3960 = vunpack.c.l.s4 1966171168
        %v3961 = vunpack.c.0.s8 %v3960
        %v3962 = vlaneseq
        %v3963 = vshrl.u32 %v3962, 7
        %v3964 = vsub.s32 %v3961, %v3963
        %v3965 = vrot.slane %v3957, %v3964
        %v3967 = vunpack.c.l.s4 1966171168
        %v3968 = vunpack.c.0.s8 %v3967
        %v3969 = vlaneseq
        %v3970 = vshrl.u32 %v3969, 7
        %v3971 = vsub.s32 %v3968, %v3970
        %v3972 = vrot.slane %v3958, %v3971
        %v3973 = vcombine.low %v3965, %v3972
        %v3974 = vcombine.low %v1827, %v1831
        %v3975 = vcombine.low %v1835, %v1839
        %v3976 = vcombine.low %v1843, %v1847
        %v3977 = vcombine.low %v1851, %v1855
        %v3979 = vunpack.c.l.s4 1966171168
        %v3980 = vunpack.c.0.s8 %v3979
        %v3981 = vlaneseq
        %v3982 = vshrl.u32 %v3981, 7
        %v3983 = vsub.s32 %v3980, %v3982
        %v3984 = vrot.slane %v3974, %v3983
        %v3986 = vunpack.c.l.s4 1966171168
        %v3987 = vunpack.c.0.s8 %v3986
        %v3988 = vlaneseq
        %v3989 = vshrl.u32 %v3988, 7
        %v3990 = vsub.s32 %v3987, %v3989
        %v3991 = vrot.slane %v3975, %v3990
        %v3993 = vunpack.c.l.s4 1966171168
        %v3994 = vunpack.c.0.s8 %v3993
        %v3995 = vlaneseq
        %v3996 = vshrl.u32 %v3995, 7
        %v3997 = vsub.s32 %v3994, %v3996
        %v3998 = vrot.slane %v3976, %v3997
        %v4000 = vunpack.c.l.s4 1966171168
        %v4001 = vunpack.c.0.s8 %v4000
        %v4002 = vlaneseq
        %v4003 = vshrl.u32 %v4002, 7
        %v4004 = vsub.s32 %v4001, %v4003
        %v4005 = vrot.slane %v3977, %v4004
        %v4006 = vcombine.low %v3984, %v3991
        %v4007 = vcombine.low %v3998, %v4005
        %v4009 = vunpack.c.l.s4 1966171168
        %v4010 = vunpack.c.0.s8 %v4009
        %v4011 = vlaneseq
        %v4012 = vshrl.u32 %v4011, 7
        %v4013 = vsub.s32 %v4010, %v4012
        %v4014 = vrot.slane %v4006, %v4013
        %v4016 = vunpack.c.l.s4 1966171168
        %v4017 = vunpack.c.0.s8 %v4016
        %v4018 = vlaneseq
        %v4019 = vshrl.u32 %v4018, 7
        %v4020 = vsub.s32 %v4017, %v4019
        %v4021 = vrot.slane %v4007, %v4020
        %v4022 = vcombine.low %v4014, %v4021
        %v4023 = vcombine.low %v1859, %v1863
        %v4024 = vcombine.low %v1867, %v1871
        %v4025 = vcombine.low %v1875, %v1879
        %v4026 = vcombine.low %v1883, %v1887
        %v4028 = vunpack.c.l.s4 1966171168
        %v4029 = vunpack.c.0.s8 %v4028
        %v4030 = vlaneseq
        %v4031 = vshrl.u32 %v4030, 7
        %v4032 = vsub.s32 %v4029, %v4031
        %v4033 = vrot.slane %v4023, %v4032
        %v4035 = vunpack.c.l.s4 1966171168
        %v4036 = vunpack.c.0.s8 %v4035
        %v4037 = vlaneseq
        %v4038 = vshrl.u32 %v4037, 7
        %v4039 = vsub.s32 %v4036, %v4038
        %v4040 = vrot.slane %v4024, %v4039
        %v4042 = vunpack.c.l.s4 1966171168
        %v4043 = vunpack.c.0.s8 %v4042
        %v4044 = vlaneseq
        %v4045 = vshrl.u32 %v4044, 7
        %v4046 = vsub.s32 %v4043, %v4045
        %v4047 = vrot.slane %v4025, %v4046
        %v4049 = vunpack.c.l.s4 1966171168
        %v4050 = vunpack.c.0.s8 %v4049
        %v4051 = vlaneseq
        %v4052 = vshrl.u32 %v4051, 7
        %v4053 = vsub.s32 %v4050, %v4052
        %v4054 = vrot.slane %v4026, %v4053
        %v4055 = vcombine.low %v4033, %v4040
        %v4056 = vcombine.low %v4047, %v4054
        %v4058 = vunpack.c.l.s4 1966171168
        %v4059 = vunpack.c.0.s8 %v4058
        %v4060 = vlaneseq
        %v4061 = vshrl.u32 %v4060, 7
        %v4062 = vsub.s32 %v4059, %v4061
        %v4063 = vrot.slane %v4055, %v4062
        %v4065 = vunpack.c.l.s4 1966171168
        %v4066 = vunpack.c.0.s8 %v4065
        %v4067 = vlaneseq
        %v4068 = vshrl.u32 %v4067, 7
        %v4069 = vsub.s32 %v4066, %v4068
        %v4070 = vrot.slane %v4056, %v4069
        %v4071 = vcombine.low %v4063, %v4070
        %v4072 = vcombine.low %v1891, %v1895
        %v4073 = vcombine.low %v1899, %v1903
        %v4074 = vcombine.low %v1907, %v1911
        %v4075 = vcombine.low %v1915, %v1919
        %v4077 = vunpack.c.l.s4 1966171168
        %v4078 = vunpack.c.0.s8 %v4077
        %v4079 = vlaneseq
        %v4080 = vshrl.u32 %v4079, 7
        %v4081 = vsub.s32 %v4078, %v4080
        %v4082 = vrot.slane %v4072, %v4081
        %v4084 = vunpack.c.l.s4 1966171168
        %v4085 = vunpack.c.0.s8 %v4084
        %v4086 = vlaneseq
        %v4087 = vshrl.u32 %v4086, 7
        %v4088 = vsub.s32 %v4085, %v4087
        %v4089 = vrot.slane %v4073, %v4088
        %v4091 = vunpack.c.l.s4 1966171168
        %v4092 = vunpack.c.0.s8 %v4091
        %v4093 = vlaneseq
        %v4094 = vshrl.u32 %v4093, 7
        %v4095 = vsub.s32 %v4092, %v4094
        %v4096 = vrot.slane %v4074, %v4095
        %v4098 = vunpack.c.l.s4 1966171168
        %v4099 = vunpack.c.0.s8 %v4098
        %v4100 = vlaneseq
        %v4101 = vshrl.u32 %v4100, 7
        %v4102 = vsub.s32 %v4099, %v4101
        %v4103 = vrot.slane %v4075, %v4102
        %v4104 = vcombine.low %v4082, %v4089
        %v4105 = vcombine.low %v4096, %v4103
        %v4107 = vunpack.c.l.s4 1966171168
        %v4108 = vunpack.c.0.s8 %v4107
        %v4109 = vlaneseq
        %v4110 = vshrl.u32 %v4109, 7
        %v4111 = vsub.s32 %v4108, %v4110
        %v4112 = vrot.slane %v4104, %v4111
        %v4114 = vunpack.c.l.s4 1966171168
        %v4115 = vunpack.c.0.s8 %v4114
        %v4116 = vlaneseq
        %v4117 = vshrl.u32 %v4116, 7
        %v4118 = vsub.s32 %v4115, %v4117
        %v4119 = vrot.slane %v4105, %v4118
        %v4120 = vcombine.low %v4112, %v4119
        %v4121 = vcombine.low %v1923, %v1927
        %v4122 = vcombine.low %v1931, %v1935
        %v4123 = vcombine.low %v1939, %v1943
        %v4124 = vcombine.low %v1947, %v1951
        %v4126 = vunpack.c.l.s4 1966171168
        %v4127 = vunpack.c.0.s8 %v4126
        %v4128 = vlaneseq
        %v4129 = vshrl.u32 %v4128, 7
        %v4130 = vsub.s32 %v4127, %v4129
        %v4131 = vrot.slane %v4121, %v4130
        %v4133 = vunpack.c.l.s4 1966171168
        %v4134 = vunpack.c.0.s8 %v4133
        %v4135 = vlaneseq
        %v4136 = vshrl.u32 %v4135, 7
        %v4137 = vsub.s32 %v4134, %v4136
        %v4138 = vrot.slane %v4122, %v4137
        %v4140 = vunpack.c.l.s4 1966171168
        %v4141 = vunpack.c.0.s8 %v4140
        %v4142 = vlaneseq
        %v4143 = vshrl.u32 %v4142, 7
        %v4144 = vsub.s32 %v4141, %v4143
        %v4145 = vrot.slane %v4123, %v4144
        %v4147 = vunpack.c.l.s4 1966171168
        %v4148 = vunpack.c.0.s8 %v4147
        %v4149 = vlaneseq
        %v4150 = vshrl.u32 %v4149, 7
        %v4151 = vsub.s32 %v4148, %v4150
        %v4152 = vrot.slane %v4124, %v4151
        %v4153 = vcombine.low %v4131, %v4138
        %v4154 = vcombine.low %v4145, %v4152
        %v4156 = vunpack.c.l.s4 1966171168
        %v4157 = vunpack.c.0.s8 %v4156
        %v4158 = vlaneseq
        %v4159 = vshrl.u32 %v4158, 7
        %v4160 = vsub.s32 %v4157, %v4159
        %v4161 = vrot.slane %v4153, %v4160
        %v4163 = vunpack.c.l.s4 1966171168
        %v4164 = vunpack.c.0.s8 %v4163
        %v4165 = vlaneseq
        %v4166 = vshrl.u32 %v4165, 7
        %v4167 = vsub.s32 %v4164, %v4166
        %v4168 = vrot.slane %v4154, %v4167
        %v4169 = vcombine.low %v4161, %v4168
        %v4170 = vcombine.low %v1955, %v1959
        %v4171 = vcombine.low %v1963, %v1967
        %v4172 = vcombine.low %v1971, %v1975
        %v4173 = vcombine.low %v1979, %v1983
        %v4175 = vunpack.c.l.s4 1966171168
        %v4176 = vunpack.c.0.s8 %v4175
        %v4177 = vlaneseq
        %v4178 = vshrl.u32 %v4177, 7
        %v4179 = vsub.s32 %v4176, %v4178
        %v4180 = vrot.slane %v4170, %v4179
        %v4182 = vunpack.c.l.s4 1966171168
        %v4183 = vunpack.c.0.s8 %v4182
        %v4184 = vlaneseq
        %v4185 = vshrl.u32 %v4184, 7
        %v4186 = vsub.s32 %v4183, %v4185
        %v4187 = vrot.slane %v4171, %v4186
        %v4189 = vunpack.c.l.s4 1966171168
        %v4190 = vunpack.c.0.s8 %v4189
        %v4191 = vlaneseq
        %v4192 = vshrl.u32 %v4191, 7
        %v4193 = vsub.s32 %v4190, %v4192
        %v4194 = vrot.slane %v4172, %v4193
        %v4196 = vunpack.c.l.s4 1966171168
        %v4197 = vunpack.c.0.s8 %v4196
        %v4198 = vlaneseq
        %v4199 = vshrl.u32 %v4198, 7
        %v4200 = vsub.s32 %v4197, %v4199
        %v4201 = vrot.slane %v4173, %v4200
        %v4202 = vcombine.low %v4180, %v4187
        %v4203 = vcombine.low %v4194, %v4201
        %v4205 = vunpack.c.l.s4 1966171168
        %v4206 = vunpack.c.0.s8 %v4205
        %v4207 = vlaneseq
        %v4208 = vshrl.u32 %v4207, 7
        %v4209 = vsub.s32 %v4206, %v4208
        %v4210 = vrot.slane %v4202, %v4209
        %v4212 = vunpack.c.l.s4 1966171168
        %v4213 = vunpack.c.0.s8 %v4212
        %v4214 = vlaneseq
        %v4215 = vshrl.u32 %v4214, 7
        %v4216 = vsub.s32 %v4213, %v4215
        %v4217 = vrot.slane %v4203, %v4216
        %v4218 = vcombine.low %v4210, %v4217
        %v4219 = vcombine.low %v1987, %v1991
        %v4220 = vcombine.low %v1995, %v1999
        %v4221 = vcombine.low %v2003, %v2007
        %v4222 = vcombine.low %v2011, %v2015
        %v4224 = vunpack.c.l.s4 1966171168
        %v4225 = vunpack.c.0.s8 %v4224
        %v4226 = vlaneseq
        %v4227 = vshrl.u32 %v4226, 7
        %v4228 = vsub.s32 %v4225, %v4227
        %v4229 = vrot.slane %v4219, %v4228
        %v4231 = vunpack.c.l.s4 1966171168
        %v4232 = vunpack.c.0.s8 %v4231
        %v4233 = vlaneseq
        %v4234 = vshrl.u32 %v4233, 7
        %v4235 = vsub.s32 %v4232, %v4234
        %v4236 = vrot.slane %v4220, %v4235
        %v4238 = vunpack.c.l.s4 1966171168
        %v4239 = vunpack.c.0.s8 %v4238
        %v4240 = vlaneseq
        %v4241 = vshrl.u32 %v4240, 7
        %v4242 = vsub.s32 %v4239, %v4241
        %v4243 = vrot.slane %v4221, %v4242
        %v4245 = vunpack.c.l.s4 1966171168
        %v4246 = vunpack.c.0.s8 %v4245
        %v4247 = vlaneseq
        %v4248 = vshrl.u32 %v4247, 7
        %v4249 = vsub.s32 %v4246, %v4248
        %v4250 = vrot.slane %v4222, %v4249
        %v4251 = vcombine.low %v4229, %v4236
        %v4252 = vcombine.low %v4243, %v4250
        %v4254 = vunpack.c.l.s4 1966171168
        %v4255 = vunpack.c.0.s8 %v4254
        %v4256 = vlaneseq
        %v4257 = vshrl.u32 %v4256, 7
        %v4258 = vsub.s32 %v4255, %v4257
        %v4259 = vrot.slane %v4251, %v4258
        %v4261 = vunpack.c.l.s4 1966171168
        %v4262 = vunpack.c.0.s8 %v4261
        %v4263 = vlaneseq
        %v4264 = vshrl.u32 %v4263, 7
        %v4265 = vsub.s32 %v4262, %v4264
        %v4266 = vrot.slane %v4252, %v4265
        %v4267 = vcombine.low %v4259, %v4266
        %v4268 = vcombine.low %v2019, %v2023
        %v4269 = vcombine.low %v2027, %v2031
        %v4270 = vcombine.low %v2035, %v2039
        %v4271 = vcombine.low %v2043, %v2047
        %v4273 = vunpack.c.l.s4 1966171168
        %v4274 = vunpack.c.0.s8 %v4273
        %v4275 = vlaneseq
        %v4276 = vshrl.u32 %v4275, 7
        %v4277 = vsub.s32 %v4274, %v4276
        %v4278 = vrot.slane %v4268, %v4277
        %v4280 = vunpack.c.l.s4 1966171168
        %v4281 = vunpack.c.0.s8 %v4280
        %v4282 = vlaneseq
        %v4283 = vshrl.u32 %v4282, 7
        %v4284 = vsub.s32 %v4281, %v4283
        %v4285 = vrot.slane %v4269, %v4284
        %v4287 = vunpack.c.l.s4 1966171168
        %v4288 = vunpack.c.0.s8 %v4287
        %v4289 = vlaneseq
        %v4290 = vshrl.u32 %v4289, 7
        %v4291 = vsub.s32 %v4288, %v4290
        %v4292 = vrot.slane %v4270, %v4291
        %v4294 = vunpack.c.l.s4 1966171168
        %v4295 = vunpack.c.0.s8 %v4294
        %v4296 = vlaneseq
        %v4297 = vshrl.u32 %v4296, 7
        %v4298 = vsub.s32 %v4295, %v4297
        %v4299 = vrot.slane %v4271, %v4298
        %v4300 = vcombine.low %v4278, %v4285
        %v4301 = vcombine.low %v4292, %v4299
        %v4303 = vunpack.c.l.s4 1966171168
        %v4304 = vunpack.c.0.s8 %v4303
        %v4305 = vlaneseq
        %v4306 = vshrl.u32 %v4305, 7
        %v4307 = vsub.s32 %v4304, %v4306
        %v4308 = vrot.slane %v4300, %v4307
        %v4310 = vunpack.c.l.s4 1966171168
        %v4311 = vunpack.c.0.s8 %v4310
        %v4312 = vlaneseq
        %v4313 = vshrl.u32 %v4312, 7
        %v4314 = vsub.s32 %v4311, %v4313
        %v4315 = vrot.slane %v4301, %v4314
        %v4316 = vcombine.low %v4308, %v4315
        %v4317 = vcombine.low %v2051, %v2055
        %v4318 = vcombine.low %v2059, %v2063
        %v4319 = vcombine.low %v2067, %v2071
        %v4320 = vcombine.low %v2075, %v2079
        %v4322 = vunpack.c.l.s4 1966171168
        %v4323 = vunpack.c.0.s8 %v4322
        %v4324 = vlaneseq
        %v4325 = vshrl.u32 %v4324, 7
        %v4326 = vsub.s32 %v4323, %v4325
        %v4327 = vrot.slane %v4317, %v4326
        %v4329 = vunpack.c.l.s4 1966171168
        %v4330 = vunpack.c.0.s8 %v4329
        %v4331 = vlaneseq
        %v4332 = vshrl.u32 %v4331, 7
        %v4333 = vsub.s32 %v4330, %v4332
        %v4334 = vrot.slane %v4318, %v4333
        %v4336 = vunpack.c.l.s4 1966171168
        %v4337 = vunpack.c.0.s8 %v4336
        %v4338 = vlaneseq
        %v4339 = vshrl.u32 %v4338, 7
        %v4340 = vsub.s32 %v4337, %v4339
        %v4341 = vrot.slane %v4319, %v4340
        %v4343 = vunpack.c.l.s4 1966171168
        %v4344 = vunpack.c.0.s8 %v4343
        %v4345 = vlaneseq
        %v4346 = vshrl.u32 %v4345, 7
        %v4347 = vsub.s32 %v4344, %v4346
        %v4348 = vrot.slane %v4320, %v4347
        %v4349 = vcombine.low %v4327, %v4334
        %v4350 = vcombine.low %v4341, %v4348
        %v4352 = vunpack.c.l.s4 1966171168
        %v4353 = vunpack.c.0.s8 %v4352
        %v4354 = vlaneseq
        %v4355 = vshrl.u32 %v4354, 7
        %v4356 = vsub.s32 %v4353, %v4355
        %v4357 = vrot.slane %v4349, %v4356
        %v4359 = vunpack.c.l.s4 1966171168
        %v4360 = vunpack.c.0.s8 %v4359
        %v4361 = vlaneseq
        %v4362 = vshrl.u32 %v4361, 7
        %v4363 = vsub.s32 %v4360, %v4362
        %v4364 = vrot.slane %v4350, %v4363
        %v4365 = vcombine.low %v4357, %v4364
        %v4366 = vcombine.low %v2083, %v2087
        %v4367 = vcombine.low %v2091, %v2095
        %v4368 = vcombine.low %v2099, %v2103
        %v4369 = vcombine.low %v2107, %v2111
        %v4371 = vunpack.c.l.s4 1966171168
        %v4372 = vunpack.c.0.s8 %v4371
        %v4373 = vlaneseq
        %v4374 = vshrl.u32 %v4373, 7
        %v4375 = vsub.s32 %v4372, %v4374
        %v4376 = vrot.slane %v4366, %v4375
        %v4378 = vunpack.c.l.s4 1966171168
        %v4379 = vunpack.c.0.s8 %v4378
        %v4380 = vlaneseq
        %v4381 = vshrl.u32 %v4380, 7
        %v4382 = vsub.s32 %v4379, %v4381
        %v4383 = vrot.slane %v4367, %v4382
        %v4385 = vunpack.c.l.s4 1966171168
        %v4386 = vunpack.c.0.s8 %v4385
        %v4387 = vlaneseq
        %v4388 = vshrl.u32 %v4387, 7
        %v4389 = vsub.s32 %v4386, %v4388
        %v4390 = vrot.slane %v4368, %v4389
        %v4392 = vunpack.c.l.s4 1966171168
        %v4393 = vunpack.c.0.s8 %v4392
        %v4394 = vlaneseq
        %v4395 = vshrl.u32 %v4394, 7
        %v4396 = vsub.s32 %v4393, %v4395
        %v4397 = vrot.slane %v4369, %v4396
        %v4398 = vcombine.low %v4376, %v4383
        %v4399 = vcombine.low %v4390, %v4397
        %v4401 = vunpack.c.l.s4 1966171168
        %v4402 = vunpack.c.0.s8 %v4401
        %v4403 = vlaneseq
        %v4404 = vshrl.u32 %v4403, 7
        %v4405 = vsub.s32 %v4402, %v4404
        %v4406 = vrot.slane %v4398, %v4405
        %v4408 = vunpack.c.l.s4 1966171168
        %v4409 = vunpack.c.0.s8 %v4408
        %v4410 = vlaneseq
        %v4411 = vshrl.u32 %v4410, 7
        %v4412 = vsub.s32 %v4409, %v4411
        %v4413 = vrot.slane %v4399, %v4412
        %v4414 = vcombine.low %v4406, %v4413
        %v4415 = vcombine.low %v2115, %v2119
        %v4416 = vcombine.low %v2123, %v2127
        %v4417 = vcombine.low %v2131, %v2135
        %v4418 = vcombine.low %v2139, %v2143
        %v4420 = vunpack.c.l.s4 1966171168
        %v4421 = vunpack.c.0.s8 %v4420
        %v4422 = vlaneseq
        %v4423 = vshrl.u32 %v4422, 7
        %v4424 = vsub.s32 %v4421, %v4423
        %v4425 = vrot.slane %v4415, %v4424
        %v4427 = vunpack.c.l.s4 1966171168
        %v4428 = vunpack.c.0.s8 %v4427
        %v4429 = vlaneseq
        %v4430 = vshrl.u32 %v4429, 7
        %v4431 = vsub.s32 %v4428, %v4430
        %v4432 = vrot.slane %v4416, %v4431
        %v4434 = vunpack.c.l.s4 1966171168
        %v4435 = vunpack.c.0.s8 %v4434
        %v4436 = vlaneseq
        %v4437 = vshrl.u32 %v4436, 7
        %v4438 = vsub.s32 %v4435, %v4437
        %v4439 = vrot.slane %v4417, %v4438
        %v4441 = vunpack.c.l.s4 1966171168
        %v4442 = vunpack.c.0.s8 %v4441
        %v4443 = vlaneseq
        %v4444 = vshrl.u32 %v4443, 7
        %v4445 = vsub.s32 %v4442, %v4444
        %v4446 = vrot.slane %v4418, %v4445
        %v4447 = vcombine.low %v4425, %v4432
        %v4448 = vcombine.low %v4439, %v4446
        %v4450 = vunpack.c.l.s4 1966171168
        %v4451 = vunpack.c.0.s8 %v4450
        %v4452 = vlaneseq
        %v4453 = vshrl.u32 %v4452, 7
        %v4454 = vsub.s32 %v4451, %v4453
        %v4455 = vrot.slane %v4447, %v4454
        %v4457 = vunpack.c.l.s4 1966171168
        %v4458 = vunpack.c.0.s8 %v4457
        %v4459 = vlaneseq
        %v4460 = vshrl.u32 %v4459, 7
        %v4461 = vsub.s32 %v4458, %v4460
        %v4462 = vrot.slane %v4448, %v4461
        %v4463 = vcombine.low %v4455, %v4462
        %v4464 = vcombine.low %v2147, %v2151
        %v4465 = vcombine.low %v2155, %v2159
        %v4466 = vcombine.low %v2163, %v2167
        %v4467 = vcombine.low %v2171, %v2175
        %v4469 = vunpack.c.l.s4 1966171168
        %v4470 = vunpack.c.0.s8 %v4469
        %v4471 = vlaneseq
        %v4472 = vshrl.u32 %v4471, 7
        %v4473 = vsub.s32 %v4470, %v4472
        %v4474 = vrot.slane %v4464, %v4473
        %v4476 = vunpack.c.l.s4 1966171168
        %v4477 = vunpack.c.0.s8 %v4476
        %v4478 = vlaneseq
        %v4479 = vshrl.u32 %v4478, 7
        %v4480 = vsub.s32 %v4477, %v4479
        %v4481 = vrot.slane %v4465, %v4480
        %v4483 = vunpack.c.l.s4 1966171168
        %v4484 = vunpack.c.0.s8 %v4483
        %v4485 = vlaneseq
        %v4486 = vshrl.u32 %v4485, 7
        %v4487 = vsub.s32 %v4484, %v4486
        %v4488 = vrot.slane %v4466, %v4487
        %v4490 = vunpack.c.l.s4 1966171168
        %v4491 = vunpack.c.0.s8 %v4490
        %v4492 = vlaneseq
        %v4493 = vshrl.u32 %v4492, 7
        %v4494 = vsub.s32 %v4491, %v4493
        %v4495 = vrot.slane %v4467, %v4494
        %v4496 = vcombine.low %v4474, %v4481
        %v4497 = vcombine.low %v4488, %v4495
        %v4499 = vunpack.c.l.s4 1966171168
        %v4500 = vunpack.c.0.s8 %v4499
        %v4501 = vlaneseq
        %v4502 = vshrl.u32 %v4501, 7
        %v4503 = vsub.s32 %v4500, %v4502
        %v4504 = vrot.slane %v4496, %v4503
        %v4506 = vunpack.c.l.s4 1966171168
        %v4507 = vunpack.c.0.s8 %v4506
        %v4508 = vlaneseq
        %v4509 = vshrl.u32 %v4508, 7
        %v4510 = vsub.s32 %v4507, %v4509
        %v4511 = vrot.slane %v4497, %v4510
        %v4512 = vcombine.low %v4504, %v4511
        %v4513 = vcombine.low %v2179, %v2183
        %v4514 = vcombine.low %v2187, %v2191
        %v4515 = vcombine.low %v2195, %v2199
        %v4516 = vcombine.low %v2203, %v2207
        %v4518 = vunpack.c.l.s4 1966171168
        %v4519 = vunpack.c.0.s8 %v4518
        %v4520 = vlaneseq
        %v4521 = vshrl.u32 %v4520, 7
        %v4522 = vsub.s32 %v4519, %v4521
        %v4523 = vrot.slane %v4513, %v4522
        %v4525 = vunpack.c.l.s4 1966171168
        %v4526 = vunpack.c.0.s8 %v4525
        %v4527 = vlaneseq
        %v4528 = vshrl.u32 %v4527, 7
        %v4529 = vsub.s32 %v4526, %v4528
        %v4530 = vrot.slane %v4514, %v4529
        %v4532 = vunpack.c.l.s4 1966171168
        %v4533 = vunpack.c.0.s8 %v4532
        %v4534 = vlaneseq
        %v4535 = vshrl.u32 %v4534, 7
        %v4536 = vsub.s32 %v4533, %v4535
        %v4537 = vrot.slane %v4515, %v4536
        %v4539 = vunpack.c.l.s4 1966171168
        %v4540 = vunpack.c.0.s8 %v4539
        %v4541 = vlaneseq
        %v4542 = vshrl.u32 %v4541, 7
        %v4543 = vsub.s32 %v4540, %v4542
        %v4544 = vrot.slane %v4516, %v4543
        %v4545 = vcombine.low %v4523, %v4530
        %v4546 = vcombine.low %v4537, %v4544
        %v4548 = vunpack.c.l.s4 1966171168
        %v4549 = vunpack.c.0.s8 %v4548
        %v4550 = vlaneseq
        %v4551 = vshrl.u32 %v4550, 7
        %v4552 = vsub.s32 %v4549, %v4551
        %v4553 = vrot.slane %v4545, %v4552
        %v4555 = vunpack.c.l.s4 1966171168
        %v4556 = vunpack.c.0.s8 %v4555
        %v4557 = vlaneseq
        %v4558 = vshrl.u32 %v4557, 7
        %v4559 = vsub.s32 %v4556, %v4558
        %v4560 = vrot.slane %v4546, %v4559
        %v4561 = vcombine.low %v4553, %v4560
        %v4562 = vcombine.low %v2211, %v2215
        %v4563 = vcombine.low %v2219, %v2223
        %v4564 = vcombine.low %v2227, %v2231
        %v4565 = vcombine.low %v2235, %v2239
        %v4567 = vunpack.c.l.s4 1966171168
        %v4568 = vunpack.c.0.s8 %v4567
        %v4569 = vlaneseq
        %v4570 = vshrl.u32 %v4569, 7
        %v4571 = vsub.s32 %v4568, %v4570
        %v4572 = vrot.slane %v4562, %v4571
        %v4574 = vunpack.c.l.s4 1966171168
        %v4575 = vunpack.c.0.s8 %v4574
        %v4576 = vlaneseq
        %v4577 = vshrl.u32 %v4576, 7
        %v4578 = vsub.s32 %v4575, %v4577
        %v4579 = vrot.slane %v4563, %v4578
        %v4581 = vunpack.c.l.s4 1966171168
        %v4582 = vunpack.c.0.s8 %v4581
        %v4583 = vlaneseq
        %v4584 = vshrl.u32 %v4583, 7
        %v4585 = vsub.s32 %v4582, %v4584
        %v4586 = vrot.slane %v4564, %v4585
        %v4588 = vunpack.c.l.s4 1966171168
        %v4589 = vunpack.c.0.s8 %v4588
        %v4590 = vlaneseq
        %v4591 = vshrl.u32 %v4590, 7
        %v4592 = vsub.s32 %v4589, %v4591
        %v4593 = vrot.slane %v4565, %v4592
        %v4594 = vcombine.low %v4572, %v4579
        %v4595 = vcombine.low %v4586, %v4593
        %v4597 = vunpack.c.l.s4 1966171168
        %v4598 = vunpack.c.0.s8 %v4597
        %v4599 = vlaneseq
        %v4600 = vshrl.u32 %v4599, 7
        %v4601 = vsub.s32 %v4598, %v4600
        %v4602 = vrot.slane %v4594, %v4601
        %v4604 = vunpack.c.l.s4 1966171168
        %v4605 = vunpack.c.0.s8 %v4604
        %v4606 = vlaneseq
        %v4607 = vshrl.u32 %v4606, 7
        %v4608 = vsub.s32 %v4605, %v4607
        %v4609 = vrot.slane %v4595, %v4608
        %v4610 = vcombine.low %v4602, %v4609
        %v4611 = vcombine.low %v2243, %v2247
        %v4612 = vcombine.low %v2251, %v2255
        %v4613 = vcombine.low %v2259, %v2263
        %v4614 = vcombine.low %v2267, %v2271
        %v4616 = vunpack.c.l.s4 1966171168
        %v4617 = vunpack.c.0.s8 %v4616
        %v4618 = vlaneseq
        %v4619 = vshrl.u32 %v4618, 7
        %v4620 = vsub.s32 %v4617, %v4619
        %v4621 = vrot.slane %v4611, %v4620
        %v4623 = vunpack.c.l.s4 1966171168
        %v4624 = vunpack.c.0.s8 %v4623
        %v4625 = vlaneseq
        %v4626 = vshrl.u32 %v4625, 7
        %v4627 = vsub.s32 %v4624, %v4626
        %v4628 = vrot.slane %v4612, %v4627
        %v4630 = vunpack.c.l.s4 1966171168
        %v4631 = vunpack.c.0.s8 %v4630
        %v4632 = vlaneseq
        %v4633 = vshrl.u32 %v4632, 7
        %v4634 = vsub.s32 %v4631, %v4633
        %v4635 = vrot.slane %v4613, %v4634
        %v4637 = vunpack.c.l.s4 1966171168
        %v4638 = vunpack.c.0.s8 %v4637
        %v4639 = vlaneseq
        %v4640 = vshrl.u32 %v4639, 7
        %v4641 = vsub.s32 %v4638, %v4640
        %v4642 = vrot.slane %v4614, %v4641
        %v4643 = vcombine.low %v4621, %v4628
        %v4644 = vcombine.low %v4635, %v4642
        %v4646 = vunpack.c.l.s4 1966171168
        %v4647 = vunpack.c.0.s8 %v4646
        %v4648 = vlaneseq
        %v4649 = vshrl.u32 %v4648, 7
        %v4650 = vsub.s32 %v4647, %v4649
        %v4651 = vrot.slane %v4643, %v4650
        %v4653 = vunpack.c.l.s4 1966171168
        %v4654 = vunpack.c.0.s8 %v4653
        %v4655 = vlaneseq
        %v4656 = vshrl.u32 %v4655, 7
        %v4657 = vsub.s32 %v4654, %v4656
        %v4658 = vrot.slane %v4644, %v4657
        %v4659 = vcombine.low %v4651, %v4658
        %v4660 = vcombine.low %v2275, %v2279
        %v4661 = vcombine.low %v2283, %v2287
        %v4662 = vcombine.low %v2291, %v2295
        %v4663 = vcombine.low %v2299, %v2303
        %v4665 = vunpack.c.l.s4 1966171168
        %v4666 = vunpack.c.0.s8 %v4665
        %v4667 = vlaneseq
        %v4668 = vshrl.u32 %v4667, 7
        %v4669 = vsub.s32 %v4666, %v4668
        %v4670 = vrot.slane %v4660, %v4669
        %v4672 = vunpack.c.l.s4 1966171168
        %v4673 = vunpack.c.0.s8 %v4672
        %v4674 = vlaneseq
        %v4675 = vshrl.u32 %v4674, 7
        %v4676 = vsub.s32 %v4673, %v4675
        %v4677 = vrot.slane %v4661, %v4676
        %v4679 = vunpack.c.l.s4 1966171168
        %v4680 = vunpack.c.0.s8 %v4679
        %v4681 = vlaneseq
        %v4682 = vshrl.u32 %v4681, 7
        %v4683 = vsub.s32 %v4680, %v4682
        %v4684 = vrot.slane %v4662, %v4683
        %v4686 = vunpack.c.l.s4 1966171168
        %v4687 = vunpack.c.0.s8 %v4686
        %v4688 = vlaneseq
        %v4689 = vshrl.u32 %v4688, 7
        %v4690 = vsub.s32 %v4687, %v4689
        %v4691 = vrot.slane %v4663, %v4690
        %v4692 = vcombine.low %v4670, %v4677
        %v4693 = vcombine.low %v4684, %v4691
        %v4695 = vunpack.c.l.s4 1966171168
        %v4696 = vunpack.c.0.s8 %v4695
        %v4697 = vlaneseq
        %v4698 = vshrl.u32 %v4697, 7
        %v4699 = vsub.s32 %v4696, %v4698
        %v4700 = vrot.slane %v4692, %v4699
        %v4702 = vunpack.c.l.s4 1966171168
        %v4703 = vunpack.c.0.s8 %v4702
        %v4704 = vlaneseq
        %v4705 = vshrl.u32 %v4704, 7
        %v4706 = vsub.s32 %v4703, %v4705
        %v4707 = vrot.slane %v4693, %v4706
        %v4708 = vcombine.low %v4700, %v4707
        %v4709 = vcombine.low %v2307, %v2311
        %v4710 = vcombine.low %v2315, %v2319
        %v4711 = vcombine.low %v2323, %v2327
        %v4712 = vcombine.low %v2331, %v2335
        %v4714 = vunpack.c.l.s4 1966171168
        %v4715 = vunpack.c.0.s8 %v4714
        %v4716 = vlaneseq
        %v4717 = vshrl.u32 %v4716, 7
        %v4718 = vsub.s32 %v4715, %v4717
        %v4719 = vrot.slane %v4709, %v4718
        %v4721 = vunpack.c.l.s4 1966171168
        %v4722 = vunpack.c.0.s8 %v4721
        %v4723 = vlaneseq
        %v4724 = vshrl.u32 %v4723, 7
        %v4725 = vsub.s32 %v4722, %v4724
        %v4726 = vrot.slane %v4710, %v4725
        %v4728 = vunpack.c.l.s4 1966171168
        %v4729 = vunpack.c.0.s8 %v4728
        %v4730 = vlaneseq
        %v4731 = vshrl.u32 %v4730, 7
        %v4732 = vsub.s32 %v4729, %v4731
        %v4733 = vrot.slane %v4711, %v4732
        %v4735 = vunpack.c.l.s4 1966171168
        %v4736 = vunpack.c.0.s8 %v4735
        %v4737 = vlaneseq
        %v4738 = vshrl.u32 %v4737, 7
        %v4739 = vsub.s32 %v4736, %v4738
        %v4740 = vrot.slane %v4712, %v4739
        %v4741 = vcombine.low %v4719, %v4726
        %v4742 = vcombine.low %v4733, %v4740
        %v4744 = vunpack.c.l.s4 1966171168
        %v4745 = vunpack.c.0.s8 %v4744
        %v4746 = vlaneseq
        %v4747 = vshrl.u32 %v4746, 7
        %v4748 = vsub.s32 %v4745, %v4747
        %v4749 = vrot.slane %v4741, %v4748
        %v4751 = vunpack.c.l.s4 1966171168
        %v4752 = vunpack.c.0.s8 %v4751
        %v4753 = vlaneseq
        %v4754 = vshrl.u32 %v4753, 7
        %v4755 = vsub.s32 %v4752, %v4754
        %v4756 = vrot.slane %v4742, %v4755
        %v4757 = vcombine.low %v4749, %v4756
        %v4758 = vcombine.low %v2339, %v2343
        %v4759 = vcombine.low %v2347, %v2351
        %v4760 = vcombine.low %v2355, %v2359
        %v4761 = vcombine.low %v2363, %v2367
        %v4763 = vunpack.c.l.s4 1966171168
        %v4764 = vunpack.c.0.s8 %v4763
        %v4765 = vlaneseq
        %v4766 = vshrl.u32 %v4765, 7
        %v4767 = vsub.s32 %v4764, %v4766
        %v4768 = vrot.slane %v4758, %v4767
        %v4770 = vunpack.c.l.s4 1966171168
        %v4771 = vunpack.c.0.s8 %v4770
        %v4772 = vlaneseq
        %v4773 = vshrl.u32 %v4772, 7
        %v4774 = vsub.s32 %v4771, %v4773
        %v4775 = vrot.slane %v4759, %v4774
        %v4777 = vunpack.c.l.s4 1966171168
        %v4778 = vunpack.c.0.s8 %v4777
        %v4779 = vlaneseq
        %v4780 = vshrl.u32 %v4779, 7
        %v4781 = vsub.s32 %v4778, %v4780
        %v4782 = vrot.slane %v4760, %v4781
        %v4784 = vunpack.c.l.s4 1966171168
        %v4785 = vunpack.c.0.s8 %v4784
        %v4786 = vlaneseq
        %v4787 = vshrl.u32 %v4786, 7
        %v4788 = vsub.s32 %v4785, %v4787
        %v4789 = vrot.slane %v4761, %v4788
        %v4790 = vcombine.low %v4768, %v4775
        %v4791 = vcombine.low %v4782, %v4789
        %v4793 = vunpack.c.l.s4 1966171168
        %v4794 = vunpack.c.0.s8 %v4793
        %v4795 = vlaneseq
        %v4796 = vshrl.u32 %v4795, 7
        %v4797 = vsub.s32 %v4794, %v4796
        %v4798 = vrot.slane %v4790, %v4797
        %v4800 = vunpack.c.l.s4 1966171168
        %v4801 = vunpack.c.0.s8 %v4800
        %v4802 = vlaneseq
        %v4803 = vshrl.u32 %v4802, 7
        %v4804 = vsub.s32 %v4801, %v4803
        %v4805 = vrot.slane %v4791, %v4804
        %v4806 = vcombine.low %v4798, %v4805
        %v4807 = vcombine.low %v2371, %v2375
        %v4808 = vcombine.low %v2379, %v2383
        %v4809 = vcombine.low %v2387, %v2391
        %v4810 = vcombine.low %v2395, %v2399
        %v4812 = vunpack.c.l.s4 1966171168
        %v4813 = vunpack.c.0.s8 %v4812
        %v4814 = vlaneseq
        %v4815 = vshrl.u32 %v4814, 7
        %v4816 = vsub.s32 %v4813, %v4815
        %v4817 = vrot.slane %v4807, %v4816
        %v4819 = vunpack.c.l.s4 1966171168
        %v4820 = vunpack.c.0.s8 %v4819
        %v4821 = vlaneseq
        %v4822 = vshrl.u32 %v4821, 7
        %v4823 = vsub.s32 %v4820, %v4822
        %v4824 = vrot.slane %v4808, %v4823
        %v4826 = vunpack.c.l.s4 1966171168
        %v4827 = vunpack.c.0.s8 %v4826
        %v4828 = vlaneseq
        %v4829 = vshrl.u32 %v4828, 7
        %v4830 = vsub.s32 %v4827, %v4829
        %v4831 = vrot.slane %v4809, %v4830
        %v4833 = vunpack.c.l.s4 1966171168
        %v4834 = vunpack.c.0.s8 %v4833
        %v4835 = vlaneseq
        %v4836 = vshrl.u32 %v4835, 7
        %v4837 = vsub.s32 %v4834, %v4836
        %v4838 = vrot.slane %v4810, %v4837
        %v4839 = vcombine.low %v4817, %v4824
        %v4840 = vcombine.low %v4831, %v4838
        %v4842 = vunpack.c.l.s4 1966171168
        %v4843 = vunpack.c.0.s8 %v4842
        %v4844 = vlaneseq
        %v4845 = vshrl.u32 %v4844, 7
        %v4846 = vsub.s32 %v4843, %v4845
        %v4847 = vrot.slane %v4839, %v4846
        %v4849 = vunpack.c.l.s4 1966171168
        %v4850 = vunpack.c.0.s8 %v4849
        %v4851 = vlaneseq
        %v4852 = vshrl.u32 %v4851, 7
        %v4853 = vsub.s32 %v4850, %v4852
        %v4854 = vrot.slane %v4840, %v4853
        %v4855 = vcombine.low %v4847, %v4854
        %v4856 = vcombine.low %v2403, %v2407
        %v4857 = vcombine.low %v2411, %v2415
        %v4858 = vcombine.low %v2419, %v2423
        %v4859 = vcombine.low %v2427, %v2431
        %v4861 = vunpack.c.l.s4 1966171168
        %v4862 = vunpack.c.0.s8 %v4861
        %v4863 = vlaneseq
        %v4864 = vshrl.u32 %v4863, 7
        %v4865 = vsub.s32 %v4862, %v4864
        %v4866 = vrot.slane %v4856, %v4865
        %v4868 = vunpack.c.l.s4 1966171168
        %v4869 = vunpack.c.0.s8 %v4868
        %v4870 = vlaneseq
        %v4871 = vshrl.u32 %v4870, 7
        %v4872 = vsub.s32 %v4869, %v4871
        %v4873 = vrot.slane %v4857, %v4872
        %v4875 = vunpack.c.l.s4 1966171168
        %v4876 = vunpack.c.0.s8 %v4875
        %v4877 = vlaneseq
        %v4878 = vshrl.u32 %v4877, 7
        %v4879 = vsub.s32 %v4876, %v4878
        %v4880 = vrot.slane %v4858, %v4879
        %v4882 = vunpack.c.l.s4 1966171168
        %v4883 = vunpack.c.0.s8 %v4882
        %v4884 = vlaneseq
        %v4885 = vshrl.u32 %v4884, 7
        %v4886 = vsub.s32 %v4883, %v4885
        %v4887 = vrot.slane %v4859, %v4886
        %v4888 = vcombine.low %v4866, %v4873
        %v4889 = vcombine.low %v4880, %v4887
        %v4891 = vunpack.c.l.s4 1966171168
        %v4892 = vunpack.c.0.s8 %v4891
        %v4893 = vlaneseq
        %v4894 = vshrl.u32 %v4893, 7
        %v4895 = vsub.s32 %v4892, %v4894
        %v4896 = vrot.slane %v4888, %v4895
        %v4898 = vunpack.c.l.s4 1966171168
        %v4899 = vunpack.c.0.s8 %v4898
        %v4900 = vlaneseq
        %v4901 = vshrl.u32 %v4900, 7
        %v4902 = vsub.s32 %v4899, %v4901
        %v4903 = vrot.slane %v4889, %v4902
        %v4904 = vcombine.low %v4896, %v4903
        %v4905 = vcombine.low %v2435, %v2439
        %v4906 = vcombine.low %v2443, %v2447
        %v4907 = vcombine.low %v2451, %v2455
        %v4908 = vcombine.low %v2459, %v2463
        %v4910 = vunpack.c.l.s4 1966171168
        %v4911 = vunpack.c.0.s8 %v4910
        %v4912 = vlaneseq
        %v4913 = vshrl.u32 %v4912, 7
        %v4914 = vsub.s32 %v4911, %v4913
        %v4915 = vrot.slane %v4905, %v4914
        %v4917 = vunpack.c.l.s4 1966171168
        %v4918 = vunpack.c.0.s8 %v4917
        %v4919 = vlaneseq
        %v4920 = vshrl.u32 %v4919, 7
        %v4921 = vsub.s32 %v4918, %v4920
        %v4922 = vrot.slane %v4906, %v4921
        %v4924 = vunpack.c.l.s4 1966171168
        %v4925 = vunpack.c.0.s8 %v4924
        %v4926 = vlaneseq
        %v4927 = vshrl.u32 %v4926, 7
        %v4928 = vsub.s32 %v4925, %v4927
        %v4929 = vrot.slane %v4907, %v4928
        %v4931 = vunpack.c.l.s4 1966171168
        %v4932 = vunpack.c.0.s8 %v4931
        %v4933 = vlaneseq
        %v4934 = vshrl.u32 %v4933, 7
        %v4935 = vsub.s32 %v4932, %v4934
        %v4936 = vrot.slane %v4908, %v4935
        %v4937 = vcombine.low %v4915, %v4922
        %v4938 = vcombine.low %v4929, %v4936
        %v4940 = vunpack.c.l.s4 1966171168
        %v4941 = vunpack.c.0.s8 %v4940
        %v4942 = vlaneseq
        %v4943 = vshrl.u32 %v4942, 7
        %v4944 = vsub.s32 %v4941, %v4943
        %v4945 = vrot.slane %v4937, %v4944
        %v4947 = vunpack.c.l.s4 1966171168
        %v4948 = vunpack.c.0.s8 %v4947
        %v4949 = vlaneseq
        %v4950 = vshrl.u32 %v4949, 7
        %v4951 = vsub.s32 %v4948, %v4950
        %v4952 = vrot.slane %v4938, %v4951
        %v4953 = vcombine.low %v4945, %v4952
        %v4954 = vcombine.low %v2467, %v2471
        %v4955 = vcombine.low %v2475, %v2479
        %v4956 = vcombine.low %v2483, %v2487
        %v4957 = vcombine.low %v2491, %v2495
        %v4959 = vunpack.c.l.s4 1966171168
        %v4960 = vunpack.c.0.s8 %v4959
        %v4961 = vlaneseq
        %v4962 = vshrl.u32 %v4961, 7
        %v4963 = vsub.s32 %v4960, %v4962
        %v4964 = vrot.slane %v4954, %v4963
        %v4966 = vunpack.c.l.s4 1966171168
        %v4967 = vunpack.c.0.s8 %v4966
        %v4968 = vlaneseq
        %v4969 = vshrl.u32 %v4968, 7
        %v4970 = vsub.s32 %v4967, %v4969
        %v4971 = vrot.slane %v4955, %v4970
        %v4973 = vunpack.c.l.s4 1966171168
        %v4974 = vunpack.c.0.s8 %v4973
        %v4975 = vlaneseq
        %v4976 = vshrl.u32 %v4975, 7
        %v4977 = vsub.s32 %v4974, %v4976
        %v4978 = vrot.slane %v4956, %v4977
        %v4980 = vunpack.c.l.s4 1966171168
        %v4981 = vunpack.c.0.s8 %v4980
        %v4982 = vlaneseq
        %v4983 = vshrl.u32 %v4982, 7
        %v4984 = vsub.s32 %v4981, %v4983
        %v4985 = vrot.slane %v4957, %v4984
        %v4986 = vcombine.low %v4964, %v4971
        %v4987 = vcombine.low %v4978, %v4985
        %v4989 = vunpack.c.l.s4 1966171168
        %v4990 = vunpack.c.0.s8 %v4989
        %v4991 = vlaneseq
        %v4992 = vshrl.u32 %v4991, 7
        %v4993 = vsub.s32 %v4990, %v4992
        %v4994 = vrot.slane %v4986, %v4993
        %v4996 = vunpack.c.l.s4 1966171168
        %v4997 = vunpack.c.0.s8 %v4996
        %v4998 = vlaneseq
        %v4999 = vshrl.u32 %v4998, 7
        %v5000 = vsub.s32 %v4997, %v4999
        %v5001 = vrot.slane %v4987, %v5000
        %v5002 = vcombine.low %v4994, %v5001
        %v5003 = vcombine.low %v2499, %v2503
        %v5004 = vcombine.low %v2507, %v2511
        %v5005 = vcombine.low %v2515, %v2519
        %v5006 = vcombine.low %v2523, %v2527
        %v5008 = vunpack.c.l.s4 1966171168
        %v5009 = vunpack.c.0.s8 %v5008
        %v5010 = vlaneseq
        %v5011 = vshrl.u32 %v5010, 7
        %v5012 = vsub.s32 %v5009, %v5011
        %v5013 = vrot.slane %v5003, %v5012
        %v5015 = vunpack.c.l.s4 1966171168
        %v5016 = vunpack.c.0.s8 %v5015
        %v5017 = vlaneseq
        %v5018 = vshrl.u32 %v5017, 7
        %v5019 = vsub.s32 %v5016, %v5018
        %v5020 = vrot.slane %v5004, %v5019
        %v5022 = vunpack.c.l.s4 1966171168
        %v5023 = vunpack.c.0.s8 %v5022
        %v5024 = vlaneseq
        %v5025 = vshrl.u32 %v5024, 7
        %v5026 = vsub.s32 %v5023, %v5025
        %v5027 = vrot.slane %v5005, %v5026
        %v5029 = vunpack.c.l.s4 1966171168
        %v5030 = vunpack.c.0.s8 %v5029
        %v5031 = vlaneseq
        %v5032 = vshrl.u32 %v5031, 7
        %v5033 = vsub.s32 %v5030, %v5032
        %v5034 = vrot.slane %v5006, %v5033
        %v5035 = vcombine.low %v5013, %v5020
        %v5036 = vcombine.low %v5027, %v5034
        %v5038 = vunpack.c.l.s4 1966171168
        %v5039 = vunpack.c.0.s8 %v5038
        %v5040 = vlaneseq
        %v5041 = vshrl.u32 %v5040, 7
        %v5042 = vsub.s32 %v5039, %v5041
        %v5043 = vrot.slane %v5035, %v5042
        %v5045 = vunpack.c.l.s4 1966171168
        %v5046 = vunpack.c.0.s8 %v5045
        %v5047 = vlaneseq
        %v5048 = vshrl.u32 %v5047, 7
        %v5049 = vsub.s32 %v5046, %v5048
        %v5050 = vrot.slane %v5036, %v5049
        %v5051 = vcombine.low %v5043, %v5050
        %v5052 = vcombine.low %v2531, %v2535
        %v5053 = vcombine.low %v2539, %v2543
        %v5054 = vcombine.low %v2547, %v2551
        %v5055 = vcombine.low %v2555, %v2559
        %v5057 = vunpack.c.l.s4 1966171168
        %v5058 = vunpack.c.0.s8 %v5057
        %v5059 = vlaneseq
        %v5060 = vshrl.u32 %v5059, 7
        %v5061 = vsub.s32 %v5058, %v5060
        %v5062 = vrot.slane %v5052, %v5061
        %v5064 = vunpack.c.l.s4 1966171168
        %v5065 = vunpack.c.0.s8 %v5064
        %v5066 = vlaneseq
        %v5067 = vshrl.u32 %v5066, 7
        %v5068 = vsub.s32 %v5065, %v5067
        %v5069 = vrot.slane %v5053, %v5068
        %v5071 = vunpack.c.l.s4 1966171168
        %v5072 = vunpack.c.0.s8 %v5071
        %v5073 = vlaneseq
        %v5074 = vshrl.u32 %v5073, 7
        %v5075 = vsub.s32 %v5072, %v5074
        %v5076 = vrot.slane %v5054, %v5075
        %v5078 = vunpack.c.l.s4 1966171168
        %v5079 = vunpack.c.0.s8 %v5078
        %v5080 = vlaneseq
        %v5081 = vshrl.u32 %v5080, 7
        %v5082 = vsub.s32 %v5079, %v5081
        %v5083 = vrot.slane %v5055, %v5082
        %v5084 = vcombine.low %v5062, %v5069
        %v5085 = vcombine.low %v5076, %v5083
        %v5087 = vunpack.c.l.s4 1966171168
        %v5088 = vunpack.c.0.s8 %v5087
        %v5089 = vlaneseq
        %v5090 = vshrl.u32 %v5089, 7
        %v5091 = vsub.s32 %v5088, %v5090
        %v5092 = vrot.slane %v5084, %v5091
        %v5094 = vunpack.c.l.s4 1966171168
        %v5095 = vunpack.c.0.s8 %v5094
        %v5096 = vlaneseq
        %v5097 = vshrl.u32 %v5096, 7
        %v5098 = vsub.s32 %v5095, %v5097
        %v5099 = vrot.slane %v5085, %v5098
        %v5100 = vcombine.low %v5092, %v5099
        %v5101 = vcombine.low %v2563, %v2567
        %v5102 = vcombine.low %v2571, %v2575
        %v5103 = vcombine.low %v2579, %v2583
        %v5104 = vcombine.low %v2587, %v2591
        %v5106 = vunpack.c.l.s4 1966171168
        %v5107 = vunpack.c.0.s8 %v5106
        %v5108 = vlaneseq
        %v5109 = vshrl.u32 %v5108, 7
        %v5110 = vsub.s32 %v5107, %v5109
        %v5111 = vrot.slane %v5101, %v5110
        %v5113 = vunpack.c.l.s4 1966171168
        %v5114 = vunpack.c.0.s8 %v5113
        %v5115 = vlaneseq
        %v5116 = vshrl.u32 %v5115, 7
        %v5117 = vsub.s32 %v5114, %v5116
        %v5118 = vrot.slane %v5102, %v5117
        %v5120 = vunpack.c.l.s4 1966171168
        %v5121 = vunpack.c.0.s8 %v5120
        %v5122 = vlaneseq
        %v5123 = vshrl.u32 %v5122, 7
        %v5124 = vsub.s32 %v5121, %v5123
        %v5125 = vrot.slane %v5103, %v5124
        %v5127 = vunpack.c.l.s4 1966171168
        %v5128 = vunpack.c.0.s8 %v5127
        %v5129 = vlaneseq
        %v5130 = vshrl.u32 %v5129, 7
        %v5131 = vsub.s32 %v5128, %v5130
        %v5132 = vrot.slane %v5104, %v5131
        %v5133 = vcombine.low %v5111, %v5118
        %v5134 = vcombine.low %v5125, %v5132
        %v5136 = vunpack.c.l.s4 1966171168
        %v5137 = vunpack.c.0.s8 %v5136
        %v5138 = vlaneseq
        %v5139 = vshrl.u32 %v5138, 7
        %v5140 = vsub.s32 %v5137, %v5139
        %v5141 = vrot.slane %v5133, %v5140
        %v5143 = vunpack.c.l.s4 1966171168
        %v5144 = vunpack.c.0.s8 %v5143
        %v5145 = vlaneseq
        %v5146 = vshrl.u32 %v5145, 7
        %v5147 = vsub.s32 %v5144, %v5146
        %v5148 = vrot.slane %v5134, %v5147
        %v5149 = vcombine.low %v5141, %v5148
        %v5150 = vcombine.low %v2595, %v2599
        %v5151 = vcombine.low %v2603, %v2607
        %v5152 = vcombine.low %v2611, %v2615
        %v5153 = vcombine.low %v2619, %v2623
        %v5155 = vunpack.c.l.s4 1966171168
        %v5156 = vunpack.c.0.s8 %v5155
        %v5157 = vlaneseq
        %v5158 = vshrl.u32 %v5157, 7
        %v5159 = vsub.s32 %v5156, %v5158
        %v5160 = vrot.slane %v5150, %v5159
        %v5162 = vunpack.c.l.s4 1966171168
        %v5163 = vunpack.c.0.s8 %v5162
        %v5164 = vlaneseq
        %v5165 = vshrl.u32 %v5164, 7
        %v5166 = vsub.s32 %v5163, %v5165
        %v5167 = vrot.slane %v5151, %v5166
        %v5169 = vunpack.c.l.s4 1966171168
        %v5170 = vunpack.c.0.s8 %v5169
        %v5171 = vlaneseq
        %v5172 = vshrl.u32 %v5171, 7
        %v5173 = vsub.s32 %v5170, %v5172
        %v5174 = vrot.slane %v5152, %v5173
        %v5176 = vunpack.c.l.s4 1966171168
        %v5177 = vunpack.c.0.s8 %v5176
        %v5178 = vlaneseq
        %v5179 = vshrl.u32 %v5178, 7
        %v5180 = vsub.s32 %v5177, %v5179
        %v5181 = vrot.slane %v5153, %v5180
        %v5182 = vcombine.low %v5160, %v5167
        %v5183 = vcombine.low %v5174, %v5181
        %v5185 = vunpack.c.l.s4 1966171168
        %v5186 = vunpack.c.0.s8 %v5185
        %v5187 = vlaneseq
        %v5188 = vshrl.u32 %v5187, 7
        %v5189 = vsub.s32 %v5186, %v5188
        %v5190 = vrot.slane %v5182, %v5189
        %v5192 = vunpack.c.l.s4 1966171168
        %v5193 = vunpack.c.0.s8 %v5192
        %v5194 = vlaneseq
        %v5195 = vshrl.u32 %v5194, 7
        %v5196 = vsub.s32 %v5193, %v5195
        %v5197 = vrot.slane %v5183, %v5196
        %v5198 = vcombine.low %v5190, %v5197
        %v5199 = vcombine.low %v2627, %v2631
        %v5200 = vcombine.low %v2635, %v2639
        %v5201 = vcombine.low %v2643, %v2647
        %v5202 = vcombine.low %v2651, %v2655
        %v5204 = vunpack.c.l.s4 1966171168
        %v5205 = vunpack.c.0.s8 %v5204
        %v5206 = vlaneseq
        %v5207 = vshrl.u32 %v5206, 7
        %v5208 = vsub.s32 %v5205, %v5207
        %v5209 = vrot.slane %v5199, %v5208
        %v5211 = vunpack.c.l.s4 1966171168
        %v5212 = vunpack.c.0.s8 %v5211
        %v5213 = vlaneseq
        %v5214 = vshrl.u32 %v5213, 7
        %v5215 = vsub.s32 %v5212, %v5214
        %v5216 = vrot.slane %v5200, %v5215
        %v5218 = vunpack.c.l.s4 1966171168
        %v5219 = vunpack.c.0.s8 %v5218
        %v5220 = vlaneseq
        %v5221 = vshrl.u32 %v5220, 7
        %v5222 = vsub.s32 %v5219, %v5221
        %v5223 = vrot.slane %v5201, %v5222
        %v5225 = vunpack.c.l.s4 1966171168
        %v5226 = vunpack.c.0.s8 %v5225
        %v5227 = vlaneseq
        %v5228 = vshrl.u32 %v5227, 7
        %v5229 = vsub.s32 %v5226, %v5228
        %v5230 = vrot.slane %v5202, %v5229
        %v5231 = vcombine.low %v5209, %v5216
        %v5232 = vcombine.low %v5223, %v5230
        %v5234 = vunpack.c.l.s4 1966171168
        %v5235 = vunpack.c.0.s8 %v5234
        %v5236 = vlaneseq
        %v5237 = vshrl.u32 %v5236, 7
        %v5238 = vsub.s32 %v5235, %v5237
        %v5239 = vrot.slane %v5231, %v5238
        %v5241 = vunpack.c.l.s4 1966171168
        %v5242 = vunpack.c.0.s8 %v5241
        %v5243 = vlaneseq
        %v5244 = vshrl.u32 %v5243, 7
        %v5245 = vsub.s32 %v5242, %v5244
        %v5246 = vrot.slane %v5232, %v5245
        %v5247 = vcombine.low %v5239, %v5246
        %v5248 = vcombine.low %v2659, %v2663
        %v5249 = vcombine.low %v2667, %v2671
        %v5250 = vcombine.low %v2675, %v2679
        %v5251 = vcombine.low %v2683, %v2687
        %v5253 = vunpack.c.l.s4 1966171168
        %v5254 = vunpack.c.0.s8 %v5253
        %v5255 = vlaneseq
        %v5256 = vshrl.u32 %v5255, 7
        %v5257 = vsub.s32 %v5254, %v5256
        %v5258 = vrot.slane %v5248, %v5257
        %v5260 = vunpack.c.l.s4 1966171168
        %v5261 = vunpack.c.0.s8 %v5260
        %v5262 = vlaneseq
        %v5263 = vshrl.u32 %v5262, 7
        %v5264 = vsub.s32 %v5261, %v5263
        %v5265 = vrot.slane %v5249, %v5264
        %v5267 = vunpack.c.l.s4 1966171168
        %v5268 = vunpack.c.0.s8 %v5267
        %v5269 = vlaneseq
        %v5270 = vshrl.u32 %v5269, 7
        %v5271 = vsub.s32 %v5268, %v5270
        %v5272 = vrot.slane %v5250, %v5271
        %v5274 = vunpack.c.l.s4 1966171168
        %v5275 = vunpack.c.0.s8 %v5274
        %v5276 = vlaneseq
        %v5277 = vshrl.u32 %v5276, 7
        %v5278 = vsub.s32 %v5275, %v5277
        %v5279 = vrot.slane %v5251, %v5278
        %v5280 = vcombine.low %v5258, %v5265
        %v5281 = vcombine.low %v5272, %v5279
        %v5283 = vunpack.c.l.s4 1966171168
        %v5284 = vunpack.c.0.s8 %v5283
        %v5285 = vlaneseq
        %v5286 = vshrl.u32 %v5285, 7
        %v5287 = vsub.s32 %v5284, %v5286
        %v5288 = vrot.slane %v5280, %v5287
        %v5290 = vunpack.c.l.s4 1966171168
        %v5291 = vunpack.c.0.s8 %v5290
        %v5292 = vlaneseq
        %v5293 = vshrl.u32 %v5292, 7
        %v5294 = vsub.s32 %v5291, %v5293
        %v5295 = vrot.slane %v5281, %v5294
        %v5296 = vcombine.low %v5288, %v5295
        %v5297 = vcombine.low %v2691, %v2695
        %v5298 = vcombine.low %v2699, %v2703
        %v5299 = vcombine.low %v2707, %v2711
        %v5300 = vcombine.low %v2715, %v2719
        %v5302 = vunpack.c.l.s4 1966171168
        %v5303 = vunpack.c.0.s8 %v5302
        %v5304 = vlaneseq
        %v5305 = vshrl.u32 %v5304, 7
        %v5306 = vsub.s32 %v5303, %v5305
        %v5307 = vrot.slane %v5297, %v5306
        %v5309 = vunpack.c.l.s4 1966171168
        %v5310 = vunpack.c.0.s8 %v5309
        %v5311 = vlaneseq
        %v5312 = vshrl.u32 %v5311, 7
        %v5313 = vsub.s32 %v5310, %v5312
        %v5314 = vrot.slane %v5298, %v5313
        %v5316 = vunpack.c.l.s4 1966171168
        %v5317 = vunpack.c.0.s8 %v5316
        %v5318 = vlaneseq
        %v5319 = vshrl.u32 %v5318, 7
        %v5320 = vsub.s32 %v5317, %v5319
        %v5321 = vrot.slane %v5299, %v5320
        %v5323 = vunpack.c.l.s4 1966171168
        %v5324 = vunpack.c.0.s8 %v5323
        %v5325 = vlaneseq
        %v5326 = vshrl.u32 %v5325, 7
        %v5327 = vsub.s32 %v5324, %v5326
        %v5328 = vrot.slane %v5300, %v5327
        %v5329 = vcombine.low %v5307, %v5314
        %v5330 = vcombine.low %v5321, %v5328
        %v5332 = vunpack.c.l.s4 1966171168
        %v5333 = vunpack.c.0.s8 %v5332
        %v5334 = vlaneseq
        %v5335 = vshrl.u32 %v5334, 7
        %v5336 = vsub.s32 %v5333, %v5335
        %v5337 = vrot.slane %v5329, %v5336
        %v5339 = vunpack.c.l.s4 1966171168
        %v5340 = vunpack.c.0.s8 %v5339
        %v5341 = vlaneseq
        %v5342 = vshrl.u32 %v5341, 7
        %v5343 = vsub.s32 %v5340, %v5342
        %v5344 = vrot.slane %v5330, %v5343
        %v5345 = vcombine.low %v5337, %v5344
        %v5346 = vcombine.low %v2723, %v2727
        %v5347 = vcombine.low %v2731, %v2735
        %v5348 = vcombine.low %v2739, %v2743
        %v5349 = vcombine.low %v2747, %v2751
        %v5351 = vunpack.c.l.s4 1966171168
        %v5352 = vunpack.c.0.s8 %v5351
        %v5353 = vlaneseq
        %v5354 = vshrl.u32 %v5353, 7
        %v5355 = vsub.s32 %v5352, %v5354
        %v5356 = vrot.slane %v5346, %v5355
        %v5358 = vunpack.c.l.s4 1966171168
        %v5359 = vunpack.c.0.s8 %v5358
        %v5360 = vlaneseq
        %v5361 = vshrl.u32 %v5360, 7
        %v5362 = vsub.s32 %v5359, %v5361
        %v5363 = vrot.slane %v5347, %v5362
        %v5365 = vunpack.c.l.s4 1966171168
        %v5366 = vunpack.c.0.s8 %v5365
        %v5367 = vlaneseq
        %v5368 = vshrl.u32 %v5367, 7
        %v5369 = vsub.s32 %v5366, %v5368
        %v5370 = vrot.slane %v5348, %v5369
        %v5372 = vunpack.c.l.s4 1966171168
        %v5373 = vunpack.c.0.s8 %v5372
        %v5374 = vlaneseq
        %v5375 = vshrl.u32 %v5374, 7
        %v5376 = vsub.s32 %v5373, %v5375
        %v5377 = vrot.slane %v5349, %v5376
        %v5378 = vcombine.low %v5356, %v5363
        %v5379 = vcombine.low %v5370, %v5377
        %v5381 = vunpack.c.l.s4 1966171168
        %v5382 = vunpack.c.0.s8 %v5381
        %v5383 = vlaneseq
        %v5384 = vshrl.u32 %v5383, 7
        %v5385 = vsub.s32 %v5382, %v5384
        %v5386 = vrot.slane %v5378, %v5385
        %v5388 = vunpack.c.l.s4 1966171168
        %v5389 = vunpack.c.0.s8 %v5388
        %v5390 = vlaneseq
        %v5391 = vshrl.u32 %v5390, 7
        %v5392 = vsub.s32 %v5389, %v5391
        %v5393 = vrot.slane %v5379, %v5392
        %v5394 = vcombine.low %v5386, %v5393
        %v5395 = vcombine.low %v2755, %v2759
        %v5396 = vcombine.low %v2763, %v2767
        %v5397 = vcombine.low %v2771, %v2775
        %v5398 = vcombine.low %v2779, %v2783
        %v5400 = vunpack.c.l.s4 1966171168
        %v5401 = vunpack.c.0.s8 %v5400
        %v5402 = vlaneseq
        %v5403 = vshrl.u32 %v5402, 7
        %v5404 = vsub.s32 %v5401, %v5403
        %v5405 = vrot.slane %v5395, %v5404
        %v5407 = vunpack.c.l.s4 1966171168
        %v5408 = vunpack.c.0.s8 %v5407
        %v5409 = vlaneseq
        %v5410 = vshrl.u32 %v5409, 7
        %v5411 = vsub.s32 %v5408, %v5410
        %v5412 = vrot.slane %v5396, %v5411
        %v5414 = vunpack.c.l.s4 1966171168
        %v5415 = vunpack.c.0.s8 %v5414
        %v5416 = vlaneseq
        %v5417 = vshrl.u32 %v5416, 7
        %v5418 = vsub.s32 %v5415, %v5417
        %v5419 = vrot.slane %v5397, %v5418
        %v5421 = vunpack.c.l.s4 1966171168
        %v5422 = vunpack.c.0.s8 %v5421
        %v5423 = vlaneseq
        %v5424 = vshrl.u32 %v5423, 7
        %v5425 = vsub.s32 %v5422, %v5424
        %v5426 = vrot.slane %v5398, %v5425
        %v5427 = vcombine.low %v5405, %v5412
        %v5428 = vcombine.low %v5419, %v5426
        %v5430 = vunpack.c.l.s4 1966171168
        %v5431 = vunpack.c.0.s8 %v5430
        %v5432 = vlaneseq
        %v5433 = vshrl.u32 %v5432, 7
        %v5434 = vsub.s32 %v5431, %v5433
        %v5435 = vrot.slane %v5427, %v5434
        %v5437 = vunpack.c.l.s4 1966171168
        %v5438 = vunpack.c.0.s8 %v5437
        %v5439 = vlaneseq
        %v5440 = vshrl.u32 %v5439, 7
        %v5441 = vsub.s32 %v5438, %v5440
        %v5442 = vrot.slane %v5428, %v5441
        %v5443 = vcombine.low %v5435, %v5442
        %v5444 = vcombine.low %v2787, %v2791
        %v5445 = vcombine.low %v2795, %v2799
        %v5446 = vcombine.low %v2803, %v2807
        %v5447 = vcombine.low %v2811, %v2815
        %v5449 = vunpack.c.l.s4 1966171168
        %v5450 = vunpack.c.0.s8 %v5449
        %v5451 = vlaneseq
        %v5452 = vshrl.u32 %v5451, 7
        %v5453 = vsub.s32 %v5450, %v5452
        %v5454 = vrot.slane %v5444, %v5453
        %v5456 = vunpack.c.l.s4 1966171168
        %v5457 = vunpack.c.0.s8 %v5456
        %v5458 = vlaneseq
        %v5459 = vshrl.u32 %v5458, 7
        %v5460 = vsub.s32 %v5457, %v5459
        %v5461 = vrot.slane %v5445, %v5460
        %v5463 = vunpack.c.l.s4 1966171168
        %v5464 = vunpack.c.0.s8 %v5463
        %v5465 = vlaneseq
        %v5466 = vshrl.u32 %v5465, 7
        %v5467 = vsub.s32 %v5464, %v5466
        %v5468 = vrot.slane %v5446, %v5467
        %v5470 = vunpack.c.l.s4 1966171168
        %v5471 = vunpack.c.0.s8 %v5470
        %v5472 = vlaneseq
        %v5473 = vshrl.u32 %v5472, 7
        %v5474 = vsub.s32 %v5471, %v5473
        %v5475 = vrot.slane %v5447, %v5474
        %v5476 = vcombine.low %v5454, %v5461
        %v5477 = vcombine.low %v5468, %v5475
        %v5479 = vunpack.c.l.s4 1966171168
        %v5480 = vunpack.c.0.s8 %v5479
        %v5481 = vlaneseq
        %v5482 = vshrl.u32 %v5481, 7
        %v5483 = vsub.s32 %v5480, %v5482
        %v5484 = vrot.slane %v5476, %v5483
        %v5486 = vunpack.c.l.s4 1966171168
        %v5487 = vunpack.c.0.s8 %v5486
        %v5488 = vlaneseq
        %v5489 = vshrl.u32 %v5488, 7
        %v5490 = vsub.s32 %v5487, %v5489
        %v5491 = vrot.slane %v5477, %v5490
        %v5492 = vcombine.low %v5484, %v5491
        %v5493 = vcombine.low %v2819, %v2823
        %v5494 = vcombine.low %v2827, %v2831
        %v5495 = vcombine.low %v2835, %v2839
        %v5496 = vcombine.low %v2843, %v2847
        %v5498 = vunpack.c.l.s4 1966171168
        %v5499 = vunpack.c.0.s8 %v5498
        %v5500 = vlaneseq
        %v5501 = vshrl.u32 %v5500, 7
        %v5502 = vsub.s32 %v5499, %v5501
        %v5503 = vrot.slane %v5493, %v5502
        %v5505 = vunpack.c.l.s4 1966171168
        %v5506 = vunpack.c.0.s8 %v5505
        %v5507 = vlaneseq
        %v5508 = vshrl.u32 %v5507, 7
        %v5509 = vsub.s32 %v5506, %v5508
        %v5510 = vrot.slane %v5494, %v5509
        %v5512 = vunpack.c.l.s4 1966171168
        %v5513 = vunpack.c.0.s8 %v5512
        %v5514 = vlaneseq
        %v5515 = vshrl.u32 %v5514, 7
        %v5516 = vsub.s32 %v5513, %v5515
        %v5517 = vrot.slane %v5495, %v5516
        %v5519 = vunpack.c.l.s4 1966171168
        %v5520 = vunpack.c.0.s8 %v5519
        %v5521 = vlaneseq
        %v5522 = vshrl.u32 %v5521, 7
        %v5523 = vsub.s32 %v5520, %v5522
        %v5524 = vrot.slane %v5496, %v5523
        %v5525 = vcombine.low %v5503, %v5510
        %v5526 = vcombine.low %v5517, %v5524
        %v5528 = vunpack.c.l.s4 1966171168
        %v5529 = vunpack.c.0.s8 %v5528
        %v5530 = vlaneseq
        %v5531 = vshrl.u32 %v5530, 7
        %v5532 = vsub.s32 %v5529, %v5531
        %v5533 = vrot.slane %v5525, %v5532
        %v5535 = vunpack.c.l.s4 1966171168
        %v5536 = vunpack.c.0.s8 %v5535
        %v5537 = vlaneseq
        %v5538 = vshrl.u32 %v5537, 7
        %v5539 = vsub.s32 %v5536, %v5538
        %v5540 = vrot.slane %v5526, %v5539
        %v5541 = vcombine.low %v5533, %v5540
        %v5542 = vcombine.low %v2851, %v2855
        %v5543 = vcombine.low %v2859, %v2863
        %v5544 = vcombine.low %v2867, %v2871
        %v5545 = vcombine.low %v2875, %v2879
        %v5547 = vunpack.c.l.s4 1966171168
        %v5548 = vunpack.c.0.s8 %v5547
        %v5549 = vlaneseq
        %v5550 = vshrl.u32 %v5549, 7
        %v5551 = vsub.s32 %v5548, %v5550
        %v5552 = vrot.slane %v5542, %v5551
        %v5554 = vunpack.c.l.s4 1966171168
        %v5555 = vunpack.c.0.s8 %v5554
        %v5556 = vlaneseq
        %v5557 = vshrl.u32 %v5556, 7
        %v5558 = vsub.s32 %v5555, %v5557
        %v5559 = vrot.slane %v5543, %v5558
        %v5561 = vunpack.c.l.s4 1966171168
        %v5562 = vunpack.c.0.s8 %v5561
        %v5563 = vlaneseq
        %v5564 = vshrl.u32 %v5563, 7
        %v5565 = vsub.s32 %v5562, %v5564
        %v5566 = vrot.slane %v5544, %v5565
        %v5568 = vunpack.c.l.s4 1966171168
        %v5569 = vunpack.c.0.s8 %v5568
        %v5570 = vlaneseq
        %v5571 = vshrl.u32 %v5570, 7
        %v5572 = vsub.s32 %v5569, %v5571
        %v5573 = vrot.slane %v5545, %v5572
        %v5574 = vcombine.low %v5552, %v5559
        %v5575 = vcombine.low %v5566, %v5573
        %v5577 = vunpack.c.l.s4 1966171168
        %v5578 = vunpack.c.0.s8 %v5577
        %v5579 = vlaneseq
        %v5580 = vshrl.u32 %v5579, 7
        %v5581 = vsub.s32 %v5578, %v5580
        %v5582 = vrot.slane %v5574, %v5581
        %v5584 = vunpack.c.l.s4 1966171168
        %v5585 = vunpack.c.0.s8 %v5584
        %v5586 = vlaneseq
        %v5587 = vshrl.u32 %v5586, 7
        %v5588 = vsub.s32 %v5585, %v5587
        %v5589 = vrot.slane %v5575, %v5588
        %v5590 = vcombine.low %v5582, %v5589
        %v5591 = vcombine.low %v2883, %v2887
        %v5592 = vcombine.low %v2891, %v2895
        %v5593 = vcombine.low %v2899, %v2903
        %v5594 = vcombine.low %v2907, %v2911
        %v5596 = vunpack.c.l.s4 1966171168
        %v5597 = vunpack.c.0.s8 %v5596
        %v5598 = vlaneseq
        %v5599 = vshrl.u32 %v5598, 7
        %v5600 = vsub.s32 %v5597, %v5599
        %v5601 = vrot.slane %v5591, %v5600
        %v5603 = vunpack.c.l.s4 1966171168
        %v5604 = vunpack.c.0.s8 %v5603
        %v5605 = vlaneseq
        %v5606 = vshrl.u32 %v5605, 7
        %v5607 = vsub.s32 %v5604, %v5606
        %v5608 = vrot.slane %v5592, %v5607
        %v5610 = vunpack.c.l.s4 1966171168
        %v5611 = vunpack.c.0.s8 %v5610
        %v5612 = vlaneseq
        %v5613 = vshrl.u32 %v5612, 7
        %v5614 = vsub.s32 %v5611, %v5613
        %v5615 = vrot.slane %v5593, %v5614
        %v5617 = vunpack.c.l.s4 1966171168
        %v5618 = vunpack.c.0.s8 %v5617
        %v5619 = vlaneseq
        %v5620 = vshrl.u32 %v5619, 7
        %v5621 = vsub.s32 %v5618, %v5620
        %v5622 = vrot.slane %v5594, %v5621
        %v5623 = vcombine.low %v5601, %v5608
        %v5624 = vcombine.low %v5615, %v5622
        %v5626 = vunpack.c.l.s4 1966171168
        %v5627 = vunpack.c.0.s8 %v5626
        %v5628 = vlaneseq
        %v5629 = vshrl.u32 %v5628, 7
        %v5630 = vsub.s32 %v5627, %v5629
        %v5631 = vrot.slane %v5623, %v5630
        %v5633 = vunpack.c.l.s4 1966171168
        %v5634 = vunpack.c.0.s8 %v5633
        %v5635 = vlaneseq
        %v5636 = vshrl.u32 %v5635, 7
        %v5637 = vsub.s32 %v5634, %v5636
        %v5638 = vrot.slane %v5624, %v5637
        %v5639 = vcombine.low %v5631, %v5638
        %v5640 = vcombine.low %v2915, %v2919
        %v5641 = vcombine.low %v2923, %v2927
        %v5642 = vcombine.low %v2931, %v2935
        %v5643 = vcombine.low %v2939, %v2943
        %v5645 = vunpack.c.l.s4 1966171168
        %v5646 = vunpack.c.0.s8 %v5645
        %v5647 = vlaneseq
        %v5648 = vshrl.u32 %v5647, 7
        %v5649 = vsub.s32 %v5646, %v5648
        %v5650 = vrot.slane %v5640, %v5649
        %v5652 = vunpack.c.l.s4 1966171168
        %v5653 = vunpack.c.0.s8 %v5652
        %v5654 = vlaneseq
        %v5655 = vshrl.u32 %v5654, 7
        %v5656 = vsub.s32 %v5653, %v5655
        %v5657 = vrot.slane %v5641, %v5656
        %v5659 = vunpack.c.l.s4 1966171168
        %v5660 = vunpack.c.0.s8 %v5659
        %v5661 = vlaneseq
        %v5662 = vshrl.u32 %v5661, 7
        %v5663 = vsub.s32 %v5660, %v5662
        %v5664 = vrot.slane %v5642, %v5663
        %v5666 = vunpack.c.l.s4 1966171168
        %v5667 = vunpack.c.0.s8 %v5666
        %v5668 = vlaneseq
        %v5669 = vshrl.u32 %v5668, 7
        %v5670 = vsub.s32 %v5667, %v5669
        %v5671 = vrot.slane %v5643, %v5670
        %v5672 = vcombine.low %v5650, %v5657
        %v5673 = vcombine.low %v5664, %v5671
        %v5675 = vunpack.c.l.s4 1966171168
        %v5676 = vunpack.c.0.s8 %v5675
        %v5677 = vlaneseq
        %v5678 = vshrl.u32 %v5677, 7
        %v5679 = vsub.s32 %v5676, %v5678
        %v5680 = vrot.slane %v5672, %v5679
        %v5682 = vunpack.c.l.s4 1966171168
        %v5683 = vunpack.c.0.s8 %v5682
        %v5684 = vlaneseq
        %v5685 = vshrl.u32 %v5684, 7
        %v5686 = vsub.s32 %v5683, %v5685
        %v5687 = vrot.slane %v5673, %v5686
        %v5688 = vcombine.low %v5680, %v5687
        %v5689 = vcombine.low %v2947, %v2951
        %v5690 = vcombine.low %v2955, %v2959
        %v5691 = vcombine.low %v2963, %v2967
        %v5692 = vcombine.low %v2971, %v2975
        %v5694 = vunpack.c.l.s4 1966171168
        %v5695 = vunpack.c.0.s8 %v5694
        %v5696 = vlaneseq
        %v5697 = vshrl.u32 %v5696, 7
        %v5698 = vsub.s32 %v5695, %v5697
        %v5699 = vrot.slane %v5689, %v5698
        %v5701 = vunpack.c.l.s4 1966171168
        %v5702 = vunpack.c.0.s8 %v5701
        %v5703 = vlaneseq
        %v5704 = vshrl.u32 %v5703, 7
        %v5705 = vsub.s32 %v5702, %v5704
        %v5706 = vrot.slane %v5690, %v5705
        %v5708 = vunpack.c.l.s4 1966171168
        %v5709 = vunpack.c.0.s8 %v5708
        %v5710 = vlaneseq
        %v5711 = vshrl.u32 %v5710, 7
        %v5712 = vsub.s32 %v5709, %v5711
        %v5713 = vrot.slane %v5691, %v5712
        %v5715 = vunpack.c.l.s4 1966171168
        %v5716 = vunpack.c.0.s8 %v5715
        %v5717 = vlaneseq
        %v5718 = vshrl.u32 %v5717, 7
        %v5719 = vsub.s32 %v5716, %v5718
        %v5720 = vrot.slane %v5692, %v5719
        %v5721 = vcombine.low %v5699, %v5706
        %v5722 = vcombine.low %v5713, %v5720
        %v5724 = vunpack.c.l.s4 1966171168
        %v5725 = vunpack.c.0.s8 %v5724
        %v5726 = vlaneseq
        %v5727 = vshrl.u32 %v5726, 7
        %v5728 = vsub.s32 %v5725, %v5727
        %v5729 = vrot.slane %v5721, %v5728
        %v5731 = vunpack.c.l.s4 1966171168
        %v5732 = vunpack.c.0.s8 %v5731
        %v5733 = vlaneseq
        %v5734 = vshrl.u32 %v5733, 7
        %v5735 = vsub.s32 %v5732, %v5734
        %v5736 = vrot.slane %v5722, %v5735
        %v5737 = vcombine.low %v5729, %v5736
        %v5738 = vcombine.low %v2979, %v2983
        %v5739 = vcombine.low %v2987, %v2991
        %v5740 = vcombine.low %v2995, %v2999
        %v5741 = vcombine.low %v3003, %v3007
        %v5743 = vunpack.c.l.s4 1966171168
        %v5744 = vunpack.c.0.s8 %v5743
        %v5745 = vlaneseq
        %v5746 = vshrl.u32 %v5745, 7
        %v5747 = vsub.s32 %v5744, %v5746
        %v5748 = vrot.slane %v5738, %v5747
        %v5750 = vunpack.c.l.s4 1966171168
        %v5751 = vunpack.c.0.s8 %v5750
        %v5752 = vlaneseq
        %v5753 = vshrl.u32 %v5752, 7
        %v5754 = vsub.s32 %v5751, %v5753
        %v5755 = vrot.slane %v5739, %v5754
        %v5757 = vunpack.c.l.s4 1966171168
        %v5758 = vunpack.c.0.s8 %v5757
        %v5759 = vlaneseq
        %v5760 = vshrl.u32 %v5759, 7
        %v5761 = vsub.s32 %v5758, %v5760
        %v5762 = vrot.slane %v5740, %v5761
        %v5764 = vunpack.c.l.s4 1966171168
        %v5765 = vunpack.c.0.s8 %v5764
        %v5766 = vlaneseq
        %v5767 = vshrl.u32 %v5766, 7
        %v5768 = vsub.s32 %v5765, %v5767
        %v5769 = vrot.slane %v5741, %v5768
        %v5770 = vcombine.low %v5748, %v5755
        %v5771 = vcombine.low %v5762, %v5769
        %v5773 = vunpack.c.l.s4 1966171168
        %v5774 = vunpack.c.0.s8 %v5773
        %v5775 = vlaneseq
        %v5776 = vshrl.u32 %v5775, 7
        %v5777 = vsub.s32 %v5774, %v5776
        %v5778 = vrot.slane %v5770, %v5777
        %v5780 = vunpack.c.l.s4 1966171168
        %v5781 = vunpack.c.0.s8 %v5780
        %v5782 = vlaneseq
        %v5783 = vshrl.u32 %v5782, 7
        %v5784 = vsub.s32 %v5781, %v5783
        %v5785 = vrot.slane %v5771, %v5784
        %v5786 = vcombine.low %v5778, %v5785
        %v5787 = vcombine.low %v3011, %v3015
        %v5788 = vcombine.low %v3019, %v3023
        %v5789 = vcombine.low %v3027, %v3031
        %v5790 = vcombine.low %v3035, %v3039
        %v5792 = vunpack.c.l.s4 1966171168
        %v5793 = vunpack.c.0.s8 %v5792
        %v5794 = vlaneseq
        %v5795 = vshrl.u32 %v5794, 7
        %v5796 = vsub.s32 %v5793, %v5795
        %v5797 = vrot.slane %v5787, %v5796
        %v5799 = vunpack.c.l.s4 1966171168
        %v5800 = vunpack.c.0.s8 %v5799
        %v5801 = vlaneseq
        %v5802 = vshrl.u32 %v5801, 7
        %v5803 = vsub.s32 %v5800, %v5802
        %v5804 = vrot.slane %v5788, %v5803
        %v5806 = vunpack.c.l.s4 1966171168
        %v5807 = vunpack.c.0.s8 %v5806
        %v5808 = vlaneseq
        %v5809 = vshrl.u32 %v5808, 7
        %v5810 = vsub.s32 %v5807, %v5809
        %v5811 = vrot.slane %v5789, %v5810
        %v5813 = vunpack.c.l.s4 1966171168
        %v5814 = vunpack.c.0.s8 %v5813
        %v5815 = vlaneseq
        %v5816 = vshrl.u32 %v5815, 7
        %v5817 = vsub.s32 %v5814, %v5816
        %v5818 = vrot.slane %v5790, %v5817
        %v5819 = vcombine.low %v5797, %v5804
        %v5820 = vcombine.low %v5811, %v5818
        %v5822 = vunpack.c.l.s4 1966171168
        %v5823 = vunpack.c.0.s8 %v5822
        %v5824 = vlaneseq
        %v5825 = vshrl.u32 %v5824, 7
        %v5826 = vsub.s32 %v5823, %v5825
        %v5827 = vrot.slane %v5819, %v5826
        %v5829 = vunpack.c.l.s4 1966171168
        %v5830 = vunpack.c.0.s8 %v5829
        %v5831 = vlaneseq
        %v5832 = vshrl.u32 %v5831, 7
        %v5833 = vsub.s32 %v5830, %v5832
        %v5834 = vrot.slane %v5820, %v5833
        %v5835 = vcombine.low %v5827, %v5834
        %v5836 = vcombine.low %v3043, %v3047
        %v5837 = vcombine.low %v3051, %v3055
        %v5838 = vcombine.low %v3059, %v3063
        %v5839 = vcombine.low %v3067, %v3071
        %v5841 = vunpack.c.l.s4 1966171168
        %v5842 = vunpack.c.0.s8 %v5841
        %v5843 = vlaneseq
        %v5844 = vshrl.u32 %v5843, 7
        %v5845 = vsub.s32 %v5842, %v5844
        %v5846 = vrot.slane %v5836, %v5845
        %v5848 = vunpack.c.l.s4 1966171168
        %v5849 = vunpack.c.0.s8 %v5848
        %v5850 = vlaneseq
        %v5851 = vshrl.u32 %v5850, 7
        %v5852 = vsub.s32 %v5849, %v5851
        %v5853 = vrot.slane %v5837, %v5852
        %v5855 = vunpack.c.l.s4 1966171168
        %v5856 = vunpack.c.0.s8 %v5855
        %v5857 = vlaneseq
        %v5858 = vshrl.u32 %v5857, 7
        %v5859 = vsub.s32 %v5856, %v5858
        %v5860 = vrot.slane %v5838, %v5859
        %v5862 = vunpack.c.l.s4 1966171168
        %v5863 = vunpack.c.0.s8 %v5862
        %v5864 = vlaneseq
        %v5865 = vshrl.u32 %v5864, 7
        %v5866 = vsub.s32 %v5863, %v5865
        %v5867 = vrot.slane %v5839, %v5866
        %v5868 = vcombine.low %v5846, %v5853
        %v5869 = vcombine.low %v5860, %v5867
        %v5871 = vunpack.c.l.s4 1966171168
        %v5872 = vunpack.c.0.s8 %v5871
        %v5873 = vlaneseq
        %v5874 = vshrl.u32 %v5873, 7
        %v5875 = vsub.s32 %v5872, %v5874
        %v5876 = vrot.slane %v5868, %v5875
        %v5878 = vunpack.c.l.s4 1966171168
        %v5879 = vunpack.c.0.s8 %v5878
        %v5880 = vlaneseq
        %v5881 = vshrl.u32 %v5880, 7
        %v5882 = vsub.s32 %v5879, %v5881
        %v5883 = vrot.slane %v5869, %v5882
        %v5884 = vcombine.low %v5876, %v5883
        %v5885 = vcombine.low %v3075, %v3079
        %v5886 = vcombine.low %v3083, %v3087
        %v5887 = vcombine.low %v3091, %v3095
        %v5888 = vcombine.low %v3099, %v3103
        %v5890 = vunpack.c.l.s4 1966171168
        %v5891 = vunpack.c.0.s8 %v5890
        %v5892 = vlaneseq
        %v5893 = vshrl.u32 %v5892, 7
        %v5894 = vsub.s32 %v5891, %v5893
        %v5895 = vrot.slane %v5885, %v5894
        %v5897 = vunpack.c.l.s4 1966171168
        %v5898 = vunpack.c.0.s8 %v5897
        %v5899 = vlaneseq
        %v5900 = vshrl.u32 %v5899, 7
        %v5901 = vsub.s32 %v5898, %v5900
        %v5902 = vrot.slane %v5886, %v5901
        %v5904 = vunpack.c.l.s4 1966171168
        %v5905 = vunpack.c.0.s8 %v5904
        %v5906 = vlaneseq
        %v5907 = vshrl.u32 %v5906, 7
        %v5908 = vsub.s32 %v5905, %v5907
        %v5909 = vrot.slane %v5887, %v5908
        %v5911 = vunpack.c.l.s4 1966171168
        %v5912 = vunpack.c.0.s8 %v5911
        %v5913 = vlaneseq
        %v5914 = vshrl.u32 %v5913, 7
        %v5915 = vsub.s32 %v5912, %v5914
        %v5916 = vrot.slane %v5888, %v5915
        %v5917 = vcombine.low %v5895, %v5902
        %v5918 = vcombine.low %v5909, %v5916
        %v5920 = vunpack.c.l.s4 1966171168
        %v5921 = vunpack.c.0.s8 %v5920
        %v5922 = vlaneseq
        %v5923 = vshrl.u32 %v5922, 7
        %v5924 = vsub.s32 %v5921, %v5923
        %v5925 = vrot.slane %v5917, %v5924
        %v5927 = vunpack.c.l.s4 1966171168
        %v5928 = vunpack.c.0.s8 %v5927
        %v5929 = vlaneseq
        %v5930 = vshrl.u32 %v5929, 7
        %v5931 = vsub.s32 %v5928, %v5930
        %v5932 = vrot.slane %v5918, %v5931
        %v5933 = vcombine.low %v5925, %v5932
        %v5934 = vcombine.low %v3107, %v3111
        %v5935 = vcombine.low %v3115, %v3119
        %v5936 = vcombine.low %v3123, %v3127
        %v5937 = vcombine.low %v3131, %v3135
        %v5939 = vunpack.c.l.s4 1966171168
        %v5940 = vunpack.c.0.s8 %v5939
        %v5941 = vlaneseq
        %v5942 = vshrl.u32 %v5941, 7
        %v5943 = vsub.s32 %v5940, %v5942
        %v5944 = vrot.slane %v5934, %v5943
        %v5946 = vunpack.c.l.s4 1966171168
        %v5947 = vunpack.c.0.s8 %v5946
        %v5948 = vlaneseq
        %v5949 = vshrl.u32 %v5948, 7
        %v5950 = vsub.s32 %v5947, %v5949
        %v5951 = vrot.slane %v5935, %v5950
        %v5953 = vunpack.c.l.s4 1966171168
        %v5954 = vunpack.c.0.s8 %v5953
        %v5955 = vlaneseq
        %v5956 = vshrl.u32 %v5955, 7
        %v5957 = vsub.s32 %v5954, %v5956
        %v5958 = vrot.slane %v5936, %v5957
        %v5960 = vunpack.c.l.s4 1966171168
        %v5961 = vunpack.c.0.s8 %v5960
        %v5962 = vlaneseq
        %v5963 = vshrl.u32 %v5962, 7
        %v5964 = vsub.s32 %v5961, %v5963
        %v5965 = vrot.slane %v5937, %v5964
        %v5966 = vcombine.low %v5944, %v5951
        %v5967 = vcombine.low %v5958, %v5965
        %v5969 = vunpack.c.l.s4 1966171168
        %v5970 = vunpack.c.0.s8 %v5969
        %v5971 = vlaneseq
        %v5972 = vshrl.u32 %v5971, 7
        %v5973 = vsub.s32 %v5970, %v5972
        %v5974 = vrot.slane %v5966, %v5973
        %v5976 = vunpack.c.l.s4 1966171168
        %v5977 = vunpack.c.0.s8 %v5976
        %v5978 = vlaneseq
        %v5979 = vshrl.u32 %v5978, 7
        %v5980 = vsub.s32 %v5977, %v5979
        %v5981 = vrot.slane %v5967, %v5980
        %v5982 = vcombine.low %v5974, %v5981
        %v5983 = vcombine.low %v3139, %v3143
        %v5984 = vcombine.low %v3147, %v3151
        %v5985 = vcombine.low %v3155, %v3159
        %v5986 = vcombine.low %v3163, %v3167
        %v5988 = vunpack.c.l.s4 1966171168
        %v5989 = vunpack.c.0.s8 %v5988
        %v5990 = vlaneseq
        %v5991 = vshrl.u32 %v5990, 7
        %v5992 = vsub.s32 %v5989, %v5991
        %v5993 = vrot.slane %v5983, %v5992
        %v5995 = vunpack.c.l.s4 1966171168
        %v5996 = vunpack.c.0.s8 %v5995
        %v5997 = vlaneseq
        %v5998 = vshrl.u32 %v5997, 7
        %v5999 = vsub.s32 %v5996, %v5998
        %v6000 = vrot.slane %v5984, %v5999
        %v6002 = vunpack.c.l.s4 1966171168
        %v6003 = vunpack.c.0.s8 %v6002
        %v6004 = vlaneseq
        %v6005 = vshrl.u32 %v6004, 7
        %v6006 = vsub.s32 %v6003, %v6005
        %v6007 = vrot.slane %v5985, %v6006
        %v6009 = vunpack.c.l.s4 1966171168
        %v6010 = vunpack.c.0.s8 %v6009
        %v6011 = vlaneseq
        %v6012 = vshrl.u32 %v6011, 7
        %v6013 = vsub.s32 %v6010, %v6012
        %v6014 = vrot.slane %v5986, %v6013
        %v6015 = vcombine.low %v5993, %v6000
        %v6016 = vcombine.low %v6007, %v6014
        %v6018 = vunpack.c.l.s4 1966171168
        %v6019 = vunpack.c.0.s8 %v6018
        %v6020 = vlaneseq
        %v6021 = vshrl.u32 %v6020, 7
        %v6022 = vsub.s32 %v6019, %v6021
        %v6023 = vrot.slane %v6015, %v6022
        %v6025 = vunpack.c.l.s4 1966171168
        %v6026 = vunpack.c.0.s8 %v6025
        %v6027 = vlaneseq
        %v6028 = vshrl.u32 %v6027, 7
        %v6029 = vsub.s32 %v6026, %v6028
        %v6030 = vrot.slane %v6016, %v6029
        %v6031 = vcombine.low %v6023, %v6030
        %v6032 = vcombine.low %v3171, %v3175
        %v6033 = vcombine.low %v3179, %v3183
        %v6034 = vcombine.low %v3187, %v3191
        %v6035 = vcombine.low %v3195, %v3199
        %v6037 = vunpack.c.l.s4 1966171168
        %v6038 = vunpack.c.0.s8 %v6037
        %v6039 = vlaneseq
        %v6040 = vshrl.u32 %v6039, 7
        %v6041 = vsub.s32 %v6038, %v6040
        %v6042 = vrot.slane %v6032, %v6041
        %v6044 = vunpack.c.l.s4 1966171168
        %v6045 = vunpack.c.0.s8 %v6044
        %v6046 = vlaneseq
        %v6047 = vshrl.u32 %v6046, 7
        %v6048 = vsub.s32 %v6045, %v6047
        %v6049 = vrot.slane %v6033, %v6048
        %v6051 = vunpack.c.l.s4 1966171168
        %v6052 = vunpack.c.0.s8 %v6051
        %v6053 = vlaneseq
        %v6054 = vshrl.u32 %v6053, 7
        %v6055 = vsub.s32 %v6052, %v6054
        %v6056 = vrot.slane %v6034, %v6055
        %v6058 = vunpack.c.l.s4 1966171168
        %v6059 = vunpack.c.0.s8 %v6058
        %v6060 = vlaneseq
        %v6061 = vshrl.u32 %v6060, 7
        %v6062 = vsub.s32 %v6059, %v6061
        %v6063 = vrot.slane %v6035, %v6062
        %v6064 = vcombine.low %v6042, %v6049
        %v6065 = vcombine.low %v6056, %v6063
        %v6067 = vunpack.c.l.s4 1966171168
        %v6068 = vunpack.c.0.s8 %v6067
        %v6069 = vlaneseq
        %v6070 = vshrl.u32 %v6069, 7
        %v6071 = vsub.s32 %v6068, %v6070
        %v6072 = vrot.slane %v6064, %v6071
        %v6074 = vunpack.c.l.s4 1966171168
        %v6075 = vunpack.c.0.s8 %v6074
        %v6076 = vlaneseq
        %v6077 = vshrl.u32 %v6076, 7
        %v6078 = vsub.s32 %v6075, %v6077
        %v6079 = vrot.slane %v6065, %v6078
        %v6080 = vcombine.low %v6072, %v6079
        %v6081 = vcombine.low %v3203, %v3207
        %v6082 = vcombine.low %v3211, %v3215
        %v6083 = vcombine.low %v3219, %v3223
        %v6084 = vcombine.low %v3227, %v3231
        %v6086 = vunpack.c.l.s4 1966171168
        %v6087 = vunpack.c.0.s8 %v6086
        %v6088 = vlaneseq
        %v6089 = vshrl.u32 %v6088, 7
        %v6090 = vsub.s32 %v6087, %v6089
        %v6091 = vrot.slane %v6081, %v6090
        %v6093 = vunpack.c.l.s4 1966171168
        %v6094 = vunpack.c.0.s8 %v6093
        %v6095 = vlaneseq
        %v6096 = vshrl.u32 %v6095, 7
        %v6097 = vsub.s32 %v6094, %v6096
        %v6098 = vrot.slane %v6082, %v6097
        %v6100 = vunpack.c.l.s4 1966171168
        %v6101 = vunpack.c.0.s8 %v6100
        %v6102 = vlaneseq
        %v6103 = vshrl.u32 %v6102, 7
        %v6104 = vsub.s32 %v6101, %v6103
        %v6105 = vrot.slane %v6083, %v6104
        %v6107 = vunpack.c.l.s4 1966171168
        %v6108 = vunpack.c.0.s8 %v6107
        %v6109 = vlaneseq
        %v6110 = vshrl.u32 %v6109, 7
        %v6111 = vsub.s32 %v6108, %v6110
        %v6112 = vrot.slane %v6084, %v6111
        %v6113 = vcombine.low %v6091, %v6098
        %v6114 = vcombine.low %v6105, %v6112
        %v6116 = vunpack.c.l.s4 1966171168
        %v6117 = vunpack.c.0.s8 %v6116
        %v6118 = vlaneseq
        %v6119 = vshrl.u32 %v6118, 7
        %v6120 = vsub.s32 %v6117, %v6119
        %v6121 = vrot.slane %v6113, %v6120
        %v6123 = vunpack.c.l.s4 1966171168
        %v6124 = vunpack.c.0.s8 %v6123
        %v6125 = vlaneseq
        %v6126 = vshrl.u32 %v6125, 7
        %v6127 = vsub.s32 %v6124, %v6126
        %v6128 = vrot.slane %v6114, %v6127
        %v6129 = vcombine.low %v6121, %v6128
        %v6130 = vcombine.low %v3235, %v3239
        %v6131 = vcombine.low %v3243, %v3247
        %v6132 = vcombine.low %v3251, %v3255
        %v6133 = vcombine.low %v3259, %v3263
        %v6135 = vunpack.c.l.s4 1966171168
        %v6136 = vunpack.c.0.s8 %v6135
        %v6137 = vlaneseq
        %v6138 = vshrl.u32 %v6137, 7
        %v6139 = vsub.s32 %v6136, %v6138
        %v6140 = vrot.slane %v6130, %v6139
        %v6142 = vunpack.c.l.s4 1966171168
        %v6143 = vunpack.c.0.s8 %v6142
        %v6144 = vlaneseq
        %v6145 = vshrl.u32 %v6144, 7
        %v6146 = vsub.s32 %v6143, %v6145
        %v6147 = vrot.slane %v6131, %v6146
        %v6149 = vunpack.c.l.s4 1966171168
        %v6150 = vunpack.c.0.s8 %v6149
        %v6151 = vlaneseq
        %v6152 = vshrl.u32 %v6151, 7
        %v6153 = vsub.s32 %v6150, %v6152
        %v6154 = vrot.slane %v6132, %v6153
        %v6156 = vunpack.c.l.s4 1966171168
        %v6157 = vunpack.c.0.s8 %v6156
        %v6158 = vlaneseq
        %v6159 = vshrl.u32 %v6158, 7
        %v6160 = vsub.s32 %v6157, %v6159
        %v6161 = vrot.slane %v6133, %v6160
        %v6162 = vcombine.low %v6140, %v6147
        %v6163 = vcombine.low %v6154, %v6161
        %v6165 = vunpack.c.l.s4 1966171168
        %v6166 = vunpack.c.0.s8 %v6165
        %v6167 = vlaneseq
        %v6168 = vshrl.u32 %v6167, 7
        %v6169 = vsub.s32 %v6166, %v6168
        %v6170 = vrot.slane %v6162, %v6169
        %v6172 = vunpack.c.l.s4 1966171168
        %v6173 = vunpack.c.0.s8 %v6172
        %v6174 = vlaneseq
        %v6175 = vshrl.u32 %v6174, 7
        %v6176 = vsub.s32 %v6173, %v6175
        %v6177 = vrot.slane %v6163, %v6176
        %v6178 = vcombine.low %v6170, %v6177
        %v6179 = vcombine.low %v3267, %v3271
        %v6180 = vcombine.low %v3275, %v3279
        %v6181 = vcombine.low %v3283, %v3287
        %v6182 = vcombine.low %v3291, %v3295
        %v6184 = vunpack.c.l.s4 1966171168
        %v6185 = vunpack.c.0.s8 %v6184
        %v6186 = vlaneseq
        %v6187 = vshrl.u32 %v6186, 7
        %v6188 = vsub.s32 %v6185, %v6187
        %v6189 = vrot.slane %v6179, %v6188
        %v6191 = vunpack.c.l.s4 1966171168
        %v6192 = vunpack.c.0.s8 %v6191
        %v6193 = vlaneseq
        %v6194 = vshrl.u32 %v6193, 7
        %v6195 = vsub.s32 %v6192, %v6194
        %v6196 = vrot.slane %v6180, %v6195
        %v6198 = vunpack.c.l.s4 1966171168
        %v6199 = vunpack.c.0.s8 %v6198
        %v6200 = vlaneseq
        %v6201 = vshrl.u32 %v6200, 7
        %v6202 = vsub.s32 %v6199, %v6201
        %v6203 = vrot.slane %v6181, %v6202
        %v6205 = vunpack.c.l.s4 1966171168
        %v6206 = vunpack.c.0.s8 %v6205
        %v6207 = vlaneseq
        %v6208 = vshrl.u32 %v6207, 7
        %v6209 = vsub.s32 %v6206, %v6208
        %v6210 = vrot.slane %v6182, %v6209
        %v6211 = vcombine.low %v6189, %v6196
        %v6212 = vcombine.low %v6203, %v6210
        %v6214 = vunpack.c.l.s4 1966171168
        %v6215 = vunpack.c.0.s8 %v6214
        %v6216 = vlaneseq
        %v6217 = vshrl.u32 %v6216, 7
        %v6218 = vsub.s32 %v6215, %v6217
        %v6219 = vrot.slane %v6211, %v6218
        %v6221 = vunpack.c.l.s4 1966171168
        %v6222 = vunpack.c.0.s8 %v6221
        %v6223 = vlaneseq
        %v6224 = vshrl.u32 %v6223, 7
        %v6225 = vsub.s32 %v6222, %v6224
        %v6226 = vrot.slane %v6212, %v6225
        %v6227 = vcombine.low %v6219, %v6226
        %v6228 = vcombine.low %v3299, %v3303
        %v6229 = vcombine.low %v3307, %v3311
        %v6230 = vcombine.low %v3315, %v3319
        %v6231 = vcombine.low %v3323, %v3327
        %v6233 = vunpack.c.l.s4 1966171168
        %v6234 = vunpack.c.0.s8 %v6233
        %v6235 = vlaneseq
        %v6236 = vshrl.u32 %v6235, 7
        %v6237 = vsub.s32 %v6234, %v6236
        %v6238 = vrot.slane %v6228, %v6237
        %v6240 = vunpack.c.l.s4 1966171168
        %v6241 = vunpack.c.0.s8 %v6240
        %v6242 = vlaneseq
        %v6243 = vshrl.u32 %v6242, 7
        %v6244 = vsub.s32 %v6241, %v6243
        %v6245 = vrot.slane %v6229, %v6244
        %v6247 = vunpack.c.l.s4 1966171168
        %v6248 = vunpack.c.0.s8 %v6247
        %v6249 = vlaneseq
        %v6250 = vshrl.u32 %v6249, 7
        %v6251 = vsub.s32 %v6248, %v6250
        %v6252 = vrot.slane %v6230, %v6251
        %v6254 = vunpack.c.l.s4 1966171168
        %v6255 = vunpack.c.0.s8 %v6254
        %v6256 = vlaneseq
        %v6257 = vshrl.u32 %v6256, 7
        %v6258 = vsub.s32 %v6255, %v6257
        %v6259 = vrot.slane %v6231, %v6258
        %v6260 = vcombine.low %v6238, %v6245
        %v6261 = vcombine.low %v6252, %v6259
        %v6263 = vunpack.c.l.s4 1966171168
        %v6264 = vunpack.c.0.s8 %v6263
        %v6265 = vlaneseq
        %v6266 = vshrl.u32 %v6265, 7
        %v6267 = vsub.s32 %v6264, %v6266
        %v6268 = vrot.slane %v6260, %v6267
        %v6270 = vunpack.c.l.s4 1966171168
        %v6271 = vunpack.c.0.s8 %v6270
        %v6272 = vlaneseq
        %v6273 = vshrl.u32 %v6272, 7
        %v6274 = vsub.s32 %v6271, %v6273
        %v6275 = vrot.slane %v6261, %v6274
        %v6276 = vcombine.low %v6268, %v6275
        %v6277 = vcombine.low %v3331, %v3335
        %v6278 = vcombine.low %v3339, %v3343
        %v6279 = vcombine.low %v3347, %v3351
        %v6280 = vcombine.low %v3355, %v3359
        %v6282 = vunpack.c.l.s4 1966171168
        %v6283 = vunpack.c.0.s8 %v6282
        %v6284 = vlaneseq
        %v6285 = vshrl.u32 %v6284, 7
        %v6286 = vsub.s32 %v6283, %v6285
        %v6287 = vrot.slane %v6277, %v6286
        %v6289 = vunpack.c.l.s4 1966171168
        %v6290 = vunpack.c.0.s8 %v6289
        %v6291 = vlaneseq
        %v6292 = vshrl.u32 %v6291, 7
        %v6293 = vsub.s32 %v6290, %v6292
        %v6294 = vrot.slane %v6278, %v6293
        %v6296 = vunpack.c.l.s4 1966171168
        %v6297 = vunpack.c.0.s8 %v6296
        %v6298 = vlaneseq
        %v6299 = vshrl.u32 %v6298, 7
        %v6300 = vsub.s32 %v6297, %v6299
        %v6301 = vrot.slane %v6279, %v6300
        %v6303 = vunpack.c.l.s4 1966171168
        %v6304 = vunpack.c.0.s8 %v6303
        %v6305 = vlaneseq
        %v6306 = vshrl.u32 %v6305, 7
        %v6307 = vsub.s32 %v6304, %v6306
        %v6308 = vrot.slane %v6280, %v6307
        %v6309 = vcombine.low %v6287, %v6294
        %v6310 = vcombine.low %v6301, %v6308
        %v6312 = vunpack.c.l.s4 1966171168
        %v6313 = vunpack.c.0.s8 %v6312
        %v6314 = vlaneseq
        %v6315 = vshrl.u32 %v6314, 7
        %v6316 = vsub.s32 %v6313, %v6315
        %v6317 = vrot.slane %v6309, %v6316
        %v6319 = vunpack.c.l.s4 1966171168
        %v6320 = vunpack.c.0.s8 %v6319
        %v6321 = vlaneseq
        %v6322 = vshrl.u32 %v6321, 7
        %v6323 = vsub.s32 %v6320, %v6322
        %v6324 = vrot.slane %v6310, %v6323
        %v6325 = vcombine.low %v6317, %v6324
        %v6326 = vcombine.low %v3363, %v3367
        %v6327 = vcombine.low %v3371, %v3375
        %v6328 = vcombine.low %v3379, %v3383
        %v6329 = vcombine.low %v3387, %v3391
        %v6331 = vunpack.c.l.s4 1966171168
        %v6332 = vunpack.c.0.s8 %v6331
        %v6333 = vlaneseq
        %v6334 = vshrl.u32 %v6333, 7
        %v6335 = vsub.s32 %v6332, %v6334
        %v6336 = vrot.slane %v6326, %v6335
        %v6338 = vunpack.c.l.s4 1966171168
        %v6339 = vunpack.c.0.s8 %v6338
        %v6340 = vlaneseq
        %v6341 = vshrl.u32 %v6340, 7
        %v6342 = vsub.s32 %v6339, %v6341
        %v6343 = vrot.slane %v6327, %v6342
        %v6345 = vunpack.c.l.s4 1966171168
        %v6346 = vunpack.c.0.s8 %v6345
        %v6347 = vlaneseq
        %v6348 = vshrl.u32 %v6347, 7
        %v6349 = vsub.s32 %v6346, %v6348
        %v6350 = vrot.slane %v6328, %v6349
        %v6352 = vunpack.c.l.s4 1966171168
        %v6353 = vunpack.c.0.s8 %v6352
        %v6354 = vlaneseq
        %v6355 = vshrl.u32 %v6354, 7
        %v6356 = vsub.s32 %v6353, %v6355
        %v6357 = vrot.slane %v6329, %v6356
        %v6358 = vcombine.low %v6336, %v6343
        %v6359 = vcombine.low %v6350, %v6357
        %v6361 = vunpack.c.l.s4 1966171168
        %v6362 = vunpack.c.0.s8 %v6361
        %v6363 = vlaneseq
        %v6364 = vshrl.u32 %v6363, 7
        %v6365 = vsub.s32 %v6362, %v6364
        %v6366 = vrot.slane %v6358, %v6365
        %v6368 = vunpack.c.l.s4 1966171168
        %v6369 = vunpack.c.0.s8 %v6368
        %v6370 = vlaneseq
        %v6371 = vshrl.u32 %v6370, 7
        %v6372 = vsub.s32 %v6369, %v6371
        %v6373 = vrot.slane %v6359, %v6372
        %v6374 = vcombine.low %v6366, %v6373
        %v6375 = vcombine.low %v3395, %v3399
        %v6376 = vcombine.low %v3403, %v3407
        %v6377 = vcombine.low %v3411, %v3415
        %v6378 = vcombine.low %v3419, %v3423
        %v6380 = vunpack.c.l.s4 1966171168
        %v6381 = vunpack.c.0.s8 %v6380
        %v6382 = vlaneseq
        %v6383 = vshrl.u32 %v6382, 7
        %v6384 = vsub.s32 %v6381, %v6383
        %v6385 = vrot.slane %v6375, %v6384
        %v6387 = vunpack.c.l.s4 1966171168
        %v6388 = vunpack.c.0.s8 %v6387
        %v6389 = vlaneseq
        %v6390 = vshrl.u32 %v6389, 7
        %v6391 = vsub.s32 %v6388, %v6390
        %v6392 = vrot.slane %v6376, %v6391
        %v6394 = vunpack.c.l.s4 1966171168
        %v6395 = vunpack.c.0.s8 %v6394
        %v6396 = vlaneseq
        %v6397 = vshrl.u32 %v6396, 7
        %v6398 = vsub.s32 %v6395, %v6397
        %v6399 = vrot.slane %v6377, %v6398
        %v6401 = vunpack.c.l.s4 1966171168
        %v6402 = vunpack.c.0.s8 %v6401
        %v6403 = vlaneseq
        %v6404 = vshrl.u32 %v6403, 7
        %v6405 = vsub.s32 %v6402, %v6404
        %v6406 = vrot.slane %v6378, %v6405
        %v6407 = vcombine.low %v6385, %v6392
        %v6408 = vcombine.low %v6399, %v6406
        %v6410 = vunpack.c.l.s4 1966171168
        %v6411 = vunpack.c.0.s8 %v6410
        %v6412 = vlaneseq
        %v6413 = vshrl.u32 %v6412, 7
        %v6414 = vsub.s32 %v6411, %v6413
        %v6415 = vrot.slane %v6407, %v6414
        %v6417 = vunpack.c.l.s4 1966171168
        %v6418 = vunpack.c.0.s8 %v6417
        %v6419 = vlaneseq
        %v6420 = vshrl.u32 %v6419, 7
        %v6421 = vsub.s32 %v6418, %v6420
        %v6422 = vrot.slane %v6408, %v6421
        %v6423 = vcombine.low %v6415, %v6422
        %v6424 = vcombine.low %v3427, %v3431
        %v6425 = vcombine.low %v3435, %v3439
        %v6426 = vcombine.low %v3443, %v3447
        %v6427 = vcombine.low %v3451, %v3455
        %v6429 = vunpack.c.l.s4 1966171168
        %v6430 = vunpack.c.0.s8 %v6429
        %v6431 = vlaneseq
        %v6432 = vshrl.u32 %v6431, 7
        %v6433 = vsub.s32 %v6430, %v6432
        %v6434 = vrot.slane %v6424, %v6433
        %v6436 = vunpack.c.l.s4 1966171168
        %v6437 = vunpack.c.0.s8 %v6436
        %v6438 = vlaneseq
        %v6439 = vshrl.u32 %v6438, 7
        %v6440 = vsub.s32 %v6437, %v6439
        %v6441 = vrot.slane %v6425, %v6440
        %v6443 = vunpack.c.l.s4 1966171168
        %v6444 = vunpack.c.0.s8 %v6443
        %v6445 = vlaneseq
        %v6446 = vshrl.u32 %v6445, 7
        %v6447 = vsub.s32 %v6444, %v6446
        %v6448 = vrot.slane %v6426, %v6447
        %v6450 = vunpack.c.l.s4 1966171168
        %v6451 = vunpack.c.0.s8 %v6450
        %v6452 = vlaneseq
        %v6453 = vshrl.u32 %v6452, 7
        %v6454 = vsub.s32 %v6451, %v6453
        %v6455 = vrot.slane %v6427, %v6454
        %v6456 = vcombine.low %v6434, %v6441
        %v6457 = vcombine.low %v6448, %v6455
        %v6459 = vunpack.c.l.s4 1966171168
        %v6460 = vunpack.c.0.s8 %v6459
        %v6461 = vlaneseq
        %v6462 = vshrl.u32 %v6461, 7
        %v6463 = vsub.s32 %v6460, %v6462
        %v6464 = vrot.slane %v6456, %v6463
        %v6466 = vunpack.c.l.s4 1966171168
        %v6467 = vunpack.c.0.s8 %v6466
        %v6468 = vlaneseq
        %v6469 = vshrl.u32 %v6468, 7
        %v6470 = vsub.s32 %v6467, %v6469
        %v6471 = vrot.slane %v6457, %v6470
        %v6472 = vcombine.low %v6464, %v6471
        %v6473 = vcombine.low %v3459, %v3463
        %v6474 = vcombine.low %v3467, %v3471
        %v6475 = vcombine.low %v3475, %v3479
        %v6476 = vcombine.low %v3483, %v3487
        %v6478 = vunpack.c.l.s4 1966171168
        %v6479 = vunpack.c.0.s8 %v6478
        %v6480 = vlaneseq
        %v6481 = vshrl.u32 %v6480, 7
        %v6482 = vsub.s32 %v6479, %v6481
        %v6483 = vrot.slane %v6473, %v6482
        %v6485 = vunpack.c.l.s4 1966171168
        %v6486 = vunpack.c.0.s8 %v6485
        %v6487 = vlaneseq
        %v6488 = vshrl.u32 %v6487, 7
        %v6489 = vsub.s32 %v6486, %v6488
        %v6490 = vrot.slane %v6474, %v6489
        %v6492 = vunpack.c.l.s4 1966171168
        %v6493 = vunpack.c.0.s8 %v6492
        %v6494 = vlaneseq
        %v6495 = vshrl.u32 %v6494, 7
        %v6496 = vsub.s32 %v6493, %v6495
        %v6497 = vrot.slane %v6475, %v6496
        %v6499 = vunpack.c.l.s4 1966171168
        %v6500 = vunpack.c.0.s8 %v6499
        %v6501 = vlaneseq
        %v6502 = vshrl.u32 %v6501, 7
        %v6503 = vsub.s32 %v6500, %v6502
        %v6504 = vrot.slane %v6476, %v6503
        %v6505 = vcombine.low %v6483, %v6490
        %v6506 = vcombine.low %v6497, %v6504
        %v6508 = vunpack.c.l.s4 1966171168
        %v6509 = vunpack.c.0.s8 %v6508
        %v6510 = vlaneseq
        %v6511 = vshrl.u32 %v6510, 7
        %v6512 = vsub.s32 %v6509, %v6511
        %v6513 = vrot.slane %v6505, %v6512
        %v6515 = vunpack.c.l.s4 1966171168
        %v6516 = vunpack.c.0.s8 %v6515
        %v6517 = vlaneseq
        %v6518 = vshrl.u32 %v6517, 7
        %v6519 = vsub.s32 %v6516, %v6518
        %v6520 = vrot.slane %v6506, %v6519
        %v6521 = vcombine.low %v6513, %v6520
        %v6522 = vcombine.low %v3491, %v3495
        %v6523 = vcombine.low %v3499, %v3503
        %v6524 = vcombine.low %v3507, %v3511
        %v6525 = vcombine.low %v3515, %v3519
        %v6527 = vunpack.c.l.s4 1966171168
        %v6528 = vunpack.c.0.s8 %v6527
        %v6529 = vlaneseq
        %v6530 = vshrl.u32 %v6529, 7
        %v6531 = vsub.s32 %v6528, %v6530
        %v6532 = vrot.slane %v6522, %v6531
        %v6534 = vunpack.c.l.s4 1966171168
        %v6535 = vunpack.c.0.s8 %v6534
        %v6536 = vlaneseq
        %v6537 = vshrl.u32 %v6536, 7
        %v6538 = vsub.s32 %v6535, %v6537
        %v6539 = vrot.slane %v6523, %v6538
        %v6541 = vunpack.c.l.s4 1966171168
        %v6542 = vunpack.c.0.s8 %v6541
        %v6543 = vlaneseq
        %v6544 = vshrl.u32 %v6543, 7
        %v6545 = vsub.s32 %v6542, %v6544
        %v6546 = vrot.slane %v6524, %v6545
        %v6548 = vunpack.c.l.s4 1966171168
        %v6549 = vunpack.c.0.s8 %v6548
        %v6550 = vlaneseq
        %v6551 = vshrl.u32 %v6550, 7
        %v6552 = vsub.s32 %v6549, %v6551
        %v6553 = vrot.slane %v6525, %v6552
        %v6554 = vcombine.low %v6532, %v6539
        %v6555 = vcombine.low %v6546, %v6553
        %v6557 = vunpack.c.l.s4 1966171168
        %v6558 = vunpack.c.0.s8 %v6557
        %v6559 = vlaneseq
        %v6560 = vshrl.u32 %v6559, 7
        %v6561 = vsub.s32 %v6558, %v6560
        %v6562 = vrot.slane %v6554, %v6561
        %v6564 = vunpack.c.l.s4 1966171168
        %v6565 = vunpack.c.0.s8 %v6564
        %v6566 = vlaneseq
        %v6567 = vshrl.u32 %v6566, 7
        %v6568 = vsub.s32 %v6565, %v6567
        %v6569 = vrot.slane %v6555, %v6568
        %v6570 = vcombine.low %v6562, %v6569
        %v6571 = vcombine.low %v3523, %v3527
        %v6572 = vcombine.low %v3531, %v3535
        %v6573 = vcombine.low %v3539, %v3543
        %v6574 = vcombine.low %v3547, %v3551
        %v6576 = vunpack.c.l.s4 1966171168
        %v6577 = vunpack.c.0.s8 %v6576
        %v6578 = vlaneseq
        %v6579 = vshrl.u32 %v6578, 7
        %v6580 = vsub.s32 %v6577, %v6579
        %v6581 = vrot.slane %v6571, %v6580
        %v6583 = vunpack.c.l.s4 1966171168
        %v6584 = vunpack.c.0.s8 %v6583
        %v6585 = vlaneseq
        %v6586 = vshrl.u32 %v6585, 7
        %v6587 = vsub.s32 %v6584, %v6586
        %v6588 = vrot.slane %v6572, %v6587
        %v6590 = vunpack.c.l.s4 1966171168
        %v6591 = vunpack.c.0.s8 %v6590
        %v6592 = vlaneseq
        %v6593 = vshrl.u32 %v6592, 7
        %v6594 = vsub.s32 %v6591, %v6593
        %v6595 = vrot.slane %v6573, %v6594
        %v6597 = vunpack.c.l.s4 1966171168
        %v6598 = vunpack.c.0.s8 %v6597
        %v6599 = vlaneseq
        %v6600 = vshrl.u32 %v6599, 7
        %v6601 = vsub.s32 %v6598, %v6600
        %v6602 = vrot.slane %v6574, %v6601
        %v6603 = vcombine.low %v6581, %v6588
        %v6604 = vcombine.low %v6595, %v6602
        %v6606 = vunpack.c.l.s4 1966171168
        %v6607 = vunpack.c.0.s8 %v6606
        %v6608 = vlaneseq
        %v6609 = vshrl.u32 %v6608, 7
        %v6610 = vsub.s32 %v6607, %v6609
        %v6611 = vrot.slane %v6603, %v6610
        %v6613 = vunpack.c.l.s4 1966171168
        %v6614 = vunpack.c.0.s8 %v6613
        %v6615 = vlaneseq
        %v6616 = vshrl.u32 %v6615, 7
        %v6617 = vsub.s32 %v6614, %v6616
        %v6618 = vrot.slane %v6604, %v6617
        %v6619 = vcombine.low %v6611, %v6618
        %v6620 = vcombine.low %v3555, %v3559
        %v6621 = vcombine.low %v3563, %v3567
        %v6622 = vcombine.low %v3571, %v3575
        %v6623 = vcombine.low %v3579, %v3583
        %v6625 = vunpack.c.l.s4 1966171168
        %v6626 = vunpack.c.0.s8 %v6625
        %v6627 = vlaneseq
        %v6628 = vshrl.u32 %v6627, 7
        %v6629 = vsub.s32 %v6626, %v6628
        %v6630 = vrot.slane %v6620, %v6629
        %v6632 = vunpack.c.l.s4 1966171168
        %v6633 = vunpack.c.0.s8 %v6632
        %v6634 = vlaneseq
        %v6635 = vshrl.u32 %v6634, 7
        %v6636 = vsub.s32 %v6633, %v6635
        %v6637 = vrot.slane %v6621, %v6636
        %v6639 = vunpack.c.l.s4 1966171168
        %v6640 = vunpack.c.0.s8 %v6639
        %v6641 = vlaneseq
        %v6642 = vshrl.u32 %v6641, 7
        %v6643 = vsub.s32 %v6640, %v6642
        %v6644 = vrot.slane %v6622, %v6643
        %v6646 = vunpack.c.l.s4 1966171168
        %v6647 = vunpack.c.0.s8 %v6646
        %v6648 = vlaneseq
        %v6649 = vshrl.u32 %v6648, 7
        %v6650 = vsub.s32 %v6647, %v6649
        %v6651 = vrot.slane %v6623, %v6650
        %v6652 = vcombine.low %v6630, %v6637
        %v6653 = vcombine.low %v6644, %v6651
        %v6655 = vunpack.c.l.s4 1966171168
        %v6656 = vunpack.c.0.s8 %v6655
        %v6657 = vlaneseq
        %v6658 = vshrl.u32 %v6657, 7
        %v6659 = vsub.s32 %v6656, %v6658
        %v6660 = vrot.slane %v6652, %v6659
        %v6662 = vunpack.c.l.s4 1966171168
        %v6663 = vunpack.c.0.s8 %v6662
        %v6664 = vlaneseq
        %v6665 = vshrl.u32 %v6664, 7
        %v6666 = vsub.s32 %v6663, %v6665
        %v6667 = vrot.slane %v6653, %v6666
        %v6668 = vcombine.low %v6660, %v6667
        %v6669 = vcombine.low %v3587, %v3591
        %v6670 = vcombine.low %v3595, %v3599
        %v6671 = vcombine.low %v3603, %v3607
        %v6672 = vcombine.low %v3611, %v3615
        %v6674 = vunpack.c.l.s4 1966171168
        %v6675 = vunpack.c.0.s8 %v6674
        %v6676 = vlaneseq
        %v6677 = vshrl.u32 %v6676, 7
        %v6678 = vsub.s32 %v6675, %v6677
        %v6679 = vrot.slane %v6669, %v6678
        %v6681 = vunpack.c.l.s4 1966171168
        %v6682 = vunpack.c.0.s8 %v6681
        %v6683 = vlaneseq
        %v6684 = vshrl.u32 %v6683, 7
        %v6685 = vsub.s32 %v6682, %v6684
        %v6686 = vrot.slane %v6670, %v6685
        %v6688 = vunpack.c.l.s4 1966171168
        %v6689 = vunpack.c.0.s8 %v6688
        %v6690 = vlaneseq
        %v6691 = vshrl.u32 %v6690, 7
        %v6692 = vsub.s32 %v6689, %v6691
        %v6693 = vrot.slane %v6671, %v6692
        %v6695 = vunpack.c.l.s4 1966171168
        %v6696 = vunpack.c.0.s8 %v6695
        %v6697 = vlaneseq
        %v6698 = vshrl.u32 %v6697, 7
        %v6699 = vsub.s32 %v6696, %v6698
        %v6700 = vrot.slane %v6672, %v6699
        %v6701 = vcombine.low %v6679, %v6686
        %v6702 = vcombine.low %v6693, %v6700
        %v6704 = vunpack.c.l.s4 1966171168
        %v6705 = vunpack.c.0.s8 %v6704
        %v6706 = vlaneseq
        %v6707 = vshrl.u32 %v6706, 7
        %v6708 = vsub.s32 %v6705, %v6707
        %v6709 = vrot.slane %v6701, %v6708
        %v6711 = vunpack.c.l.s4 1966171168
        %v6712 = vunpack.c.0.s8 %v6711
        %v6713 = vlaneseq
        %v6714 = vshrl.u32 %v6713, 7
        %v6715 = vsub.s32 %v6712, %v6714
        %v6716 = vrot.slane %v6702, %v6715
        %v6717 = vcombine.low %v6709, %v6716
        %v6718 = vcombine.low %v3619, %v3623
        %v6719 = vcombine.low %v3627, %v3631
        %v6720 = vcombine.low %v3635, %v3639
        %v6721 = vcombine.low %v3643, %v3647
        %v6723 = vunpack.c.l.s4 1966171168
        %v6724 = vunpack.c.0.s8 %v6723
        %v6725 = vlaneseq
        %v6726 = vshrl.u32 %v6725, 7
        %v6727 = vsub.s32 %v6724, %v6726
        %v6728 = vrot.slane %v6718, %v6727
        %v6730 = vunpack.c.l.s4 1966171168
        %v6731 = vunpack.c.0.s8 %v6730
        %v6732 = vlaneseq
        %v6733 = vshrl.u32 %v6732, 7
        %v6734 = vsub.s32 %v6731, %v6733
        %v6735 = vrot.slane %v6719, %v6734
        %v6737 = vunpack.c.l.s4 1966171168
        %v6738 = vunpack.c.0.s8 %v6737
        %v6739 = vlaneseq
        %v6740 = vshrl.u32 %v6739, 7
        %v6741 = vsub.s32 %v6738, %v6740
        %v6742 = vrot.slane %v6720, %v6741
        %v6744 = vunpack.c.l.s4 1966171168
        %v6745 = vunpack.c.0.s8 %v6744
        %v6746 = vlaneseq
        %v6747 = vshrl.u32 %v6746, 7
        %v6748 = vsub.s32 %v6745, %v6747
        %v6749 = vrot.slane %v6721, %v6748
        %v6750 = vcombine.low %v6728, %v6735
        %v6751 = vcombine.low %v6742, %v6749
        %v6753 = vunpack.c.l.s4 1966171168
        %v6754 = vunpack.c.0.s8 %v6753
        %v6755 = vlaneseq
        %v6756 = vshrl.u32 %v6755, 7
        %v6757 = vsub.s32 %v6754, %v6756
        %v6758 = vrot.slane %v6750, %v6757
        %v6760 = vunpack.c.l.s4 1966171168
        %v6761 = vunpack.c.0.s8 %v6760
        %v6762 = vlaneseq
        %v6763 = vshrl.u32 %v6762, 7
        %v6764 = vsub.s32 %v6761, %v6763
        %v6765 = vrot.slane %v6751, %v6764
        %v6766 = vcombine.low %v6758, %v6765
        %v6767 = vcombine.low %v3651, %v3655
        %v6768 = vcombine.low %v3659, %v3663
        %v6769 = vcombine.low %v3667, %v3671
        %v6770 = vcombine.low %v3675, %v3679
        %v6772 = vunpack.c.l.s4 1966171168
        %v6773 = vunpack.c.0.s8 %v6772
        %v6774 = vlaneseq
        %v6775 = vshrl.u32 %v6774, 7
        %v6776 = vsub.s32 %v6773, %v6775
        %v6777 = vrot.slane %v6767, %v6776
        %v6779 = vunpack.c.l.s4 1966171168
        %v6780 = vunpack.c.0.s8 %v6779
        %v6781 = vlaneseq
        %v6782 = vshrl.u32 %v6781, 7
        %v6783 = vsub.s32 %v6780, %v6782
        %v6784 = vrot.slane %v6768, %v6783
        %v6786 = vunpack.c.l.s4 1966171168
        %v6787 = vunpack.c.0.s8 %v6786
        %v6788 = vlaneseq
        %v6789 = vshrl.u32 %v6788, 7
        %v6790 = vsub.s32 %v6787, %v6789
        %v6791 = vrot.slane %v6769, %v6790
        %v6793 = vunpack.c.l.s4 1966171168
        %v6794 = vunpack.c.0.s8 %v6793
        %v6795 = vlaneseq
        %v6796 = vshrl.u32 %v6795, 7
        %v6797 = vsub.s32 %v6794, %v6796
        %v6798 = vrot.slane %v6770, %v6797
        %v6799 = vcombine.low %v6777, %v6784
        %v6800 = vcombine.low %v6791, %v6798
        %v6802 = vunpack.c.l.s4 1966171168
        %v6803 = vunpack.c.0.s8 %v6802
        %v6804 = vlaneseq
        %v6805 = vshrl.u32 %v6804, 7
        %v6806 = vsub.s32 %v6803, %v6805
        %v6807 = vrot.slane %v6799, %v6806
        %v6809 = vunpack.c.l.s4 1966171168
        %v6810 = vunpack.c.0.s8 %v6809
        %v6811 = vlaneseq
        %v6812 = vshrl.u32 %v6811, 7
        %v6813 = vsub.s32 %v6810, %v6812
        %v6814 = vrot.slane %v6800, %v6813
        %v6815 = vcombine.low %v6807, %v6814
        %6816 = vset.pattern.permute.xlu0 0
        %6817 = vperm.xlu0 %6816, %v3728
        %v6818 = vpop.permute.xlu0 %6817
        %6819 = vset.pattern.permute.xlu0 0
        %6820 = vperm.xlu0 %6819, %v3777
        %v6821 = vpop.permute.xlu0 %6820
        %6822 = vset.pattern.permute.xlu0 0
        %6823 = vperm.xlu0 %6822, %v3826
        %v6824 = vpop.permute.xlu0 %6823
        %6825 = vset.pattern.permute.xlu0 0
        %6826 = vperm.xlu0 %6825, %v3875
        %v6827 = vpop.permute.xlu0 %6826
        %6828 = vset.pattern.permute.xlu0 0
        %6829 = vperm.xlu0 %6828, %v3924
        %v6830 = vpop.permute.xlu0 %6829
        %6831 = vset.pattern.permute.xlu0 0
        %6832 = vperm.xlu0 %6831, %v3973
        %v6833 = vpop.permute.xlu0 %6832
        %6834 = vset.pattern.permute.xlu0 0
        %6835 = vperm.xlu0 %6834, %v4022
        %v6836 = vpop.permute.xlu0 %6835
        %6837 = vset.pattern.permute.xlu0 0
        %6838 = vperm.xlu0 %6837, %v4071
        %v6839 = vpop.permute.xlu0 %6838
        %6840 = vset.pattern.permute.xlu0 0
        %6841 = vperm.xlu0 %6840, %v4120
        %v6842 = vpop.permute.xlu0 %6841
        %6843 = vset.pattern.permute.xlu0 0
        %6844 = vperm.xlu0 %6843, %v4169
        %v6845 = vpop.permute.xlu0 %6844
        %6846 = vset.pattern.permute.xlu0 0
        %6847 = vperm.xlu0 %6846, %v4218
        %v6848 = vpop.permute.xlu0 %6847
        %6849 = vset.pattern.permute.xlu0 0
        %6850 = vperm.xlu0 %6849, %v4267
        %v6851 = vpop.permute.xlu0 %6850
        %6852 = vset.pattern.permute.xlu0 0
        %6853 = vperm.xlu0 %6852, %v4316
        %v6854 = vpop.permute.xlu0 %6853
        %6855 = vset.pattern.permute.xlu0 0
        %6856 = vperm.xlu0 %6855, %v4365
        %v6857 = vpop.permute.xlu0 %6856
        %6858 = vset.pattern.permute.xlu0 0
        %6859 = vperm.xlu0 %6858, %v4414
        %v6860 = vpop.permute.xlu0 %6859
        %6861 = vset.pattern.permute.xlu0 0
        %6862 = vperm.xlu0 %6861, %v4463
        %v6863 = vpop.permute.xlu0 %6862
        %6864 = vset.pattern.permute.xlu0 0
        %6865 = vperm.xlu0 %6864, %v4512
        %v6866 = vpop.permute.xlu0 %6865
        %6867 = vset.pattern.permute.xlu0 0
        %6868 = vperm.xlu0 %6867, %v4561
        %v6869 = vpop.permute.xlu0 %6868
        %6870 = vset.pattern.permute.xlu0 0
        %6871 = vperm.xlu0 %6870, %v4610
        %v6872 = vpop.permute.xlu0 %6871
        %6873 = vset.pattern.permute.xlu0 0
        %6874 = vperm.xlu0 %6873, %v4659
        %v6875 = vpop.permute.xlu0 %6874
        %6876 = vset.pattern.permute.xlu0 0
        %6877 = vperm.xlu0 %6876, %v4708
        %v6878 = vpop.permute.xlu0 %6877
        %6879 = vset.pattern.permute.xlu0 0
        %6880 = vperm.xlu0 %6879, %v4757
        %v6881 = vpop.permute.xlu0 %6880
        %6882 = vset.pattern.permute.xlu0 0
        %6883 = vperm.xlu0 %6882, %v4806
        %v6884 = vpop.permute.xlu0 %6883
        %6885 = vset.pattern.permute.xlu0 0
        %6886 = vperm.xlu0 %6885, %v4855
        %v6887 = vpop.permute.xlu0 %6886
        %6888 = vset.pattern.permute.xlu0 0
        %6889 = vperm.xlu0 %6888, %v4904
        %v6890 = vpop.permute.xlu0 %6889
        %6891 = vset.pattern.permute.xlu0 0
        %6892 = vperm.xlu0 %6891, %v4953
        %v6893 = vpop.permute.xlu0 %6892
        %6894 = vset.pattern.permute.xlu0 0
        %6895 = vperm.xlu0 %6894, %v5002
        %v6896 = vpop.permute.xlu0 %6895
        %6897 = vset.pattern.permute.xlu0 0
        %6898 = vperm.xlu0 %6897, %v5051
        %v6899 = vpop.permute.xlu0 %6898
        %6900 = vset.pattern.permute.xlu0 0
        %6901 = vperm.xlu0 %6900, %v5100
        %v6902 = vpop.permute.xlu0 %6901
        %6903 = vset.pattern.permute.xlu0 0
        %6904 = vperm.xlu0 %6903, %v5149
        %v6905 = vpop.permute.xlu0 %6904
        %6906 = vset.pattern.permute.xlu0 0
        %6907 = vperm.xlu0 %6906, %v5198
        %v6908 = vpop.permute.xlu0 %6907
        %6909 = vset.pattern.permute.xlu0 0
        %6910 = vperm.xlu0 %6909, %v5247
        %v6911 = vpop.permute.xlu0 %6910
        %6912 = vset.pattern.permute.xlu0 0
        %6913 = vperm.xlu0 %6912, %v5296
        %v6914 = vpop.permute.xlu0 %6913
        %6915 = vset.pattern.permute.xlu0 0
        %6916 = vperm.xlu0 %6915, %v5345
        %v6917 = vpop.permute.xlu0 %6916
        %6918 = vset.pattern.permute.xlu0 0
        %6919 = vperm.xlu0 %6918, %v5394
        %v6920 = vpop.permute.xlu0 %6919
        %6921 = vset.pattern.permute.xlu0 0
        %6922 = vperm.xlu0 %6921, %v5443
        %v6923 = vpop.permute.xlu0 %6922
        %6924 = vset.pattern.permute.xlu0 0
        %6925 = vperm.xlu0 %6924, %v5492
        %v6926 = vpop.permute.xlu0 %6925
        %6927 = vset.pattern.permute.xlu0 0
        %6928 = vperm.xlu0 %6927, %v5541
        %v6929 = vpop.permute.xlu0 %6928
        %6930 = vset.pattern.permute.xlu0 0
        %6931 = vperm.xlu0 %6930, %v5590
        %v6932 = vpop.permute.xlu0 %6931
        %6933 = vset.pattern.permute.xlu0 0
        %6934 = vperm.xlu0 %6933, %v5639
        %v6935 = vpop.permute.xlu0 %6934
        %6936 = vset.pattern.permute.xlu0 0
        %6937 = vperm.xlu0 %6936, %v5688
        %v6938 = vpop.permute.xlu0 %6937
        %6939 = vset.pattern.permute.xlu0 0
        %6940 = vperm.xlu0 %6939, %v5737
        %v6941 = vpop.permute.xlu0 %6940
        %6942 = vset.pattern.permute.xlu0 0
        %6943 = vperm.xlu0 %6942, %v5786
        %v6944 = vpop.permute.xlu0 %6943
        %6945 = vset.pattern.permute.xlu0 0
        %6946 = vperm.xlu0 %6945, %v5835
        %v6947 = vpop.permute.xlu0 %6946
        %6948 = vset.pattern.permute.xlu0 0
        %6949 = vperm.xlu0 %6948, %v5884
        %v6950 = vpop.permute.xlu0 %6949
        %6951 = vset.pattern.permute.xlu0 0
        %6952 = vperm.xlu0 %6951, %v5933
        %v6953 = vpop.permute.xlu0 %6952
        %6954 = vset.pattern.permute.xlu0 0
        %6955 = vperm.xlu0 %6954, %v5982
        %v6956 = vpop.permute.xlu0 %6955
        %6957 = vset.pattern.permute.xlu0 0
        %6958 = vperm.xlu0 %6957, %v6031
        %v6959 = vpop.permute.xlu0 %6958
        %6960 = vset.pattern.permute.xlu0 0
        %6961 = vperm.xlu0 %6960, %v6080
        %v6962 = vpop.permute.xlu0 %6961
        %6963 = vset.pattern.permute.xlu0 0
        %6964 = vperm.xlu0 %6963, %v6129
        %v6965 = vpop.permute.xlu0 %6964
        %6966 = vset.pattern.permute.xlu0 0
        %6967 = vperm.xlu0 %6966, %v6178
        %v6968 = vpop.permute.xlu0 %6967
        %6969 = vset.pattern.permute.xlu0 0
        %6970 = vperm.xlu0 %6969, %v6227
        %v6971 = vpop.permute.xlu0 %6970
        %6972 = vset.pattern.permute.xlu0 0
        %6973 = vperm.xlu0 %6972, %v6276
        %v6974 = vpop.permute.xlu0 %6973
        %6975 = vset.pattern.permute.xlu0 0
        %6976 = vperm.xlu0 %6975, %v6325
        %v6977 = vpop.permute.xlu0 %6976
        %6978 = vset.pattern.permute.xlu0 0
        %6979 = vperm.xlu0 %6978, %v6374
        %v6980 = vpop.permute.xlu0 %6979
        %6981 = vset.pattern.permute.xlu0 0
        %6982 = vperm.xlu0 %6981, %v6423
        %v6983 = vpop.permute.xlu0 %6982
        %6984 = vset.pattern.permute.xlu0 0
        %6985 = vperm.xlu0 %6984, %v6472
        %v6986 = vpop.permute.xlu0 %6985
        %6987 = vset.pattern.permute.xlu0 0
        %6988 = vperm.xlu0 %6987, %v6521
        %v6989 = vpop.permute.xlu0 %6988
        %6990 = vset.pattern.permute.xlu0 0
        %6991 = vperm.xlu0 %6990, %v6570
        %v6992 = vpop.permute.xlu0 %6991
        %6993 = vset.pattern.permute.xlu0 0
        %6994 = vperm.xlu0 %6993, %v6619
        %v6995 = vpop.permute.xlu0 %6994
        %6996 = vset.pattern.permute.xlu0 0
        %6997 = vperm.xlu0 %6996, %v6668
        %v6998 = vpop.permute.xlu0 %6997
        %6999 = vset.pattern.permute.xlu0 0
        %7000 = vperm.xlu0 %6999, %v6717
        %v7001 = vpop.permute.xlu0 %7000
        %7002 = vset.pattern.permute.xlu0 0
        %7003 = vperm.xlu0 %7002, %v6766
        %v7004 = vpop.permute.xlu0 %7003
        %7005 = vset.pattern.permute.xlu0 0
        %7006 = vperm.xlu0 %7005, %v6815
        %v7007 = vpop.permute.xlu0 %7006
        %v7008 = vlaneseq
        %v7009 = vshrl.u32 %v7008, 7
        %v7010 = vsub.s32 %v974, %v7009
        %v7011 = vrot.slane %v6818, %v7010
        %v7012 = vadd.s32 %v974, 4294967288
        %v7013 = vlaneseq
        %v7014 = vshrl.u32 %v7013, 7
        %v7015 = vsub.s32 %v7012, %v7014
        %v7016 = vrot.slane %v6821, %v7015
        %vm7017 = vcmask 130112
        %v7018 = vsel %vm7017, %v7016, %v7011
        %v7019 = vadd.s32 %v974, 4294967280
        %v7020 = vlaneseq
        %v7021 = vshrl.u32 %v7020, 7
        %v7022 = vsub.s32 %v7019, %v7021
        %v7023 = vrot.slane %v6824, %v7022
        %vm7024 = vcmask 195712
        %v7025 = vsel %vm7024, %v7023, %v7018
        %v7026 = vadd.s32 %v974, 4294967272
        %v7027 = vlaneseq
        %v7028 = vshrl.u32 %v7027, 7
        %v7029 = vsub.s32 %v7026, %v7028
        %v7030 = vrot.slane %v6827, %v7029
        %vm7031 = vcmask 261312
        %v7032 = vsel %vm7031, %v7030, %v7025
        %v7033 = vadd.s32 %v974, 4294967264
        %v7034 = vlaneseq
        %v7035 = vshrl.u32 %v7034, 7
        %v7036 = vsub.s32 %v7033, %v7035
        %v7037 = vrot.slane %v6830, %v7036
        %vm7038 = vcmask 326912
        %v7039 = vsel %vm7038, %v7037, %v7032
        %v7040 = vadd.s32 %v974, 4294967256
        %v7041 = vlaneseq
        %v7042 = vshrl.u32 %v7041, 7
        %v7043 = vsub.s32 %v7040, %v7042
        %v7044 = vrot.slane %v6833, %v7043
        %vm7045 = vcmask 392512
        %v7046 = vsel %vm7045, %v7044, %v7039
        %v7047 = vadd.s32 %v974, 4294967248
        %v7048 = vlaneseq
        %v7049 = vshrl.u32 %v7048, 7
        %v7050 = vsub.s32 %v7047, %v7049
        %v7051 = vrot.slane %v6836, %v7050
        %vm7052 = vcmask 458112
        %v7053 = vsel %vm7052, %v7051, %v7046
        %v7054 = vadd.s32 %v974, 4294967240
        %v7055 = vlaneseq
        %v7056 = vshrl.u32 %v7055, 7
        %v7057 = vsub.s32 %v7054, %v7056
        %v7058 = vrot.slane %v6839, %v7057
        %vm7059 = vcmask 523712
        %v7060 = vsel %vm7059, %v7058, %v7053
        %v7061 = vadd.s32 %v974, 4294967232
        %v7062 = vlaneseq
        %v7063 = vshrl.u32 %v7062, 7
        %v7064 = vsub.s32 %v7061, %v7063
        %v7065 = vrot.slane %v6842, %v7064
        %vm7066 = vcmask 589312
        %v7067 = vsel %vm7066, %v7065, %v7060
        %v7068 = vadd.s32 %v974, 4294967224
        %v7069 = vlaneseq
        %v7070 = vshrl.u32 %v7069, 7
        %v7071 = vsub.s32 %v7068, %v7070
        %v7072 = vrot.slane %v6845, %v7071
        %vm7073 = vcmask 654912
        %v7074 = vsel %vm7073, %v7072, %v7067
        %v7075 = vadd.s32 %v974, 4294967216
        %v7076 = vlaneseq
        %v7077 = vshrl.u32 %v7076, 7
        %v7078 = vsub.s32 %v7075, %v7077
        %v7079 = vrot.slane %v6848, %v7078
        %vm7080 = vcmask 720512
        %v7081 = vsel %vm7080, %v7079, %v7074
        %v7082 = vadd.s32 %v974, 4294967208
        %v7083 = vlaneseq
        %v7084 = vshrl.u32 %v7083, 7
        %v7085 = vsub.s32 %v7082, %v7084
        %v7086 = vrot.slane %v6851, %v7085
        %vm7087 = vcmask 786112
        %v7088 = vsel %vm7087, %v7086, %v7081
        %v7089 = vadd.s32 %v974, 4294967200
        %v7090 = vlaneseq
        %v7091 = vshrl.u32 %v7090, 7
        %v7092 = vsub.s32 %v7089, %v7091
        %v7093 = vrot.slane %v6854, %v7092
        %vm7094 = vcmask 851712
        %v7095 = vsel %vm7094, %v7093, %v7088
        %v7096 = vadd.s32 %v974, 4294967192
        %v7097 = vlaneseq
        %v7098 = vshrl.u32 %v7097, 7
        %v7099 = vsub.s32 %v7096, %v7098
        %v7100 = vrot.slane %v6857, %v7099
        %vm7101 = vcmask 917312
        %v7102 = vsel %vm7101, %v7100, %v7095
        %v7103 = vadd.s32 %v974, 4294967184
        %v7104 = vlaneseq
        %v7105 = vshrl.u32 %v7104, 7
        %v7106 = vsub.s32 %v7103, %v7105
        %v7107 = vrot.slane %v6860, %v7106
        %vm7108 = vcmask 982912
        %v7109 = vsel %vm7108, %v7107, %v7102
        %v7110 = vadd.s32 %v974, 4294967176
        %v7111 = vlaneseq
        %v7112 = vshrl.u32 %v7111, 7
        %v7113 = vsub.s32 %v7110, %v7112
        %v7114 = vrot.slane %v6863, %v7113
        %vm7115 = vcmask 1048512
        %v7116 = vsel %vm7115, %v7114, %v7109
        %v7117 = vlaneseq
        %v7118 = vshrl.u32 %v7117, 7
        %v7119 = vsub.s32 %v974, %v7118
        %v7120 = vrot.slane %v6866, %v7119
        %v7121 = vlaneseq
        %v7122 = vshrl.u32 %v7121, 7
        %v7123 = vsub.s32 %v7012, %v7122
        %v7124 = vrot.slane %v6869, %v7123
        %v7125 = vsel %vm7017, %v7124, %v7120
        %v7126 = vlaneseq
        %v7127 = vshrl.u32 %v7126, 7
        %v7128 = vsub.s32 %v7019, %v7127
        %v7129 = vrot.slane %v6872, %v7128
        %v7130 = vsel %vm7024, %v7129, %v7125
        %v7131 = vlaneseq
        %v7132 = vshrl.u32 %v7131, 7
        %v7133 = vsub.s32 %v7026, %v7132
        %v7134 = vrot.slane %v6875, %v7133
        %v7135 = vsel %vm7031, %v7134, %v7130
        %v7136 = vlaneseq
        %v7137 = vshrl.u32 %v7136, 7
        %v7138 = vsub.s32 %v7033, %v7137
        %v7139 = vrot.slane %v6878, %v7138
        %v7140 = vsel %vm7038, %v7139, %v7135
        %v7141 = vlaneseq
        %v7142 = vshrl.u32 %v7141, 7
        %v7143 = vsub.s32 %v7040, %v7142
        %v7144 = vrot.slane %v6881, %v7143
        %v7145 = vsel %vm7045, %v7144, %v7140
        %v7146 = vlaneseq
        %v7147 = vshrl.u32 %v7146, 7
        %v7148 = vsub.s32 %v7047, %v7147
        %v7149 = vrot.slane %v6884, %v7148
        %v7150 = vsel %vm7052, %v7149, %v7145
        %v7151 = vlaneseq
        %v7152 = vshrl.u32 %v7151, 7
        %v7153 = vsub.s32 %v7054, %v7152
        %v7154 = vrot.slane %v6887, %v7153
        %v7155 = vsel %vm7059, %v7154, %v7150
        %v7156 = vlaneseq
        %v7157 = vshrl.u32 %v7156, 7
        %v7158 = vsub.s32 %v7061, %v7157
        %v7159 = vrot.slane %v6890, %v7158
        %v7160 = vsel %vm7066, %v7159, %v7155
        %v7161 = vlaneseq
        %v7162 = vshrl.u32 %v7161, 7
        %v7163 = vsub.s32 %v7068, %v7162
        %v7164 = vrot.slane %v6893, %v7163
        %v7165 = vsel %vm7073, %v7164, %v7160
        %v7166 = vlaneseq
        %v7167 = vshrl.u32 %v7166, 7
        %v7168 = vsub.s32 %v7075, %v7167
        %v7169 = vrot.slane %v6896, %v7168
        %v7170 = vsel %vm7080, %v7169, %v7165
        %v7171 = vlaneseq
        %v7172 = vshrl.u32 %v7171, 7
        %v7173 = vsub.s32 %v7082, %v7172
        %v7174 = vrot.slane %v6899, %v7173
        %v7175 = vsel %vm7087, %v7174, %v7170
        %v7176 = vlaneseq
        %v7177 = vshrl.u32 %v7176, 7
        %v7178 = vsub.s32 %v7089, %v7177
        %v7179 = vrot.slane %v6902, %v7178
        %v7180 = vsel %vm7094, %v7179, %v7175
        %v7181 = vlaneseq
        %v7182 = vshrl.u32 %v7181, 7
        %v7183 = vsub.s32 %v7096, %v7182
        %v7184 = vrot.slane %v6905, %v7183
        %v7185 = vsel %vm7101, %v7184, %v7180
        %v7186 = vlaneseq
        %v7187 = vshrl.u32 %v7186, 7
        %v7188 = vsub.s32 %v7103, %v7187
        %v7189 = vrot.slane %v6908, %v7188
        %v7190 = vsel %vm7108, %v7189, %v7185
        %v7191 = vlaneseq
        %v7192 = vshrl.u32 %v7191, 7
        %v7193 = vsub.s32 %v7110, %v7192
        %v7194 = vrot.slane %v6911, %v7193
        %v7195 = vsel %vm7115, %v7194, %v7190
        %v7196 = vlaneseq
        %v7197 = vshrl.u32 %v7196, 7
        %v7198 = vsub.s32 %v974, %v7197
        %v7199 = vrot.slane %v6914, %v7198
        %v7200 = vlaneseq
        %v7201 = vshrl.u32 %v7200, 7
        %v7202 = vsub.s32 %v7012, %v7201
        %v7203 = vrot.slane %v6917, %v7202
        %v7204 = vsel %vm7017, %v7203, %v7199
        %v7205 = vlaneseq
        %v7206 = vshrl.u32 %v7205, 7
        %v7207 = vsub.s32 %v7019, %v7206
        %v7208 = vrot.slane %v6920, %v7207
        %v7209 = vsel %vm7024, %v7208, %v7204
        %v7210 = vlaneseq
        %v7211 = vshrl.u32 %v7210, 7
        %v7212 = vsub.s32 %v7026, %v7211
        %v7213 = vrot.slane %v6923, %v7212
        %v7214 = vsel %vm7031, %v7213, %v7209
        %v7215 = vlaneseq
        %v7216 = vshrl.u32 %v7215, 7
        %v7217 = vsub.s32 %v7033, %v7216
        %v7218 = vrot.slane %v6926, %v7217
        %v7219 = vsel %vm7038, %v7218, %v7214
        %v7220 = vlaneseq
        %v7221 = vshrl.u32 %v7220, 7
        %v7222 = vsub.s32 %v7040, %v7221
        %v7223 = vrot.slane %v6929, %v7222
        %v7224 = vsel %vm7045, %v7223, %v7219
        %v7225 = vlaneseq
        %v7226 = vshrl.u32 %v7225, 7
        %v7227 = vsub.s32 %v7047, %v7226
        %v7228 = vrot.slane %v6932, %v7227
        %v7229 = vsel %vm7052, %v7228, %v7224
        %v7230 = vlaneseq
        %v7231 = vshrl.u32 %v7230, 7
        %v7232 = vsub.s32 %v7054, %v7231
        %v7233 = vrot.slane %v6935, %v7232
        %v7234 = vsel %vm7059, %v7233, %v7229
        %v7235 = vlaneseq
        %v7236 = vshrl.u32 %v7235, 7
        %v7237 = vsub.s32 %v7061, %v7236
        %v7238 = vrot.slane %v6938, %v7237
        %v7239 = vsel %vm7066, %v7238, %v7234
        %v7240 = vlaneseq
        %v7241 = vshrl.u32 %v7240, 7
        %v7242 = vsub.s32 %v7068, %v7241
        %v7243 = vrot.slane %v6941, %v7242
        %v7244 = vsel %vm7073, %v7243, %v7239
        %v7245 = vlaneseq
        %v7246 = vshrl.u32 %v7245, 7
        %v7247 = vsub.s32 %v7075, %v7246
        %v7248 = vrot.slane %v6944, %v7247
        %v7249 = vsel %vm7080, %v7248, %v7244
        %v7250 = vlaneseq
        %v7251 = vshrl.u32 %v7250, 7
        %v7252 = vsub.s32 %v7082, %v7251
        %v7253 = vrot.slane %v6947, %v7252
        %v7254 = vsel %vm7087, %v7253, %v7249
        %v7255 = vlaneseq
        %v7256 = vshrl.u32 %v7255, 7
        %v7257 = vsub.s32 %v7089, %v7256
        %v7258 = vrot.slane %v6950, %v7257
        %v7259 = vsel %vm7094, %v7258, %v7254
        %v7260 = vlaneseq
        %v7261 = vshrl.u32 %v7260, 7
        %v7262 = vsub.s32 %v7096, %v7261
        %v7263 = vrot.slane %v6953, %v7262
        %v7264 = vsel %vm7101, %v7263, %v7259
        %v7265 = vlaneseq
        %v7266 = vshrl.u32 %v7265, 7
        %v7267 = vsub.s32 %v7103, %v7266
        %v7268 = vrot.slane %v6956, %v7267
        %v7269 = vsel %vm7108, %v7268, %v7264
        %v7270 = vlaneseq
        %v7271 = vshrl.u32 %v7270, 7
        %v7272 = vsub.s32 %v7110, %v7271
        %v7273 = vrot.slane %v6959, %v7272
        %v7274 = vsel %vm7115, %v7273, %v7269
        %v7275 = vlaneseq
        %v7276 = vshrl.u32 %v7275, 7
        %v7277 = vsub.s32 %v974, %v7276
        %v7278 = vrot.slane %v6962, %v7277
        %v7279 = vlaneseq
        %v7280 = vshrl.u32 %v7279, 7
        %v7281 = vsub.s32 %v7012, %v7280
        %v7282 = vrot.slane %v6965, %v7281
        %v7283 = vsel %vm7017, %v7282, %v7278
        %v7284 = vlaneseq
        %v7285 = vshrl.u32 %v7284, 7
        %v7286 = vsub.s32 %v7019, %v7285
        %v7287 = vrot.slane %v6968, %v7286
        %v7288 = vsel %vm7024, %v7287, %v7283
        %v7289 = vlaneseq
        %v7290 = vshrl.u32 %v7289, 7
        %v7291 = vsub.s32 %v7026, %v7290
        %v7292 = vrot.slane %v6971, %v7291
        %v7293 = vsel %vm7031, %v7292, %v7288
        %v7294 = vlaneseq
        %v7295 = vshrl.u32 %v7294, 7
        %v7296 = vsub.s32 %v7033, %v7295
        %v7297 = vrot.slane %v6974, %v7296
        %v7298 = vsel %vm7038, %v7297, %v7293
        %v7299 = vlaneseq
        %v7300 = vshrl.u32 %v7299, 7
        %v7301 = vsub.s32 %v7040, %v7300
        %v7302 = vrot.slane %v6977, %v7301
        %v7303 = vsel %vm7045, %v7302, %v7298
        %v7304 = vlaneseq
        %v7305 = vshrl.u32 %v7304, 7
        %v7306 = vsub.s32 %v7047, %v7305
        %v7307 = vrot.slane %v6980, %v7306
        %v7308 = vsel %vm7052, %v7307, %v7303
        %v7309 = vlaneseq
        %v7310 = vshrl.u32 %v7309, 7
        %v7311 = vsub.s32 %v7054, %v7310
        %v7312 = vrot.slane %v6983, %v7311
        %v7313 = vsel %vm7059, %v7312, %v7308
        %v7314 = vlaneseq
        %v7315 = vshrl.u32 %v7314, 7
        %v7316 = vsub.s32 %v7061, %v7315
        %v7317 = vrot.slane %v6986, %v7316
        %v7318 = vsel %vm7066, %v7317, %v7313
        %v7319 = vlaneseq
        %v7320 = vshrl.u32 %v7319, 7
        %v7321 = vsub.s32 %v7068, %v7320
        %v7322 = vrot.slane %v6989, %v7321
        %v7323 = vsel %vm7073, %v7322, %v7318
        %v7324 = vlaneseq
        %v7325 = vshrl.u32 %v7324, 7
        %v7326 = vsub.s32 %v7075, %v7325
        %v7327 = vrot.slane %v6992, %v7326
        %v7328 = vsel %vm7080, %v7327, %v7323
        %v7329 = vlaneseq
        %v7330 = vshrl.u32 %v7329, 7
        %v7331 = vsub.s32 %v7082, %v7330
        %v7332 = vrot.slane %v6995, %v7331
        %v7333 = vsel %vm7087, %v7332, %v7328
        %v7334 = vlaneseq
        %v7335 = vshrl.u32 %v7334, 7
        %v7336 = vsub.s32 %v7089, %v7335
        %v7337 = vrot.slane %v6998, %v7336
        %v7338 = vsel %vm7094, %v7337, %v7333
        %v7339 = vlaneseq
        %v7340 = vshrl.u32 %v7339, 7
        %v7341 = vsub.s32 %v7096, %v7340
        %v7342 = vrot.slane %v7001, %v7341
        %v7343 = vsel %vm7101, %v7342, %v7338
        %v7344 = vlaneseq
        %v7345 = vshrl.u32 %v7344, 7
        %v7346 = vsub.s32 %v7103, %v7345
        %v7347 = vrot.slane %v7004, %v7346
        %v7348 = vsel %vm7108, %v7347, %v7343
        %v7349 = vlaneseq
        %v7350 = vshrl.u32 %v7349, 7
        %v7351 = vsub.s32 %v7110, %v7350
        %v7352 = vrot.slane %v7007, %v7351
        %v7353 = vsel %vm7115, %v7352, %v7348
        %v7354 = vcombine.low %v7116, %v7195
        %v7355 = vcombine.low %v7274, %v7353
        %v7357 = vunpack.c.l.s4 1966171168
        %v7358 = vunpack.c.0.s8 %v7357
        %v7359 = vlaneseq
        %v7360 = vshrl.u32 %v7359, 7
        %v7361 = vsub.s32 %v7358, %v7360
        %v7362 = vrot.slane %v7354, %v7361
        %v7364 = vunpack.c.l.s4 1966171168
        %v7365 = vunpack.c.0.s8 %v7364
        %v7366 = vlaneseq
        %v7367 = vshrl.u32 %v7366, 7
        %v7368 = vsub.s32 %v7365, %v7367
        %v7369 = vrot.slane %v7355, %v7368
        %v7370 = vcombine.low %v7362, %v7369
        %v7372 = vunpack.c.l.s4 1966171168
        %v7373 = vunpack.c.0.s8 %v7372
        %v7374 = vlaneseq
        %v7375 = vshrl.u32 %v7374, 7
        %v7376 = vsub.s32 %v7373, %v7375
        %v7377 = vrot.slane %v7370, %v7376
        %v7378 = vlaneseq
        %vm7379 = vcmp.ge.s32.totalorder %v7378, 0
        %vm7380 = vcmp.lt.s32.totalorder %v7378, 512
        %vm7381 = vmand %vm7379, %vm7380
        %7382 = vst.msk [vmem:[%s256] sm:$0xf] %vm7381, %v7377
        %v7383 = vsub.f32 %v1250, %v276
        %v7384 = vsub.f32 %v1255, %v277
        %v7385 = vsub.f32 %v1260, %v278
        %v7386 = vsub.f32 %v1265, %v279
        %v7387 = vsub.f32 %v1270, %v280
        %v7388 = vsub.f32 %v1275, %v281
        %v7389 = vsub.f32 %v1280, %v282
        %v7390 = vsub.f32 %v1285, %v283
        %v7391 = vsub.f32 %v1290, %v284
        %v7392 = vsub.f32 %v1295, %v285
        %v7393 = vsub.f32 %v1300, %v286
        %v7394 = vsub.f32 %v1305, %v287
        %v7395 = vsub.f32 %v1310, %v288
        %v7396 = vsub.f32 %v1315, %v289
        %v7397 = vsub.f32 %v1320, %v290
        %v7398 = vsub.f32 %v1325, %v291
        %v7399 = vsub.f32 %v1330, %v292
        %v7400 = vsub.f32 %v1335, %v293
        %v7401 = vsub.f32 %v1340, %v294
        %v7402 = vsub.f32 %v1345, %v295
        %v7403 = vsub.f32 %v1350, %v296
        %v7404 = vsub.f32 %v1355, %v297
        %v7405 = vsub.f32 %v1360, %v298
        %v7406 = vsub.f32 %v1365, %v299
        %v7407 = vsub.f32 %v1370, %v300
        %v7408 = vsub.f32 %v1375, %v301
        %v7409 = vsub.f32 %v1380, %v302
        %v7410 = vsub.f32 %v1385, %v303
        %v7411 = vsub.f32 %v1390, %v304
        %v7412 = vsub.f32 %v1395, %v305
        %v7413 = vsub.f32 %v1400, %v306
        %v7414 = vsub.f32 %v1405, %v307
        %v7415 = vsub.f32 %v1410, %v308
        %v7416 = vsub.f32 %v1415, %v309
        %v7417 = vsub.f32 %v1420, %v310
        %v7418 = vsub.f32 %v1425, %v311
        %v7419 = vsub.f32 %v1430, %v312
        %v7420 = vsub.f32 %v1435, %v313
        %v7421 = vsub.f32 %v1440, %v314
        %v7422 = vsub.f32 %v1445, %v315
        %v7423 = vsub.f32 %v1450, %v316
        %v7424 = vsub.f32 %v1455, %v317
        %v7425 = vsub.f32 %v1460, %v318
        %v7426 = vsub.f32 %v1465, %v319
        %v7427 = vsub.f32 %v1470, %v320
        %v7428 = vsub.f32 %v1475, %v321
        %v7429 = vsub.f32 %v1480, %v322
        %v7430 = vsub.f32 %v1485, %v323
        %v7431 = vsub.f32 %v1490, %v324
        %v7432 = vsub.f32 %v1495, %v325
        %v7433 = vsub.f32 %v1500, %v326
        %v7434 = vsub.f32 %v1505, %v327
        %v7435 = vsub.f32 %v1510, %v328
        %v7436 = vsub.f32 %v1515, %v329
        %v7437 = vsub.f32 %v1520, %v330
        %v7438 = vsub.f32 %v1525, %v331
        %v7439 = vsub.f32 %v1530, %v332
        %v7440 = vsub.f32 %v1535, %v333
        %v7441 = vsub.f32 %v1540, %v334
        %v7442 = vsub.f32 %v1545, %v335
        %v7443 = vsub.f32 %v1550, %v336
        %v7444 = vsub.f32 %v1555, %v337
        %v7445 = vsub.f32 %v1560, %v338
        %v7446 = vsub.f32 %v1565, %v339
        %v7447 = vmul.f32 %v7383, %v7383
        %v7448 = vmul.f32 %v7384, %v7384
        %v7449 = vmul.f32 %v7385, %v7385
        %v7450 = vmul.f32 %v7386, %v7386
        %v7451 = vmul.f32 %v7387, %v7387
        %v7452 = vmul.f32 %v7388, %v7388
        %v7453 = vmul.f32 %v7389, %v7389
        %v7454 = vmul.f32 %v7390, %v7390
        %v7455 = vmul.f32 %v7391, %v7391
        %v7456 = vmul.f32 %v7392, %v7392
        %v7457 = vmul.f32 %v7393, %v7393
        %v7458 = vmul.f32 %v7394, %v7394
        %v7459 = vmul.f32 %v7395, %v7395
        %v7460 = vmul.f32 %v7396, %v7396
        %v7461 = vmul.f32 %v7397, %v7397
        %v7462 = vmul.f32 %v7398, %v7398
        %v7463 = vmul.f32 %v7399, %v7399
        %v7464 = vmul.f32 %v7400, %v7400
        %v7465 = vmul.f32 %v7401, %v7401
        %v7466 = vmul.f32 %v7402, %v7402
        %v7467 = vmul.f32 %v7403, %v7403
        %v7468 = vmul.f32 %v7404, %v7404
        %v7469 = vmul.f32 %v7405, %v7405
        %v7470 = vmul.f32 %v7406, %v7406
        %v7471 = vmul.f32 %v7407, %v7407
        %v7472 = vmul.f32 %v7408, %v7408
        %v7473 = vmul.f32 %v7409, %v7409
        %v7474 = vmul.f32 %v7410, %v7410
        %v7475 = vmul.f32 %v7411, %v7411
        %v7476 = vmul.f32 %v7412, %v7412
        %v7477 = vmul.f32 %v7413, %v7413
        %v7478 = vmul.f32 %v7414, %v7414
        %v7479 = vmul.f32 %v7415, %v7415
        %v7480 = vmul.f32 %v7416, %v7416
        %v7481 = vmul.f32 %v7417, %v7417
        %v7482 = vmul.f32 %v7418, %v7418
        %v7483 = vmul.f32 %v7419, %v7419
        %v7484 = vmul.f32 %v7420, %v7420
        %v7485 = vmul.f32 %v7421, %v7421
        %v7486 = vmul.f32 %v7422, %v7422
        %v7487 = vmul.f32 %v7423, %v7423
        %v7488 = vmul.f32 %v7424, %v7424
        %v7489 = vmul.f32 %v7425, %v7425
        %v7490 = vmul.f32 %v7426, %v7426
        %v7491 = vmul.f32 %v7427, %v7427
        %v7492 = vmul.f32 %v7428, %v7428
        %v7493 = vmul.f32 %v7429, %v7429
        %v7494 = vmul.f32 %v7430, %v7430
        %v7495 = vmul.f32 %v7431, %v7431
        %v7496 = vmul.f32 %v7432, %v7432
        %v7497 = vmul.f32 %v7433, %v7433
        %v7498 = vmul.f32 %v7434, %v7434
        %v7499 = vmul.f32 %v7435, %v7435
        %v7500 = vmul.f32 %v7436, %v7436
        %v7501 = vmul.f32 %v7437, %v7437
        %v7502 = vmul.f32 %v7438, %v7438
        %v7503 = vmul.f32 %v7439, %v7439
        %v7504 = vmul.f32 %v7440, %v7440
        %v7505 = vmul.f32 %v7441, %v7441
        %v7506 = vmul.f32 %v7442, %v7442
        %v7507 = vmul.f32 %v7443, %v7443
        %v7508 = vmul.f32 %v7444, %v7444
        %v7509 = vmul.f32 %v7445, %v7445
        %v7510 = vmul.f32 %v7446, %v7446
        %v7511 = vsel %vm388, %v7447, 0.0
        %v7512 = vsel %vm388, %v7448, 0.0
        %v7513 = vadd.f32 %v7511, %v7512
        %v7514 = vsel %vm388, %v7449, 0.0
        %v7515 = vadd.f32 %v7513, %v7514
        %v7516 = vsel %vm388, %v7450, 0.0
        %v7517 = vadd.f32 %v7515, %v7516
        %v7518 = vsel %vm388, %v7451, 0.0
        %v7519 = vadd.f32 %v7517, %v7518
        %v7520 = vsel %vm388, %v7452, 0.0
        %v7521 = vadd.f32 %v7519, %v7520
        %v7522 = vsel %vm388, %v7453, 0.0
        %v7523 = vadd.f32 %v7521, %v7522
        %v7524 = vsel %vm388, %v7454, 0.0
        %v7525 = vadd.f32 %v7523, %v7524
        %v7526 = vsel %vm388, %v7455, 0.0
        %v7527 = vadd.f32 %v7525, %v7526
        %v7528 = vsel %vm388, %v7456, 0.0
        %v7529 = vadd.f32 %v7527, %v7528
        %v7530 = vsel %vm388, %v7457, 0.0
        %v7531 = vadd.f32 %v7529, %v7530
        %v7532 = vsel %vm388, %v7458, 0.0
        %v7533 = vadd.f32 %v7531, %v7532
        %v7534 = vsel %vm388, %v7459, 0.0
        %v7535 = vadd.f32 %v7533, %v7534
        %v7536 = vsel %vm388, %v7460, 0.0
        %v7537 = vadd.f32 %v7535, %v7536
        %v7538 = vsel %vm388, %v7461, 0.0
        %v7539 = vadd.f32 %v7537, %v7538
        %v7540 = vsel %vm388, %v7462, 0.0
        %v7541 = vadd.f32 %v7539, %v7540
        %v7542 = vsel %vm388, %v7463, 0.0
        %v7543 = vadd.f32 %v7541, %v7542
        %v7544 = vsel %vm388, %v7464, 0.0
        %v7545 = vadd.f32 %v7543, %v7544
        %v7546 = vsel %vm388, %v7465, 0.0
        %v7547 = vadd.f32 %v7545, %v7546
        %v7548 = vsel %vm388, %v7466, 0.0
        %v7549 = vadd.f32 %v7547, %v7548
        %v7550 = vsel %vm388, %v7467, 0.0
        %v7551 = vadd.f32 %v7549, %v7550
        %v7552 = vsel %vm388, %v7468, 0.0
        %v7553 = vadd.f32 %v7551, %v7552
        %v7554 = vsel %vm388, %v7469, 0.0
        %v7555 = vadd.f32 %v7553, %v7554
        %v7556 = vsel %vm388, %v7470, 0.0
        %v7557 = vadd.f32 %v7555, %v7556
        %v7558 = vsel %vm388, %v7471, 0.0
        %v7559 = vadd.f32 %v7557, %v7558
        %v7560 = vsel %vm388, %v7472, 0.0
        %v7561 = vadd.f32 %v7559, %v7560
        %v7562 = vsel %vm388, %v7473, 0.0
        %v7563 = vadd.f32 %v7561, %v7562
        %v7564 = vsel %vm388, %v7474, 0.0
        %v7565 = vadd.f32 %v7563, %v7564
        %v7566 = vsel %vm388, %v7475, 0.0
        %v7567 = vadd.f32 %v7565, %v7566
        %v7568 = vsel %vm388, %v7476, 0.0
        %v7569 = vadd.f32 %v7567, %v7568
        %v7570 = vsel %vm388, %v7477, 0.0
        %v7571 = vadd.f32 %v7569, %v7570
        %v7572 = vsel %vm388, %v7478, 0.0
        %v7573 = vadd.f32 %v7571, %v7572
        %v7574 = vsel %vm388, %v7479, 0.0
        %v7575 = vadd.f32 %v7573, %v7574
        %v7576 = vsel %vm388, %v7480, 0.0
        %v7577 = vadd.f32 %v7575, %v7576
        %v7578 = vsel %vm388, %v7481, 0.0
        %v7579 = vadd.f32 %v7577, %v7578
        %v7580 = vsel %vm388, %v7482, 0.0
        %v7581 = vadd.f32 %v7579, %v7580
        %v7582 = vsel %vm388, %v7483, 0.0
        %v7583 = vadd.f32 %v7581, %v7582
        %v7584 = vsel %vm388, %v7484, 0.0
        %v7585 = vadd.f32 %v7583, %v7584
        %v7586 = vsel %vm388, %v7485, 0.0
        %v7587 = vadd.f32 %v7585, %v7586
        %v7588 = vsel %vm388, %v7486, 0.0
        %v7589 = vadd.f32 %v7587, %v7588
        %v7590 = vsel %vm388, %v7487, 0.0
        %v7591 = vadd.f32 %v7589, %v7590
        %v7592 = vsel %vm388, %v7488, 0.0
        %v7593 = vadd.f32 %v7591, %v7592
        %v7594 = vsel %vm388, %v7489, 0.0
        %v7595 = vadd.f32 %v7593, %v7594
        %v7596 = vsel %vm388, %v7490, 0.0
        %v7597 = vadd.f32 %v7595, %v7596
        %v7598 = vsel %vm388, %v7491, 0.0
        %v7599 = vadd.f32 %v7597, %v7598
        %v7600 = vsel %vm388, %v7492, 0.0
        %v7601 = vadd.f32 %v7599, %v7600
        %v7602 = vsel %vm388, %v7493, 0.0
        %v7603 = vadd.f32 %v7601, %v7602
        %v7604 = vsel %vm388, %v7494, 0.0
        %v7605 = vadd.f32 %v7603, %v7604
        %v7606 = vsel %vm388, %v7495, 0.0
        %v7607 = vadd.f32 %v7605, %v7606
        %v7608 = vsel %vm388, %v7496, 0.0
        %v7609 = vadd.f32 %v7607, %v7608
        %v7610 = vsel %vm388, %v7497, 0.0
        %v7611 = vadd.f32 %v7609, %v7610
        %v7612 = vsel %vm388, %v7498, 0.0
        %v7613 = vadd.f32 %v7611, %v7612
        %v7614 = vsel %vm388, %v7499, 0.0
        %v7615 = vadd.f32 %v7613, %v7614
        %v7616 = vsel %vm388, %v7500, 0.0
        %v7617 = vadd.f32 %v7615, %v7616
        %v7618 = vsel %vm388, %v7501, 0.0
        %v7619 = vadd.f32 %v7617, %v7618
        %v7620 = vsel %vm388, %v7502, 0.0
        %v7621 = vadd.f32 %v7619, %v7620
        %v7622 = vsel %vm388, %v7503, 0.0
        %v7623 = vadd.f32 %v7621, %v7622
        %v7624 = vsel %vm388, %v7504, 0.0
        %v7625 = vadd.f32 %v7623, %v7624
        %v7626 = vsel %vm388, %v7505, 0.0
        %v7627 = vadd.f32 %v7625, %v7626
        %v7628 = vsel %vm388, %v7506, 0.0
        %v7629 = vadd.f32 %v7627, %v7628
        %v7630 = vsel %vm388, %v7507, 0.0
        %v7631 = vadd.f32 %v7629, %v7630
        %v7632 = vsel %vm388, %v7508, 0.0
        %v7633 = vadd.f32 %v7631, %v7632
        %v7634 = vsel %vm388, %v7509, 0.0
        %v7635 = vadd.f32 %v7633, %v7634
        %v7636 = vsel %vm388, %v7510, 0.0
        %v7637 = vadd.f32 %v7635, %v7636
        %v7638 = vrot.slane %v7637, 4
        %v7639 = vadd.f32 %v7637, %v7638
        %v7640 = vrot.slane %v7639, 2
        %v7641 = vadd.f32 %v7639, %v7640
        %v7642 = vrot.slane %v7641, 1
        %v7643 = vadd.f32 %v7641, %v7642
        %vm7644 = vcmask 253952
        %7645 = vst.msk [vmem:[%s262] sm:$0x1] %vm7644, %v7643
        %s7646 = smul.u32 64, %s24
        %p7647 = scmp.lt.s32.totalorder %s7646, 127
        %s7648 = scalar_select %p7647, %s7646, 127
        %s7649 = smul.addr %s7648, 8
        %s7650 = scalar_lea.vmem %s4, %s7649
        %s7651 = sand.u32 %s147, 1
        %s7652 = scalar_lea.sflag [#allocation3], %s7651
        %s7653 = sand.u32 %s147, 1
        %s7654 = smul.addr %s7653, 4
        %s7655 = scalar_lea.vmem [#allocation2], %s7654
        %s7656 = sand.u32 %s173, 1
        %s7657 = scalar_lea.sflag [#allocation5], %s7656
        %s7658 = sand.u32 %s173, 1
        %s7659 = scalar_lea.vmem [#allocation4], %s7658
        // Predicated region
        $region37: #{tpu_custom_call.1} parent=35 // pred_check
          %p7660 = pneg %p131
        $region38: #{tpu_custom_call.1} parent=35 // pred_check_branch
          %7662 = sbr.rel (%p7660) target = $region40
        $region39: #{tpu_custom_call.1} parent=35 // pred_region
          %s7663 = smul.u32 64, %s24
        $region40: #{tpu_custom_call.1} parent=35 // pred_fallthru
          _
        // Predicated region
        $region41: #{tpu_custom_call.1} parent=35 // pred_check
          %p7664 = pneg %p157
        $region42: #{tpu_custom_call.1} parent=35 // pred_check_branch
          %7666 = sbr.rel (%p7664) target = $region44
        $region43: #{tpu_custom_call.1} parent=35 // pred_region
          %s7668 = ssub.s32 64, 64
          %7669 = vsyncadd %s7652, %s7668
          %s7670 = smul.addr %s24, 4
          %s7671 = smul.addr %s7670, 16
          %s7672 = scalar_lea.hbm %s5, %s7671
          %s7674 = sshll.u32 %s7655, 4
          %s7675 = int_to_ptr.vmem [resolvable:$true] %s7674
          %7677 = dma.vmem_to_hbm [thread:$0]  %s7675, 64, %s7672, %s7652
        $region44: #{tpu_custom_call.1} parent=35 // pred_fallthru
          _
        // Predicated region
        $region45: #{tpu_custom_call.1} parent=35 // pred_check
          %p7678 = pneg %p183
        $region46: #{tpu_custom_call.1} parent=35 // pred_check_branch
          %7680 = sbr.rel (%p7678) target = $region48
        $region47: #{tpu_custom_call.1} parent=35 // pred_region
          %s7682 = ssub.s32 16, 16
          %7683 = vsyncadd %s7657, %s7682
          %s7684 = smul.addr %s24, 16
          %s7685 = scalar_lea.hbm %s6, %s7684
          %s7687 = sshll.u32 %s7659, 4
          %s7688 = int_to_ptr.vmem [resolvable:$true] %s7687
          %7690 = dma.vmem_to_hbm [thread:$0]  %s7688, 16, %s7685, %s7657
        $region48: #{tpu_custom_call.1} parent=35 // pred_fallthru
          _
      $region36: #{tpu_custom_call.1} parent=5 // pred_fallthru
        _
      %p7691 = scmp.le.s32.totalorder 2, %s19
      // Predicated region
      $region49: #{tpu_custom_call.1} parent=5 // pred_check
        %p7692 = pneg %p7691
      $region50: #{tpu_custom_call.1} parent=5 // pred_check_branch
        %7694 = sbr.rel (%p7692) target = $region52
      $region51: #{tpu_custom_call.1} parent=5 // pred_region
        %s7695 = ssub.s32 %s19, 2
        // Predicated region
        $region53: #{tpu_custom_call.1} parent=51 // pred_check
          %p7696 = pneg %p137
        $region54: #{tpu_custom_call.1} parent=51 // pred_check_branch
          %7698 = sbr.rel (%p7696) target = $region56
        $region55: #{tpu_custom_call.1} parent=51 // pred_region
          %s7699 = smul.u32 64, %s25
          %p7700 = scmp.lt.s32.totalorder %s7699, 127
          %s7701 = scalar_select %p7700, %s7699, 127
          %s7702 = smul.addr %s7701, 8
          %s7703 = scalar_lea.vmem %s4, %s7702
        $region56: #{tpu_custom_call.1} parent=51 // pred_fallthru
          _
        // Predicated region
        $region57: #{tpu_custom_call.1} parent=51 // pred_check
          %p7704 = pneg %p163
        $region58: #{tpu_custom_call.1} parent=51 // pred_check_branch
          %7706 = sbr.rel (%p7704) target = $region60
        $region59: #{tpu_custom_call.1} parent=51 // pred_region
          %s7707 = sand.u32 %s148, 1
          %s7708 = scalar_lea.sflag [#allocation3], %s7707
          %s7709 = sand.u32 %s148, 1
          %s7710 = smul.addr %s7709, 4
          %s7711 = scalar_lea.vmem [#allocation2], %s7710
          %7712 = dma.done %s7708, 64
        $region60: #{tpu_custom_call.1} parent=51 // pred_fallthru
          _
        // Predicated region
        $region61: #{tpu_custom_call.1} parent=51 // pred_check
          %p7713 = pneg %p189
        $region62: #{tpu_custom_call.1} parent=51 // pred_check_branch
          %7715 = sbr.rel (%p7713) target = $region64
        $region63: #{tpu_custom_call.1} parent=51 // pred_region
          %s7716 = sand.u32 %s174, 1
          %s7717 = scalar_lea.sflag [#allocation5], %s7716
          %s7718 = sand.u32 %s174, 1
          %s7719 = scalar_lea.vmem [#allocation4], %s7718
          %7720 = dma.done %s7717, 16
        $region64: #{tpu_custom_call.1} parent=51 // pred_fallthru
          _
      $region52: #{tpu_custom_call.1} parent=5 // pred_fallthru
        _
    $region6: #{tpu_custom_call.1} parent=1 // loop_footer
      %s23 = sadd.s32 1, %s19
    $region7: #{tpu_custom_call.1} parent=1 // loop_footer_branch
      %18 = sbr.rel target = $region3
    $region8: #{tpu_custom_call.1} parent=1 // loop_exit
      _
    %7721 = vsyncpa [#allocation3], 1
    %s7722 = scalar_lea.sflag [#allocation3], 1
    %7723 = vsyncpa %s7722, 1
    %7724 = vsyncpa [#allocation5], 1
    %s7725 = scalar_lea.sflag [#allocation5], 1
    %7726 = vsyncpa %s7725, 1

</llo_original>
